<compile_context>
chip_gen: v7x
topology: tpu7x:2x2x1
jax: 0.10.0
libtpu: 0.0.40
codegen_flags: <defaults>
</compile_context>

<pallas_src>
import functools

import jax
import jax.numpy as jnp
from jax.experimental import pallas as pl
from jax.experimental.pallas import tpu as pltpu


def _wan_cam_resblock_kernel(xp_ref, w1_ref, b1_ref, w2_ref, b2_ref, o_ref,
                             mid_ref, *, H, W, C):
    # xp_ref : (1, H+2, W+2, C)   zero-padded input slab for this batch element
    # w1_ref : (9, C, C)          conv1 weight, tap-major [dy*3+dx][Cin, Cout]
    # b1_ref : (1, C)
    # w2_ref : (9, C, C)          conv2 weight
    # b2_ref : (1, C)
    # o_ref  : (1, H, W, C)
    # mid_ref: (H+2, W+2, C)      VMEM scratch: zero-padded conv1 output
    f32 = jnp.float32
    cdt = w1_ref.dtype                      # MXU compute dtype (matches params)

    xp = xp_ref[0]                          # (H+2, W+2, C)

    # ---------------- conv1 (3x3, pad 1) as 9 shifted matmuls ----------------
    acc = jnp.zeros((H * W, C), f32)
    for dy in range(3):
        for dx in range(3):
            tap = dy * 3 + dx
            patch = xp[dy:dy + H, dx:dx + W, :].reshape(H * W, C).astype(cdt)
            acc = acc + jnp.dot(patch, w1_ref[tap],
                                preferred_element_type=f32)
    acc = acc + b1_ref[...].astype(f32)     # bias, broadcast over rows
    h1 = jnp.maximum(acc, 0.0)              # ReLU

    # -------- zero-padded intermediate (halo for conv2) in VMEM scratch ------
    mid_ref[...] = jnp.zeros_like(mid_ref)
    mid_ref[1:H + 1, 1:W + 1, :] = h1.reshape(H, W, C).astype(mid_ref.dtype)
    hp = mid_ref[...]                       # (H+2, W+2, C)

    # ---------------- conv2 (3x3, pad 1) --------------------------------------
    acc2 = jnp.zeros((H * W, C), f32)
    for dy in range(3):
        for dx in range(3):
            tap = dy * 3 + dx
            patch = hp[dy:dy + H, dx:dx + W, :].reshape(H * W, C).astype(cdt)
            acc2 = acc2 + jnp.dot(patch, w2_ref[tap],
                                  preferred_element_type=f32)
    acc2 = acc2 + b2_ref[...].astype(f32)

    # ---------------- residual add --------------------------------------------
    res = xp[1:H + 1, 1:W + 1, :].reshape(H * W, C).astype(f32)
    out = acc2 + res
    o_ref[0] = out.reshape(H, W, C).astype(o_ref.dtype)


def wan_cam_residual_block(x, w1, b1, w2, b2):
    """Fused Pallas forward of WanCamResidualBlock.

    x : [B, C, H, W]   (NCHW, like the PyTorch module)
    w1, w2 : [C, C, 3, 3]   (torch Conv2d weight layout OIHW)
    b1, b2 : [C]
    returns: [B, C, H, W]
    """
    B, C, H, W = x.shape
    assert w1.shape == (C, C, 3, 3) and w2.shape == (C, C, 3, 3)

    # NCHW -> NHWC (channels on lanes), zero-pad spatially by 1 for 'SAME'.
    x_nhwc = jnp.transpose(x, (0, 2, 3, 1))
    xp = jnp.pad(x_nhwc, ((0, 0), (1, 1), (1, 1), (0, 0)))

    # [Cout, Cin, 3, 3] -> [9, Cin, Cout], tap index = dy*3 + dx.
    w1t = jnp.transpose(w1, (2, 3, 1, 0)).reshape(9, C, C)
    w2t = jnp.transpose(w2, (2, 3, 1, 0)).reshape(9, C, C)
    b1r = b1.reshape(1, C)
    b2r = b2.reshape(1, C)

    kernel = functools.partial(_wan_cam_resblock_kernel, H=H, W=W, C=C)

    itemsize = jnp.dtype(x.dtype).itemsize
    w_itemsize = jnp.dtype(w1.dtype).itemsize
    # Rough VMEM budget (double-buffered x/out, resident weights, scratch,
    # f32 temporaries), clamped to a per-generation-safe ceiling.
    vmem_bytes = (2 * (H + 2) * (W + 2) * C * itemsize
                  + 2 * H * W * C * itemsize
                  + 2 * 2 * 9 * C * C * w_itemsize
                  + (H + 2) * (W + 2) * C * itemsize
                  + 8 * H * W * C * 4)
    vmem_limit = int(min(max(2 * vmem_bytes, 16 * 1024 * 1024),
                         32 * 1024 * 1024))

    flops = 2 * (2 * 9 * B * H * W * C * C)          # two convs, 9 taps each
    bytes_accessed = (xp.size + B * H * W * C) * itemsize \
        + (w1t.size + w2t.size) * w_itemsize

    out_nhwc = pl.pallas_call(
        kernel,
        out_shape=jax.ShapeDtypeStruct((B, H, W, C), x.dtype),
        grid_spec=pltpu.PrefetchScalarGridSpec(
            num_scalar_prefetch=0,
            grid=(B,),
            in_specs=[
                pl.BlockSpec((1, H + 2, W + 2, C), lambda b: (b, 0, 0, 0)),  # x (padded)
                pl.BlockSpec((9, C, C), lambda b: (0, 0, 0)),                # w1 (resident)
                pl.BlockSpec((1, C), lambda b: (0, 0)),                      # b1
                pl.BlockSpec((9, C, C), lambda b: (0, 0, 0)),                # w2 (resident)
                pl.BlockSpec((1, C), lambda b: (0, 0)),                      # b2
            ],
            out_specs=pl.BlockSpec((1, H, W, C), lambda b: (b, 0, 0, 0)),
            scratch_shapes=[pltpu.VMEM((H + 2, W + 2, C), x.dtype)],
        ),
        compiler_params=pltpu.CompilerParams(
            dimension_semantics=("parallel",),
            vmem_limit_bytes=vmem_limit,
        ),
        cost_estimate=pl.CostEstimate(flops=flops, transcendentals=0,
                                      bytes_accessed=bytes_accessed),
    )(xp, w1t, b1r, w2t, b2r)

    return jnp.transpose(out_nhwc, (0, 3, 1, 2))     # back to NCHW


def wan_cam_residual_block_reference(x, w1, b1, w2, b2):
    """Pure-JAX reference matching the PyTorch semantics (NCHW)."""
    dn = jax.lax.conv_dimension_numbers(x.shape, w1.shape,
                                        ('NCHW', 'OIHW', 'NCHW'))
    y = jax.lax.conv_general_dilated(x, w1, (1, 1), 'SAME',
                                     dimension_numbers=dn,
                                     precision=jax.lax.Precision.HIGHEST)
    y = y + b1[None, :, None, None]
    y = jnp.maximum(y, 0.0)
    z = jax.lax.conv_general_dilated(y, w2, (1, 1), 'SAME',
                                     dimension_numbers=dn,
                                     precision=jax.lax.Precision.HIGHEST)
    z = z + b2[None, :, None, None]
    return z + x


if __name__ == "__main__":
    # Small shapes consistent with the module: dim channels, square spatial.
    # dim=128 keeps the channel axis lane-dense (128 lanes).
    B, C, H, W = 2, 128, 16, 16

    key = jax.random.PRNGKey(0)
    kx, kw1, kb1, kw2, kb2 = jax.random.split(key, 5)

    x = jax.random.normal(kx, (B, C, H, W), dtype=jnp.float32)
    fan_in = 9 * C
    w1 = jax.random.normal(kw1, (C, C, 3, 3), dtype=jnp.float32) / jnp.sqrt(fan_in)
    b1 = 0.01 * jax.random.normal(kb1, (C,), dtype=jnp.float32)
    w2 = jax.random.normal(kw2, (C, C, 3, 3), dtype=jnp.float32) / jnp.sqrt(fan_in)
    b2 = 0.01 * jax.random.normal(kb2, (C,), dtype=jnp.float32)

    out = wan_cam_residual_block(x, w1, b1, w2, b2)
    out = jax.block_until_ready(out)

    ref = wan_cam_residual_block_reference(x, w1, b1, w2, b2)
    assert out.shape == (B, C, H, W)
    assert jnp.allclose(out, ref, atol=2e-3, rtol=2e-3), \
        f"mismatch vs reference, max err {jnp.max(jnp.abs(out - ref))}"

    print("KERNEL_OK")
</pallas_src>

<mosaic_0001>
module attributes {stable_mosaic.version = 11 : i64} {
  func.func @_wan_cam_resblock_kernel(%arg0: i32, %arg1: memref<1x18x18x128xf32, #tpu.memory_space<vmem>>, %arg2: memref<9x128x128xf32, #tpu.memory_space<vmem>>, %arg3: memref<1x128xf32, #tpu.memory_space<vmem>>, %arg4: memref<9x128x128xf32, #tpu.memory_space<vmem>>, %arg5: memref<1x128xf32, #tpu.memory_space<vmem>>, %arg6: memref<1x16x16x128xf32, #tpu.memory_space<vmem>>, %arg7: memref<18x18x128xf32, #tpu.memory_space<vmem>>) attributes {dimension_semantics = [#tpu.dimension_semantics<parallel>], iteration_bounds = array<i64: 2>, scalar_prefetch = 0 : i64, scratch_operands = 1 : i64, tpu.core_type = #tpu.core_type<tc>, window_params = [{transform_indices = @transform_0, window_bounds = array<i64: 1, 18, 18, 128>}, {pipeline_mode = #tpu.pipeline_mode<synchronous>, transform_indices = @transform_1, window_bounds = array<i64: 9, 128, 128>}, {pipeline_mode = #tpu.pipeline_mode<synchronous>, transform_indices = @transform_2, window_bounds = array<i64: 1, 128>}, {pipeline_mode = #tpu.pipeline_mode<synchronous>, transform_indices = @transform_3, window_bounds = array<i64: 9, 128, 128>}, {pipeline_mode = #tpu.pipeline_mode<synchronous>, transform_indices = @transform_4, window_bounds = array<i64: 1, 128>}, {transform_indices = @transform_5, window_bounds = array<i64: 1, 16, 16, 128>}]} {
    %c0 = arith.constant 0 : index
    %c0_0 = arith.constant 0 : index
    %c0_1 = arith.constant 0 : index
    %c0_2 = arith.constant 0 : index
    %0 = vector.load %arg1[%c0, %c0_0, %c0_1, %c0_2] : memref<1x18x18x128xf32, #tpu.memory_space<vmem>>, vector<1x18x18x128xf32>
    %1 = vector.shape_cast %0 : vector<1x18x18x128xf32> to vector<18x18x128xf32>
    %cst = arith.constant 0.000000e+00 : f32
    %2 = vector.broadcast %cst : f32 to vector<256x128xf32>
    %3 = vector.extract_strided_slice %1 {offsets = [0, 0, 0], sizes = [16, 16, 128], strides = [1, 1, 1]} : vector<18x18x128xf32> to vector<16x16x128xf32>
    %4 = vector.shape_cast %3 : vector<16x16x128xf32> to vector<256x128xf32>
    %c0_3 = arith.constant 0 : index
    %c0_4 = arith.constant 0 : index
    %c0_5 = arith.constant 0 : index
    %5 = vector.load %arg2[%c0_3, %c0_4, %c0_5] : memref<9x128x128xf32, #tpu.memory_space<vmem>>, vector<1x128x128xf32>
    %6 = vector.shape_cast %5 : vector<1x128x128xf32> to vector<128x128xf32>
    %cst_6 = arith.constant dense<0.000000e+00> : vector<256x128xf32>
    %7 = tpu.matmul %4, %6, %cst_6 {dimension_numbers = #tpu.dot_dimension_numbers<[1], [0], [0], [1], [0, 0, 1, 1], [], []>} : vector<256x128xf32>, vector<128x128xf32>, vector<256x128xf32> -> vector<256x128xf32>
    %8 = arith.addf %2, %7 : vector<256x128xf32>
    %9 = vector.extract_strided_slice %1 {offsets = [0, 1, 0], sizes = [16, 16, 128], strides = [1, 1, 1]} : vector<18x18x128xf32> to vector<16x16x128xf32>
    %10 = vector.shape_cast %9 : vector<16x16x128xf32> to vector<256x128xf32>
    %c1 = arith.constant 1 : index
    %c0_7 = arith.constant 0 : index
    %c0_8 = arith.constant 0 : index
    %11 = vector.load %arg2[%c1, %c0_7, %c0_8] : memref<9x128x128xf32, #tpu.memory_space<vmem>>, vector<1x128x128xf32>
    %12 = vector.shape_cast %11 : vector<1x128x128xf32> to vector<128x128xf32>
    %cst_9 = arith.constant dense<0.000000e+00> : vector<256x128xf32>
    %13 = tpu.matmul %10, %12, %cst_9 {dimension_numbers = #tpu.dot_dimension_numbers<[1], [0], [0], [1], [0, 0, 1, 1], [], []>} : vector<256x128xf32>, vector<128x128xf32>, vector<256x128xf32> -> vector<256x128xf32>
    %14 = arith.addf %8, %13 : vector<256x128xf32>
    %15 = vector.extract_strided_slice %1 {offsets = [0, 2, 0], sizes = [16, 16, 128], strides = [1, 1, 1]} : vector<18x18x128xf32> to vector<16x16x128xf32>
    %16 = vector.shape_cast %15 : vector<16x16x128xf32> to vector<256x128xf32>
    %c2 = arith.constant 2 : index
    %c0_10 = arith.constant 0 : index
    %c0_11 = arith.constant 0 : index
    %17 = vector.load %arg2[%c2, %c0_10, %c0_11] : memref<9x128x128xf32, #tpu.memory_space<vmem>>, vector<1x128x128xf32>
    %18 = vector.shape_cast %17 : vector<1x128x128xf32> to vector<128x128xf32>
    %cst_12 = arith.constant dense<0.000000e+00> : vector<256x128xf32>
    %19 = tpu.matmul %16, %18, %cst_12 {dimension_numbers = #tpu.dot_dimension_numbers<[1], [0], [0], [1], [0, 0, 1, 1], [], []>} : vector<256x128xf32>, vector<128x128xf32>, vector<256x128xf32> -> vector<256x128xf32>
    %20 = arith.addf %14, %19 : vector<256x128xf32>
    %21 = vector.extract_strided_slice %1 {offsets = [1, 0, 0], sizes = [16, 16, 128], strides = [1, 1, 1]} : vector<18x18x128xf32> to vector<16x16x128xf32>
    %22 = vector.shape_cast %21 : vector<16x16x128xf32> to vector<256x128xf32>
    %c3 = arith.constant 3 : index
    %c0_13 = arith.constant 0 : index
    %c0_14 = arith.constant 0 : index
    %23 = vector.load %arg2[%c3, %c0_13, %c0_14] : memref<9x128x128xf32, #tpu.memory_space<vmem>>, vector<1x128x128xf32>
    %24 = vector.shape_cast %23 : vector<1x128x128xf32> to vector<128x128xf32>
    %cst_15 = arith.constant dense<0.000000e+00> : vector<256x128xf32>
    %25 = tpu.matmul %22, %24, %cst_15 {dimension_numbers = #tpu.dot_dimension_numbers<[1], [0], [0], [1], [0, 0, 1, 1], [], []>} : vector<256x128xf32>, vector<128x128xf32>, vector<256x128xf32> -> vector<256x128xf32>
    %26 = arith.addf %20, %25 : vector<256x128xf32>
    %27 = vector.extract_strided_slice %1 {offsets = [1, 1, 0], sizes = [16, 16, 128], strides = [1, 1, 1]} : vector<18x18x128xf32> to vector<16x16x128xf32>
    %28 = vector.shape_cast %27 : vector<16x16x128xf32> to vector<256x128xf32>
    %c4 = arith.constant 4 : index
    %c0_16 = arith.constant 0 : index
    %c0_17 = arith.constant 0 : index
    %29 = vector.load %arg2[%c4, %c0_16, %c0_17] : memref<9x128x128xf32, #tpu.memory_space<vmem>>, vector<1x128x128xf32>
    %30 = vector.shape_cast %29 : vector<1x128x128xf32> to vector<128x128xf32>
    %cst_18 = arith.constant dense<0.000000e+00> : vector<256x128xf32>
    %31 = tpu.matmul %28, %30, %cst_18 {dimension_numbers = #tpu.dot_dimension_numbers<[1], [0], [0], [1], [0, 0, 1, 1], [], []>} : vector<256x128xf32>, vector<128x128xf32>, vector<256x128xf32> -> vector<256x128xf32>
    %32 = arith.addf %26, %31 : vector<256x128xf32>
    %33 = vector.extract_strided_slice %1 {offsets = [1, 2, 0], sizes = [16, 16, 128], strides = [1, 1, 1]} : vector<18x18x128xf32> to vector<16x16x128xf32>
    %34 = vector.shape_cast %33 : vector<16x16x128xf32> to vector<256x128xf32>
    %c5 = arith.constant 5 : index
    %c0_19 = arith.constant 0 : index
    %c0_20 = arith.constant 0 : index
    %35 = vector.load %arg2[%c5, %c0_19, %c0_20] : memref<9x128x128xf32, #tpu.memory_space<vmem>>, vector<1x128x128xf32>
    %36 = vector.shape_cast %35 : vector<1x128x128xf32> to vector<128x128xf32>
    %cst_21 = arith.constant dense<0.000000e+00> : vector<256x128xf32>
    %37 = tpu.matmul %34, %36, %cst_21 {dimension_numbers = #tpu.dot_dimension_numbers<[1], [0], [0], [1], [0, 0, 1, 1], [], []>} : vector<256x128xf32>, vector<128x128xf32>, vector<256x128xf32> -> vector<256x128xf32>
    %38 = arith.addf %32, %37 : vector<256x128xf32>
    %39 = vector.extract_strided_slice %1 {offsets = [2, 0, 0], sizes = [16, 16, 128], strides = [1, 1, 1]} : vector<18x18x128xf32> to vector<16x16x128xf32>
    %40 = vector.shape_cast %39 : vector<16x16x128xf32> to vector<256x128xf32>
    %c6 = arith.constant 6 : index
    %c0_22 = arith.constant 0 : index
    %c0_23 = arith.constant 0 : index
    %41 = vector.load %arg2[%c6, %c0_22, %c0_23] : memref<9x128x128xf32, #tpu.memory_space<vmem>>, vector<1x128x128xf32>
    %42 = vector.shape_cast %41 : vector<1x128x128xf32> to vector<128x128xf32>
    %cst_24 = arith.constant dense<0.000000e+00> : vector<256x128xf32>
    %43 = tpu.matmul %40, %42, %cst_24 {dimension_numbers = #tpu.dot_dimension_numbers<[1], [0], [0], [1], [0, 0, 1, 1], [], []>} : vector<256x128xf32>, vector<128x128xf32>, vector<256x128xf32> -> vector<256x128xf32>
    %44 = arith.addf %38, %43 : vector<256x128xf32>
    %45 = vector.extract_strided_slice %1 {offsets = [2, 1, 0], sizes = [16, 16, 128], strides = [1, 1, 1]} : vector<18x18x128xf32> to vector<16x16x128xf32>
    %46 = vector.shape_cast %45 : vector<16x16x128xf32> to vector<256x128xf32>
    %c7 = arith.constant 7 : index
    %c0_25 = arith.constant 0 : index
    %c0_26 = arith.constant 0 : index
    %47 = vector.load %arg2[%c7, %c0_25, %c0_26] : memref<9x128x128xf32, #tpu.memory_space<vmem>>, vector<1x128x128xf32>
    %48 = vector.shape_cast %47 : vector<1x128x128xf32> to vector<128x128xf32>
    %cst_27 = arith.constant dense<0.000000e+00> : vector<256x128xf32>
    %49 = tpu.matmul %46, %48, %cst_27 {dimension_numbers = #tpu.dot_dimension_numbers<[1], [0], [0], [1], [0, 0, 1, 1], [], []>} : vector<256x128xf32>, vector<128x128xf32>, vector<256x128xf32> -> vector<256x128xf32>
    %50 = arith.addf %44, %49 : vector<256x128xf32>
    %51 = vector.extract_strided_slice %1 {offsets = [2, 2, 0], sizes = [16, 16, 128], strides = [1, 1, 1]} : vector<18x18x128xf32> to vector<16x16x128xf32>
    %52 = vector.shape_cast %51 : vector<16x16x128xf32> to vector<256x128xf32>
    %c8 = arith.constant 8 : index
    %c0_28 = arith.constant 0 : index
    %c0_29 = arith.constant 0 : index
    %53 = vector.load %arg2[%c8, %c0_28, %c0_29] : memref<9x128x128xf32, #tpu.memory_space<vmem>>, vector<1x128x128xf32>
    %54 = vector.shape_cast %53 : vector<1x128x128xf32> to vector<128x128xf32>
    %cst_30 = arith.constant dense<0.000000e+00> : vector<256x128xf32>
    %55 = tpu.matmul %52, %54, %cst_30 {dimension_numbers = #tpu.dot_dimension_numbers<[1], [0], [0], [1], [0, 0, 1, 1], [], []>} : vector<256x128xf32>, vector<128x128xf32>, vector<256x128xf32> -> vector<256x128xf32>
    %56 = arith.addf %50, %55 : vector<256x128xf32>
    %c0_31 = arith.constant 0 : index
    %c0_32 = arith.constant 0 : index
    %57 = vector.load %arg3[%c0_31, %c0_32] : memref<1x128xf32, #tpu.memory_space<vmem>>, vector<1x128xf32>
    %58 = vector.broadcast %57 : vector<1x128xf32> to vector<256x128xf32>
    %59 = arith.addf %56, %58 : vector<256x128xf32>
    %cst_33 = arith.constant 0.000000e+00 : f32
    %60 = vector.broadcast %cst_33 : f32 to vector<256x128xf32>
    %61 = arith.maximumf %59, %60 : vector<256x128xf32>
    %cst_34 = arith.constant 0.000000e+00 : f32
    %62 = vector.broadcast %cst_34 : f32 to vector<18x18x128xf32>
    %c0_35 = arith.constant 0 : index
    %c0_36 = arith.constant 0 : index
    %c0_37 = arith.constant 0 : index
    %63 = vector.load %arg7[%c0_35, %c0_36, %c0_37] : memref<18x18x128xf32, #tpu.memory_space<vmem>>, vector<18x18x128xf32>
    tpu.vector_store %arg7[%c0_35, %c0_36, %c0_37], %62 {strides = array<i32>} : memref<18x18x128xf32, #tpu.memory_space<vmem>>, vector<18x18x128xf32>,
    %64 = vector.shape_cast %61 : vector<256x128xf32> to vector<16x16x128xf32>
    %c1_38 = arith.constant 1 : index
    %c1_39 = arith.constant 1 : index
    %c0_40 = arith.constant 0 : index
    %65 = vector.load %arg7[%c1_38, %c1_39, %c0_40] : memref<18x18x128xf32, #tpu.memory_space<vmem>>, vector<16x16x128xf32>
    tpu.vector_store %arg7[%c1_38, %c1_39, %c0_40], %64 {strides = array<i32>} : memref<18x18x128xf32, #tpu.memory_space<vmem>>, vector<16x16x128xf32>,
    %c0_41 = arith.constant 0 : index
    %c0_42 = arith.constant 0 : index
    %c0_43 = arith.constant 0 : index
    %66 = vector.load %arg7[%c0_41, %c0_42, %c0_43] : memref<18x18x128xf32, #tpu.memory_space<vmem>>, vector<18x18x128xf32>
    %cst_44 = arith.constant 0.000000e+00 : f32
    %67 = vector.broadcast %cst_44 : f32 to vector<256x128xf32>
    %68 = vector.extract_strided_slice %66 {offsets = [0, 0, 0], sizes = [16, 16, 128], strides = [1, 1, 1]} : vector<18x18x128xf32> to vector<16x16x128xf32>
    %69 = vector.shape_cast %68 : vector<16x16x128xf32> to vector<256x128xf32>
    %c0_45 = arith.constant 0 : index
    %c0_46 = arith.constant 0 : index
    %c0_47 = arith.constant 0 : index
    %70 = vector.load %arg4[%c0_45, %c0_46, %c0_47] : memref<9x128x128xf32, #tpu.memory_space<vmem>>, vector<1x128x128xf32>
    %71 = vector.shape_cast %70 : vector<1x128x128xf32> to vector<128x128xf32>
    %cst_48 = arith.constant dense<0.000000e+00> : vector<256x128xf32>
    %72 = tpu.matmul %69, %71, %cst_48 {dimension_numbers = #tpu.dot_dimension_numbers<[1], [0], [0], [1], [0, 0, 1, 1], [], []>} : vector<256x128xf32>, vector<128x128xf32>, vector<256x128xf32> -> vector<256x128xf32>
    %73 = arith.addf %67, %72 : vector<256x128xf32>
    %74 = vector.extract_strided_slice %66 {offsets = [0, 1, 0], sizes = [16, 16, 128], strides = [1, 1, 1]} : vector<18x18x128xf32> to vector<16x16x128xf32>
    %75 = vector.shape_cast %74 : vector<16x16x128xf32> to vector<256x128xf32>
    %c1_49 = arith.constant 1 : index
    %c0_50 = arith.constant 0 : index
    %c0_51 = arith.constant 0 : index
    %76 = vector.load %arg4[%c1_49, %c0_50, %c0_51] : memref<9x128x128xf32, #tpu.memory_space<vmem>>, vector<1x128x128xf32>
    %77 = vector.shape_cast %76 : vector<1x128x128xf32> to vector<128x128xf32>
    %cst_52 = arith.constant dense<0.000000e+00> : vector<256x128xf32>
    %78 = tpu.matmul %75, %77, %cst_52 {dimension_numbers = #tpu.dot_dimension_numbers<[1], [0], [0], [1], [0, 0, 1, 1], [], []>} : vector<256x128xf32>, vector<128x128xf32>, vector<256x128xf32> -> vector<256x128xf32>
    %79 = arith.addf %73, %78 : vector<256x128xf32>
    %80 = vector.extract_strided_slice %66 {offsets = [0, 2, 0], sizes = [16, 16, 128], strides = [1, 1, 1]} : vector<18x18x128xf32> to vector<16x16x128xf32>
    %81 = vector.shape_cast %80 : vector<16x16x128xf32> to vector<256x128xf32>
    %c2_53 = arith.constant 2 : index
    %c0_54 = arith.constant 0 : index
    %c0_55 = arith.constant 0 : index
    %82 = vector.load %arg4[%c2_53, %c0_54, %c0_55] : memref<9x128x128xf32, #tpu.memory_space<vmem>>, vector<1x128x128xf32>
    %83 = vector.shape_cast %82 : vector<1x128x128xf32> to vector<128x128xf32>
    %cst_56 = arith.constant dense<0.000000e+00> : vector<256x128xf32>
    %84 = tpu.matmul %81, %83, %cst_56 {dimension_numbers = #tpu.dot_dimension_numbers<[1], [0], [0], [1], [0, 0, 1, 1], [], []>} : vector<256x128xf32>, vector<128x128xf32>, vector<256x128xf32> -> vector<256x128xf32>
    %85 = arith.addf %79, %84 : vector<256x128xf32>
    %86 = vector.extract_strided_slice %66 {offsets = [1, 0, 0], sizes = [16, 16, 128], strides = [1, 1, 1]} : vector<18x18x128xf32> to vector<16x16x128xf32>
    %87 = vector.shape_cast %86 : vector<16x16x128xf32> to vector<256x128xf32>
    %c3_57 = arith.constant 3 : index
    %c0_58 = arith.constant 0 : index
    %c0_59 = arith.constant 0 : index
    %88 = vector.load %arg4[%c3_57, %c0_58, %c0_59] : memref<9x128x128xf32, #tpu.memory_space<vmem>>, vector<1x128x128xf32>
    %89 = vector.shape_cast %88 : vector<1x128x128xf32> to vector<128x128xf32>
    %cst_60 = arith.constant dense<0.000000e+00> : vector<256x128xf32>
    %90 = tpu.matmul %87, %89, %cst_60 {dimension_numbers = #tpu.dot_dimension_numbers<[1], [0], [0], [1], [0, 0, 1, 1], [], []>} : vector<256x128xf32>, vector<128x128xf32>, vector<256x128xf32> -> vector<256x128xf32>
    %91 = arith.addf %85, %90 : vector<256x128xf32>
    %92 = vector.extract_strided_slice %66 {offsets = [1, 1, 0], sizes = [16, 16, 128], strides = [1, 1, 1]} : vector<18x18x128xf32> to vector<16x16x128xf32>
    %93 = vector.shape_cast %92 : vector<16x16x128xf32> to vector<256x128xf32>
    %c4_61 = arith.constant 4 : index
    %c0_62 = arith.constant 0 : index
    %c0_63 = arith.constant 0 : index
    %94 = vector.load %arg4[%c4_61, %c0_62, %c0_63] : memref<9x128x128xf32, #tpu.memory_space<vmem>>, vector<1x128x128xf32>
    %95 = vector.shape_cast %94 : vector<1x128x128xf32> to vector<128x128xf32>
    %cst_64 = arith.constant dense<0.000000e+00> : vector<256x128xf32>
    %96 = tpu.matmul %93, %95, %cst_64 {dimension_numbers = #tpu.dot_dimension_numbers<[1], [0], [0], [1], [0, 0, 1, 1], [], []>} : vector<256x128xf32>, vector<128x128xf32>, vector<256x128xf32> -> vector<256x128xf32>
    %97 = arith.addf %91, %96 : vector<256x128xf32>
    %98 = vector.extract_strided_slice %66 {offsets = [1, 2, 0], sizes = [16, 16, 128], strides = [1, 1, 1]} : vector<18x18x128xf32> to vector<16x16x128xf32>
    %99 = vector.shape_cast %98 : vector<16x16x128xf32> to vector<256x128xf32>
    %c5_65 = arith.constant 5 : index
    %c0_66 = arith.constant 0 : index
    %c0_67 = arith.constant 0 : index
    %100 = vector.load %arg4[%c5_65, %c0_66, %c0_67] : memref<9x128x128xf32, #tpu.memory_space<vmem>>, vector<1x128x128xf32>
    %101 = vector.shape_cast %100 : vector<1x128x128xf32> to vector<128x128xf32>
    %cst_68 = arith.constant dense<0.000000e+00> : vector<256x128xf32>
    %102 = tpu.matmul %99, %101, %cst_68 {dimension_numbers = #tpu.dot_dimension_numbers<[1], [0], [0], [1], [0, 0, 1, 1], [], []>} : vector<256x128xf32>, vector<128x128xf32>, vector<256x128xf32> -> vector<256x128xf32>
    %103 = arith.addf %97, %102 : vector<256x128xf32>
    %104 = vector.extract_strided_slice %66 {offsets = [2, 0, 0], sizes = [16, 16, 128], strides = [1, 1, 1]} : vector<18x18x128xf32> to vector<16x16x128xf32>
    %105 = vector.shape_cast %104 : vector<16x16x128xf32> to vector<256x128xf32>
    %c6_69 = arith.constant 6 : index
    %c0_70 = arith.constant 0 : index
    %c0_71 = arith.constant 0 : index
    %106 = vector.load %arg4[%c6_69, %c0_70, %c0_71] : memref<9x128x128xf32, #tpu.memory_space<vmem>>, vector<1x128x128xf32>
    %107 = vector.shape_cast %106 : vector<1x128x128xf32> to vector<128x128xf32>
    %cst_72 = arith.constant dense<0.000000e+00> : vector<256x128xf32>
    %108 = tpu.matmul %105, %107, %cst_72 {dimension_numbers = #tpu.dot_dimension_numbers<[1], [0], [0], [1], [0, 0, 1, 1], [], []>} : vector<256x128xf32>, vector<128x128xf32>, vector<256x128xf32> -> vector<256x128xf32>
    %109 = arith.addf %103, %108 : vector<256x128xf32>
    %110 = vector.extract_strided_slice %66 {offsets = [2, 1, 0], sizes = [16, 16, 128], strides = [1, 1, 1]} : vector<18x18x128xf32> to vector<16x16x128xf32>
    %111 = vector.shape_cast %110 : vector<16x16x128xf32> to vector<256x128xf32>
    %c7_73 = arith.constant 7 : index
    %c0_74 = arith.constant 0 : index
    %c0_75 = arith.constant 0 : index
    %112 = vector.load %arg4[%c7_73, %c0_74, %c0_75] : memref<9x128x128xf32, #tpu.memory_space<vmem>>, vector<1x128x128xf32>
    %113 = vector.shape_cast %112 : vector<1x128x128xf32> to vector<128x128xf32>
    %cst_76 = arith.constant dense<0.000000e+00> : vector<256x128xf32>
    %114 = tpu.matmul %111, %113, %cst_76 {dimension_numbers = #tpu.dot_dimension_numbers<[1], [0], [0], [1], [0, 0, 1, 1], [], []>} : vector<256x128xf32>, vector<128x128xf32>, vector<256x128xf32> -> vector<256x128xf32>
    %115 = arith.addf %109, %114 : vector<256x128xf32>
    %116 = vector.extract_strided_slice %66 {offsets = [2, 2, 0], sizes = [16, 16, 128], strides = [1, 1, 1]} : vector<18x18x128xf32> to vector<16x16x128xf32>
    %117 = vector.shape_cast %116 : vector<16x16x128xf32> to vector<256x128xf32>
    %c8_77 = arith.constant 8 : index
    %c0_78 = arith.constant 0 : index
    %c0_79 = arith.constant 0 : index
    %118 = vector.load %arg4[%c8_77, %c0_78, %c0_79] : memref<9x128x128xf32, #tpu.memory_space<vmem>>, vector<1x128x128xf32>
    %119 = vector.shape_cast %118 : vector<1x128x128xf32> to vector<128x128xf32>
    %cst_80 = arith.constant dense<0.000000e+00> : vector<256x128xf32>
    %120 = tpu.matmul %117, %119, %cst_80 {dimension_numbers = #tpu.dot_dimension_numbers<[1], [0], [0], [1], [0, 0, 1, 1], [], []>} : vector<256x128xf32>, vector<128x128xf32>, vector<256x128xf32> -> vector<256x128xf32>
    %121 = arith.addf %115, %120 : vector<256x128xf32>
    %c0_81 = arith.constant 0 : index
    %c0_82 = arith.constant 0 : index
    %122 = vector.load %arg5[%c0_81, %c0_82] : memref<1x128xf32, #tpu.memory_space<vmem>>, vector<1x128xf32>
    %123 = vector.broadcast %122 : vector<1x128xf32> to vector<256x128xf32>
    %124 = arith.addf %121, %123 : vector<256x128xf32>
    %125 = vector.extract_strided_slice %1 {offsets = [1, 1, 0], sizes = [16, 16, 128], strides = [1, 1, 1]} : vector<18x18x128xf32> to vector<16x16x128xf32>
    %126 = vector.shape_cast %125 : vector<16x16x128xf32> to vector<256x128xf32>
    %127 = arith.addf %124, %126 : vector<256x128xf32>
    %128 = vector.shape_cast %127 : vector<256x128xf32> to vector<16x16x128xf32>
    %c0_83 = arith.constant 0 : index
    %c0_84 = arith.constant 0 : index
    %c0_85 = arith.constant 0 : index
    %c0_86 = arith.constant 0 : index
    %129 = vector.load %arg6[%c0_83, %c0_84, %c0_85, %c0_86] : memref<1x16x16x128xf32, #tpu.memory_space<vmem>>, vector<1x16x16x128xf32>
    %130 = vector.shape_cast %129 : vector<1x16x16x128xf32> to vector<16x16x128xf32>
    %131 = vector.shape_cast %128 : vector<16x16x128xf32> to vector<1x16x16x128xf32>
    tpu.vector_store %arg6[%c0_83, %c0_84, %c0_85, %c0_86], %131 {strides = array<i32>} : memref<1x16x16x128xf32, #tpu.memory_space<vmem>>, vector<1x16x16x128xf32>,
    return
  }
  func.func @transform_0(%arg0: i32) -> (i32, i32, i32, i32) {
    %c0_i32 = arith.constant 0 : i32
    %c0_i32_0 = arith.constant 0 : i32
    %c0_i32_1 = arith.constant 0 : i32
    %c0_i32_2 = arith.constant 0 : i32
    return %arg0, %c0_i32, %c0_i32_0, %c0_i32_1 : i32, i32, i32, i32
  }
  func.func @transform_1(%arg0: i32) -> (i32, i32, i32) {
    %c0_i32 = arith.constant 0 : i32
    %c0_i32_0 = arith.constant 0 : i32
    %c0_i32_1 = arith.constant 0 : i32
    %c0_i32_2 = arith.constant 0 : i32
    return %c0_i32, %c0_i32_0, %c0_i32_1 : i32, i32, i32
  }
  func.func @transform_2(%arg0: i32) -> (i32, i32) {
    %c0_i32 = arith.constant 0 : i32
    %c0_i32_0 = arith.constant 0 : i32
    %c0_i32_1 = arith.constant 0 : i32
    return %c0_i32, %c0_i32_0 : i32, i32
  }
  func.func @transform_3(%arg0: i32) -> (i32, i32, i32) {
    %c0_i32 = arith.constant 0 : i32
    %c0_i32_0 = arith.constant 0 : i32
    %c0_i32_1 = arith.constant 0 : i32
    %c0_i32_2 = arith.constant 0 : i32
    return %c0_i32, %c0_i32_0, %c0_i32_1 : i32, i32, i32
  }
  func.func @transform_4(%arg0: i32) -> (i32, i32) {
    %c0_i32 = arith.constant 0 : i32
    %c0_i32_0 = arith.constant 0 : i32
    %c0_i32_1 = arith.constant 0 : i32
    return %c0_i32, %c0_i32_0 : i32, i32
  }
  func.func @transform_5(%arg0: i32) -> (i32, i32, i32, i32) {
    %c0_i32 = arith.constant 0 : i32
    %c0_i32_0 = arith.constant 0 : i32
    %c0_i32_1 = arith.constant 0 : i32
    %c0_i32_2 = arith.constant 0 : i32
    return %arg0, %c0_i32, %c0_i32_0, %c0_i32_1 : i32, i32, i32, i32
  }
}

</mosaic_0001>

<llo_original>
// kernel: tpu_custom_call.1
$region0: #{tpu_custom_call.1}
  #allocation0 [shape = 'u32[]', space=smem, size = 0x4, offset = 0x4, fixed_abs, tag = 'smem constant byte address 0x4 - core index']
  #allocation1 [shape = 'u32[144,128]{1,0:T(1,128)}', space=vmem, size = 0x12000, scoped, tag = 'internal scratch']
  #allocation2 [shape = 'f32[18,18,128]{2,1,0:T(8,128)}', space=vmem, size = 0x36000, scoped, tag = 'scratch operand']
  %s0 = inlined_call_operand.vmem [shape: f32[2,18,18,128], index: 0, kind: input, shape index: {}]
  %s1 = inlined_call_operand.vmem [shape: f32[9,128,128], index: 1, kind: input, shape index: {}]
  %s2 = inlined_call_operand.vmem [shape: f32[1,128], index: 2, kind: input, shape index: {}]
  %s3 = inlined_call_operand.hbm [shape: f32[9,128,128], index: 3, kind: input, shape index: {}]
  %s4 = inlined_call_operand.vmem [shape: f32[1,128], index: 4, kind: input, shape index: {}]
  %s5 = inlined_call_operand.hbm [shape: f32[2,16,16,128], index: 5, kind: output, shape index: {}]
  %s6 = sld [smem:[#allocation0]]
  $region57: #{tpu_custom_call.1} parent=0
    _
  %s8 = ssub.s32 1, %s6
  %s9 = scalar_select 0, %s8, %s6
  $region1: #{tpu_custom_call.1} parent=0
    #allocation3 [shape = 'u8[589824]{0}', space=vmem, size = 0x90000, scoped, tag = 'input window, operand 3, single buffered']
    #allocation4 [shape = 's32[2]{0}', space=sflag, size = 0x8, scoped, tag = 'scoped memory for tpu_custom_call.1']
    #allocation5 [shape = 's32[2]{0}', space=sflag, size = 0x8, scoped, tag = 'scoped memory for tpu_custom_call.1']
    #allocation6 [shape = 'u8[262144]{0}', space=vmem, size = 0x40000, scoped, tag = 'output window, operand 0']
    %10 = vsyncpa [#allocation4], 0
    %11 = vsyncpa [#allocation5], 0
    %s12 = scalar_lea.sflag [#allocation5], 1
    %13 = vsyncpa %s12, 0
    loop: start=0, step=1, limit=4
    $region2: #{tpu_custom_call.1} parent=1 // loop_pre_header
      _
    $region3: #{tpu_custom_call.1} parent=1 // loop_header
      %s15 = sphi 0, %s19
      %p16 = scmp.ge.s32.totalorder %s15, 4
      %s25 = sphi 0, %s27
      %s28 = sphi 0, %s25
      %s29 = sphi 0, %s28
      %s45 = sphi 0, %s29
      %s49 = sphi 0, %s49
      %s51 = sphi 0, %s49
      %s52 = sphi 0, %s51
      %s66 = sphi 0, %s52
      %s70 = sphi 0, %s70
      %s72 = sphi 0, %s70
      %s73 = sphi 0, %s72
      %s87 = sphi 0, %s73
      %s91 = sphi 0, %s91
      %s93 = sphi 0, %s91
      %s94 = sphi 0, %s93
      %s108 = sphi 0, %s94
      %s112 = sphi 0, %s112
      %s114 = sphi 0, %s112
      %s115 = sphi 0, %s114
      %s129 = sphi 0, %s115
      %s135 = sphi 0, %s137
      %s138 = sphi 0, %s135
      %s139 = sphi 0, %s138
      %s155 = sphi 0, %s139
    $region4: #{tpu_custom_call.1} parent=1 // loop_header_branch
      %18 = sbr.rel (%p16) target = $region8
    $region5: #{tpu_custom_call.1} parent=1 // loop_body
      %s20 = ssub.s32 %s15, 1
      %s21 = ssub.s32 %s15, 2
      %s22 = sadd.s32 %s15, 1
      %s23 = ssub.s32 %s15, %s22
      %p24 = scmp.eq.s32.totalorder %s23, 0
      %s26 = sadd.s32 %s25, 1
      %s27 = scalar_select %p24, %s25, %s26
      %p30 = pneg %p24
      %p31 = scmp.eq.s32.totalorder %s15, 1
      %p32 = por %p30, %p31
      %p33 = scmp.ne.s32.totalorder %s25, %s28
      %p34 = scmp.eq.s32.totalorder %s15, 0
      %p35 = por %p33, %p34
      %p36 = scmp.ne.s32.totalorder %s25, %s28
      %p37 = scmp.eq.s32.totalorder %s20, 1
      %p38 = por %p36, %p37
      %p39 = scmp.ne.s32.totalorder %s28, %s29
      %p40 = scmp.eq.s32.totalorder %s20, 0
      %p41 = por %p39, %p40
      %p42 = scmp.ne.s32.totalorder %s28, %s29
      %p43 = scmp.eq.s32.totalorder %s21, 1
      %p44 = por %p42, %p43
      %p46 = scmp.ne.s32.totalorder %s29, %s45
      %p47 = scmp.eq.s32.totalorder %s21, 0
      %p48 = por %p46, %p47
      %s50 = sadd.s32 %s49, 1
      %p53 = scmp.eq.s32.totalorder %s15, 1
      %p54 = scmp.ne.s32.totalorder %s49, %s51
      %p55 = scmp.eq.s32.totalorder %s15, 0
      %p56 = por %p54, %p55
      %p57 = scmp.ne.s32.totalorder %s49, %s51
      %p58 = scmp.eq.s32.totalorder %s20, 1
      %p59 = por %p57, %p58
      %p60 = scmp.ne.s32.totalorder %s51, %s52
      %p61 = scmp.eq.s32.totalorder %s20, 0
      %p62 = por %p60, %p61
      %p63 = scmp.ne.s32.totalorder %s51, %s52
      %p64 = scmp.eq.s32.totalorder %s21, 1
      %p65 = por %p63, %p64
      %p67 = scmp.ne.s32.totalorder %s52, %s66
      %p68 = scmp.eq.s32.totalorder %s21, 0
      %p69 = por %p67, %p68
      %s71 = sadd.s32 %s70, 1
      %p74 = scmp.eq.s32.totalorder %s15, 1
      %p75 = scmp.ne.s32.totalorder %s70, %s72
      %p76 = scmp.eq.s32.totalorder %s15, 0
      %p77 = por %p75, %p76
      %p78 = scmp.ne.s32.totalorder %s70, %s72
      %p79 = scmp.eq.s32.totalorder %s20, 1
      %p80 = por %p78, %p79
      %p81 = scmp.ne.s32.totalorder %s72, %s73
      %p82 = scmp.eq.s32.totalorder %s20, 0
      %p83 = por %p81, %p82
      %p84 = scmp.ne.s32.totalorder %s72, %s73
      %p85 = scmp.eq.s32.totalorder %s21, 1
      %p86 = por %p84, %p85
      %p88 = scmp.ne.s32.totalorder %s73, %s87
      %p89 = scmp.eq.s32.totalorder %s21, 0
      %p90 = por %p88, %p89
      %s92 = sadd.s32 %s91, 1
      %p95 = scmp.eq.s32.totalorder %s15, 1
      %p96 = scmp.ne.s32.totalorder %s91, %s93
      %p97 = scmp.eq.s32.totalorder %s15, 0
      %p98 = por %p96, %p97
      %p99 = scmp.ne.s32.totalorder %s91, %s93
      %p100 = scmp.eq.s32.totalorder %s20, 1
      %p101 = por %p99, %p100
      %p102 = scmp.ne.s32.totalorder %s93, %s94
      %p103 = scmp.eq.s32.totalorder %s20, 0
      %p104 = por %p102, %p103
      %p105 = scmp.ne.s32.totalorder %s93, %s94
      %p106 = scmp.eq.s32.totalorder %s21, 1
      %p107 = por %p105, %p106
      %p109 = scmp.ne.s32.totalorder %s94, %s108
      %p110 = scmp.eq.s32.totalorder %s21, 0
      %p111 = por %p109, %p110
      %s113 = sadd.s32 %s112, 1
      %p116 = scmp.eq.s32.totalorder %s15, 1
      %p117 = scmp.ne.s32.totalorder %s112, %s114
      %p118 = scmp.eq.s32.totalorder %s15, 0
      %p119 = por %p117, %p118
      %p120 = scmp.ne.s32.totalorder %s112, %s114
      %p121 = scmp.eq.s32.totalorder %s20, 1
      %p122 = por %p120, %p121
      %p123 = scmp.ne.s32.totalorder %s114, %s115
      %p124 = scmp.eq.s32.totalorder %s20, 0
      %p125 = por %p123, %p124
      %p126 = scmp.ne.s32.totalorder %s114, %s115
      %p127 = scmp.eq.s32.totalorder %s21, 1
      %p128 = por %p126, %p127
      %p130 = scmp.ne.s32.totalorder %s115, %s129
      %p131 = scmp.eq.s32.totalorder %s21, 0
      %p132 = por %p130, %p131
      %s133 = ssub.s32 %s15, %s22
      %p134 = scmp.eq.s32.totalorder %s133, 0
      %s136 = sadd.s32 %s135, 1
      %s137 = scalar_select %p134, %s135, %s136
      %p140 = pneg %p134
      %p141 = scmp.eq.s32.totalorder %s15, 1
      %p142 = por %p140, %p141
      %p143 = scmp.ne.s32.totalorder %s135, %s138
      %p144 = scmp.eq.s32.totalorder %s15, 0
      %p145 = por %p143, %p144
      %p146 = scmp.ne.s32.totalorder %s135, %s138
      %p147 = scmp.eq.s32.totalorder %s20, 1
      %p148 = por %p146, %p147
      %p149 = scmp.ne.s32.totalorder %s138, %s139
      %p150 = scmp.eq.s32.totalorder %s20, 0
      %p151 = por %p149, %p150
      %p152 = scmp.ne.s32.totalorder %s138, %s139
      %p153 = scmp.eq.s32.totalorder %s21, 1
      %p154 = por %p152, %p153
      %p156 = scmp.ne.s32.totalorder %s139, %s155
      %p157 = scmp.eq.s32.totalorder %s21, 0
      %p158 = por %p156, %p157
      %p159 = scmp.le.s32.totalorder 1, %s15
      %p160 = scmp.lt.s32.totalorder %s15, 3
      %p161 = pnand %p159, %p160
      %p162 = pneg %p161
      // Predicated region
      $region9: #{tpu_custom_call.1} parent=5 // pred_check
        _
      $region10: #{tpu_custom_call.1} parent=5 // pred_check_branch
        %164 = sbr.rel (%p161) target = $region12
      $region11: #{tpu_custom_call.1} parent=5 // pred_region
        %s165 = ssub.s32 %s15, 1
        // Predicated region
        $region13: #{tpu_custom_call.1} parent=11 // pred_check
          %p166 = pneg %p62
        $region14: #{tpu_custom_call.1} parent=11 // pred_check_branch
          %168 = sbr.rel (%p166) target = $region16
        $region15: #{tpu_custom_call.1} parent=11 // pred_region
          _
        $region16: #{tpu_custom_call.1} parent=11 // pred_fallthru
          _
        // Predicated region
        $region17: #{tpu_custom_call.1} parent=11 // pred_check
          %p169 = pneg %p83
        $region18: #{tpu_custom_call.1} parent=11 // pred_check_branch
          %171 = sbr.rel (%p169) target = $region20
        $region19: #{tpu_custom_call.1} parent=11 // pred_region
          _
        $region20: #{tpu_custom_call.1} parent=11 // pred_fallthru
          _
        // Predicated region
        $region21: #{tpu_custom_call.1} parent=11 // pred_check
          %p172 = pneg %p104
        $region22: #{tpu_custom_call.1} parent=11 // pred_check_branch
          %174 = sbr.rel (%p172) target = $region24
        $region23: #{tpu_custom_call.1} parent=11 // pred_region
          %s176 = ssub.s32 18432, 18432
          %177 = vsyncadd [#allocation4], %s176
          %s178 = sshll.u32 [#allocation3], 4
          %s179 = int_to_ptr.vmem [resolvable:$true] %s178
          %184 = dma.hbm_to_vmem [thread:$0]  %s3, 18432, %s179, [#allocation4], 128, 128, 8
        $region24: #{tpu_custom_call.1} parent=11 // pred_fallthru
          _
        // Predicated region
        $region25: #{tpu_custom_call.1} parent=11 // pred_check
          %p185 = pneg %p125
        $region26: #{tpu_custom_call.1} parent=11 // pred_check_branch
          %187 = sbr.rel (%p185) target = $region28
        $region27: #{tpu_custom_call.1} parent=11 // pred_region
          _
        $region28: #{tpu_custom_call.1} parent=11 // pred_fallthru
          _
      $region12: #{tpu_custom_call.1} parent=5 // pred_fallthru
        _
      %p188 = scmp.lt.s32.totalorder %s15, 2
      // Predicated region
      $region29: #{tpu_custom_call.1} parent=5 // pred_check
        %p189 = pneg %p188
      $region30: #{tpu_custom_call.1} parent=5 // pred_check_branch
        %191 = sbr.rel (%p189) target = $region32
      $region31: #{tpu_custom_call.1} parent=5 // pred_region
        // Predicated region
        $region33: #{tpu_custom_call.1} parent=31 // pred_check
          %p192 = pneg %p35
        $region34: #{tpu_custom_call.1} parent=31 // pred_check_branch
          %194 = sbr.rel (%p192) target = $region36
        $region35: #{tpu_custom_call.1} parent=31 // pred_region
          %p195 = scmp.lt.s32.totalorder %s15, 1
          %s196 = scalar_select %p195, %s15, 1
          %s197 = smul.addr %s196, 54
          %s198 = smul.addr %s197, 8
          %s199 = scalar_lea.vmem %s0, %s198
        $region36: #{tpu_custom_call.1} parent=31 // pred_fallthru
          _
      $region32: #{tpu_custom_call.1} parent=5 // pred_fallthru
        _
      %p200 = scmp.le.s32.totalorder 1, %s15
      %p201 = scmp.lt.s32.totalorder %s15, 3
      %p202 = pnand %p200, %p201
      %p203 = pneg %p202
      // Predicated region
      $region37: #{tpu_custom_call.1} parent=5 // pred_check
        _
      $region38: #{tpu_custom_call.1} parent=5 // pred_check_branch
        %205 = sbr.rel (%p202) target = $region40
      $region39: #{tpu_custom_call.1} parent=5 // pred_region
        %s206 = ssub.s32 %s15, 1
        // Predicated region
        $region41: #{tpu_custom_call.1} parent=39 // pred_check
          %p207 = pneg %p104
        $region42: #{tpu_custom_call.1} parent=39 // pred_check_branch
          %209 = sbr.rel (%p207) target = $region44
        $region43: #{tpu_custom_call.1} parent=39 // pred_region
          %210 = dma.done [#allocation4], 18432
        $region44: #{tpu_custom_call.1} parent=39 // pred_fallthru
          _
        %p211 = scmp.lt.s32.totalorder %s20, 1
        %s212 = scalar_select %p211, %s20, 1
        %s213 = smul.addr %s212, 54
        %s214 = smul.addr %s213, 8
        %s215 = scalar_lea.vmem %s0, %s214
        %p216 = pneg %p41
        %p217 = pneg %p38
        %p218 = pneg %p62
        %p219 = pneg %p59
        %p220 = pneg %p83
        %p221 = pneg %p80
        %p222 = pneg %p104
        %p223 = pneg %p101
        %p224 = pneg %p125
        %p225 = pneg %p122
        %p226 = pneg %p151
        %p227 = pneg %p148
        %s228 = sand.u32 %s138, 1
        %s229 = scalar_lea.sflag [#allocation5], %s228
        %s230 = sand.u32 %s138, 1
        %s231 = smul.addr %s230, 256
        %s232 = scalar_lea.vmem [#allocation6], %s231
        %p233 = scmp.lt.s32.totalorder %s20, 1
        %s234 = scalar_select %p233, %s20, 1
        %s235 = smul.addr %s234, 54
        %s236 = smul.addr %s235, 8
        %s237 = scalar_lea.vmem %s0, %s236
        %v238 = vld [vmem:[%s237] sm:$0xff]
        %v239 = vld [vmem:[%s237 + $0x8] sm:$0xff]
        %v240 = vld [vmem:[%s237 + $0x10] sm:$0x3]
        %v241 = vld [vmem:[%s237 + $0x18] sm:$0xff]
        %v242 = vld [vmem:[%s237 + $0x20] sm:$0xff]
        %v243 = vld [vmem:[%s237 + $0x28] sm:$0x3]
        %v244 = vld [vmem:[%s237 + $0x30] sm:$0xff]
        %v245 = vld [vmem:[%s237 + $0x38] sm:$0xff]
        %v246 = vld [vmem:[%s237 + $0x40] sm:$0x3]
        %v247 = vld [vmem:[%s237 + $0x48] sm:$0xff]
        %v248 = vld [vmem:[%s237 + $0x50] sm:$0xff]
        %v249 = vld [vmem:[%s237 + $0x58] sm:$0x3]
        %v250 = vld [vmem:[%s237 + $0x60] sm:$0xff]
        %v251 = vld [vmem:[%s237 + $0x68] sm:$0xff]
        %v252 = vld [vmem:[%s237 + $0x70] sm:$0x3]
        %v253 = vld [vmem:[%s237 + $0x78] sm:$0xff]
        %v254 = vld [vmem:[%s237 + $0x80] sm:$0xff]
        %v255 = vld [vmem:[%s237 + $0x88] sm:$0x3]
        %v256 = vld [vmem:[%s237 + $0x90] sm:$0xff]
        %v257 = vld [vmem:[%s237 + $0x98] sm:$0xff]
        %v258 = vld [vmem:[%s237 + $0xa0] sm:$0x3]
        %v259 = vld [vmem:[%s237 + $0xa8] sm:$0xff]
        %v260 = vld [vmem:[%s237 + $0xb0] sm:$0xff]
        %v261 = vld [vmem:[%s237 + $0xb8] sm:$0x3]
        %v262 = vld [vmem:[%s237 + $0xc0] sm:$0xff]
        %v263 = vld [vmem:[%s237 + $0xc8] sm:$0xff]
        %v264 = vld [vmem:[%s237 + $0xd0] sm:$0x3]
        %v265 = vld [vmem:[%s237 + $0xd8] sm:$0xff]
        %v266 = vld [vmem:[%s237 + $0xe0] sm:$0xff]
        %v267 = vld [vmem:[%s237 + $0xe8] sm:$0x3]
        %v268 = vld [vmem:[%s237 + $0xf0] sm:$0xff]
        %v269 = vld [vmem:[%s237 + $0xf8] sm:$0xff]
        %v270 = vld [vmem:[%s237 + $0x100] sm:$0x3]
        %v271 = vld [vmem:[%s237 + $0x108] sm:$0xff]
        %v272 = vld [vmem:[%s237 + $0x110] sm:$0xff]
        %v273 = vld [vmem:[%s237 + $0x118] sm:$0x3]
        %v274 = vld [vmem:[%s237 + $0x120] sm:$0xff]
        %v275 = vld [vmem:[%s237 + $0x128] sm:$0xff]
        %v276 = vld [vmem:[%s237 + $0x130] sm:$0x3]
        %v277 = vld [vmem:[%s237 + $0x138] sm:$0xff]
        %v278 = vld [vmem:[%s237 + $0x140] sm:$0xff]
        %v279 = vld [vmem:[%s237 + $0x148] sm:$0x3]
        %v280 = vld [vmem:[%s237 + $0x150] sm:$0xff]
        %v281 = vld [vmem:[%s237 + $0x158] sm:$0xff]
        %v282 = vld [vmem:[%s237 + $0x160] sm:$0x3]
        %v283 = vld [vmem:[%s237 + $0x168] sm:$0xff]
        %v284 = vld [vmem:[%s237 + $0x170] sm:$0xff]
        %v285 = vld [vmem:[%s237 + $0x178] sm:$0x3]
        %v286 = vld [vmem:[%s237 + $0x180] sm:$0xff]
        %v287 = vld [vmem:[%s237 + $0x188] sm:$0xff]
        %v288 = vld [vmem:[%s237 + $0x190] sm:$0x3]
        %v289 = vld [vmem:[%s237 + $0x198] sm:$0xff]
        %v290 = vld [vmem:[%s237 + $0x1a0] sm:$0xff]
        %v291 = vld [vmem:[%s237 + $0x1a8] sm:$0x3]
        %v292 = vld [vmem:[%s1] sm:$0xff]
        %v293 = vld [vmem:[%s1 + $0x8] sm:$0xff]
        %v294 = vld [vmem:[%s1 + $0x10] sm:$0xff]
        %v295 = vld [vmem:[%s1 + $0x18] sm:$0xff]
        %v296 = vld [vmem:[%s1 + $0x20] sm:$0xff]
        %v297 = vld [vmem:[%s1 + $0x28] sm:$0xff]
        %v298 = vld [vmem:[%s1 + $0x30] sm:$0xff]
        %v299 = vld [vmem:[%s1 + $0x38] sm:$0xff]
        %v300 = vld [vmem:[%s1 + $0x40] sm:$0xff]
        %v301 = vld [vmem:[%s1 + $0x48] sm:$0xff]
        %v302 = vld [vmem:[%s1 + $0x50] sm:$0xff]
        %v303 = vld [vmem:[%s1 + $0x58] sm:$0xff]
        %v304 = vld [vmem:[%s1 + $0x60] sm:$0xff]
        %v305 = vld [vmem:[%s1 + $0x68] sm:$0xff]
        %v306 = vld [vmem:[%s1 + $0x70] sm:$0xff]
        %v307 = vld [vmem:[%s1 + $0x78] sm:$0xff]
        %vm356 = vcmask 1046528
        %v357 = vrot.slane %v238, 1
        %v358 = vrot.slane %v239, 1
        %v359 = vsel %vm356, %v357, %v358
        %v360 = vrot.slane %v240, 1
        %v361 = vsel %vm356, %v358, %v360
        %v362 = vrot.slane %v241, 1
        %v363 = vrot.slane %v242, 1
        %v364 = vsel %vm356, %v362, %v363
        %v365 = vrot.slane %v243, 1
        %v366 = vsel %vm356, %v363, %v365
        %v367 = vrot.slane %v244, 1
        %v368 = vrot.slane %v245, 1
        %v369 = vsel %vm356, %v367, %v368
        %v370 = vrot.slane %v246, 1
        %v371 = vsel %vm356, %v368, %v370
        %v372 = vrot.slane %v247, 1
        %v373 = vrot.slane %v248, 1
        %v374 = vsel %vm356, %v372, %v373
        %v375 = vrot.slane %v249, 1
        %v376 = vsel %vm356, %v373, %v375
        %v377 = vrot.slane %v250, 1
        %v378 = vrot.slane %v251, 1
        %v379 = vsel %vm356, %v377, %v378
        %v380 = vrot.slane %v252, 1
        %v381 = vsel %vm356, %v378, %v380
        %v382 = vrot.slane %v253, 1
        %v383 = vrot.slane %v254, 1
        %v384 = vsel %vm356, %v382, %v383
        %v385 = vrot.slane %v255, 1
        %v386 = vsel %vm356, %v383, %v385
        %v387 = vrot.slane %v256, 1
        %v388 = vrot.slane %v257, 1
        %v389 = vsel %vm356, %v387, %v388
        %v390 = vrot.slane %v258, 1
        %v391 = vsel %vm356, %v388, %v390
        %v392 = vrot.slane %v259, 1
        %v393 = vrot.slane %v260, 1
        %v394 = vsel %vm356, %v392, %v393
        %v395 = vrot.slane %v261, 1
        %v396 = vsel %vm356, %v393, %v395
        %v397 = vrot.slane %v262, 1
        %v398 = vrot.slane %v263, 1
        %v399 = vsel %vm356, %v397, %v398
        %v400 = vrot.slane %v264, 1
        %v401 = vsel %vm356, %v398, %v400
        %v402 = vrot.slane %v265, 1
        %v403 = vrot.slane %v266, 1
        %v404 = vsel %vm356, %v402, %v403
        %v405 = vrot.slane %v267, 1
        %v406 = vsel %vm356, %v403, %v405
        %v407 = vrot.slane %v268, 1
        %v408 = vrot.slane %v269, 1
        %v409 = vsel %vm356, %v407, %v408
        %v410 = vrot.slane %v270, 1
        %v411 = vsel %vm356, %v408, %v410
        %v412 = vrot.slane %v271, 1
        %v413 = vrot.slane %v272, 1
        %v414 = vsel %vm356, %v412, %v413
        %v415 = vrot.slane %v273, 1
        %v416 = vsel %vm356, %v413, %v415
        %v417 = vrot.slane %v274, 1
        %v418 = vrot.slane %v275, 1
        %v419 = vsel %vm356, %v417, %v418
        %v420 = vrot.slane %v276, 1
        %v421 = vsel %vm356, %v418, %v420
        %v422 = vrot.slane %v277, 1
        %v423 = vrot.slane %v278, 1
        %v424 = vsel %vm356, %v422, %v423
        %v425 = vrot.slane %v279, 1
        %v426 = vsel %vm356, %v423, %v425
        %v427 = vrot.slane %v280, 1
        %v428 = vrot.slane %v281, 1
        %v429 = vsel %vm356, %v427, %v428
        %v430 = vrot.slane %v282, 1
        %v431 = vsel %vm356, %v428, %v430
        %v432 = vrot.slane %v283, 1
        %v433 = vrot.slane %v284, 1
        %v434 = vsel %vm356, %v432, %v433
        %v435 = vrot.slane %v285, 1
        %v436 = vsel %vm356, %v433, %v435
        %s469 = scalar_lea.vmem %s1, 128
        %v470 = vld [vmem:[%s469] sm:$0xff]
        %v471 = vld [vmem:[%s469 + $0x8] sm:$0xff]
        %v472 = vld [vmem:[%s469 + $0x10] sm:$0xff]
        %v473 = vld [vmem:[%s469 + $0x18] sm:$0xff]
        %v474 = vld [vmem:[%s469 + $0x20] sm:$0xff]
        %v475 = vld [vmem:[%s469 + $0x28] sm:$0xff]
        %v476 = vld [vmem:[%s469 + $0x30] sm:$0xff]
        %v477 = vld [vmem:[%s469 + $0x38] sm:$0xff]
        %v478 = vld [vmem:[%s469 + $0x40] sm:$0xff]
        %v479 = vld [vmem:[%s469 + $0x48] sm:$0xff]
        %v480 = vld [vmem:[%s469 + $0x50] sm:$0xff]
        %v481 = vld [vmem:[%s469 + $0x58] sm:$0xff]
        %v482 = vld [vmem:[%s469 + $0x60] sm:$0xff]
        %v483 = vld [vmem:[%s469 + $0x68] sm:$0xff]
        %v484 = vld [vmem:[%s469 + $0x70] sm:$0xff]
        %v485 = vld [vmem:[%s469 + $0x78] sm:$0xff]
        %486 = vmatprep.subr.mxu0 0.0
        %487 = vmatpush1.msra.mxu0 %v470
        %488 = vmatprep.subr.mxu0 0.0
        %489 = vmatpush1.msra.mxu0 %v471
        %490 = vmatprep.subr.mxu0 0.0
        %491 = vmatpush1.msra.mxu0 %v472
        %492 = vmatprep.subr.mxu0 0.0
        %493 = vmatpush1.msra.mxu0 %v473
        %494 = vmatprep.subr.mxu0 0.0
        %495 = vmatpush1.msra.mxu0 %v474
        %496 = vmatprep.subr.mxu0 0.0
        %497 = vmatpush1.msra.mxu0 %v475
        %498 = vmatprep.subr.mxu0 0.0
        %499 = vmatpush1.msra.mxu0 %v476
        %500 = vmatprep.subr.mxu0 0.0
        %501 = vmatpush1.msra.mxu0 %v477
        %502 = vmatprep.subr.mxu0 0.0
        %503 = vmatpush1.msra.mxu0 %v478
        %504 = vmatprep.subr.mxu0 0.0
        %505 = vmatpush1.msra.mxu0 %v479
        %506 = vmatprep.subr.mxu0 0.0
        %507 = vmatpush1.msra.mxu0 %v480
        %508 = vmatprep.subr.mxu0 0.0
        %509 = vmatpush1.msra.mxu0 %v481
        %510 = vmatprep.subr.mxu0 0.0
        %511 = vmatpush1.msra.mxu0 %v482
        %512 = vmatprep.subr.mxu0 0.0
        %513 = vmatpush1.msra.mxu0 %v483
        %514 = vmatprep.subr.mxu0 0.0
        %515 = vmatpush1.msra.mxu0 %v484
        %516 = vmatprep.subr.mxu0 0.0
        %517 = vmatpush1.msra.mxu0 %v485
        %518 = vmatprep.subr.mxu0 0.0
        %519 = vmatpush1.msra.mxu0 0.0
        %520 = vmatprep.subr.mxu0 0.0
        %521 = vmatpush1.msra.mxu0 0.0
        %522 = vmatprep.subr.mxu0 0.0
        %523 = vmatpush1.msra.mxu0 0.0
        %524 = vmatprep.subr.mxu0 0.0
        %525 = vmatpush1.msra.mxu0 0.0
        %526 = vmatprep.subr.mxu0 0.0
        %527 = vmatpush1.msra.mxu0 0.0
        %528 = vmatprep.subr.mxu0 0.0
        %529 = vmatpush1.msra.mxu0 0.0
        %530 = vmatprep.subr.mxu0 0.0
        %531 = vmatpush1.msra.mxu0 0.0
        %532 = vmatprep.subr.mxu0 0.0
        %533 = vmatpush1.msra.mxu0 0.0
        %534 = vmatprep.subr.mxu0 0.0
        %535 = vmatpush1.msra.mxu0 0.0
        %536 = vmatprep.subr.mxu0 0.0
        %537 = vmatpush1.msra.mxu0 0.0
        %538 = vmatprep.subr.mxu0 0.0
        %539 = vmatpush1.msra.mxu0 0.0
        %540 = vmatprep.subr.mxu0 0.0
        %541 = vmatpush1.msra.mxu0 0.0
        %542 = vmatprep.subr.mxu0 0.0
        %543 = vmatpush1.msra.mxu0 0.0
        %544 = vmatprep.subr.mxu0 0.0
        %545 = vmatpush1.msra.mxu0 0.0
        %546 = vmatprep.subr.mxu0 0.0
        %547 = vmatpush1.msra.mxu0 0.0
        %548 = vmatprep.subr.mxu0 0.0
        %549 = vmatpush1.msra.mxu0 0.0
        %550 = vmatprep.mubr.f32.mxu0 0.0
        %551 = vmatmul.mubr.f32.gmra.mrb[0].mxu0 %v359
        %v552 = vpop.f32.mrb[0].mxu0
        %v553 = vadd.f32 0.0, %v552
        %v554 = vpop.f32.mrb[0].mxu0
        %555 = vmatprep.mubr.f32.mxu0 0.0
        %556 = vmatmul.mubr.f32.gmra.mrb[0].mxu0 %v361
        %v557 = vpop.f32.mrb[0].mxu0
        %v558 = vadd.f32 0.0, %v557
        %v559 = vpop.f32.mrb[0].mxu0
        %560 = vmatprep.mubr.f32.mxu0 0.0
        %561 = vmatmul.mubr.f32.gmra.mrb[0].mxu0 %v364
        %v562 = vpop.f32.mrb[0].mxu0
        %v563 = vadd.f32 0.0, %v562
        %v564 = vpop.f32.mrb[0].mxu0
        %565 = vmatprep.mubr.f32.mxu0 0.0
        %566 = vmatmul.mubr.f32.gmra.mrb[0].mxu0 %v366
        %v567 = vpop.f32.mrb[0].mxu0
        %v568 = vadd.f32 0.0, %v567
        %v569 = vpop.f32.mrb[0].mxu0
        %570 = vmatprep.mubr.f32.mxu0 0.0
        %571 = vmatmul.mubr.f32.gmra.mrb[0].mxu0 %v369
        %v572 = vpop.f32.mrb[0].mxu0
        %v573 = vadd.f32 0.0, %v572
        %v574 = vpop.f32.mrb[0].mxu0
        %575 = vmatprep.mubr.f32.mxu0 0.0
        %576 = vmatmul.mubr.f32.gmra.mrb[0].mxu0 %v371
        %v577 = vpop.f32.mrb[0].mxu0
        %v578 = vadd.f32 0.0, %v577
        %v579 = vpop.f32.mrb[0].mxu0
        %580 = vmatprep.mubr.f32.mxu0 0.0
        %581 = vmatmul.mubr.f32.gmra.mrb[0].mxu0 %v374
        %v582 = vpop.f32.mrb[0].mxu0
        %v583 = vadd.f32 0.0, %v582
        %v584 = vpop.f32.mrb[0].mxu0
        %585 = vmatprep.mubr.f32.mxu0 0.0
        %586 = vmatmul.mubr.f32.gmra.mrb[0].mxu0 %v376
        %v587 = vpop.f32.mrb[0].mxu0
        %v588 = vadd.f32 0.0, %v587
        %v589 = vpop.f32.mrb[0].mxu0
        %590 = vmatprep.mubr.f32.mxu0 0.0
        %591 = vmatmul.mubr.f32.gmra.mrb[0].mxu0 %v379
        %v592 = vpop.f32.mrb[0].mxu0
        %v593 = vadd.f32 0.0, %v592
        %v594 = vpop.f32.mrb[0].mxu0
        %595 = vmatprep.mubr.f32.mxu0 0.0
        %596 = vmatmul.mubr.f32.gmra.mrb[0].mxu0 %v381
        %v597 = vpop.f32.mrb[0].mxu0
        %v598 = vadd.f32 0.0, %v597
        %v599 = vpop.f32.mrb[0].mxu0
        %600 = vmatprep.mubr.f32.mxu0 0.0
        %601 = vmatmul.mubr.f32.gmra.mrb[0].mxu0 %v384
        %v602 = vpop.f32.mrb[0].mxu0
        %v603 = vadd.f32 0.0, %v602
        %v604 = vpop.f32.mrb[0].mxu0
        %605 = vmatprep.mubr.f32.mxu0 0.0
        %606 = vmatmul.mubr.f32.gmra.mrb[0].mxu0 %v386
        %v607 = vpop.f32.mrb[0].mxu0
        %v608 = vadd.f32 0.0, %v607
        %v609 = vpop.f32.mrb[0].mxu0
        %610 = vmatprep.mubr.f32.mxu0 0.0
        %611 = vmatmul.mubr.f32.gmra.mrb[0].mxu0 %v389
        %v612 = vpop.f32.mrb[0].mxu0
        %v613 = vadd.f32 0.0, %v612
        %v614 = vpop.f32.mrb[0].mxu0
        %615 = vmatprep.mubr.f32.mxu0 0.0
        %616 = vmatmul.mubr.f32.gmra.mrb[0].mxu0 %v391
        %v617 = vpop.f32.mrb[0].mxu0
        %v618 = vadd.f32 0.0, %v617
        %v619 = vpop.f32.mrb[0].mxu0
        %620 = vmatprep.mubr.f32.mxu0 0.0
        %621 = vmatmul.mubr.f32.gmra.mrb[0].mxu0 %v394
        %v622 = vpop.f32.mrb[0].mxu0
        %v623 = vadd.f32 0.0, %v622
        %v624 = vpop.f32.mrb[0].mxu0
        %625 = vmatprep.mubr.f32.mxu0 0.0
        %626 = vmatmul.mubr.f32.gmra.mrb[0].mxu0 %v396
        %v627 = vpop.f32.mrb[0].mxu0
        %v628 = vadd.f32 0.0, %v627
        %v629 = vpop.f32.mrb[0].mxu0
        %630 = vmatprep.mubr.f32.mxu0 0.0
        %631 = vmatmul.mubr.f32.gmra.mrb[0].mxu0 %v399
        %v632 = vpop.f32.mrb[0].mxu0
        %v633 = vadd.f32 0.0, %v632
        %v634 = vpop.f32.mrb[0].mxu0
        %635 = vmatprep.mubr.f32.mxu0 0.0
        %636 = vmatmul.mubr.f32.gmra.mrb[0].mxu0 %v401
        %v637 = vpop.f32.mrb[0].mxu0
        %v638 = vadd.f32 0.0, %v637
        %v639 = vpop.f32.mrb[0].mxu0
        %640 = vmatprep.mubr.f32.mxu0 0.0
        %641 = vmatmul.mubr.f32.gmra.mrb[0].mxu0 %v404
        %v642 = vpop.f32.mrb[0].mxu0
        %v643 = vadd.f32 0.0, %v642
        %v644 = vpop.f32.mrb[0].mxu0
        %645 = vmatprep.mubr.f32.mxu0 0.0
        %646 = vmatmul.mubr.f32.gmra.mrb[0].mxu0 %v406
        %v647 = vpop.f32.mrb[0].mxu0
        %v648 = vadd.f32 0.0, %v647
        %v649 = vpop.f32.mrb[0].mxu0
        %650 = vmatprep.mubr.f32.mxu0 0.0
        %651 = vmatmul.mubr.f32.gmra.mrb[0].mxu0 %v409
        %v652 = vpop.f32.mrb[0].mxu0
        %v653 = vadd.f32 0.0, %v652
        %v654 = vpop.f32.mrb[0].mxu0
        %655 = vmatprep.mubr.f32.mxu0 0.0
        %656 = vmatmul.mubr.f32.gmra.mrb[0].mxu0 %v411
        %v657 = vpop.f32.mrb[0].mxu0
        %v658 = vadd.f32 0.0, %v657
        %v659 = vpop.f32.mrb[0].mxu0
        %660 = vmatprep.mubr.f32.mxu0 0.0
        %661 = vmatmul.mubr.f32.gmra.mrb[0].mxu0 %v414
        %v662 = vpop.f32.mrb[0].mxu0
        %v663 = vadd.f32 0.0, %v662
        %v664 = vpop.f32.mrb[0].mxu0
        %665 = vmatprep.mubr.f32.mxu0 0.0
        %666 = vmatmul.mubr.f32.gmra.mrb[0].mxu0 %v416
        %v667 = vpop.f32.mrb[0].mxu0
        %v668 = vadd.f32 0.0, %v667
        %v669 = vpop.f32.mrb[0].mxu0
        %670 = vmatprep.mubr.f32.mxu0 0.0
        %671 = vmatmul.mubr.f32.gmra.mrb[0].mxu0 %v419
        %v672 = vpop.f32.mrb[0].mxu0
        %v673 = vadd.f32 0.0, %v672
        %v674 = vpop.f32.mrb[0].mxu0
        %675 = vmatprep.mubr.f32.mxu0 0.0
        %676 = vmatmul.mubr.f32.gmra.mrb[0].mxu0 %v421
        %v677 = vpop.f32.mrb[0].mxu0
        %v678 = vadd.f32 0.0, %v677
        %v679 = vpop.f32.mrb[0].mxu0
        %680 = vmatprep.mubr.f32.mxu0 0.0
        %681 = vmatmul.mubr.f32.gmra.mrb[0].mxu0 %v424
        %v682 = vpop.f32.mrb[0].mxu0
        %v683 = vadd.f32 0.0, %v682
        %v684 = vpop.f32.mrb[0].mxu0
        %685 = vmatprep.mubr.f32.mxu0 0.0
        %686 = vmatmul.mubr.f32.gmra.mrb[0].mxu0 %v426
        %v687 = vpop.f32.mrb[0].mxu0
        %v688 = vadd.f32 0.0, %v687
        %v689 = vpop.f32.mrb[0].mxu0
        %690 = vmatprep.mubr.f32.mxu0 0.0
        %691 = vmatmul.mubr.f32.gmra.mrb[0].mxu0 %v429
        %v692 = vpop.f32.mrb[0].mxu0
        %v693 = vadd.f32 0.0, %v692
        %v694 = vpop.f32.mrb[0].mxu0
        %695 = vmatprep.mubr.f32.mxu0 0.0
        %696 = vmatmul.mubr.f32.gmra.mrb[0].mxu0 %v431
        %v697 = vpop.f32.mrb[0].mxu0
        %v698 = vadd.f32 0.0, %v697
        %v699 = vpop.f32.mrb[0].mxu0
        %700 = vmatprep.mubr.f32.mxu0 0.0
        %701 = vmatmul.mubr.f32.gmra.mrb[0].mxu0 %v434
        %v702 = vpop.f32.mrb[0].mxu0
        %v703 = vadd.f32 0.0, %v702
        %v704 = vpop.f32.mrb[0].mxu0
        %705 = vmatprep.mubr.f32.mxu0 0.0
        %706 = vmatmul.mubr.f32.gmra.mrb[0].mxu0 %v436
        %v707 = vpop.f32.mrb[0].mxu0
        %v708 = vadd.f32 0.0, %v707
        %v709 = vpop.f32.mrb[0].mxu0
        %710 = vdwg.mxu0
        %711 = vmatprep.subr.mxu0 0.0
        %712 = vmatpush1.msra.mxu0 %v292
        %713 = vmatprep.subr.mxu0 0.0
        %714 = vmatpush1.msra.mxu0 %v293
        %715 = vmatprep.subr.mxu0 0.0
        %716 = vmatpush1.msra.mxu0 %v294
        %717 = vmatprep.subr.mxu0 0.0
        %718 = vmatpush1.msra.mxu0 %v295
        %719 = vmatprep.subr.mxu0 0.0
        %720 = vmatpush1.msra.mxu0 %v296
        %721 = vmatprep.subr.mxu0 0.0
        %722 = vmatpush1.msra.mxu0 %v297
        %723 = vmatprep.subr.mxu0 0.0
        %724 = vmatpush1.msra.mxu0 %v298
        %725 = vmatprep.subr.mxu0 0.0
        %726 = vmatpush1.msra.mxu0 %v299
        %727 = vmatprep.subr.mxu0 0.0
        %728 = vmatpush1.msra.mxu0 %v300
        %729 = vmatprep.subr.mxu0 0.0
        %730 = vmatpush1.msra.mxu0 %v301
        %731 = vmatprep.subr.mxu0 0.0
        %732 = vmatpush1.msra.mxu0 %v302
        %733 = vmatprep.subr.mxu0 0.0
        %734 = vmatpush1.msra.mxu0 %v303
        %735 = vmatprep.subr.mxu0 0.0
        %736 = vmatpush1.msra.mxu0 %v304
        %737 = vmatprep.subr.mxu0 0.0
        %738 = vmatpush1.msra.mxu0 %v305
        %739 = vmatprep.subr.mxu0 0.0
        %740 = vmatpush1.msra.mxu0 %v306
        %741 = vmatprep.subr.mxu0 0.0
        %742 = vmatpush1.msra.mxu0 %v307
        %743 = vmatprep.subr.mxu0 0.0
        %744 = vmatpush1.msra.mxu0 0.0
        %745 = vmatprep.subr.mxu0 0.0
        %746 = vmatpush1.msra.mxu0 0.0
        %747 = vmatprep.subr.mxu0 0.0
        %748 = vmatpush1.msra.mxu0 0.0
        %749 = vmatprep.subr.mxu0 0.0
        %750 = vmatpush1.msra.mxu0 0.0
        %751 = vmatprep.subr.mxu0 0.0
        %752 = vmatpush1.msra.mxu0 0.0
        %753 = vmatprep.subr.mxu0 0.0
        %754 = vmatpush1.msra.mxu0 0.0
        %755 = vmatprep.subr.mxu0 0.0
        %756 = vmatpush1.msra.mxu0 0.0
        %757 = vmatprep.subr.mxu0 0.0
        %758 = vmatpush1.msra.mxu0 0.0
        %759 = vmatprep.subr.mxu0 0.0
        %760 = vmatpush1.msra.mxu0 0.0
        %761 = vmatprep.subr.mxu0 0.0
        %762 = vmatpush1.msra.mxu0 0.0
        %763 = vmatprep.subr.mxu0 0.0
        %764 = vmatpush1.msra.mxu0 0.0
        %765 = vmatprep.subr.mxu0 0.0
        %766 = vmatpush1.msra.mxu0 0.0
        %767 = vmatprep.subr.mxu0 0.0
        %768 = vmatpush1.msra.mxu0 0.0
        %769 = vmatprep.subr.mxu0 0.0
        %770 = vmatpush1.msra.mxu0 0.0
        %771 = vmatprep.subr.mxu0 0.0
        %772 = vmatpush1.msra.mxu0 0.0
        %773 = vmatprep.subr.mxu0 0.0
        %774 = vmatpush1.msra.mxu0 0.0
        %775 = vmatprep.mubr.f32.mxu0 0.0
        %776 = vmatmul.mubr.f32.gmra.mrb[0].mxu0 %v238
        %v777 = vpop.f32.mrb[0].mxu0
        %v778 = vadd.f32 %v553, %v777
        %v779 = vpop.f32.mrb[0].mxu0
        %780 = vmatprep.mubr.f32.mxu0 0.0
        %781 = vmatmul.mubr.f32.gmra.mrb[0].mxu0 %v239
        %v782 = vpop.f32.mrb[0].mxu0
        %v783 = vadd.f32 %v558, %v782
        %v784 = vpop.f32.mrb[0].mxu0
        %785 = vmatprep.mubr.f32.mxu0 0.0
        %786 = vmatmul.mubr.f32.gmra.mrb[0].mxu0 %v241
        %v787 = vpop.f32.mrb[0].mxu0
        %v788 = vadd.f32 %v563, %v787
        %v789 = vpop.f32.mrb[0].mxu0
        %790 = vmatprep.mubr.f32.mxu0 0.0
        %791 = vmatmul.mubr.f32.gmra.mrb[0].mxu0 %v242
        %v792 = vpop.f32.mrb[0].mxu0
        %v793 = vadd.f32 %v568, %v792
        %v794 = vpop.f32.mrb[0].mxu0
        %795 = vmatprep.mubr.f32.mxu0 0.0
        %796 = vmatmul.mubr.f32.gmra.mrb[0].mxu0 %v244
        %v797 = vpop.f32.mrb[0].mxu0
        %v798 = vadd.f32 %v573, %v797
        %v799 = vpop.f32.mrb[0].mxu0
        %800 = vmatprep.mubr.f32.mxu0 0.0
        %801 = vmatmul.mubr.f32.gmra.mrb[0].mxu0 %v245
        %v802 = vpop.f32.mrb[0].mxu0
        %v803 = vadd.f32 %v578, %v802
        %v804 = vpop.f32.mrb[0].mxu0
        %805 = vmatprep.mubr.f32.mxu0 0.0
        %806 = vmatmul.mubr.f32.gmra.mrb[0].mxu0 %v247
        %v807 = vpop.f32.mrb[0].mxu0
        %v808 = vadd.f32 %v583, %v807
        %v809 = vpop.f32.mrb[0].mxu0
        %810 = vmatprep.mubr.f32.mxu0 0.0
        %811 = vmatmul.mubr.f32.gmra.mrb[0].mxu0 %v248
        %v812 = vpop.f32.mrb[0].mxu0
        %v813 = vadd.f32 %v588, %v812
        %v814 = vpop.f32.mrb[0].mxu0
        %815 = vmatprep.mubr.f32.mxu0 0.0
        %816 = vmatmul.mubr.f32.gmra.mrb[0].mxu0 %v250
        %v817 = vpop.f32.mrb[0].mxu0
        %v818 = vadd.f32 %v593, %v817
        %v819 = vpop.f32.mrb[0].mxu0
        %820 = vmatprep.mubr.f32.mxu0 0.0
        %821 = vmatmul.mubr.f32.gmra.mrb[0].mxu0 %v251
        %v822 = vpop.f32.mrb[0].mxu0
        %v823 = vadd.f32 %v598, %v822
        %v824 = vpop.f32.mrb[0].mxu0
        %825 = vmatprep.mubr.f32.mxu0 0.0
        %826 = vmatmul.mubr.f32.gmra.mrb[0].mxu0 %v253
        %v827 = vpop.f32.mrb[0].mxu0
        %v828 = vadd.f32 %v603, %v827
        %v829 = vpop.f32.mrb[0].mxu0
        %830 = vmatprep.mubr.f32.mxu0 0.0
        %831 = vmatmul.mubr.f32.gmra.mrb[0].mxu0 %v254
        %v832 = vpop.f32.mrb[0].mxu0
        %v833 = vadd.f32 %v608, %v832
        %v834 = vpop.f32.mrb[0].mxu0
        %835 = vmatprep.mubr.f32.mxu0 0.0
        %836 = vmatmul.mubr.f32.gmra.mrb[0].mxu0 %v256
        %v837 = vpop.f32.mrb[0].mxu0
        %v838 = vadd.f32 %v613, %v837
        %v839 = vpop.f32.mrb[0].mxu0
        %840 = vmatprep.mubr.f32.mxu0 0.0
        %841 = vmatmul.mubr.f32.gmra.mrb[0].mxu0 %v257
        %v842 = vpop.f32.mrb[0].mxu0
        %v843 = vadd.f32 %v618, %v842
        %v844 = vpop.f32.mrb[0].mxu0
        %845 = vmatprep.mubr.f32.mxu0 0.0
        %846 = vmatmul.mubr.f32.gmra.mrb[0].mxu0 %v259
        %v847 = vpop.f32.mrb[0].mxu0
        %v848 = vadd.f32 %v623, %v847
        %v849 = vpop.f32.mrb[0].mxu0
        %850 = vmatprep.mubr.f32.mxu0 0.0
        %851 = vmatmul.mubr.f32.gmra.mrb[0].mxu0 %v260
        %v852 = vpop.f32.mrb[0].mxu0
        %v853 = vadd.f32 %v628, %v852
        %v854 = vpop.f32.mrb[0].mxu0
        %855 = vmatprep.mubr.f32.mxu0 0.0
        %856 = vmatmul.mubr.f32.gmra.mrb[0].mxu0 %v262
        %v857 = vpop.f32.mrb[0].mxu0
        %v858 = vadd.f32 %v633, %v857
        %v859 = vpop.f32.mrb[0].mxu0
        %860 = vmatprep.mubr.f32.mxu0 0.0
        %861 = vmatmul.mubr.f32.gmra.mrb[0].mxu0 %v263
        %v862 = vpop.f32.mrb[0].mxu0
        %v863 = vadd.f32 %v638, %v862
        %v864 = vpop.f32.mrb[0].mxu0
        %865 = vmatprep.mubr.f32.mxu0 0.0
        %866 = vmatmul.mubr.f32.gmra.mrb[0].mxu0 %v265
        %v867 = vpop.f32.mrb[0].mxu0
        %v868 = vadd.f32 %v643, %v867
        %v869 = vpop.f32.mrb[0].mxu0
        %870 = vmatprep.mubr.f32.mxu0 0.0
        %871 = vmatmul.mubr.f32.gmra.mrb[0].mxu0 %v266
        %v872 = vpop.f32.mrb[0].mxu0
        %v873 = vadd.f32 %v648, %v872
        %v874 = vpop.f32.mrb[0].mxu0
        %875 = vmatprep.mubr.f32.mxu0 0.0
        %876 = vmatmul.mubr.f32.gmra.mrb[0].mxu0 %v268
        %v877 = vpop.f32.mrb[0].mxu0
        %v878 = vadd.f32 %v653, %v877
        %v879 = vpop.f32.mrb[0].mxu0
        %880 = vmatprep.mubr.f32.mxu0 0.0
        %881 = vmatmul.mubr.f32.gmra.mrb[0].mxu0 %v269
        %v882 = vpop.f32.mrb[0].mxu0
        %v883 = vadd.f32 %v658, %v882
        %v884 = vpop.f32.mrb[0].mxu0
        %885 = vmatprep.mubr.f32.mxu0 0.0
        %886 = vmatmul.mubr.f32.gmra.mrb[0].mxu0 %v271
        %v887 = vpop.f32.mrb[0].mxu0
        %v888 = vadd.f32 %v663, %v887
        %v889 = vpop.f32.mrb[0].mxu0
        %890 = vmatprep.mubr.f32.mxu0 0.0
        %891 = vmatmul.mubr.f32.gmra.mrb[0].mxu0 %v272
        %v892 = vpop.f32.mrb[0].mxu0
        %v893 = vadd.f32 %v668, %v892
        %v894 = vpop.f32.mrb[0].mxu0
        %895 = vmatprep.mubr.f32.mxu0 0.0
        %896 = vmatmul.mubr.f32.gmra.mrb[0].mxu0 %v274
        %v897 = vpop.f32.mrb[0].mxu0
        %v898 = vadd.f32 %v673, %v897
        %v899 = vpop.f32.mrb[0].mxu0
        %900 = vmatprep.mubr.f32.mxu0 0.0
        %901 = vmatmul.mubr.f32.gmra.mrb[0].mxu0 %v275
        %v902 = vpop.f32.mrb[0].mxu0
        %v903 = vadd.f32 %v678, %v902
        %v904 = vpop.f32.mrb[0].mxu0
        %905 = vmatprep.mubr.f32.mxu0 0.0
        %906 = vmatmul.mubr.f32.gmra.mrb[0].mxu0 %v277
        %v907 = vpop.f32.mrb[0].mxu0
        %v908 = vadd.f32 %v683, %v907
        %v909 = vpop.f32.mrb[0].mxu0
        %910 = vmatprep.mubr.f32.mxu0 0.0
        %911 = vmatmul.mubr.f32.gmra.mrb[0].mxu0 %v278
        %v912 = vpop.f32.mrb[0].mxu0
        %v913 = vadd.f32 %v688, %v912
        %v914 = vpop.f32.mrb[0].mxu0
        %915 = vmatprep.mubr.f32.mxu0 0.0
        %916 = vmatmul.mubr.f32.gmra.mrb[0].mxu0 %v280
        %v917 = vpop.f32.mrb[0].mxu0
        %v918 = vadd.f32 %v693, %v917
        %v919 = vpop.f32.mrb[0].mxu0
        %920 = vmatprep.mubr.f32.mxu0 0.0
        %921 = vmatmul.mubr.f32.gmra.mrb[0].mxu0 %v281
        %v922 = vpop.f32.mrb[0].mxu0
        %v923 = vadd.f32 %v698, %v922
        %v924 = vpop.f32.mrb[0].mxu0
        %925 = vmatprep.mubr.f32.mxu0 0.0
        %926 = vmatmul.mubr.f32.gmra.mrb[0].mxu0 %v283
        %v927 = vpop.f32.mrb[0].mxu0
        %v928 = vadd.f32 %v703, %v927
        %v929 = vpop.f32.mrb[0].mxu0
        %930 = vmatprep.mubr.f32.mxu0 0.0
        %931 = vmatmul.mubr.f32.gmra.mrb[0].mxu0 %v284
        %v932 = vpop.f32.mrb[0].mxu0
        %v933 = vadd.f32 %v708, %v932
        %v934 = vpop.f32.mrb[0].mxu0
        %935 = vdwg.mxu0
        %vm936 = vcmask 1045504
        %v937 = vrot.slane %v238, 2
        %v938 = vrot.slane %v239, 2
        %v939 = vsel %vm936, %v937, %v938
        %v940 = vrot.slane %v240, 2
        %v941 = vsel %vm936, %v938, %v940
        %v942 = vrot.slane %v241, 2
        %v943 = vrot.slane %v242, 2
        %v944 = vsel %vm936, %v942, %v943
        %v945 = vrot.slane %v243, 2
        %v946 = vsel %vm936, %v943, %v945
        %v947 = vrot.slane %v244, 2
        %v948 = vrot.slane %v245, 2
        %v949 = vsel %vm936, %v947, %v948
        %v950 = vrot.slane %v246, 2
        %v951 = vsel %vm936, %v948, %v950
        %v952 = vrot.slane %v247, 2
        %v953 = vrot.slane %v248, 2
        %v954 = vsel %vm936, %v952, %v953
        %v955 = vrot.slane %v249, 2
        %v956 = vsel %vm936, %v953, %v955
        %v957 = vrot.slane %v250, 2
        %v958 = vrot.slane %v251, 2
        %v959 = vsel %vm936, %v957, %v958
        %v960 = vrot.slane %v252, 2
        %v961 = vsel %vm936, %v958, %v960
        %v962 = vrot.slane %v253, 2
        %v963 = vrot.slane %v254, 2
        %v964 = vsel %vm936, %v962, %v963
        %v965 = vrot.slane %v255, 2
        %v966 = vsel %vm936, %v963, %v965
        %v967 = vrot.slane %v256, 2
        %v968 = vrot.slane %v257, 2
        %v969 = vsel %vm936, %v967, %v968
        %v970 = vrot.slane %v258, 2
        %v971 = vsel %vm936, %v968, %v970
        %v972 = vrot.slane %v259, 2
        %v973 = vrot.slane %v260, 2
        %v974 = vsel %vm936, %v972, %v973
        %v975 = vrot.slane %v261, 2
        %v976 = vsel %vm936, %v973, %v975
        %v977 = vrot.slane %v262, 2
        %v978 = vrot.slane %v263, 2
        %v979 = vsel %vm936, %v977, %v978
        %v980 = vrot.slane %v264, 2
        %v981 = vsel %vm936, %v978, %v980
        %v982 = vrot.slane %v265, 2
        %v983 = vrot.slane %v266, 2
        %v984 = vsel %vm936, %v982, %v983
        %v985 = vrot.slane %v267, 2
        %v986 = vsel %vm936, %v983, %v985
        %v987 = vrot.slane %v268, 2
        %v988 = vrot.slane %v269, 2
        %v989 = vsel %vm936, %v987, %v988
        %v990 = vrot.slane %v270, 2
        %v991 = vsel %vm936, %v988, %v990
        %v992 = vrot.slane %v271, 2
        %v993 = vrot.slane %v272, 2
        %v994 = vsel %vm936, %v992, %v993
        %v995 = vrot.slane %v273, 2
        %v996 = vsel %vm936, %v993, %v995
        %v997 = vrot.slane %v274, 2
        %v998 = vrot.slane %v275, 2
        %v999 = vsel %vm936, %v997, %v998
        %v1000 = vrot.slane %v276, 2
        %v1001 = vsel %vm936, %v998, %v1000
        %v1002 = vrot.slane %v277, 2
        %v1003 = vrot.slane %v278, 2
        %v1004 = vsel %vm936, %v1002, %v1003
        %v1005 = vrot.slane %v279, 2
        %v1006 = vsel %vm936, %v1003, %v1005
        %v1007 = vrot.slane %v280, 2
        %v1008 = vrot.slane %v281, 2
        %v1009 = vsel %vm936, %v1007, %v1008
        %v1010 = vrot.slane %v282, 2
        %v1011 = vsel %vm936, %v1008, %v1010
        %v1012 = vrot.slane %v283, 2
        %v1013 = vrot.slane %v284, 2
        %v1014 = vsel %vm936, %v1012, %v1013
        %v1015 = vrot.slane %v285, 2
        %v1016 = vsel %vm936, %v1013, %v1015
        %s1049 = scalar_lea.vmem %s1, 256
        %v1050 = vld [vmem:[%s1049] sm:$0xff]
        %v1051 = vld [vmem:[%s1049 + $0x8] sm:$0xff]
        %v1052 = vld [vmem:[%s1049 + $0x10] sm:$0xff]
        %v1053 = vld [vmem:[%s1049 + $0x18] sm:$0xff]
        %v1054 = vld [vmem:[%s1049 + $0x20] sm:$0xff]
        %v1055 = vld [vmem:[%s1049 + $0x28] sm:$0xff]
        %v1056 = vld [vmem:[%s1049 + $0x30] sm:$0xff]
        %v1057 = vld [vmem:[%s1049 + $0x38] sm:$0xff]
        %v1058 = vld [vmem:[%s1049 + $0x40] sm:$0xff]
        %v1059 = vld [vmem:[%s1049 + $0x48] sm:$0xff]
        %v1060 = vld [vmem:[%s1049 + $0x50] sm:$0xff]
        %v1061 = vld [vmem:[%s1049 + $0x58] sm:$0xff]
        %v1062 = vld [vmem:[%s1049 + $0x60] sm:$0xff]
        %v1063 = vld [vmem:[%s1049 + $0x68] sm:$0xff]
        %v1064 = vld [vmem:[%s1049 + $0x70] sm:$0xff]
        %v1065 = vld [vmem:[%s1049 + $0x78] sm:$0xff]
        %1066 = vmatprep.subr.mxu0 0.0
        %1067 = vmatpush1.msra.mxu0 %v1050
        %1068 = vmatprep.subr.mxu0 0.0
        %1069 = vmatpush1.msra.mxu0 %v1051
        %1070 = vmatprep.subr.mxu0 0.0
        %1071 = vmatpush1.msra.mxu0 %v1052
        %1072 = vmatprep.subr.mxu0 0.0
        %1073 = vmatpush1.msra.mxu0 %v1053
        %1074 = vmatprep.subr.mxu0 0.0
        %1075 = vmatpush1.msra.mxu0 %v1054
        %1076 = vmatprep.subr.mxu0 0.0
        %1077 = vmatpush1.msra.mxu0 %v1055
        %1078 = vmatprep.subr.mxu0 0.0
        %1079 = vmatpush1.msra.mxu0 %v1056
        %1080 = vmatprep.subr.mxu0 0.0
        %1081 = vmatpush1.msra.mxu0 %v1057
        %1082 = vmatprep.subr.mxu0 0.0
        %1083 = vmatpush1.msra.mxu0 %v1058
        %1084 = vmatprep.subr.mxu0 0.0
        %1085 = vmatpush1.msra.mxu0 %v1059
        %1086 = vmatprep.subr.mxu0 0.0
        %1087 = vmatpush1.msra.mxu0 %v1060
        %1088 = vmatprep.subr.mxu0 0.0
        %1089 = vmatpush1.msra.mxu0 %v1061
        %1090 = vmatprep.subr.mxu0 0.0
        %1091 = vmatpush1.msra.mxu0 %v1062
        %1092 = vmatprep.subr.mxu0 0.0
        %1093 = vmatpush1.msra.mxu0 %v1063
        %1094 = vmatprep.subr.mxu0 0.0
        %1095 = vmatpush1.msra.mxu0 %v1064
        %1096 = vmatprep.subr.mxu0 0.0
        %1097 = vmatpush1.msra.mxu0 %v1065
        %1098 = vmatprep.subr.mxu0 0.0
        %1099 = vmatpush1.msra.mxu0 0.0
        %1100 = vmatprep.subr.mxu0 0.0
        %1101 = vmatpush1.msra.mxu0 0.0
        %1102 = vmatprep.subr.mxu0 0.0
        %1103 = vmatpush1.msra.mxu0 0.0
        %1104 = vmatprep.subr.mxu0 0.0
        %1105 = vmatpush1.msra.mxu0 0.0
        %1106 = vmatprep.subr.mxu0 0.0
        %1107 = vmatpush1.msra.mxu0 0.0
        %1108 = vmatprep.subr.mxu0 0.0
        %1109 = vmatpush1.msra.mxu0 0.0
        %1110 = vmatprep.subr.mxu0 0.0
        %1111 = vmatpush1.msra.mxu0 0.0
        %1112 = vmatprep.subr.mxu0 0.0
        %1113 = vmatpush1.msra.mxu0 0.0
        %1114 = vmatprep.subr.mxu0 0.0
        %1115 = vmatpush1.msra.mxu0 0.0
        %1116 = vmatprep.subr.mxu0 0.0
        %1117 = vmatpush1.msra.mxu0 0.0
        %1118 = vmatprep.subr.mxu0 0.0
        %1119 = vmatpush1.msra.mxu0 0.0
        %1120 = vmatprep.subr.mxu0 0.0
        %1121 = vmatpush1.msra.mxu0 0.0
        %1122 = vmatprep.subr.mxu0 0.0
        %1123 = vmatpush1.msra.mxu0 0.0
        %1124 = vmatprep.subr.mxu0 0.0
        %1125 = vmatpush1.msra.mxu0 0.0
        %1126 = vmatprep.subr.mxu0 0.0
        %1127 = vmatpush1.msra.mxu0 0.0
        %1128 = vmatprep.subr.mxu0 0.0
        %1129 = vmatpush1.msra.mxu0 0.0
        %1130 = vmatprep.mubr.f32.mxu0 0.0
        %1131 = vmatmul.mubr.f32.gmra.mrb[0].mxu0 %v939
        %v1132 = vpop.f32.mrb[0].mxu0
        %v1133 = vadd.f32 0.0, %v1132
        %v1134 = vpop.f32.mrb[0].mxu0
        %1135 = vmatprep.mubr.f32.mxu0 0.0
        %1136 = vmatmul.mubr.f32.gmra.mrb[0].mxu0 %v941
        %v1137 = vpop.f32.mrb[0].mxu0
        %v1138 = vadd.f32 0.0, %v1137
        %v1139 = vpop.f32.mrb[0].mxu0
        %1140 = vmatprep.mubr.f32.mxu0 0.0
        %1141 = vmatmul.mubr.f32.gmra.mrb[0].mxu0 %v944
        %v1142 = vpop.f32.mrb[0].mxu0
        %v1143 = vadd.f32 0.0, %v1142
        %v1144 = vpop.f32.mrb[0].mxu0
        %1145 = vmatprep.mubr.f32.mxu0 0.0
        %1146 = vmatmul.mubr.f32.gmra.mrb[0].mxu0 %v946
        %v1147 = vpop.f32.mrb[0].mxu0
        %v1148 = vadd.f32 0.0, %v1147
        %v1149 = vpop.f32.mrb[0].mxu0
        %1150 = vmatprep.mubr.f32.mxu0 0.0
        %1151 = vmatmul.mubr.f32.gmra.mrb[0].mxu0 %v949
        %v1152 = vpop.f32.mrb[0].mxu0
        %v1153 = vadd.f32 0.0, %v1152
        %v1154 = vpop.f32.mrb[0].mxu0
        %1155 = vmatprep.mubr.f32.mxu0 0.0
        %1156 = vmatmul.mubr.f32.gmra.mrb[0].mxu0 %v951
        %v1157 = vpop.f32.mrb[0].mxu0
        %v1158 = vadd.f32 0.0, %v1157
        %v1159 = vpop.f32.mrb[0].mxu0
        %1160 = vmatprep.mubr.f32.mxu0 0.0
        %1161 = vmatmul.mubr.f32.gmra.mrb[0].mxu0 %v954
        %v1162 = vpop.f32.mrb[0].mxu0
        %v1163 = vadd.f32 0.0, %v1162
        %v1164 = vpop.f32.mrb[0].mxu0
        %1165 = vmatprep.mubr.f32.mxu0 0.0
        %1166 = vmatmul.mubr.f32.gmra.mrb[0].mxu0 %v956
        %v1167 = vpop.f32.mrb[0].mxu0
        %v1168 = vadd.f32 0.0, %v1167
        %v1169 = vpop.f32.mrb[0].mxu0
        %1170 = vmatprep.mubr.f32.mxu0 0.0
        %1171 = vmatmul.mubr.f32.gmra.mrb[0].mxu0 %v959
        %v1172 = vpop.f32.mrb[0].mxu0
        %v1173 = vadd.f32 0.0, %v1172
        %v1174 = vpop.f32.mrb[0].mxu0
        %1175 = vmatprep.mubr.f32.mxu0 0.0
        %1176 = vmatmul.mubr.f32.gmra.mrb[0].mxu0 %v961
        %v1177 = vpop.f32.mrb[0].mxu0
        %v1178 = vadd.f32 0.0, %v1177
        %v1179 = vpop.f32.mrb[0].mxu0
        %1180 = vmatprep.mubr.f32.mxu0 0.0
        %1181 = vmatmul.mubr.f32.gmra.mrb[0].mxu0 %v964
        %v1182 = vpop.f32.mrb[0].mxu0
        %v1183 = vadd.f32 0.0, %v1182
        %v1184 = vpop.f32.mrb[0].mxu0
        %1185 = vmatprep.mubr.f32.mxu0 0.0
        %1186 = vmatmul.mubr.f32.gmra.mrb[0].mxu0 %v966
        %v1187 = vpop.f32.mrb[0].mxu0
        %v1188 = vadd.f32 0.0, %v1187
        %v1189 = vpop.f32.mrb[0].mxu0
        %1190 = vmatprep.mubr.f32.mxu0 0.0
        %1191 = vmatmul.mubr.f32.gmra.mrb[0].mxu0 %v969
        %v1192 = vpop.f32.mrb[0].mxu0
        %v1193 = vadd.f32 0.0, %v1192
        %v1194 = vpop.f32.mrb[0].mxu0
        %1195 = vmatprep.mubr.f32.mxu0 0.0
        %1196 = vmatmul.mubr.f32.gmra.mrb[0].mxu0 %v971
        %v1197 = vpop.f32.mrb[0].mxu0
        %v1198 = vadd.f32 0.0, %v1197
        %v1199 = vpop.f32.mrb[0].mxu0
        %1200 = vmatprep.mubr.f32.mxu0 0.0
        %1201 = vmatmul.mubr.f32.gmra.mrb[0].mxu0 %v974
        %v1202 = vpop.f32.mrb[0].mxu0
        %v1203 = vadd.f32 0.0, %v1202
        %v1204 = vpop.f32.mrb[0].mxu0
        %1205 = vmatprep.mubr.f32.mxu0 0.0
        %1206 = vmatmul.mubr.f32.gmra.mrb[0].mxu0 %v976
        %v1207 = vpop.f32.mrb[0].mxu0
        %v1208 = vadd.f32 0.0, %v1207
        %v1209 = vpop.f32.mrb[0].mxu0
        %1210 = vmatprep.mubr.f32.mxu0 0.0
        %1211 = vmatmul.mubr.f32.gmra.mrb[0].mxu0 %v979
        %v1212 = vpop.f32.mrb[0].mxu0
        %v1213 = vadd.f32 0.0, %v1212
        %v1214 = vpop.f32.mrb[0].mxu0
        %1215 = vmatprep.mubr.f32.mxu0 0.0
        %1216 = vmatmul.mubr.f32.gmra.mrb[0].mxu0 %v981
        %v1217 = vpop.f32.mrb[0].mxu0
        %v1218 = vadd.f32 0.0, %v1217
        %v1219 = vpop.f32.mrb[0].mxu0
        %1220 = vmatprep.mubr.f32.mxu0 0.0
        %1221 = vmatmul.mubr.f32.gmra.mrb[0].mxu0 %v984
        %v1222 = vpop.f32.mrb[0].mxu0
        %v1223 = vadd.f32 0.0, %v1222
        %v1224 = vpop.f32.mrb[0].mxu0
        %1225 = vmatprep.mubr.f32.mxu0 0.0
        %1226 = vmatmul.mubr.f32.gmra.mrb[0].mxu0 %v986
        %v1227 = vpop.f32.mrb[0].mxu0
        %v1228 = vadd.f32 0.0, %v1227
        %v1229 = vpop.f32.mrb[0].mxu0
        %1230 = vmatprep.mubr.f32.mxu0 0.0
        %1231 = vmatmul.mubr.f32.gmra.mrb[0].mxu0 %v989
        %v1232 = vpop.f32.mrb[0].mxu0
        %v1233 = vadd.f32 0.0, %v1232
        %v1234 = vpop.f32.mrb[0].mxu0
        %1235 = vmatprep.mubr.f32.mxu0 0.0
        %1236 = vmatmul.mubr.f32.gmra.mrb[0].mxu0 %v991
        %v1237 = vpop.f32.mrb[0].mxu0
        %v1238 = vadd.f32 0.0, %v1237
        %v1239 = vpop.f32.mrb[0].mxu0
        %1240 = vmatprep.mubr.f32.mxu0 0.0
        %1241 = vmatmul.mubr.f32.gmra.mrb[0].mxu0 %v994
        %v1242 = vpop.f32.mrb[0].mxu0
        %v1243 = vadd.f32 0.0, %v1242
        %v1244 = vpop.f32.mrb[0].mxu0
        %1245 = vmatprep.mubr.f32.mxu0 0.0
        %1246 = vmatmul.mubr.f32.gmra.mrb[0].mxu0 %v996
        %v1247 = vpop.f32.mrb[0].mxu0
        %v1248 = vadd.f32 0.0, %v1247
        %v1249 = vpop.f32.mrb[0].mxu0
        %1250 = vmatprep.mubr.f32.mxu0 0.0
        %1251 = vmatmul.mubr.f32.gmra.mrb[0].mxu0 %v999
        %v1252 = vpop.f32.mrb[0].mxu0
        %v1253 = vadd.f32 0.0, %v1252
        %v1254 = vpop.f32.mrb[0].mxu0
        %1255 = vmatprep.mubr.f32.mxu0 0.0
        %1256 = vmatmul.mubr.f32.gmra.mrb[0].mxu0 %v1001
        %v1257 = vpop.f32.mrb[0].mxu0
        %v1258 = vadd.f32 0.0, %v1257
        %v1259 = vpop.f32.mrb[0].mxu0
        %1260 = vmatprep.mubr.f32.mxu0 0.0
        %1261 = vmatmul.mubr.f32.gmra.mrb[0].mxu0 %v1004
        %v1262 = vpop.f32.mrb[0].mxu0
        %v1263 = vadd.f32 0.0, %v1262
        %v1264 = vpop.f32.mrb[0].mxu0
        %1265 = vmatprep.mubr.f32.mxu0 0.0
        %1266 = vmatmul.mubr.f32.gmra.mrb[0].mxu0 %v1006
        %v1267 = vpop.f32.mrb[0].mxu0
        %v1268 = vadd.f32 0.0, %v1267
        %v1269 = vpop.f32.mrb[0].mxu0
        %1270 = vmatprep.mubr.f32.mxu0 0.0
        %1271 = vmatmul.mubr.f32.gmra.mrb[0].mxu0 %v1009
        %v1272 = vpop.f32.mrb[0].mxu0
        %v1273 = vadd.f32 0.0, %v1272
        %v1274 = vpop.f32.mrb[0].mxu0
        %1275 = vmatprep.mubr.f32.mxu0 0.0
        %1276 = vmatmul.mubr.f32.gmra.mrb[0].mxu0 %v1011
        %v1277 = vpop.f32.mrb[0].mxu0
        %v1278 = vadd.f32 0.0, %v1277
        %v1279 = vpop.f32.mrb[0].mxu0
        %1280 = vmatprep.mubr.f32.mxu0 0.0
        %1281 = vmatmul.mubr.f32.gmra.mrb[0].mxu0 %v1014
        %v1282 = vpop.f32.mrb[0].mxu0
        %v1283 = vadd.f32 0.0, %v1282
        %v1284 = vpop.f32.mrb[0].mxu0
        %1285 = vmatprep.mubr.f32.mxu0 0.0
        %1286 = vmatmul.mubr.f32.gmra.mrb[0].mxu0 %v1016
        %v1287 = vpop.f32.mrb[0].mxu0
        %v1288 = vadd.f32 0.0, %v1287
        %v1289 = vpop.f32.mrb[0].mxu0
        %1290 = vdwg.mxu0
        %v1291 = vadd.f32 %v778, %v1133
        %v1292 = vadd.f32 %v783, %v1138
        %v1293 = vadd.f32 %v788, %v1143
        %v1294 = vadd.f32 %v793, %v1148
        %v1295 = vadd.f32 %v798, %v1153
        %v1296 = vadd.f32 %v803, %v1158
        %v1297 = vadd.f32 %v808, %v1163
        %v1298 = vadd.f32 %v813, %v1168
        %v1299 = vadd.f32 %v818, %v1173
        %v1300 = vadd.f32 %v823, %v1178
        %v1301 = vadd.f32 %v828, %v1183
        %v1302 = vadd.f32 %v833, %v1188
        %v1303 = vadd.f32 %v838, %v1193
        %v1304 = vadd.f32 %v843, %v1198
        %v1305 = vadd.f32 %v848, %v1203
        %v1306 = vadd.f32 %v853, %v1208
        %v1307 = vadd.f32 %v858, %v1213
        %v1308 = vadd.f32 %v863, %v1218
        %v1309 = vadd.f32 %v868, %v1223
        %v1310 = vadd.f32 %v873, %v1228
        %v1311 = vadd.f32 %v878, %v1233
        %v1312 = vadd.f32 %v883, %v1238
        %v1313 = vadd.f32 %v888, %v1243
        %v1314 = vadd.f32 %v893, %v1248
        %v1315 = vadd.f32 %v898, %v1253
        %v1316 = vadd.f32 %v903, %v1258
        %v1317 = vadd.f32 %v908, %v1263
        %v1318 = vadd.f32 %v913, %v1268
        %v1319 = vadd.f32 %v918, %v1273
        %v1320 = vadd.f32 %v923, %v1278
        %v1321 = vadd.f32 %v928, %v1283
        %v1322 = vadd.f32 %v933, %v1288
        %s1323 = scalar_lea.vmem %s1, 384
        %v1324 = vld [vmem:[%s1323] sm:$0xff]
        %v1325 = vld [vmem:[%s1323 + $0x8] sm:$0xff]
        %v1326 = vld [vmem:[%s1323 + $0x10] sm:$0xff]
        %v1327 = vld [vmem:[%s1323 + $0x18] sm:$0xff]
        %v1328 = vld [vmem:[%s1323 + $0x20] sm:$0xff]
        %v1329 = vld [vmem:[%s1323 + $0x28] sm:$0xff]
        %v1330 = vld [vmem:[%s1323 + $0x30] sm:$0xff]
        %v1331 = vld [vmem:[%s1323 + $0x38] sm:$0xff]
        %v1332 = vld [vmem:[%s1323 + $0x40] sm:$0xff]
        %v1333 = vld [vmem:[%s1323 + $0x48] sm:$0xff]
        %v1334 = vld [vmem:[%s1323 + $0x50] sm:$0xff]
        %v1335 = vld [vmem:[%s1323 + $0x58] sm:$0xff]
        %v1336 = vld [vmem:[%s1323 + $0x60] sm:$0xff]
        %v1337 = vld [vmem:[%s1323 + $0x68] sm:$0xff]
        %v1338 = vld [vmem:[%s1323 + $0x70] sm:$0xff]
        %v1339 = vld [vmem:[%s1323 + $0x78] sm:$0xff]
        %1340 = vmatprep.subr.mxu0 0.0
        %1341 = vmatpush1.msra.mxu0 %v1324
        %1342 = vmatprep.subr.mxu0 0.0
        %1343 = vmatpush1.msra.mxu0 %v1325
        %1344 = vmatprep.subr.mxu0 0.0
        %1345 = vmatpush1.msra.mxu0 %v1326
        %1346 = vmatprep.subr.mxu0 0.0
        %1347 = vmatpush1.msra.mxu0 %v1327
        %1348 = vmatprep.subr.mxu0 0.0
        %1349 = vmatpush1.msra.mxu0 %v1328
        %1350 = vmatprep.subr.mxu0 0.0
        %1351 = vmatpush1.msra.mxu0 %v1329
        %1352 = vmatprep.subr.mxu0 0.0
        %1353 = vmatpush1.msra.mxu0 %v1330
        %1354 = vmatprep.subr.mxu0 0.0
        %1355 = vmatpush1.msra.mxu0 %v1331
        %1356 = vmatprep.subr.mxu0 0.0
        %1357 = vmatpush1.msra.mxu0 %v1332
        %1358 = vmatprep.subr.mxu0 0.0
        %1359 = vmatpush1.msra.mxu0 %v1333
        %1360 = vmatprep.subr.mxu0 0.0
        %1361 = vmatpush1.msra.mxu0 %v1334
        %1362 = vmatprep.subr.mxu0 0.0
        %1363 = vmatpush1.msra.mxu0 %v1335
        %1364 = vmatprep.subr.mxu0 0.0
        %1365 = vmatpush1.msra.mxu0 %v1336
        %1366 = vmatprep.subr.mxu0 0.0
        %1367 = vmatpush1.msra.mxu0 %v1337
        %1368 = vmatprep.subr.mxu0 0.0
        %1369 = vmatpush1.msra.mxu0 %v1338
        %1370 = vmatprep.subr.mxu0 0.0
        %1371 = vmatpush1.msra.mxu0 %v1339
        %1372 = vmatprep.subr.mxu0 0.0
        %1373 = vmatpush1.msra.mxu0 0.0
        %1374 = vmatprep.subr.mxu0 0.0
        %1375 = vmatpush1.msra.mxu0 0.0
        %1376 = vmatprep.subr.mxu0 0.0
        %1377 = vmatpush1.msra.mxu0 0.0
        %1378 = vmatprep.subr.mxu0 0.0
        %1379 = vmatpush1.msra.mxu0 0.0
        %1380 = vmatprep.subr.mxu0 0.0
        %1381 = vmatpush1.msra.mxu0 0.0
        %1382 = vmatprep.subr.mxu0 0.0
        %1383 = vmatpush1.msra.mxu0 0.0
        %1384 = vmatprep.subr.mxu0 0.0
        %1385 = vmatpush1.msra.mxu0 0.0
        %1386 = vmatprep.subr.mxu0 0.0
        %1387 = vmatpush1.msra.mxu0 0.0
        %1388 = vmatprep.subr.mxu0 0.0
        %1389 = vmatpush1.msra.mxu0 0.0
        %1390 = vmatprep.subr.mxu0 0.0
        %1391 = vmatpush1.msra.mxu0 0.0
        %1392 = vmatprep.subr.mxu0 0.0
        %1393 = vmatpush1.msra.mxu0 0.0
        %1394 = vmatprep.subr.mxu0 0.0
        %1395 = vmatpush1.msra.mxu0 0.0
        %1396 = vmatprep.subr.mxu0 0.0
        %1397 = vmatpush1.msra.mxu0 0.0
        %1398 = vmatprep.subr.mxu0 0.0
        %1399 = vmatpush1.msra.mxu0 0.0
        %1400 = vmatprep.subr.mxu0 0.0
        %1401 = vmatpush1.msra.mxu0 0.0
        %1402 = vmatprep.subr.mxu0 0.0
        %1403 = vmatpush1.msra.mxu0 0.0
        %1404 = vmatprep.mubr.f32.mxu0 0.0
        %1405 = vmatmul.mubr.f32.gmra.mrb[0].mxu0 %v241
        %v1406 = vpop.f32.mrb[0].mxu0
        %v1407 = vadd.f32 0.0, %v1406
        %v1408 = vpop.f32.mrb[0].mxu0
        %1409 = vmatprep.mubr.f32.mxu0 0.0
        %1410 = vmatmul.mubr.f32.gmra.mrb[0].mxu0 %v242
        %v1411 = vpop.f32.mrb[0].mxu0
        %v1412 = vadd.f32 0.0, %v1411
        %v1413 = vpop.f32.mrb[0].mxu0
        %1414 = vmatprep.mubr.f32.mxu0 0.0
        %1415 = vmatmul.mubr.f32.gmra.mrb[0].mxu0 %v244
        %v1416 = vpop.f32.mrb[0].mxu0
        %v1417 = vadd.f32 0.0, %v1416
        %v1418 = vpop.f32.mrb[0].mxu0
        %1419 = vmatprep.mubr.f32.mxu0 0.0
        %1420 = vmatmul.mubr.f32.gmra.mrb[0].mxu0 %v245
        %v1421 = vpop.f32.mrb[0].mxu0
        %v1422 = vadd.f32 0.0, %v1421
        %v1423 = vpop.f32.mrb[0].mxu0
        %1424 = vmatprep.mubr.f32.mxu0 0.0
        %1425 = vmatmul.mubr.f32.gmra.mrb[0].mxu0 %v247
        %v1426 = vpop.f32.mrb[0].mxu0
        %v1427 = vadd.f32 0.0, %v1426
        %v1428 = vpop.f32.mrb[0].mxu0
        %1429 = vmatprep.mubr.f32.mxu0 0.0
        %1430 = vmatmul.mubr.f32.gmra.mrb[0].mxu0 %v248
        %v1431 = vpop.f32.mrb[0].mxu0
        %v1432 = vadd.f32 0.0, %v1431
        %v1433 = vpop.f32.mrb[0].mxu0
        %1434 = vmatprep.mubr.f32.mxu0 0.0
        %1435 = vmatmul.mubr.f32.gmra.mrb[0].mxu0 %v250
        %v1436 = vpop.f32.mrb[0].mxu0
        %v1437 = vadd.f32 0.0, %v1436
        %v1438 = vpop.f32.mrb[0].mxu0
        %1439 = vmatprep.mubr.f32.mxu0 0.0
        %1440 = vmatmul.mubr.f32.gmra.mrb[0].mxu0 %v251
        %v1441 = vpop.f32.mrb[0].mxu0
        %v1442 = vadd.f32 0.0, %v1441
        %v1443 = vpop.f32.mrb[0].mxu0
        %1444 = vmatprep.mubr.f32.mxu0 0.0
        %1445 = vmatmul.mubr.f32.gmra.mrb[0].mxu0 %v253
        %v1446 = vpop.f32.mrb[0].mxu0
        %v1447 = vadd.f32 0.0, %v1446
        %v1448 = vpop.f32.mrb[0].mxu0
        %1449 = vmatprep.mubr.f32.mxu0 0.0
        %1450 = vmatmul.mubr.f32.gmra.mrb[0].mxu0 %v254
        %v1451 = vpop.f32.mrb[0].mxu0
        %v1452 = vadd.f32 0.0, %v1451
        %v1453 = vpop.f32.mrb[0].mxu0
        %1454 = vmatprep.mubr.f32.mxu0 0.0
        %1455 = vmatmul.mubr.f32.gmra.mrb[0].mxu0 %v256
        %v1456 = vpop.f32.mrb[0].mxu0
        %v1457 = vadd.f32 0.0, %v1456
        %v1458 = vpop.f32.mrb[0].mxu0
        %1459 = vmatprep.mubr.f32.mxu0 0.0
        %1460 = vmatmul.mubr.f32.gmra.mrb[0].mxu0 %v257
        %v1461 = vpop.f32.mrb[0].mxu0
        %v1462 = vadd.f32 0.0, %v1461
        %v1463 = vpop.f32.mrb[0].mxu0
        %1464 = vmatprep.mubr.f32.mxu0 0.0
        %1465 = vmatmul.mubr.f32.gmra.mrb[0].mxu0 %v259
        %v1466 = vpop.f32.mrb[0].mxu0
        %v1467 = vadd.f32 0.0, %v1466
        %v1468 = vpop.f32.mrb[0].mxu0
        %1469 = vmatprep.mubr.f32.mxu0 0.0
        %1470 = vmatmul.mubr.f32.gmra.mrb[0].mxu0 %v260
        %v1471 = vpop.f32.mrb[0].mxu0
        %v1472 = vadd.f32 0.0, %v1471
        %v1473 = vpop.f32.mrb[0].mxu0
        %1474 = vmatprep.mubr.f32.mxu0 0.0
        %1475 = vmatmul.mubr.f32.gmra.mrb[0].mxu0 %v262
        %v1476 = vpop.f32.mrb[0].mxu0
        %v1477 = vadd.f32 0.0, %v1476
        %v1478 = vpop.f32.mrb[0].mxu0
        %1479 = vmatprep.mubr.f32.mxu0 0.0
        %1480 = vmatmul.mubr.f32.gmra.mrb[0].mxu0 %v263
        %v1481 = vpop.f32.mrb[0].mxu0
        %v1482 = vadd.f32 0.0, %v1481
        %v1483 = vpop.f32.mrb[0].mxu0
        %1484 = vmatprep.mubr.f32.mxu0 0.0
        %1485 = vmatmul.mubr.f32.gmra.mrb[0].mxu0 %v265
        %v1486 = vpop.f32.mrb[0].mxu0
        %v1487 = vadd.f32 0.0, %v1486
        %v1488 = vpop.f32.mrb[0].mxu0
        %1489 = vmatprep.mubr.f32.mxu0 0.0
        %1490 = vmatmul.mubr.f32.gmra.mrb[0].mxu0 %v266
        %v1491 = vpop.f32.mrb[0].mxu0
        %v1492 = vadd.f32 0.0, %v1491
        %v1493 = vpop.f32.mrb[0].mxu0
        %1494 = vmatprep.mubr.f32.mxu0 0.0
        %1495 = vmatmul.mubr.f32.gmra.mrb[0].mxu0 %v268
        %v1496 = vpop.f32.mrb[0].mxu0
        %v1497 = vadd.f32 0.0, %v1496
        %v1498 = vpop.f32.mrb[0].mxu0
        %1499 = vmatprep.mubr.f32.mxu0 0.0
        %1500 = vmatmul.mubr.f32.gmra.mrb[0].mxu0 %v269
        %v1501 = vpop.f32.mrb[0].mxu0
        %v1502 = vadd.f32 0.0, %v1501
        %v1503 = vpop.f32.mrb[0].mxu0
        %1504 = vmatprep.mubr.f32.mxu0 0.0
        %1505 = vmatmul.mubr.f32.gmra.mrb[0].mxu0 %v271
        %v1506 = vpop.f32.mrb[0].mxu0
        %v1507 = vadd.f32 0.0, %v1506
        %v1508 = vpop.f32.mrb[0].mxu0
        %1509 = vmatprep.mubr.f32.mxu0 0.0
        %1510 = vmatmul.mubr.f32.gmra.mrb[0].mxu0 %v272
        %v1511 = vpop.f32.mrb[0].mxu0
        %v1512 = vadd.f32 0.0, %v1511
        %v1513 = vpop.f32.mrb[0].mxu0
        %1514 = vmatprep.mubr.f32.mxu0 0.0
        %1515 = vmatmul.mubr.f32.gmra.mrb[0].mxu0 %v274
        %v1516 = vpop.f32.mrb[0].mxu0
        %v1517 = vadd.f32 0.0, %v1516
        %v1518 = vpop.f32.mrb[0].mxu0
        %1519 = vmatprep.mubr.f32.mxu0 0.0
        %1520 = vmatmul.mubr.f32.gmra.mrb[0].mxu0 %v275
        %v1521 = vpop.f32.mrb[0].mxu0
        %v1522 = vadd.f32 0.0, %v1521
        %v1523 = vpop.f32.mrb[0].mxu0
        %1524 = vmatprep.mubr.f32.mxu0 0.0
        %1525 = vmatmul.mubr.f32.gmra.mrb[0].mxu0 %v277
        %v1526 = vpop.f32.mrb[0].mxu0
        %v1527 = vadd.f32 0.0, %v1526
        %v1528 = vpop.f32.mrb[0].mxu0
        %1529 = vmatprep.mubr.f32.mxu0 0.0
        %1530 = vmatmul.mubr.f32.gmra.mrb[0].mxu0 %v278
        %v1531 = vpop.f32.mrb[0].mxu0
        %v1532 = vadd.f32 0.0, %v1531
        %v1533 = vpop.f32.mrb[0].mxu0
        %1534 = vmatprep.mubr.f32.mxu0 0.0
        %1535 = vmatmul.mubr.f32.gmra.mrb[0].mxu0 %v280
        %v1536 = vpop.f32.mrb[0].mxu0
        %v1537 = vadd.f32 0.0, %v1536
        %v1538 = vpop.f32.mrb[0].mxu0
        %1539 = vmatprep.mubr.f32.mxu0 0.0
        %1540 = vmatmul.mubr.f32.gmra.mrb[0].mxu0 %v281
        %v1541 = vpop.f32.mrb[0].mxu0
        %v1542 = vadd.f32 0.0, %v1541
        %v1543 = vpop.f32.mrb[0].mxu0
        %1544 = vmatprep.mubr.f32.mxu0 0.0
        %1545 = vmatmul.mubr.f32.gmra.mrb[0].mxu0 %v283
        %v1546 = vpop.f32.mrb[0].mxu0
        %v1547 = vadd.f32 0.0, %v1546
        %v1548 = vpop.f32.mrb[0].mxu0
        %1549 = vmatprep.mubr.f32.mxu0 0.0
        %1550 = vmatmul.mubr.f32.gmra.mrb[0].mxu0 %v284
        %v1551 = vpop.f32.mrb[0].mxu0
        %v1552 = vadd.f32 0.0, %v1551
        %v1553 = vpop.f32.mrb[0].mxu0
        %1554 = vmatprep.mubr.f32.mxu0 0.0
        %1555 = vmatmul.mubr.f32.gmra.mrb[0].mxu0 %v286
        %v1556 = vpop.f32.mrb[0].mxu0
        %v1557 = vadd.f32 0.0, %v1556
        %v1558 = vpop.f32.mrb[0].mxu0
        %1559 = vmatprep.mubr.f32.mxu0 0.0
        %1560 = vmatmul.mubr.f32.gmra.mrb[0].mxu0 %v287
        %v1561 = vpop.f32.mrb[0].mxu0
        %v1562 = vadd.f32 0.0, %v1561
        %v1563 = vpop.f32.mrb[0].mxu0
        %1564 = vdwg.mxu0
        %v1565 = vadd.f32 %v1291, %v1407
        %v1566 = vadd.f32 %v1292, %v1412
        %v1567 = vadd.f32 %v1293, %v1417
        %v1568 = vadd.f32 %v1294, %v1422
        %v1569 = vadd.f32 %v1295, %v1427
        %v1570 = vadd.f32 %v1296, %v1432
        %v1571 = vadd.f32 %v1297, %v1437
        %v1572 = vadd.f32 %v1298, %v1442
        %v1573 = vadd.f32 %v1299, %v1447
        %v1574 = vadd.f32 %v1300, %v1452
        %v1575 = vadd.f32 %v1301, %v1457
        %v1576 = vadd.f32 %v1302, %v1462
        %v1577 = vadd.f32 %v1303, %v1467
        %v1578 = vadd.f32 %v1304, %v1472
        %v1579 = vadd.f32 %v1305, %v1477
        %v1580 = vadd.f32 %v1306, %v1482
        %v1581 = vadd.f32 %v1307, %v1487
        %v1582 = vadd.f32 %v1308, %v1492
        %v1583 = vadd.f32 %v1309, %v1497
        %v1584 = vadd.f32 %v1310, %v1502
        %v1585 = vadd.f32 %v1311, %v1507
        %v1586 = vadd.f32 %v1312, %v1512
        %v1587 = vadd.f32 %v1313, %v1517
        %v1588 = vadd.f32 %v1314, %v1522
        %v1589 = vadd.f32 %v1315, %v1527
        %v1590 = vadd.f32 %v1316, %v1532
        %v1591 = vadd.f32 %v1317, %v1537
        %v1592 = vadd.f32 %v1318, %v1542
        %v1593 = vadd.f32 %v1319, %v1547
        %v1594 = vadd.f32 %v1320, %v1552
        %v1595 = vadd.f32 %v1321, %v1557
        %v1596 = vadd.f32 %v1322, %v1562
        %v1600 = vrot.slane %v286, 1
        %v1601 = vrot.slane %v287, 1
        %v1602 = vsel %vm356, %v1600, %v1601
        %v1603 = vrot.slane %v288, 1
        %v1604 = vsel %vm356, %v1601, %v1603
        %s1607 = scalar_lea.vmem %s1, 512
        %v1608 = vld [vmem:[%s1607] sm:$0xff]
        %v1609 = vld [vmem:[%s1607 + $0x8] sm:$0xff]
        %v1610 = vld [vmem:[%s1607 + $0x10] sm:$0xff]
        %v1611 = vld [vmem:[%s1607 + $0x18] sm:$0xff]
        %v1612 = vld [vmem:[%s1607 + $0x20] sm:$0xff]
        %v1613 = vld [vmem:[%s1607 + $0x28] sm:$0xff]
        %v1614 = vld [vmem:[%s1607 + $0x30] sm:$0xff]
        %v1615 = vld [vmem:[%s1607 + $0x38] sm:$0xff]
        %v1616 = vld [vmem:[%s1607 + $0x40] sm:$0xff]
        %v1617 = vld [vmem:[%s1607 + $0x48] sm:$0xff]
        %v1618 = vld [vmem:[%s1607 + $0x50] sm:$0xff]
        %v1619 = vld [vmem:[%s1607 + $0x58] sm:$0xff]
        %v1620 = vld [vmem:[%s1607 + $0x60] sm:$0xff]
        %v1621 = vld [vmem:[%s1607 + $0x68] sm:$0xff]
        %v1622 = vld [vmem:[%s1607 + $0x70] sm:$0xff]
        %v1623 = vld [vmem:[%s1607 + $0x78] sm:$0xff]
        %1624 = vmatprep.subr.mxu0 0.0
        %1625 = vmatpush1.msra.mxu0 %v1608
        %1626 = vmatprep.subr.mxu0 0.0
        %1627 = vmatpush1.msra.mxu0 %v1609
        %1628 = vmatprep.subr.mxu0 0.0
        %1629 = vmatpush1.msra.mxu0 %v1610
        %1630 = vmatprep.subr.mxu0 0.0
        %1631 = vmatpush1.msra.mxu0 %v1611
        %1632 = vmatprep.subr.mxu0 0.0
        %1633 = vmatpush1.msra.mxu0 %v1612
        %1634 = vmatprep.subr.mxu0 0.0
        %1635 = vmatpush1.msra.mxu0 %v1613
        %1636 = vmatprep.subr.mxu0 0.0
        %1637 = vmatpush1.msra.mxu0 %v1614
        %1638 = vmatprep.subr.mxu0 0.0
        %1639 = vmatpush1.msra.mxu0 %v1615
        %1640 = vmatprep.subr.mxu0 0.0
        %1641 = vmatpush1.msra.mxu0 %v1616
        %1642 = vmatprep.subr.mxu0 0.0
        %1643 = vmatpush1.msra.mxu0 %v1617
        %1644 = vmatprep.subr.mxu0 0.0
        %1645 = vmatpush1.msra.mxu0 %v1618
        %1646 = vmatprep.subr.mxu0 0.0
        %1647 = vmatpush1.msra.mxu0 %v1619
        %1648 = vmatprep.subr.mxu0 0.0
        %1649 = vmatpush1.msra.mxu0 %v1620
        %1650 = vmatprep.subr.mxu0 0.0
        %1651 = vmatpush1.msra.mxu0 %v1621
        %1652 = vmatprep.subr.mxu0 0.0
        %1653 = vmatpush1.msra.mxu0 %v1622
        %1654 = vmatprep.subr.mxu0 0.0
        %1655 = vmatpush1.msra.mxu0 %v1623
        %1656 = vmatprep.subr.mxu0 0.0
        %1657 = vmatpush1.msra.mxu0 0.0
        %1658 = vmatprep.subr.mxu0 0.0
        %1659 = vmatpush1.msra.mxu0 0.0
        %1660 = vmatprep.subr.mxu0 0.0
        %1661 = vmatpush1.msra.mxu0 0.0
        %1662 = vmatprep.subr.mxu0 0.0
        %1663 = vmatpush1.msra.mxu0 0.0
        %1664 = vmatprep.subr.mxu0 0.0
        %1665 = vmatpush1.msra.mxu0 0.0
        %1666 = vmatprep.subr.mxu0 0.0
        %1667 = vmatpush1.msra.mxu0 0.0
        %1668 = vmatprep.subr.mxu0 0.0
        %1669 = vmatpush1.msra.mxu0 0.0
        %1670 = vmatprep.subr.mxu0 0.0
        %1671 = vmatpush1.msra.mxu0 0.0
        %1672 = vmatprep.subr.mxu0 0.0
        %1673 = vmatpush1.msra.mxu0 0.0
        %1674 = vmatprep.subr.mxu0 0.0
        %1675 = vmatpush1.msra.mxu0 0.0
        %1676 = vmatprep.subr.mxu0 0.0
        %1677 = vmatpush1.msra.mxu0 0.0
        %1678 = vmatprep.subr.mxu0 0.0
        %1679 = vmatpush1.msra.mxu0 0.0
        %1680 = vmatprep.subr.mxu0 0.0
        %1681 = vmatpush1.msra.mxu0 0.0
        %1682 = vmatprep.subr.mxu0 0.0
        %1683 = vmatpush1.msra.mxu0 0.0
        %1684 = vmatprep.subr.mxu0 0.0
        %1685 = vmatpush1.msra.mxu0 0.0
        %1686 = vmatprep.subr.mxu0 0.0
        %1687 = vmatpush1.msra.mxu0 0.0
        %1688 = vmatprep.mubr.f32.mxu0 0.0
        %1689 = vmatmul.mubr.f32.gmra.mrb[0].mxu0 %v364
        %v1690 = vpop.f32.mrb[0].mxu0
        %v1691 = vadd.f32 0.0, %v1690
        %v1692 = vpop.f32.mrb[0].mxu0
        %1693 = vmatprep.mubr.f32.mxu0 0.0
        %1694 = vmatmul.mubr.f32.gmra.mrb[0].mxu0 %v366
        %v1695 = vpop.f32.mrb[0].mxu0
        %v1696 = vadd.f32 0.0, %v1695
        %v1697 = vpop.f32.mrb[0].mxu0
        %1698 = vmatprep.mubr.f32.mxu0 0.0
        %1699 = vmatmul.mubr.f32.gmra.mrb[0].mxu0 %v369
        %v1700 = vpop.f32.mrb[0].mxu0
        %v1701 = vadd.f32 0.0, %v1700
        %v1702 = vpop.f32.mrb[0].mxu0
        %1703 = vmatprep.mubr.f32.mxu0 0.0
        %1704 = vmatmul.mubr.f32.gmra.mrb[0].mxu0 %v371
        %v1705 = vpop.f32.mrb[0].mxu0
        %v1706 = vadd.f32 0.0, %v1705
        %v1707 = vpop.f32.mrb[0].mxu0
        %1708 = vmatprep.mubr.f32.mxu0 0.0
        %1709 = vmatmul.mubr.f32.gmra.mrb[0].mxu0 %v374
        %v1710 = vpop.f32.mrb[0].mxu0
        %v1711 = vadd.f32 0.0, %v1710
        %v1712 = vpop.f32.mrb[0].mxu0
        %1713 = vmatprep.mubr.f32.mxu0 0.0
        %1714 = vmatmul.mubr.f32.gmra.mrb[0].mxu0 %v376
        %v1715 = vpop.f32.mrb[0].mxu0
        %v1716 = vadd.f32 0.0, %v1715
        %v1717 = vpop.f32.mrb[0].mxu0
        %1718 = vmatprep.mubr.f32.mxu0 0.0
        %1719 = vmatmul.mubr.f32.gmra.mrb[0].mxu0 %v379
        %v1720 = vpop.f32.mrb[0].mxu0
        %v1721 = vadd.f32 0.0, %v1720
        %v1722 = vpop.f32.mrb[0].mxu0
        %1723 = vmatprep.mubr.f32.mxu0 0.0
        %1724 = vmatmul.mubr.f32.gmra.mrb[0].mxu0 %v381
        %v1725 = vpop.f32.mrb[0].mxu0
        %v1726 = vadd.f32 0.0, %v1725
        %v1727 = vpop.f32.mrb[0].mxu0
        %1728 = vmatprep.mubr.f32.mxu0 0.0
        %1729 = vmatmul.mubr.f32.gmra.mrb[0].mxu0 %v384
        %v1730 = vpop.f32.mrb[0].mxu0
        %v1731 = vadd.f32 0.0, %v1730
        %v1732 = vpop.f32.mrb[0].mxu0
        %1733 = vmatprep.mubr.f32.mxu0 0.0
        %1734 = vmatmul.mubr.f32.gmra.mrb[0].mxu0 %v386
        %v1735 = vpop.f32.mrb[0].mxu0
        %v1736 = vadd.f32 0.0, %v1735
        %v1737 = vpop.f32.mrb[0].mxu0
        %1738 = vmatprep.mubr.f32.mxu0 0.0
        %1739 = vmatmul.mubr.f32.gmra.mrb[0].mxu0 %v389
        %v1740 = vpop.f32.mrb[0].mxu0
        %v1741 = vadd.f32 0.0, %v1740
        %v1742 = vpop.f32.mrb[0].mxu0
        %1743 = vmatprep.mubr.f32.mxu0 0.0
        %1744 = vmatmul.mubr.f32.gmra.mrb[0].mxu0 %v391
        %v1745 = vpop.f32.mrb[0].mxu0
        %v1746 = vadd.f32 0.0, %v1745
        %v1747 = vpop.f32.mrb[0].mxu0
        %1748 = vmatprep.mubr.f32.mxu0 0.0
        %1749 = vmatmul.mubr.f32.gmra.mrb[0].mxu0 %v394
        %v1750 = vpop.f32.mrb[0].mxu0
        %v1751 = vadd.f32 0.0, %v1750
        %v1752 = vpop.f32.mrb[0].mxu0
        %1753 = vmatprep.mubr.f32.mxu0 0.0
        %1754 = vmatmul.mubr.f32.gmra.mrb[0].mxu0 %v396
        %v1755 = vpop.f32.mrb[0].mxu0
        %v1756 = vadd.f32 0.0, %v1755
        %v1757 = vpop.f32.mrb[0].mxu0
        %1758 = vmatprep.mubr.f32.mxu0 0.0
        %1759 = vmatmul.mubr.f32.gmra.mrb[0].mxu0 %v399
        %v1760 = vpop.f32.mrb[0].mxu0
        %v1761 = vadd.f32 0.0, %v1760
        %v1762 = vpop.f32.mrb[0].mxu0
        %1763 = vmatprep.mubr.f32.mxu0 0.0
        %1764 = vmatmul.mubr.f32.gmra.mrb[0].mxu0 %v401
        %v1765 = vpop.f32.mrb[0].mxu0
        %v1766 = vadd.f32 0.0, %v1765
        %v1767 = vpop.f32.mrb[0].mxu0
        %1768 = vmatprep.mubr.f32.mxu0 0.0
        %1769 = vmatmul.mubr.f32.gmra.mrb[0].mxu0 %v404
        %v1770 = vpop.f32.mrb[0].mxu0
        %v1771 = vadd.f32 0.0, %v1770
        %v1772 = vpop.f32.mrb[0].mxu0
        %1773 = vmatprep.mubr.f32.mxu0 0.0
        %1774 = vmatmul.mubr.f32.gmra.mrb[0].mxu0 %v406
        %v1775 = vpop.f32.mrb[0].mxu0
        %v1776 = vadd.f32 0.0, %v1775
        %v1777 = vpop.f32.mrb[0].mxu0
        %1778 = vmatprep.mubr.f32.mxu0 0.0
        %1779 = vmatmul.mubr.f32.gmra.mrb[0].mxu0 %v409
        %v1780 = vpop.f32.mrb[0].mxu0
        %v1781 = vadd.f32 0.0, %v1780
        %v1782 = vpop.f32.mrb[0].mxu0
        %1783 = vmatprep.mubr.f32.mxu0 0.0
        %1784 = vmatmul.mubr.f32.gmra.mrb[0].mxu0 %v411
        %v1785 = vpop.f32.mrb[0].mxu0
        %v1786 = vadd.f32 0.0, %v1785
        %v1787 = vpop.f32.mrb[0].mxu0
        %1788 = vmatprep.mubr.f32.mxu0 0.0
        %1789 = vmatmul.mubr.f32.gmra.mrb[0].mxu0 %v414
        %v1790 = vpop.f32.mrb[0].mxu0
        %v1791 = vadd.f32 0.0, %v1790
        %v1792 = vpop.f32.mrb[0].mxu0
        %1793 = vmatprep.mubr.f32.mxu0 0.0
        %1794 = vmatmul.mubr.f32.gmra.mrb[0].mxu0 %v416
        %v1795 = vpop.f32.mrb[0].mxu0
        %v1796 = vadd.f32 0.0, %v1795
        %v1797 = vpop.f32.mrb[0].mxu0
        %1798 = vmatprep.mubr.f32.mxu0 0.0
        %1799 = vmatmul.mubr.f32.gmra.mrb[0].mxu0 %v419
        %v1800 = vpop.f32.mrb[0].mxu0
        %v1801 = vadd.f32 0.0, %v1800
        %v1802 = vpop.f32.mrb[0].mxu0
        %1803 = vmatprep.mubr.f32.mxu0 0.0
        %1804 = vmatmul.mubr.f32.gmra.mrb[0].mxu0 %v421
        %v1805 = vpop.f32.mrb[0].mxu0
        %v1806 = vadd.f32 0.0, %v1805
        %v1807 = vpop.f32.mrb[0].mxu0
        %1808 = vmatprep.mubr.f32.mxu0 0.0
        %1809 = vmatmul.mubr.f32.gmra.mrb[0].mxu0 %v424
        %v1810 = vpop.f32.mrb[0].mxu0
        %v1811 = vadd.f32 0.0, %v1810
        %v1812 = vpop.f32.mrb[0].mxu0
        %1813 = vmatprep.mubr.f32.mxu0 0.0
        %1814 = vmatmul.mubr.f32.gmra.mrb[0].mxu0 %v426
        %v1815 = vpop.f32.mrb[0].mxu0
        %v1816 = vadd.f32 0.0, %v1815
        %v1817 = vpop.f32.mrb[0].mxu0
        %1818 = vmatprep.mubr.f32.mxu0 0.0
        %1819 = vmatmul.mubr.f32.gmra.mrb[0].mxu0 %v429
        %v1820 = vpop.f32.mrb[0].mxu0
        %v1821 = vadd.f32 0.0, %v1820
        %v1822 = vpop.f32.mrb[0].mxu0
        %1823 = vmatprep.mubr.f32.mxu0 0.0
        %1824 = vmatmul.mubr.f32.gmra.mrb[0].mxu0 %v431
        %v1825 = vpop.f32.mrb[0].mxu0
        %v1826 = vadd.f32 0.0, %v1825
        %v1827 = vpop.f32.mrb[0].mxu0
        %1828 = vmatprep.mubr.f32.mxu0 0.0
        %1829 = vmatmul.mubr.f32.gmra.mrb[0].mxu0 %v434
        %v1830 = vpop.f32.mrb[0].mxu0
        %v1831 = vadd.f32 0.0, %v1830
        %v1832 = vpop.f32.mrb[0].mxu0
        %1833 = vmatprep.mubr.f32.mxu0 0.0
        %1834 = vmatmul.mubr.f32.gmra.mrb[0].mxu0 %v436
        %v1835 = vpop.f32.mrb[0].mxu0
        %v1836 = vadd.f32 0.0, %v1835
        %v1837 = vpop.f32.mrb[0].mxu0
        %1838 = vmatprep.mubr.f32.mxu0 0.0
        %1839 = vmatmul.mubr.f32.gmra.mrb[0].mxu0 %v1602
        %v1840 = vpop.f32.mrb[0].mxu0
        %v1841 = vadd.f32 0.0, %v1840
        %v1842 = vpop.f32.mrb[0].mxu0
        %1843 = vmatprep.mubr.f32.mxu0 0.0
        %1844 = vmatmul.mubr.f32.gmra.mrb[0].mxu0 %v1604
        %v1845 = vpop.f32.mrb[0].mxu0
        %v1846 = vadd.f32 0.0, %v1845
        %v1847 = vpop.f32.mrb[0].mxu0
        %1848 = vdwg.mxu0
        %v1849 = vadd.f32 %v1565, %v1691
        %v1850 = vadd.f32 %v1566, %v1696
        %v1851 = vadd.f32 %v1567, %v1701
        %v1852 = vadd.f32 %v1568, %v1706
        %v1853 = vadd.f32 %v1569, %v1711
        %v1854 = vadd.f32 %v1570, %v1716
        %v1855 = vadd.f32 %v1571, %v1721
        %v1856 = vadd.f32 %v1572, %v1726
        %v1857 = vadd.f32 %v1573, %v1731
        %v1858 = vadd.f32 %v1574, %v1736
        %v1859 = vadd.f32 %v1575, %v1741
        %v1860 = vadd.f32 %v1576, %v1746
        %v1861 = vadd.f32 %v1577, %v1751
        %v1862 = vadd.f32 %v1578, %v1756
        %v1863 = vadd.f32 %v1579, %v1761
        %v1864 = vadd.f32 %v1580, %v1766
        %v1865 = vadd.f32 %v1581, %v1771
        %v1866 = vadd.f32 %v1582, %v1776
        %v1867 = vadd.f32 %v1583, %v1781
        %v1868 = vadd.f32 %v1584, %v1786
        %v1869 = vadd.f32 %v1585, %v1791
        %v1870 = vadd.f32 %v1586, %v1796
        %v1871 = vadd.f32 %v1587, %v1801
        %v1872 = vadd.f32 %v1588, %v1806
        %v1873 = vadd.f32 %v1589, %v1811
        %v1874 = vadd.f32 %v1590, %v1816
        %v1875 = vadd.f32 %v1591, %v1821
        %v1876 = vadd.f32 %v1592, %v1826
        %v1877 = vadd.f32 %v1593, %v1831
        %v1878 = vadd.f32 %v1594, %v1836
        %v1879 = vadd.f32 %v1595, %v1841
        %v1880 = vadd.f32 %v1596, %v1846
        %v1881 = vrot.slane %v286, 2
        %v1882 = vrot.slane %v287, 2
        %v1883 = vsel %vm936, %v1881, %v1882
        %v1884 = vrot.slane %v288, 2
        %v1885 = vsel %vm936, %v1882, %v1884
        %s1888 = scalar_lea.vmem %s1, 640
        %v1889 = vld [vmem:[%s1888] sm:$0xff]
        %v1890 = vld [vmem:[%s1888 + $0x8] sm:$0xff]
        %v1891 = vld [vmem:[%s1888 + $0x10] sm:$0xff]
        %v1892 = vld [vmem:[%s1888 + $0x18] sm:$0xff]
        %v1893 = vld [vmem:[%s1888 + $0x20] sm:$0xff]
        %v1894 = vld [vmem:[%s1888 + $0x28] sm:$0xff]
        %v1895 = vld [vmem:[%s1888 + $0x30] sm:$0xff]
        %v1896 = vld [vmem:[%s1888 + $0x38] sm:$0xff]
        %v1897 = vld [vmem:[%s1888 + $0x40] sm:$0xff]
        %v1898 = vld [vmem:[%s1888 + $0x48] sm:$0xff]
        %v1899 = vld [vmem:[%s1888 + $0x50] sm:$0xff]
        %v1900 = vld [vmem:[%s1888 + $0x58] sm:$0xff]
        %v1901 = vld [vmem:[%s1888 + $0x60] sm:$0xff]
        %v1902 = vld [vmem:[%s1888 + $0x68] sm:$0xff]
        %v1903 = vld [vmem:[%s1888 + $0x70] sm:$0xff]
        %v1904 = vld [vmem:[%s1888 + $0x78] sm:$0xff]
        %1905 = vmatprep.subr.mxu0 0.0
        %1906 = vmatpush1.msra.mxu0 %v1889
        %1907 = vmatprep.subr.mxu0 0.0
        %1908 = vmatpush1.msra.mxu0 %v1890
        %1909 = vmatprep.subr.mxu0 0.0
        %1910 = vmatpush1.msra.mxu0 %v1891
        %1911 = vmatprep.subr.mxu0 0.0
        %1912 = vmatpush1.msra.mxu0 %v1892
        %1913 = vmatprep.subr.mxu0 0.0
        %1914 = vmatpush1.msra.mxu0 %v1893
        %1915 = vmatprep.subr.mxu0 0.0
        %1916 = vmatpush1.msra.mxu0 %v1894
        %1917 = vmatprep.subr.mxu0 0.0
        %1918 = vmatpush1.msra.mxu0 %v1895
        %1919 = vmatprep.subr.mxu0 0.0
        %1920 = vmatpush1.msra.mxu0 %v1896
        %1921 = vmatprep.subr.mxu0 0.0
        %1922 = vmatpush1.msra.mxu0 %v1897
        %1923 = vmatprep.subr.mxu0 0.0
        %1924 = vmatpush1.msra.mxu0 %v1898
        %1925 = vmatprep.subr.mxu0 0.0
        %1926 = vmatpush1.msra.mxu0 %v1899
        %1927 = vmatprep.subr.mxu0 0.0
        %1928 = vmatpush1.msra.mxu0 %v1900
        %1929 = vmatprep.subr.mxu0 0.0
        %1930 = vmatpush1.msra.mxu0 %v1901
        %1931 = vmatprep.subr.mxu0 0.0
        %1932 = vmatpush1.msra.mxu0 %v1902
        %1933 = vmatprep.subr.mxu0 0.0
        %1934 = vmatpush1.msra.mxu0 %v1903
        %1935 = vmatprep.subr.mxu0 0.0
        %1936 = vmatpush1.msra.mxu0 %v1904
        %1937 = vmatprep.subr.mxu0 0.0
        %1938 = vmatpush1.msra.mxu0 0.0
        %1939 = vmatprep.subr.mxu0 0.0
        %1940 = vmatpush1.msra.mxu0 0.0
        %1941 = vmatprep.subr.mxu0 0.0
        %1942 = vmatpush1.msra.mxu0 0.0
        %1943 = vmatprep.subr.mxu0 0.0
        %1944 = vmatpush1.msra.mxu0 0.0
        %1945 = vmatprep.subr.mxu0 0.0
        %1946 = vmatpush1.msra.mxu0 0.0
        %1947 = vmatprep.subr.mxu0 0.0
        %1948 = vmatpush1.msra.mxu0 0.0
        %1949 = vmatprep.subr.mxu0 0.0
        %1950 = vmatpush1.msra.mxu0 0.0
        %1951 = vmatprep.subr.mxu0 0.0
        %1952 = vmatpush1.msra.mxu0 0.0
        %1953 = vmatprep.subr.mxu0 0.0
        %1954 = vmatpush1.msra.mxu0 0.0
        %1955 = vmatprep.subr.mxu0 0.0
        %1956 = vmatpush1.msra.mxu0 0.0
        %1957 = vmatprep.subr.mxu0 0.0
        %1958 = vmatpush1.msra.mxu0 0.0
        %1959 = vmatprep.subr.mxu0 0.0
        %1960 = vmatpush1.msra.mxu0 0.0
        %1961 = vmatprep.subr.mxu0 0.0
        %1962 = vmatpush1.msra.mxu0 0.0
        %1963 = vmatprep.subr.mxu0 0.0
        %1964 = vmatpush1.msra.mxu0 0.0
        %1965 = vmatprep.subr.mxu0 0.0
        %1966 = vmatpush1.msra.mxu0 0.0
        %1967 = vmatprep.subr.mxu0 0.0
        %1968 = vmatpush1.msra.mxu0 0.0
        %1969 = vmatprep.mubr.f32.mxu0 0.0
        %1970 = vmatmul.mubr.f32.gmra.mrb[0].mxu0 %v944
        %v1971 = vpop.f32.mrb[0].mxu0
        %v1972 = vadd.f32 0.0, %v1971
        %v1973 = vpop.f32.mrb[0].mxu0
        %1974 = vmatprep.mubr.f32.mxu0 0.0
        %1975 = vmatmul.mubr.f32.gmra.mrb[0].mxu0 %v946
        %v1976 = vpop.f32.mrb[0].mxu0
        %v1977 = vadd.f32 0.0, %v1976
        %v1978 = vpop.f32.mrb[0].mxu0
        %1979 = vmatprep.mubr.f32.mxu0 0.0
        %1980 = vmatmul.mubr.f32.gmra.mrb[0].mxu0 %v949
        %v1981 = vpop.f32.mrb[0].mxu0
        %v1982 = vadd.f32 0.0, %v1981
        %v1983 = vpop.f32.mrb[0].mxu0
        %1984 = vmatprep.mubr.f32.mxu0 0.0
        %1985 = vmatmul.mubr.f32.gmra.mrb[0].mxu0 %v951
        %v1986 = vpop.f32.mrb[0].mxu0
        %v1987 = vadd.f32 0.0, %v1986
        %v1988 = vpop.f32.mrb[0].mxu0
        %1989 = vmatprep.mubr.f32.mxu0 0.0
        %1990 = vmatmul.mubr.f32.gmra.mrb[0].mxu0 %v954
        %v1991 = vpop.f32.mrb[0].mxu0
        %v1992 = vadd.f32 0.0, %v1991
        %v1993 = vpop.f32.mrb[0].mxu0
        %1994 = vmatprep.mubr.f32.mxu0 0.0
        %1995 = vmatmul.mubr.f32.gmra.mrb[0].mxu0 %v956
        %v1996 = vpop.f32.mrb[0].mxu0
        %v1997 = vadd.f32 0.0, %v1996
        %v1998 = vpop.f32.mrb[0].mxu0
        %1999 = vmatprep.mubr.f32.mxu0 0.0
        %2000 = vmatmul.mubr.f32.gmra.mrb[0].mxu0 %v959
        %v2001 = vpop.f32.mrb[0].mxu0
        %v2002 = vadd.f32 0.0, %v2001
        %v2003 = vpop.f32.mrb[0].mxu0
        %2004 = vmatprep.mubr.f32.mxu0 0.0
        %2005 = vmatmul.mubr.f32.gmra.mrb[0].mxu0 %v961
        %v2006 = vpop.f32.mrb[0].mxu0
        %v2007 = vadd.f32 0.0, %v2006
        %v2008 = vpop.f32.mrb[0].mxu0
        %2009 = vmatprep.mubr.f32.mxu0 0.0
        %2010 = vmatmul.mubr.f32.gmra.mrb[0].mxu0 %v964
        %v2011 = vpop.f32.mrb[0].mxu0
        %v2012 = vadd.f32 0.0, %v2011
        %v2013 = vpop.f32.mrb[0].mxu0
        %2014 = vmatprep.mubr.f32.mxu0 0.0
        %2015 = vmatmul.mubr.f32.gmra.mrb[0].mxu0 %v966
        %v2016 = vpop.f32.mrb[0].mxu0
        %v2017 = vadd.f32 0.0, %v2016
        %v2018 = vpop.f32.mrb[0].mxu0
        %2019 = vmatprep.mubr.f32.mxu0 0.0
        %2020 = vmatmul.mubr.f32.gmra.mrb[0].mxu0 %v969
        %v2021 = vpop.f32.mrb[0].mxu0
        %v2022 = vadd.f32 0.0, %v2021
        %v2023 = vpop.f32.mrb[0].mxu0
        %2024 = vmatprep.mubr.f32.mxu0 0.0
        %2025 = vmatmul.mubr.f32.gmra.mrb[0].mxu0 %v971
        %v2026 = vpop.f32.mrb[0].mxu0
        %v2027 = vadd.f32 0.0, %v2026
        %v2028 = vpop.f32.mrb[0].mxu0
        %2029 = vmatprep.mubr.f32.mxu0 0.0
        %2030 = vmatmul.mubr.f32.gmra.mrb[0].mxu0 %v974
        %v2031 = vpop.f32.mrb[0].mxu0
        %v2032 = vadd.f32 0.0, %v2031
        %v2033 = vpop.f32.mrb[0].mxu0
        %2034 = vmatprep.mubr.f32.mxu0 0.0
        %2035 = vmatmul.mubr.f32.gmra.mrb[0].mxu0 %v976
        %v2036 = vpop.f32.mrb[0].mxu0
        %v2037 = vadd.f32 0.0, %v2036
        %v2038 = vpop.f32.mrb[0].mxu0
        %2039 = vmatprep.mubr.f32.mxu0 0.0
        %2040 = vmatmul.mubr.f32.gmra.mrb[0].mxu0 %v979
        %v2041 = vpop.f32.mrb[0].mxu0
        %v2042 = vadd.f32 0.0, %v2041
        %v2043 = vpop.f32.mrb[0].mxu0
        %2044 = vmatprep.mubr.f32.mxu0 0.0
        %2045 = vmatmul.mubr.f32.gmra.mrb[0].mxu0 %v981
        %v2046 = vpop.f32.mrb[0].mxu0
        %v2047 = vadd.f32 0.0, %v2046
        %v2048 = vpop.f32.mrb[0].mxu0
        %2049 = vmatprep.mubr.f32.mxu0 0.0
        %2050 = vmatmul.mubr.f32.gmra.mrb[0].mxu0 %v984
        %v2051 = vpop.f32.mrb[0].mxu0
        %v2052 = vadd.f32 0.0, %v2051
        %v2053 = vpop.f32.mrb[0].mxu0
        %2054 = vmatprep.mubr.f32.mxu0 0.0
        %2055 = vmatmul.mubr.f32.gmra.mrb[0].mxu0 %v986
        %v2056 = vpop.f32.mrb[0].mxu0
        %v2057 = vadd.f32 0.0, %v2056
        %v2058 = vpop.f32.mrb[0].mxu0
        %2059 = vmatprep.mubr.f32.mxu0 0.0
        %2060 = vmatmul.mubr.f32.gmra.mrb[0].mxu0 %v989
        %v2061 = vpop.f32.mrb[0].mxu0
        %v2062 = vadd.f32 0.0, %v2061
        %v2063 = vpop.f32.mrb[0].mxu0
        %2064 = vmatprep.mubr.f32.mxu0 0.0
        %2065 = vmatmul.mubr.f32.gmra.mrb[0].mxu0 %v991
        %v2066 = vpop.f32.mrb[0].mxu0
        %v2067 = vadd.f32 0.0, %v2066
        %v2068 = vpop.f32.mrb[0].mxu0
        %2069 = vmatprep.mubr.f32.mxu0 0.0
        %2070 = vmatmul.mubr.f32.gmra.mrb[0].mxu0 %v994
        %v2071 = vpop.f32.mrb[0].mxu0
        %v2072 = vadd.f32 0.0, %v2071
        %v2073 = vpop.f32.mrb[0].mxu0
        %2074 = vmatprep.mubr.f32.mxu0 0.0
        %2075 = vmatmul.mubr.f32.gmra.mrb[0].mxu0 %v996
        %v2076 = vpop.f32.mrb[0].mxu0
        %v2077 = vadd.f32 0.0, %v2076
        %v2078 = vpop.f32.mrb[0].mxu0
        %2079 = vmatprep.mubr.f32.mxu0 0.0
        %2080 = vmatmul.mubr.f32.gmra.mrb[0].mxu0 %v999
        %v2081 = vpop.f32.mrb[0].mxu0
        %v2082 = vadd.f32 0.0, %v2081
        %v2083 = vpop.f32.mrb[0].mxu0
        %2084 = vmatprep.mubr.f32.mxu0 0.0
        %2085 = vmatmul.mubr.f32.gmra.mrb[0].mxu0 %v1001
        %v2086 = vpop.f32.mrb[0].mxu0
        %v2087 = vadd.f32 0.0, %v2086
        %v2088 = vpop.f32.mrb[0].mxu0
        %2089 = vmatprep.mubr.f32.mxu0 0.0
        %2090 = vmatmul.mubr.f32.gmra.mrb[0].mxu0 %v1004
        %v2091 = vpop.f32.mrb[0].mxu0
        %v2092 = vadd.f32 0.0, %v2091
        %v2093 = vpop.f32.mrb[0].mxu0
        %2094 = vmatprep.mubr.f32.mxu0 0.0
        %2095 = vmatmul.mubr.f32.gmra.mrb[0].mxu0 %v1006
        %v2096 = vpop.f32.mrb[0].mxu0
        %v2097 = vadd.f32 0.0, %v2096
        %v2098 = vpop.f32.mrb[0].mxu0
        %2099 = vmatprep.mubr.f32.mxu0 0.0
        %2100 = vmatmul.mubr.f32.gmra.mrb[0].mxu0 %v1009
        %v2101 = vpop.f32.mrb[0].mxu0
        %v2102 = vadd.f32 0.0, %v2101
        %v2103 = vpop.f32.mrb[0].mxu0
        %2104 = vmatprep.mubr.f32.mxu0 0.0
        %2105 = vmatmul.mubr.f32.gmra.mrb[0].mxu0 %v1011
        %v2106 = vpop.f32.mrb[0].mxu0
        %v2107 = vadd.f32 0.0, %v2106
        %v2108 = vpop.f32.mrb[0].mxu0
        %2109 = vmatprep.mubr.f32.mxu0 0.0
        %2110 = vmatmul.mubr.f32.gmra.mrb[0].mxu0 %v1014
        %v2111 = vpop.f32.mrb[0].mxu0
        %v2112 = vadd.f32 0.0, %v2111
        %v2113 = vpop.f32.mrb[0].mxu0
        %2114 = vmatprep.mubr.f32.mxu0 0.0
        %2115 = vmatmul.mubr.f32.gmra.mrb[0].mxu0 %v1016
        %v2116 = vpop.f32.mrb[0].mxu0
        %v2117 = vadd.f32 0.0, %v2116
        %v2118 = vpop.f32.mrb[0].mxu0
        %2119 = vmatprep.mubr.f32.mxu0 0.0
        %2120 = vmatmul.mubr.f32.gmra.mrb[0].mxu0 %v1883
        %v2121 = vpop.f32.mrb[0].mxu0
        %v2122 = vadd.f32 0.0, %v2121
        %v2123 = vpop.f32.mrb[0].mxu0
        %2124 = vmatprep.mubr.f32.mxu0 0.0
        %2125 = vmatmul.mubr.f32.gmra.mrb[0].mxu0 %v1885
        %v2126 = vpop.f32.mrb[0].mxu0
        %v2127 = vadd.f32 0.0, %v2126
        %v2128 = vpop.f32.mrb[0].mxu0
        %2129 = vdwg.mxu0
        %v2130 = vadd.f32 %v1849, %v1972
        %v2131 = vadd.f32 %v1850, %v1977
        %v2132 = vadd.f32 %v1851, %v1982
        %v2133 = vadd.f32 %v1852, %v1987
        %v2134 = vadd.f32 %v1853, %v1992
        %v2135 = vadd.f32 %v1854, %v1997
        %v2136 = vadd.f32 %v1855, %v2002
        %v2137 = vadd.f32 %v1856, %v2007
        %v2138 = vadd.f32 %v1857, %v2012
        %v2139 = vadd.f32 %v1858, %v2017
        %v2140 = vadd.f32 %v1859, %v2022
        %v2141 = vadd.f32 %v1860, %v2027
        %v2142 = vadd.f32 %v1861, %v2032
        %v2143 = vadd.f32 %v1862, %v2037
        %v2144 = vadd.f32 %v1863, %v2042
        %v2145 = vadd.f32 %v1864, %v2047
        %v2146 = vadd.f32 %v1865, %v2052
        %v2147 = vadd.f32 %v1866, %v2057
        %v2148 = vadd.f32 %v1867, %v2062
        %v2149 = vadd.f32 %v1868, %v2067
        %v2150 = vadd.f32 %v1869, %v2072
        %v2151 = vadd.f32 %v1870, %v2077
        %v2152 = vadd.f32 %v1871, %v2082
        %v2153 = vadd.f32 %v1872, %v2087
        %v2154 = vadd.f32 %v1873, %v2092
        %v2155 = vadd.f32 %v1874, %v2097
        %v2156 = vadd.f32 %v1875, %v2102
        %v2157 = vadd.f32 %v1876, %v2107
        %v2158 = vadd.f32 %v1877, %v2112
        %v2159 = vadd.f32 %v1878, %v2117
        %v2160 = vadd.f32 %v1879, %v2122
        %v2161 = vadd.f32 %v1880, %v2127
        %s2162 = scalar_lea.vmem %s1, 768
        %v2163 = vld [vmem:[%s2162] sm:$0xff]
        %v2164 = vld [vmem:[%s2162 + $0x8] sm:$0xff]
        %v2165 = vld [vmem:[%s2162 + $0x10] sm:$0xff]
        %v2166 = vld [vmem:[%s2162 + $0x18] sm:$0xff]
        %v2167 = vld [vmem:[%s2162 + $0x20] sm:$0xff]
        %v2168 = vld [vmem:[%s2162 + $0x28] sm:$0xff]
        %v2169 = vld [vmem:[%s2162 + $0x30] sm:$0xff]
        %v2170 = vld [vmem:[%s2162 + $0x38] sm:$0xff]
        %v2171 = vld [vmem:[%s2162 + $0x40] sm:$0xff]
        %v2172 = vld [vmem:[%s2162 + $0x48] sm:$0xff]
        %v2173 = vld [vmem:[%s2162 + $0x50] sm:$0xff]
        %v2174 = vld [vmem:[%s2162 + $0x58] sm:$0xff]
        %v2175 = vld [vmem:[%s2162 + $0x60] sm:$0xff]
        %v2176 = vld [vmem:[%s2162 + $0x68] sm:$0xff]
        %v2177 = vld [vmem:[%s2162 + $0x70] sm:$0xff]
        %v2178 = vld [vmem:[%s2162 + $0x78] sm:$0xff]
        %2179 = vmatprep.subr.mxu0 0.0
        %2180 = vmatpush1.msra.mxu0 %v2163
        %2181 = vmatprep.subr.mxu0 0.0
        %2182 = vmatpush1.msra.mxu0 %v2164
        %2183 = vmatprep.subr.mxu0 0.0
        %2184 = vmatpush1.msra.mxu0 %v2165
        %2185 = vmatprep.subr.mxu0 0.0
        %2186 = vmatpush1.msra.mxu0 %v2166
        %2187 = vmatprep.subr.mxu0 0.0
        %2188 = vmatpush1.msra.mxu0 %v2167
        %2189 = vmatprep.subr.mxu0 0.0
        %2190 = vmatpush1.msra.mxu0 %v2168
        %2191 = vmatprep.subr.mxu0 0.0
        %2192 = vmatpush1.msra.mxu0 %v2169
        %2193 = vmatprep.subr.mxu0 0.0
        %2194 = vmatpush1.msra.mxu0 %v2170
        %2195 = vmatprep.subr.mxu0 0.0
        %2196 = vmatpush1.msra.mxu0 %v2171
        %2197 = vmatprep.subr.mxu0 0.0
        %2198 = vmatpush1.msra.mxu0 %v2172
        %2199 = vmatprep.subr.mxu0 0.0
        %2200 = vmatpush1.msra.mxu0 %v2173
        %2201 = vmatprep.subr.mxu0 0.0
        %2202 = vmatpush1.msra.mxu0 %v2174
        %2203 = vmatprep.subr.mxu0 0.0
        %2204 = vmatpush1.msra.mxu0 %v2175
        %2205 = vmatprep.subr.mxu0 0.0
        %2206 = vmatpush1.msra.mxu0 %v2176
        %2207 = vmatprep.subr.mxu0 0.0
        %2208 = vmatpush1.msra.mxu0 %v2177
        %2209 = vmatprep.subr.mxu0 0.0
        %2210 = vmatpush1.msra.mxu0 %v2178
        %2211 = vmatprep.subr.mxu0 0.0
        %2212 = vmatpush1.msra.mxu0 0.0
        %2213 = vmatprep.subr.mxu0 0.0
        %2214 = vmatpush1.msra.mxu0 0.0
        %2215 = vmatprep.subr.mxu0 0.0
        %2216 = vmatpush1.msra.mxu0 0.0
        %2217 = vmatprep.subr.mxu0 0.0
        %2218 = vmatpush1.msra.mxu0 0.0
        %2219 = vmatprep.subr.mxu0 0.0
        %2220 = vmatpush1.msra.mxu0 0.0
        %2221 = vmatprep.subr.mxu0 0.0
        %2222 = vmatpush1.msra.mxu0 0.0
        %2223 = vmatprep.subr.mxu0 0.0
        %2224 = vmatpush1.msra.mxu0 0.0
        %2225 = vmatprep.subr.mxu0 0.0
        %2226 = vmatpush1.msra.mxu0 0.0
        %2227 = vmatprep.subr.mxu0 0.0
        %2228 = vmatpush1.msra.mxu0 0.0
        %2229 = vmatprep.subr.mxu0 0.0
        %2230 = vmatpush1.msra.mxu0 0.0
        %2231 = vmatprep.subr.mxu0 0.0
        %2232 = vmatpush1.msra.mxu0 0.0
        %2233 = vmatprep.subr.mxu0 0.0
        %2234 = vmatpush1.msra.mxu0 0.0
        %2235 = vmatprep.subr.mxu0 0.0
        %2236 = vmatpush1.msra.mxu0 0.0
        %2237 = vmatprep.subr.mxu0 0.0
        %2238 = vmatpush1.msra.mxu0 0.0
        %2239 = vmatprep.subr.mxu0 0.0
        %2240 = vmatpush1.msra.mxu0 0.0
        %2241 = vmatprep.subr.mxu0 0.0
        %2242 = vmatpush1.msra.mxu0 0.0
        %2243 = vmatprep.mubr.f32.mxu0 0.0
        %2244 = vmatmul.mubr.f32.gmra.mrb[0].mxu0 %v244
        %v2245 = vpop.f32.mrb[0].mxu0
        %v2246 = vadd.f32 0.0, %v2245
        %v2247 = vpop.f32.mrb[0].mxu0
        %2248 = vmatprep.mubr.f32.mxu0 0.0
        %2249 = vmatmul.mubr.f32.gmra.mrb[0].mxu0 %v245
        %v2250 = vpop.f32.mrb[0].mxu0
        %v2251 = vadd.f32 0.0, %v2250
        %v2252 = vpop.f32.mrb[0].mxu0
        %2253 = vmatprep.mubr.f32.mxu0 0.0
        %2254 = vmatmul.mubr.f32.gmra.mrb[0].mxu0 %v247
        %v2255 = vpop.f32.mrb[0].mxu0
        %v2256 = vadd.f32 0.0, %v2255
        %v2257 = vpop.f32.mrb[0].mxu0
        %2258 = vmatprep.mubr.f32.mxu0 0.0
        %2259 = vmatmul.mubr.f32.gmra.mrb[0].mxu0 %v248
        %v2260 = vpop.f32.mrb[0].mxu0
        %v2261 = vadd.f32 0.0, %v2260
        %v2262 = vpop.f32.mrb[0].mxu0
        %2263 = vmatprep.mubr.f32.mxu0 0.0
        %2264 = vmatmul.mubr.f32.gmra.mrb[0].mxu0 %v250
        %v2265 = vpop.f32.mrb[0].mxu0
        %v2266 = vadd.f32 0.0, %v2265
        %v2267 = vpop.f32.mrb[0].mxu0
        %2268 = vmatprep.mubr.f32.mxu0 0.0
        %2269 = vmatmul.mubr.f32.gmra.mrb[0].mxu0 %v251
        %v2270 = vpop.f32.mrb[0].mxu0
        %v2271 = vadd.f32 0.0, %v2270
        %v2272 = vpop.f32.mrb[0].mxu0
        %2273 = vmatprep.mubr.f32.mxu0 0.0
        %2274 = vmatmul.mubr.f32.gmra.mrb[0].mxu0 %v253
        %v2275 = vpop.f32.mrb[0].mxu0
        %v2276 = vadd.f32 0.0, %v2275
        %v2277 = vpop.f32.mrb[0].mxu0
        %2278 = vmatprep.mubr.f32.mxu0 0.0
        %2279 = vmatmul.mubr.f32.gmra.mrb[0].mxu0 %v254
        %v2280 = vpop.f32.mrb[0].mxu0
        %v2281 = vadd.f32 0.0, %v2280
        %v2282 = vpop.f32.mrb[0].mxu0
        %2283 = vmatprep.mubr.f32.mxu0 0.0
        %2284 = vmatmul.mubr.f32.gmra.mrb[0].mxu0 %v256
        %v2285 = vpop.f32.mrb[0].mxu0
        %v2286 = vadd.f32 0.0, %v2285
        %v2287 = vpop.f32.mrb[0].mxu0
        %2288 = vmatprep.mubr.f32.mxu0 0.0
        %2289 = vmatmul.mubr.f32.gmra.mrb[0].mxu0 %v257
        %v2290 = vpop.f32.mrb[0].mxu0
        %v2291 = vadd.f32 0.0, %v2290
        %v2292 = vpop.f32.mrb[0].mxu0
        %2293 = vmatprep.mubr.f32.mxu0 0.0
        %2294 = vmatmul.mubr.f32.gmra.mrb[0].mxu0 %v259
        %v2295 = vpop.f32.mrb[0].mxu0
        %v2296 = vadd.f32 0.0, %v2295
        %v2297 = vpop.f32.mrb[0].mxu0
        %2298 = vmatprep.mubr.f32.mxu0 0.0
        %2299 = vmatmul.mubr.f32.gmra.mrb[0].mxu0 %v260
        %v2300 = vpop.f32.mrb[0].mxu0
        %v2301 = vadd.f32 0.0, %v2300
        %v2302 = vpop.f32.mrb[0].mxu0
        %2303 = vmatprep.mubr.f32.mxu0 0.0
        %2304 = vmatmul.mubr.f32.gmra.mrb[0].mxu0 %v262
        %v2305 = vpop.f32.mrb[0].mxu0
        %v2306 = vadd.f32 0.0, %v2305
        %v2307 = vpop.f32.mrb[0].mxu0
        %2308 = vmatprep.mubr.f32.mxu0 0.0
        %2309 = vmatmul.mubr.f32.gmra.mrb[0].mxu0 %v263
        %v2310 = vpop.f32.mrb[0].mxu0
        %v2311 = vadd.f32 0.0, %v2310
        %v2312 = vpop.f32.mrb[0].mxu0
        %2313 = vmatprep.mubr.f32.mxu0 0.0
        %2314 = vmatmul.mubr.f32.gmra.mrb[0].mxu0 %v265
        %v2315 = vpop.f32.mrb[0].mxu0
        %v2316 = vadd.f32 0.0, %v2315
        %v2317 = vpop.f32.mrb[0].mxu0
        %2318 = vmatprep.mubr.f32.mxu0 0.0
        %2319 = vmatmul.mubr.f32.gmra.mrb[0].mxu0 %v266
        %v2320 = vpop.f32.mrb[0].mxu0
        %v2321 = vadd.f32 0.0, %v2320
        %v2322 = vpop.f32.mrb[0].mxu0
        %2323 = vmatprep.mubr.f32.mxu0 0.0
        %2324 = vmatmul.mubr.f32.gmra.mrb[0].mxu0 %v268
        %v2325 = vpop.f32.mrb[0].mxu0
        %v2326 = vadd.f32 0.0, %v2325
        %v2327 = vpop.f32.mrb[0].mxu0
        %2328 = vmatprep.mubr.f32.mxu0 0.0
        %2329 = vmatmul.mubr.f32.gmra.mrb[0].mxu0 %v269
        %v2330 = vpop.f32.mrb[0].mxu0
        %v2331 = vadd.f32 0.0, %v2330
        %v2332 = vpop.f32.mrb[0].mxu0
        %2333 = vmatprep.mubr.f32.mxu0 0.0
        %2334 = vmatmul.mubr.f32.gmra.mrb[0].mxu0 %v271
        %v2335 = vpop.f32.mrb[0].mxu0
        %v2336 = vadd.f32 0.0, %v2335
        %v2337 = vpop.f32.mrb[0].mxu0
        %2338 = vmatprep.mubr.f32.mxu0 0.0
        %2339 = vmatmul.mubr.f32.gmra.mrb[0].mxu0 %v272
        %v2340 = vpop.f32.mrb[0].mxu0
        %v2341 = vadd.f32 0.0, %v2340
        %v2342 = vpop.f32.mrb[0].mxu0
        %2343 = vmatprep.mubr.f32.mxu0 0.0
        %2344 = vmatmul.mubr.f32.gmra.mrb[0].mxu0 %v274
        %v2345 = vpop.f32.mrb[0].mxu0
        %v2346 = vadd.f32 0.0, %v2345
        %v2347 = vpop.f32.mrb[0].mxu0
        %2348 = vmatprep.mubr.f32.mxu0 0.0
        %2349 = vmatmul.mubr.f32.gmra.mrb[0].mxu0 %v275
        %v2350 = vpop.f32.mrb[0].mxu0
        %v2351 = vadd.f32 0.0, %v2350
        %v2352 = vpop.f32.mrb[0].mxu0
        %2353 = vmatprep.mubr.f32.mxu0 0.0
        %2354 = vmatmul.mubr.f32.gmra.mrb[0].mxu0 %v277
        %v2355 = vpop.f32.mrb[0].mxu0
        %v2356 = vadd.f32 0.0, %v2355
        %v2357 = vpop.f32.mrb[0].mxu0
        %2358 = vmatprep.mubr.f32.mxu0 0.0
        %2359 = vmatmul.mubr.f32.gmra.mrb[0].mxu0 %v278
        %v2360 = vpop.f32.mrb[0].mxu0
        %v2361 = vadd.f32 0.0, %v2360
        %v2362 = vpop.f32.mrb[0].mxu0
        %2363 = vmatprep.mubr.f32.mxu0 0.0
        %2364 = vmatmul.mubr.f32.gmra.mrb[0].mxu0 %v280
        %v2365 = vpop.f32.mrb[0].mxu0
        %v2366 = vadd.f32 0.0, %v2365
        %v2367 = vpop.f32.mrb[0].mxu0
        %2368 = vmatprep.mubr.f32.mxu0 0.0
        %2369 = vmatmul.mubr.f32.gmra.mrb[0].mxu0 %v281
        %v2370 = vpop.f32.mrb[0].mxu0
        %v2371 = vadd.f32 0.0, %v2370
        %v2372 = vpop.f32.mrb[0].mxu0
        %2373 = vmatprep.mubr.f32.mxu0 0.0
        %2374 = vmatmul.mubr.f32.gmra.mrb[0].mxu0 %v283
        %v2375 = vpop.f32.mrb[0].mxu0
        %v2376 = vadd.f32 0.0, %v2375
        %v2377 = vpop.f32.mrb[0].mxu0
        %2378 = vmatprep.mubr.f32.mxu0 0.0
        %2379 = vmatmul.mubr.f32.gmra.mrb[0].mxu0 %v284
        %v2380 = vpop.f32.mrb[0].mxu0
        %v2381 = vadd.f32 0.0, %v2380
        %v2382 = vpop.f32.mrb[0].mxu0
        %2383 = vmatprep.mubr.f32.mxu0 0.0
        %2384 = vmatmul.mubr.f32.gmra.mrb[0].mxu0 %v286
        %v2385 = vpop.f32.mrb[0].mxu0
        %v2386 = vadd.f32 0.0, %v2385
        %v2387 = vpop.f32.mrb[0].mxu0
        %2388 = vmatprep.mubr.f32.mxu0 0.0
        %2389 = vmatmul.mubr.f32.gmra.mrb[0].mxu0 %v287
        %v2390 = vpop.f32.mrb[0].mxu0
        %v2391 = vadd.f32 0.0, %v2390
        %v2392 = vpop.f32.mrb[0].mxu0
        %2393 = vmatprep.mubr.f32.mxu0 0.0
        %2394 = vmatmul.mubr.f32.gmra.mrb[0].mxu0 %v289
        %v2395 = vpop.f32.mrb[0].mxu0
        %v2396 = vadd.f32 0.0, %v2395
        %v2397 = vpop.f32.mrb[0].mxu0
        %2398 = vmatprep.mubr.f32.mxu0 0.0
        %2399 = vmatmul.mubr.f32.gmra.mrb[0].mxu0 %v290
        %v2400 = vpop.f32.mrb[0].mxu0
        %v2401 = vadd.f32 0.0, %v2400
        %v2402 = vpop.f32.mrb[0].mxu0
        %2403 = vdwg.mxu0
        %v2404 = vadd.f32 %v2130, %v2246
        %v2405 = vadd.f32 %v2131, %v2251
        %v2406 = vadd.f32 %v2132, %v2256
        %v2407 = vadd.f32 %v2133, %v2261
        %v2408 = vadd.f32 %v2134, %v2266
        %v2409 = vadd.f32 %v2135, %v2271
        %v2410 = vadd.f32 %v2136, %v2276
        %v2411 = vadd.f32 %v2137, %v2281
        %v2412 = vadd.f32 %v2138, %v2286
        %v2413 = vadd.f32 %v2139, %v2291
        %v2414 = vadd.f32 %v2140, %v2296
        %v2415 = vadd.f32 %v2141, %v2301
        %v2416 = vadd.f32 %v2142, %v2306
        %v2417 = vadd.f32 %v2143, %v2311
        %v2418 = vadd.f32 %v2144, %v2316
        %v2419 = vadd.f32 %v2145, %v2321
        %v2420 = vadd.f32 %v2146, %v2326
        %v2421 = vadd.f32 %v2147, %v2331
        %v2422 = vadd.f32 %v2148, %v2336
        %v2423 = vadd.f32 %v2149, %v2341
        %v2424 = vadd.f32 %v2150, %v2346
        %v2425 = vadd.f32 %v2151, %v2351
        %v2426 = vadd.f32 %v2152, %v2356
        %v2427 = vadd.f32 %v2153, %v2361
        %v2428 = vadd.f32 %v2154, %v2366
        %v2429 = vadd.f32 %v2155, %v2371
        %v2430 = vadd.f32 %v2156, %v2376
        %v2431 = vadd.f32 %v2157, %v2381
        %v2432 = vadd.f32 %v2158, %v2386
        %v2433 = vadd.f32 %v2159, %v2391
        %v2434 = vadd.f32 %v2160, %v2396
        %v2435 = vadd.f32 %v2161, %v2401
        %v2439 = vrot.slane %v289, 1
        %v2440 = vrot.slane %v290, 1
        %v2441 = vsel %vm356, %v2439, %v2440
        %v2442 = vrot.slane %v291, 1
        %v2443 = vsel %vm356, %v2440, %v2442
        %s2446 = scalar_lea.vmem %s1, 896
        %v2447 = vld [vmem:[%s2446] sm:$0xff]
        %v2448 = vld [vmem:[%s2446 + $0x8] sm:$0xff]
        %v2449 = vld [vmem:[%s2446 + $0x10] sm:$0xff]
        %v2450 = vld [vmem:[%s2446 + $0x18] sm:$0xff]
        %v2451 = vld [vmem:[%s2446 + $0x20] sm:$0xff]
        %v2452 = vld [vmem:[%s2446 + $0x28] sm:$0xff]
        %v2453 = vld [vmem:[%s2446 + $0x30] sm:$0xff]
        %v2454 = vld [vmem:[%s2446 + $0x38] sm:$0xff]
        %v2455 = vld [vmem:[%s2446 + $0x40] sm:$0xff]
        %v2456 = vld [vmem:[%s2446 + $0x48] sm:$0xff]
        %v2457 = vld [vmem:[%s2446 + $0x50] sm:$0xff]
        %v2458 = vld [vmem:[%s2446 + $0x58] sm:$0xff]
        %v2459 = vld [vmem:[%s2446 + $0x60] sm:$0xff]
        %v2460 = vld [vmem:[%s2446 + $0x68] sm:$0xff]
        %v2461 = vld [vmem:[%s2446 + $0x70] sm:$0xff]
        %v2462 = vld [vmem:[%s2446 + $0x78] sm:$0xff]
        %2463 = vmatprep.subr.mxu0 0.0
        %2464 = vmatpush1.msra.mxu0 %v2447
        %2465 = vmatprep.subr.mxu0 0.0
        %2466 = vmatpush1.msra.mxu0 %v2448
        %2467 = vmatprep.subr.mxu0 0.0
        %2468 = vmatpush1.msra.mxu0 %v2449
        %2469 = vmatprep.subr.mxu0 0.0
        %2470 = vmatpush1.msra.mxu0 %v2450
        %2471 = vmatprep.subr.mxu0 0.0
        %2472 = vmatpush1.msra.mxu0 %v2451
        %2473 = vmatprep.subr.mxu0 0.0
        %2474 = vmatpush1.msra.mxu0 %v2452
        %2475 = vmatprep.subr.mxu0 0.0
        %2476 = vmatpush1.msra.mxu0 %v2453
        %2477 = vmatprep.subr.mxu0 0.0
        %2478 = vmatpush1.msra.mxu0 %v2454
        %2479 = vmatprep.subr.mxu0 0.0
        %2480 = vmatpush1.msra.mxu0 %v2455
        %2481 = vmatprep.subr.mxu0 0.0
        %2482 = vmatpush1.msra.mxu0 %v2456
        %2483 = vmatprep.subr.mxu0 0.0
        %2484 = vmatpush1.msra.mxu0 %v2457
        %2485 = vmatprep.subr.mxu0 0.0
        %2486 = vmatpush1.msra.mxu0 %v2458
        %2487 = vmatprep.subr.mxu0 0.0
        %2488 = vmatpush1.msra.mxu0 %v2459
        %2489 = vmatprep.subr.mxu0 0.0
        %2490 = vmatpush1.msra.mxu0 %v2460
        %2491 = vmatprep.subr.mxu0 0.0
        %2492 = vmatpush1.msra.mxu0 %v2461
        %2493 = vmatprep.subr.mxu0 0.0
        %2494 = vmatpush1.msra.mxu0 %v2462
        %2495 = vmatprep.subr.mxu0 0.0
        %2496 = vmatpush1.msra.mxu0 0.0
        %2497 = vmatprep.subr.mxu0 0.0
        %2498 = vmatpush1.msra.mxu0 0.0
        %2499 = vmatprep.subr.mxu0 0.0
        %2500 = vmatpush1.msra.mxu0 0.0
        %2501 = vmatprep.subr.mxu0 0.0
        %2502 = vmatpush1.msra.mxu0 0.0
        %2503 = vmatprep.subr.mxu0 0.0
        %2504 = vmatpush1.msra.mxu0 0.0
        %2505 = vmatprep.subr.mxu0 0.0
        %2506 = vmatpush1.msra.mxu0 0.0
        %2507 = vmatprep.subr.mxu0 0.0
        %2508 = vmatpush1.msra.mxu0 0.0
        %2509 = vmatprep.subr.mxu0 0.0
        %2510 = vmatpush1.msra.mxu0 0.0
        %2511 = vmatprep.subr.mxu0 0.0
        %2512 = vmatpush1.msra.mxu0 0.0
        %2513 = vmatprep.subr.mxu0 0.0
        %2514 = vmatpush1.msra.mxu0 0.0
        %2515 = vmatprep.subr.mxu0 0.0
        %2516 = vmatpush1.msra.mxu0 0.0
        %2517 = vmatprep.subr.mxu0 0.0
        %2518 = vmatpush1.msra.mxu0 0.0
        %2519 = vmatprep.subr.mxu0 0.0
        %2520 = vmatpush1.msra.mxu0 0.0
        %2521 = vmatprep.subr.mxu0 0.0
        %2522 = vmatpush1.msra.mxu0 0.0
        %2523 = vmatprep.subr.mxu0 0.0
        %2524 = vmatpush1.msra.mxu0 0.0
        %2525 = vmatprep.subr.mxu0 0.0
        %2526 = vmatpush1.msra.mxu0 0.0
        %2527 = vmatprep.mubr.f32.mxu0 0.0
        %2528 = vmatmul.mubr.f32.gmra.mrb[0].mxu0 %v369
        %v2529 = vpop.f32.mrb[0].mxu0
        %v2530 = vadd.f32 0.0, %v2529
        %v2531 = vpop.f32.mrb[0].mxu0
        %2532 = vmatprep.mubr.f32.mxu0 0.0
        %2533 = vmatmul.mubr.f32.gmra.mrb[0].mxu0 %v371
        %v2534 = vpop.f32.mrb[0].mxu0
        %v2535 = vadd.f32 0.0, %v2534
        %v2536 = vpop.f32.mrb[0].mxu0
        %2537 = vmatprep.mubr.f32.mxu0 0.0
        %2538 = vmatmul.mubr.f32.gmra.mrb[0].mxu0 %v374
        %v2539 = vpop.f32.mrb[0].mxu0
        %v2540 = vadd.f32 0.0, %v2539
        %v2541 = vpop.f32.mrb[0].mxu0
        %2542 = vmatprep.mubr.f32.mxu0 0.0
        %2543 = vmatmul.mubr.f32.gmra.mrb[0].mxu0 %v376
        %v2544 = vpop.f32.mrb[0].mxu0
        %v2545 = vadd.f32 0.0, %v2544
        %v2546 = vpop.f32.mrb[0].mxu0
        %2547 = vmatprep.mubr.f32.mxu0 0.0
        %2548 = vmatmul.mubr.f32.gmra.mrb[0].mxu0 %v379
        %v2549 = vpop.f32.mrb[0].mxu0
        %v2550 = vadd.f32 0.0, %v2549
        %v2551 = vpop.f32.mrb[0].mxu0
        %2552 = vmatprep.mubr.f32.mxu0 0.0
        %2553 = vmatmul.mubr.f32.gmra.mrb[0].mxu0 %v381
        %v2554 = vpop.f32.mrb[0].mxu0
        %v2555 = vadd.f32 0.0, %v2554
        %v2556 = vpop.f32.mrb[0].mxu0
        %2557 = vmatprep.mubr.f32.mxu0 0.0
        %2558 = vmatmul.mubr.f32.gmra.mrb[0].mxu0 %v384
        %v2559 = vpop.f32.mrb[0].mxu0
        %v2560 = vadd.f32 0.0, %v2559
        %v2561 = vpop.f32.mrb[0].mxu0
        %2562 = vmatprep.mubr.f32.mxu0 0.0
        %2563 = vmatmul.mubr.f32.gmra.mrb[0].mxu0 %v386
        %v2564 = vpop.f32.mrb[0].mxu0
        %v2565 = vadd.f32 0.0, %v2564
        %v2566 = vpop.f32.mrb[0].mxu0
        %2567 = vmatprep.mubr.f32.mxu0 0.0
        %2568 = vmatmul.mubr.f32.gmra.mrb[0].mxu0 %v389
        %v2569 = vpop.f32.mrb[0].mxu0
        %v2570 = vadd.f32 0.0, %v2569
        %v2571 = vpop.f32.mrb[0].mxu0
        %2572 = vmatprep.mubr.f32.mxu0 0.0
        %2573 = vmatmul.mubr.f32.gmra.mrb[0].mxu0 %v391
        %v2574 = vpop.f32.mrb[0].mxu0
        %v2575 = vadd.f32 0.0, %v2574
        %v2576 = vpop.f32.mrb[0].mxu0
        %2577 = vmatprep.mubr.f32.mxu0 0.0
        %2578 = vmatmul.mubr.f32.gmra.mrb[0].mxu0 %v394
        %v2579 = vpop.f32.mrb[0].mxu0
        %v2580 = vadd.f32 0.0, %v2579
        %v2581 = vpop.f32.mrb[0].mxu0
        %2582 = vmatprep.mubr.f32.mxu0 0.0
        %2583 = vmatmul.mubr.f32.gmra.mrb[0].mxu0 %v396
        %v2584 = vpop.f32.mrb[0].mxu0
        %v2585 = vadd.f32 0.0, %v2584
        %v2586 = vpop.f32.mrb[0].mxu0
        %2587 = vmatprep.mubr.f32.mxu0 0.0
        %2588 = vmatmul.mubr.f32.gmra.mrb[0].mxu0 %v399
        %v2589 = vpop.f32.mrb[0].mxu0
        %v2590 = vadd.f32 0.0, %v2589
        %v2591 = vpop.f32.mrb[0].mxu0
        %2592 = vmatprep.mubr.f32.mxu0 0.0
        %2593 = vmatmul.mubr.f32.gmra.mrb[0].mxu0 %v401
        %v2594 = vpop.f32.mrb[0].mxu0
        %v2595 = vadd.f32 0.0, %v2594
        %v2596 = vpop.f32.mrb[0].mxu0
        %2597 = vmatprep.mubr.f32.mxu0 0.0
        %2598 = vmatmul.mubr.f32.gmra.mrb[0].mxu0 %v404
        %v2599 = vpop.f32.mrb[0].mxu0
        %v2600 = vadd.f32 0.0, %v2599
        %v2601 = vpop.f32.mrb[0].mxu0
        %2602 = vmatprep.mubr.f32.mxu0 0.0
        %2603 = vmatmul.mubr.f32.gmra.mrb[0].mxu0 %v406
        %v2604 = vpop.f32.mrb[0].mxu0
        %v2605 = vadd.f32 0.0, %v2604
        %v2606 = vpop.f32.mrb[0].mxu0
        %2607 = vmatprep.mubr.f32.mxu0 0.0
        %2608 = vmatmul.mubr.f32.gmra.mrb[0].mxu0 %v409
        %v2609 = vpop.f32.mrb[0].mxu0
        %v2610 = vadd.f32 0.0, %v2609
        %v2611 = vpop.f32.mrb[0].mxu0
        %2612 = vmatprep.mubr.f32.mxu0 0.0
        %2613 = vmatmul.mubr.f32.gmra.mrb[0].mxu0 %v411
        %v2614 = vpop.f32.mrb[0].mxu0
        %v2615 = vadd.f32 0.0, %v2614
        %v2616 = vpop.f32.mrb[0].mxu0
        %2617 = vmatprep.mubr.f32.mxu0 0.0
        %2618 = vmatmul.mubr.f32.gmra.mrb[0].mxu0 %v414
        %v2619 = vpop.f32.mrb[0].mxu0
        %v2620 = vadd.f32 0.0, %v2619
        %v2621 = vpop.f32.mrb[0].mxu0
        %2622 = vmatprep.mubr.f32.mxu0 0.0
        %2623 = vmatmul.mubr.f32.gmra.mrb[0].mxu0 %v416
        %v2624 = vpop.f32.mrb[0].mxu0
        %v2625 = vadd.f32 0.0, %v2624
        %v2626 = vpop.f32.mrb[0].mxu0
        %2627 = vmatprep.mubr.f32.mxu0 0.0
        %2628 = vmatmul.mubr.f32.gmra.mrb[0].mxu0 %v419
        %v2629 = vpop.f32.mrb[0].mxu0
        %v2630 = vadd.f32 0.0, %v2629
        %v2631 = vpop.f32.mrb[0].mxu0
        %2632 = vmatprep.mubr.f32.mxu0 0.0
        %2633 = vmatmul.mubr.f32.gmra.mrb[0].mxu0 %v421
        %v2634 = vpop.f32.mrb[0].mxu0
        %v2635 = vadd.f32 0.0, %v2634
        %v2636 = vpop.f32.mrb[0].mxu0
        %2637 = vmatprep.mubr.f32.mxu0 0.0
        %2638 = vmatmul.mubr.f32.gmra.mrb[0].mxu0 %v424
        %v2639 = vpop.f32.mrb[0].mxu0
        %v2640 = vadd.f32 0.0, %v2639
        %v2641 = vpop.f32.mrb[0].mxu0
        %2642 = vmatprep.mubr.f32.mxu0 0.0
        %2643 = vmatmul.mubr.f32.gmra.mrb[0].mxu0 %v426
        %v2644 = vpop.f32.mrb[0].mxu0
        %v2645 = vadd.f32 0.0, %v2644
        %v2646 = vpop.f32.mrb[0].mxu0
        %2647 = vmatprep.mubr.f32.mxu0 0.0
        %2648 = vmatmul.mubr.f32.gmra.mrb[0].mxu0 %v429
        %v2649 = vpop.f32.mrb[0].mxu0
        %v2650 = vadd.f32 0.0, %v2649
        %v2651 = vpop.f32.mrb[0].mxu0
        %2652 = vmatprep.mubr.f32.mxu0 0.0
        %2653 = vmatmul.mubr.f32.gmra.mrb[0].mxu0 %v431
        %v2654 = vpop.f32.mrb[0].mxu0
        %v2655 = vadd.f32 0.0, %v2654
        %v2656 = vpop.f32.mrb[0].mxu0
        %2657 = vmatprep.mubr.f32.mxu0 0.0
        %2658 = vmatmul.mubr.f32.gmra.mrb[0].mxu0 %v434
        %v2659 = vpop.f32.mrb[0].mxu0
        %v2660 = vadd.f32 0.0, %v2659
        %v2661 = vpop.f32.mrb[0].mxu0
        %2662 = vmatprep.mubr.f32.mxu0 0.0
        %2663 = vmatmul.mubr.f32.gmra.mrb[0].mxu0 %v436
        %v2664 = vpop.f32.mrb[0].mxu0
        %v2665 = vadd.f32 0.0, %v2664
        %v2666 = vpop.f32.mrb[0].mxu0
        %2667 = vmatprep.mubr.f32.mxu0 0.0
        %2668 = vmatmul.mubr.f32.gmra.mrb[0].mxu0 %v1602
        %v2669 = vpop.f32.mrb[0].mxu0
        %v2670 = vadd.f32 0.0, %v2669
        %v2671 = vpop.f32.mrb[0].mxu0
        %2672 = vmatprep.mubr.f32.mxu0 0.0
        %2673 = vmatmul.mubr.f32.gmra.mrb[0].mxu0 %v1604
        %v2674 = vpop.f32.mrb[0].mxu0
        %v2675 = vadd.f32 0.0, %v2674
        %v2676 = vpop.f32.mrb[0].mxu0
        %2677 = vmatprep.mubr.f32.mxu0 0.0
        %2678 = vmatmul.mubr.f32.gmra.mrb[0].mxu0 %v2441
        %v2679 = vpop.f32.mrb[0].mxu0
        %v2680 = vadd.f32 0.0, %v2679
        %v2681 = vpop.f32.mrb[0].mxu0
        %2682 = vmatprep.mubr.f32.mxu0 0.0
        %2683 = vmatmul.mubr.f32.gmra.mrb[0].mxu0 %v2443
        %v2684 = vpop.f32.mrb[0].mxu0
        %v2685 = vadd.f32 0.0, %v2684
        %v2686 = vpop.f32.mrb[0].mxu0
        %2687 = vdwg.mxu0
        %v2688 = vadd.f32 %v2404, %v2530
        %v2689 = vadd.f32 %v2405, %v2535
        %v2690 = vadd.f32 %v2406, %v2540
        %v2691 = vadd.f32 %v2407, %v2545
        %v2692 = vadd.f32 %v2408, %v2550
        %v2693 = vadd.f32 %v2409, %v2555
        %v2694 = vadd.f32 %v2410, %v2560
        %v2695 = vadd.f32 %v2411, %v2565
        %v2696 = vadd.f32 %v2412, %v2570
        %v2697 = vadd.f32 %v2413, %v2575
        %v2698 = vadd.f32 %v2414, %v2580
        %v2699 = vadd.f32 %v2415, %v2585
        %v2700 = vadd.f32 %v2416, %v2590
        %v2701 = vadd.f32 %v2417, %v2595
        %v2702 = vadd.f32 %v2418, %v2600
        %v2703 = vadd.f32 %v2419, %v2605
        %v2704 = vadd.f32 %v2420, %v2610
        %v2705 = vadd.f32 %v2421, %v2615
        %v2706 = vadd.f32 %v2422, %v2620
        %v2707 = vadd.f32 %v2423, %v2625
        %v2708 = vadd.f32 %v2424, %v2630
        %v2709 = vadd.f32 %v2425, %v2635
        %v2710 = vadd.f32 %v2426, %v2640
        %v2711 = vadd.f32 %v2427, %v2645
        %v2712 = vadd.f32 %v2428, %v2650
        %v2713 = vadd.f32 %v2429, %v2655
        %v2714 = vadd.f32 %v2430, %v2660
        %v2715 = vadd.f32 %v2431, %v2665
        %v2716 = vadd.f32 %v2432, %v2670
        %v2717 = vadd.f32 %v2433, %v2675
        %v2718 = vadd.f32 %v2434, %v2680
        %v2719 = vadd.f32 %v2435, %v2685
        %v2720 = vrot.slane %v289, 2
        %v2721 = vrot.slane %v290, 2
        %v2722 = vsel %vm936, %v2720, %v2721
        %v2723 = vrot.slane %v291, 2
        %v2724 = vsel %vm936, %v2721, %v2723
        %s2727 = scalar_lea.vmem %s1, 1024
        %v2728 = vld [vmem:[%s2727] sm:$0xff]
        %v2729 = vld [vmem:[%s2727 + $0x8] sm:$0xff]
        %v2730 = vld [vmem:[%s2727 + $0x10] sm:$0xff]
        %v2731 = vld [vmem:[%s2727 + $0x18] sm:$0xff]
        %v2732 = vld [vmem:[%s2727 + $0x20] sm:$0xff]
        %v2733 = vld [vmem:[%s2727 + $0x28] sm:$0xff]
        %v2734 = vld [vmem:[%s2727 + $0x30] sm:$0xff]
        %v2735 = vld [vmem:[%s2727 + $0x38] sm:$0xff]
        %v2736 = vld [vmem:[%s2727 + $0x40] sm:$0xff]
        %v2737 = vld [vmem:[%s2727 + $0x48] sm:$0xff]
        %v2738 = vld [vmem:[%s2727 + $0x50] sm:$0xff]
        %v2739 = vld [vmem:[%s2727 + $0x58] sm:$0xff]
        %v2740 = vld [vmem:[%s2727 + $0x60] sm:$0xff]
        %v2741 = vld [vmem:[%s2727 + $0x68] sm:$0xff]
        %v2742 = vld [vmem:[%s2727 + $0x70] sm:$0xff]
        %v2743 = vld [vmem:[%s2727 + $0x78] sm:$0xff]
        %2744 = vmatprep.subr.mxu0 0.0
        %2745 = vmatpush1.msra.mxu0 %v2728
        %2746 = vmatprep.subr.mxu0 0.0
        %2747 = vmatpush1.msra.mxu0 %v2729
        %2748 = vmatprep.subr.mxu0 0.0
        %2749 = vmatpush1.msra.mxu0 %v2730
        %2750 = vmatprep.subr.mxu0 0.0
        %2751 = vmatpush1.msra.mxu0 %v2731
        %2752 = vmatprep.subr.mxu0 0.0
        %2753 = vmatpush1.msra.mxu0 %v2732
        %2754 = vmatprep.subr.mxu0 0.0
        %2755 = vmatpush1.msra.mxu0 %v2733
        %2756 = vmatprep.subr.mxu0 0.0
        %2757 = vmatpush1.msra.mxu0 %v2734
        %2758 = vmatprep.subr.mxu0 0.0
        %2759 = vmatpush1.msra.mxu0 %v2735
        %2760 = vmatprep.subr.mxu0 0.0
        %2761 = vmatpush1.msra.mxu0 %v2736
        %2762 = vmatprep.subr.mxu0 0.0
        %2763 = vmatpush1.msra.mxu0 %v2737
        %2764 = vmatprep.subr.mxu0 0.0
        %2765 = vmatpush1.msra.mxu0 %v2738
        %2766 = vmatprep.subr.mxu0 0.0
        %2767 = vmatpush1.msra.mxu0 %v2739
        %2768 = vmatprep.subr.mxu0 0.0
        %2769 = vmatpush1.msra.mxu0 %v2740
        %2770 = vmatprep.subr.mxu0 0.0
        %2771 = vmatpush1.msra.mxu0 %v2741
        %2772 = vmatprep.subr.mxu0 0.0
        %2773 = vmatpush1.msra.mxu0 %v2742
        %2774 = vmatprep.subr.mxu0 0.0
        %2775 = vmatpush1.msra.mxu0 %v2743
        %2776 = vmatprep.subr.mxu0 0.0
        %2777 = vmatpush1.msra.mxu0 0.0
        %2778 = vmatprep.subr.mxu0 0.0
        %2779 = vmatpush1.msra.mxu0 0.0
        %2780 = vmatprep.subr.mxu0 0.0
        %2781 = vmatpush1.msra.mxu0 0.0
        %2782 = vmatprep.subr.mxu0 0.0
        %2783 = vmatpush1.msra.mxu0 0.0
        %2784 = vmatprep.subr.mxu0 0.0
        %2785 = vmatpush1.msra.mxu0 0.0
        %2786 = vmatprep.subr.mxu0 0.0
        %2787 = vmatpush1.msra.mxu0 0.0
        %2788 = vmatprep.subr.mxu0 0.0
        %2789 = vmatpush1.msra.mxu0 0.0
        %2790 = vmatprep.subr.mxu0 0.0
        %2791 = vmatpush1.msra.mxu0 0.0
        %2792 = vmatprep.subr.mxu0 0.0
        %2793 = vmatpush1.msra.mxu0 0.0
        %2794 = vmatprep.subr.mxu0 0.0
        %2795 = vmatpush1.msra.mxu0 0.0
        %2796 = vmatprep.subr.mxu0 0.0
        %2797 = vmatpush1.msra.mxu0 0.0
        %2798 = vmatprep.subr.mxu0 0.0
        %2799 = vmatpush1.msra.mxu0 0.0
        %2800 = vmatprep.subr.mxu0 0.0
        %2801 = vmatpush1.msra.mxu0 0.0
        %2802 = vmatprep.subr.mxu0 0.0
        %2803 = vmatpush1.msra.mxu0 0.0
        %2804 = vmatprep.subr.mxu0 0.0
        %2805 = vmatpush1.msra.mxu0 0.0
        %2806 = vmatprep.subr.mxu0 0.0
        %2807 = vmatpush1.msra.mxu0 0.0
        %2808 = vmatprep.mubr.f32.mxu0 0.0
        %2809 = vmatmul.mubr.f32.gmra.mrb[0].mxu0 %v949
        %v2810 = vpop.f32.mrb[0].mxu0
        %v2811 = vadd.f32 0.0, %v2810
        %v2812 = vpop.f32.mrb[0].mxu0
        %2813 = vmatprep.mubr.f32.mxu0 0.0
        %2814 = vmatmul.mubr.f32.gmra.mrb[0].mxu0 %v951
        %v2815 = vpop.f32.mrb[0].mxu0
        %v2816 = vadd.f32 0.0, %v2815
        %v2817 = vpop.f32.mrb[0].mxu0
        %2818 = vmatprep.mubr.f32.mxu0 0.0
        %2819 = vmatmul.mubr.f32.gmra.mrb[0].mxu0 %v954
        %v2820 = vpop.f32.mrb[0].mxu0
        %v2821 = vadd.f32 0.0, %v2820
        %v2822 = vpop.f32.mrb[0].mxu0
        %2823 = vmatprep.mubr.f32.mxu0 0.0
        %2824 = vmatmul.mubr.f32.gmra.mrb[0].mxu0 %v956
        %v2825 = vpop.f32.mrb[0].mxu0
        %v2826 = vadd.f32 0.0, %v2825
        %v2827 = vpop.f32.mrb[0].mxu0
        %2828 = vmatprep.mubr.f32.mxu0 0.0
        %2829 = vmatmul.mubr.f32.gmra.mrb[0].mxu0 %v959
        %v2830 = vpop.f32.mrb[0].mxu0
        %v2831 = vadd.f32 0.0, %v2830
        %v2832 = vpop.f32.mrb[0].mxu0
        %2833 = vmatprep.mubr.f32.mxu0 0.0
        %2834 = vmatmul.mubr.f32.gmra.mrb[0].mxu0 %v961
        %v2835 = vpop.f32.mrb[0].mxu0
        %v2836 = vadd.f32 0.0, %v2835
        %v2837 = vpop.f32.mrb[0].mxu0
        %2838 = vmatprep.mubr.f32.mxu0 0.0
        %2839 = vmatmul.mubr.f32.gmra.mrb[0].mxu0 %v964
        %v2840 = vpop.f32.mrb[0].mxu0
        %v2841 = vadd.f32 0.0, %v2840
        %v2842 = vpop.f32.mrb[0].mxu0
        %2843 = vmatprep.mubr.f32.mxu0 0.0
        %2844 = vmatmul.mubr.f32.gmra.mrb[0].mxu0 %v966
        %v2845 = vpop.f32.mrb[0].mxu0
        %v2846 = vadd.f32 0.0, %v2845
        %v2847 = vpop.f32.mrb[0].mxu0
        %2848 = vmatprep.mubr.f32.mxu0 0.0
        %2849 = vmatmul.mubr.f32.gmra.mrb[0].mxu0 %v969
        %v2850 = vpop.f32.mrb[0].mxu0
        %v2851 = vadd.f32 0.0, %v2850
        %v2852 = vpop.f32.mrb[0].mxu0
        %2853 = vmatprep.mubr.f32.mxu0 0.0
        %2854 = vmatmul.mubr.f32.gmra.mrb[0].mxu0 %v971
        %v2855 = vpop.f32.mrb[0].mxu0
        %v2856 = vadd.f32 0.0, %v2855
        %v2857 = vpop.f32.mrb[0].mxu0
        %2858 = vmatprep.mubr.f32.mxu0 0.0
        %2859 = vmatmul.mubr.f32.gmra.mrb[0].mxu0 %v974
        %v2860 = vpop.f32.mrb[0].mxu0
        %v2861 = vadd.f32 0.0, %v2860
        %v2862 = vpop.f32.mrb[0].mxu0
        %2863 = vmatprep.mubr.f32.mxu0 0.0
        %2864 = vmatmul.mubr.f32.gmra.mrb[0].mxu0 %v976
        %v2865 = vpop.f32.mrb[0].mxu0
        %v2866 = vadd.f32 0.0, %v2865
        %v2867 = vpop.f32.mrb[0].mxu0
        %2868 = vmatprep.mubr.f32.mxu0 0.0
        %2869 = vmatmul.mubr.f32.gmra.mrb[0].mxu0 %v979
        %v2870 = vpop.f32.mrb[0].mxu0
        %v2871 = vadd.f32 0.0, %v2870
        %v2872 = vpop.f32.mrb[0].mxu0
        %2873 = vmatprep.mubr.f32.mxu0 0.0
        %2874 = vmatmul.mubr.f32.gmra.mrb[0].mxu0 %v981
        %v2875 = vpop.f32.mrb[0].mxu0
        %v2876 = vadd.f32 0.0, %v2875
        %v2877 = vpop.f32.mrb[0].mxu0
        %2878 = vmatprep.mubr.f32.mxu0 0.0
        %2879 = vmatmul.mubr.f32.gmra.mrb[0].mxu0 %v984
        %v2880 = vpop.f32.mrb[0].mxu0
        %v2881 = vadd.f32 0.0, %v2880
        %v2882 = vpop.f32.mrb[0].mxu0
        %2883 = vmatprep.mubr.f32.mxu0 0.0
        %2884 = vmatmul.mubr.f32.gmra.mrb[0].mxu0 %v986
        %v2885 = vpop.f32.mrb[0].mxu0
        %v2886 = vadd.f32 0.0, %v2885
        %v2887 = vpop.f32.mrb[0].mxu0
        %2888 = vmatprep.mubr.f32.mxu0 0.0
        %2889 = vmatmul.mubr.f32.gmra.mrb[0].mxu0 %v989
        %v2890 = vpop.f32.mrb[0].mxu0
        %v2891 = vadd.f32 0.0, %v2890
        %v2892 = vpop.f32.mrb[0].mxu0
        %2893 = vmatprep.mubr.f32.mxu0 0.0
        %2894 = vmatmul.mubr.f32.gmra.mrb[0].mxu0 %v991
        %v2895 = vpop.f32.mrb[0].mxu0
        %v2896 = vadd.f32 0.0, %v2895
        %v2897 = vpop.f32.mrb[0].mxu0
        %2898 = vmatprep.mubr.f32.mxu0 0.0
        %2899 = vmatmul.mubr.f32.gmra.mrb[0].mxu0 %v994
        %v2900 = vpop.f32.mrb[0].mxu0
        %v2901 = vadd.f32 0.0, %v2900
        %v2902 = vpop.f32.mrb[0].mxu0
        %2903 = vmatprep.mubr.f32.mxu0 0.0
        %2904 = vmatmul.mubr.f32.gmra.mrb[0].mxu0 %v996
        %v2905 = vpop.f32.mrb[0].mxu0
        %v2906 = vadd.f32 0.0, %v2905
        %v2907 = vpop.f32.mrb[0].mxu0
        %2908 = vmatprep.mubr.f32.mxu0 0.0
        %2909 = vmatmul.mubr.f32.gmra.mrb[0].mxu0 %v999
        %v2910 = vpop.f32.mrb[0].mxu0
        %v2911 = vadd.f32 0.0, %v2910
        %v2912 = vpop.f32.mrb[0].mxu0
        %2913 = vmatprep.mubr.f32.mxu0 0.0
        %2914 = vmatmul.mubr.f32.gmra.mrb[0].mxu0 %v1001
        %v2915 = vpop.f32.mrb[0].mxu0
        %v2916 = vadd.f32 0.0, %v2915
        %v2917 = vpop.f32.mrb[0].mxu0
        %2918 = vmatprep.mubr.f32.mxu0 0.0
        %2919 = vmatmul.mubr.f32.gmra.mrb[0].mxu0 %v1004
        %v2920 = vpop.f32.mrb[0].mxu0
        %v2921 = vadd.f32 0.0, %v2920
        %v2922 = vpop.f32.mrb[0].mxu0
        %2923 = vmatprep.mubr.f32.mxu0 0.0
        %2924 = vmatmul.mubr.f32.gmra.mrb[0].mxu0 %v1006
        %v2925 = vpop.f32.mrb[0].mxu0
        %v2926 = vadd.f32 0.0, %v2925
        %v2927 = vpop.f32.mrb[0].mxu0
        %2928 = vmatprep.mubr.f32.mxu0 0.0
        %2929 = vmatmul.mubr.f32.gmra.mrb[0].mxu0 %v1009
        %v2930 = vpop.f32.mrb[0].mxu0
        %v2931 = vadd.f32 0.0, %v2930
        %v2932 = vpop.f32.mrb[0].mxu0
        %2933 = vmatprep.mubr.f32.mxu0 0.0
        %2934 = vmatmul.mubr.f32.gmra.mrb[0].mxu0 %v1011
        %v2935 = vpop.f32.mrb[0].mxu0
        %v2936 = vadd.f32 0.0, %v2935
        %v2937 = vpop.f32.mrb[0].mxu0
        %2938 = vmatprep.mubr.f32.mxu0 0.0
        %2939 = vmatmul.mubr.f32.gmra.mrb[0].mxu0 %v1014
        %v2940 = vpop.f32.mrb[0].mxu0
        %v2941 = vadd.f32 0.0, %v2940
        %v2942 = vpop.f32.mrb[0].mxu0
        %2943 = vmatprep.mubr.f32.mxu0 0.0
        %2944 = vmatmul.mubr.f32.gmra.mrb[0].mxu0 %v1016
        %v2945 = vpop.f32.mrb[0].mxu0
        %v2946 = vadd.f32 0.0, %v2945
        %v2947 = vpop.f32.mrb[0].mxu0
        %2948 = vmatprep.mubr.f32.mxu0 0.0
        %2949 = vmatmul.mubr.f32.gmra.mrb[0].mxu0 %v1883
        %v2950 = vpop.f32.mrb[0].mxu0
        %v2951 = vadd.f32 0.0, %v2950
        %v2952 = vpop.f32.mrb[0].mxu0
        %2953 = vmatprep.mubr.f32.mxu0 0.0
        %2954 = vmatmul.mubr.f32.gmra.mrb[0].mxu0 %v1885
        %v2955 = vpop.f32.mrb[0].mxu0
        %v2956 = vadd.f32 0.0, %v2955
        %v2957 = vpop.f32.mrb[0].mxu0
        %2958 = vmatprep.mubr.f32.mxu0 0.0
        %2959 = vmatmul.mubr.f32.gmra.mrb[0].mxu0 %v2722
        %v2960 = vpop.f32.mrb[0].mxu0
        %v2961 = vadd.f32 0.0, %v2960
        %v2962 = vpop.f32.mrb[0].mxu0
        %2963 = vmatprep.mubr.f32.mxu0 0.0
        %2964 = vmatmul.mubr.f32.gmra.mrb[0].mxu0 %v2724
        %v2965 = vpop.f32.mrb[0].mxu0
        %v2966 = vadd.f32 0.0, %v2965
        %v2967 = vpop.f32.mrb[0].mxu0
        %2968 = vdwg.mxu0
        %v2969 = vadd.f32 %v2688, %v2811
        %v2970 = vadd.f32 %v2689, %v2816
        %v2971 = vadd.f32 %v2690, %v2821
        %v2972 = vadd.f32 %v2691, %v2826
        %v2973 = vadd.f32 %v2692, %v2831
        %v2974 = vadd.f32 %v2693, %v2836
        %v2975 = vadd.f32 %v2694, %v2841
        %v2976 = vadd.f32 %v2695, %v2846
        %v2977 = vadd.f32 %v2696, %v2851
        %v2978 = vadd.f32 %v2697, %v2856
        %v2979 = vadd.f32 %v2698, %v2861
        %v2980 = vadd.f32 %v2699, %v2866
        %v2981 = vadd.f32 %v2700, %v2871
        %v2982 = vadd.f32 %v2701, %v2876
        %v2983 = vadd.f32 %v2702, %v2881
        %v2984 = vadd.f32 %v2703, %v2886
        %v2985 = vadd.f32 %v2704, %v2891
        %v2986 = vadd.f32 %v2705, %v2896
        %v2987 = vadd.f32 %v2706, %v2901
        %v2988 = vadd.f32 %v2707, %v2906
        %v2989 = vadd.f32 %v2708, %v2911
        %v2990 = vadd.f32 %v2709, %v2916
        %v2991 = vadd.f32 %v2710, %v2921
        %v2992 = vadd.f32 %v2711, %v2926
        %v2993 = vadd.f32 %v2712, %v2931
        %v2994 = vadd.f32 %v2713, %v2936
        %v2995 = vadd.f32 %v2714, %v2941
        %v2996 = vadd.f32 %v2715, %v2946
        %v2997 = vadd.f32 %v2716, %v2951
        %v2998 = vadd.f32 %v2717, %v2956
        %v2999 = vadd.f32 %v2718, %v2961
        %v3000 = vadd.f32 %v2719, %v2966
        %v3001 = vld [vmem:[%s2] sm:$0x1]
        %v3003 = vlaneseq
        %v3004 = vshrl.u32 %v3003, 7
        %v3005 = vsub.s32 0, %v3004
        %v3006 = vrot.slane %v3001, %v3005
        %v3008 = vadd.f32 %v2969, %v3006
        %v3009 = vadd.f32 %v2970, %v3006
        %v3010 = vadd.f32 %v2971, %v3006
        %v3011 = vadd.f32 %v2972, %v3006
        %v3012 = vadd.f32 %v2973, %v3006
        %v3013 = vadd.f32 %v2974, %v3006
        %v3014 = vadd.f32 %v2975, %v3006
        %v3015 = vadd.f32 %v2976, %v3006
        %v3016 = vadd.f32 %v2977, %v3006
        %v3017 = vadd.f32 %v2978, %v3006
        %v3018 = vadd.f32 %v2979, %v3006
        %v3019 = vadd.f32 %v2980, %v3006
        %v3020 = vadd.f32 %v2981, %v3006
        %v3021 = vadd.f32 %v2982, %v3006
        %v3022 = vadd.f32 %v2983, %v3006
        %v3023 = vadd.f32 %v2984, %v3006
        %v3024 = vadd.f32 %v2985, %v3006
        %v3025 = vadd.f32 %v2986, %v3006
        %v3026 = vadd.f32 %v2987, %v3006
        %v3027 = vadd.f32 %v2988, %v3006
        %v3028 = vadd.f32 %v2989, %v3006
        %v3029 = vadd.f32 %v2990, %v3006
        %v3030 = vadd.f32 %v2991, %v3006
        %v3031 = vadd.f32 %v2992, %v3006
        %v3032 = vadd.f32 %v2993, %v3006
        %v3033 = vadd.f32 %v2994, %v3006
        %v3034 = vadd.f32 %v2995, %v3006
        %v3035 = vadd.f32 %v2996, %v3006
        %v3036 = vadd.f32 %v2997, %v3006
        %v3037 = vadd.f32 %v2998, %v3006
        %v3038 = vadd.f32 %v2999, %v3006
        %v3039 = vadd.f32 %v3000, %v3006
        %v3040 = vmax.f32 %v3008, 0.0
        %v3041 = vmax.f32 %v3009, 0.0
        %v3042 = vmax.f32 %v3010, 0.0
        %v3043 = vmax.f32 %v3011, 0.0
        %v3044 = vmax.f32 %v3012, 0.0
        %v3045 = vmax.f32 %v3013, 0.0
        %v3046 = vmax.f32 %v3014, 0.0
        %v3047 = vmax.f32 %v3015, 0.0
        %v3048 = vmax.f32 %v3016, 0.0
        %v3049 = vmax.f32 %v3017, 0.0
        %v3050 = vmax.f32 %v3018, 0.0
        %v3051 = vmax.f32 %v3019, 0.0
        %v3052 = vmax.f32 %v3020, 0.0
        %v3053 = vmax.f32 %v3021, 0.0
        %v3054 = vmax.f32 %v3022, 0.0
        %v3055 = vmax.f32 %v3023, 0.0
        %v3056 = vmax.f32 %v3024, 0.0
        %v3057 = vmax.f32 %v3025, 0.0
        %v3058 = vmax.f32 %v3026, 0.0
        %v3059 = vmax.f32 %v3027, 0.0
        %v3060 = vmax.f32 %v3028, 0.0
        %v3061 = vmax.f32 %v3029, 0.0
        %v3062 = vmax.f32 %v3030, 0.0
        %v3063 = vmax.f32 %v3031, 0.0
        %v3064 = vmax.f32 %v3032, 0.0
        %v3065 = vmax.f32 %v3033, 0.0
        %v3066 = vmax.f32 %v3034, 0.0
        %v3067 = vmax.f32 %v3035, 0.0
        %v3068 = vmax.f32 %v3036, 0.0
        %v3069 = vmax.f32 %v3037, 0.0
        %v3070 = vmax.f32 %v3038, 0.0
        %v3071 = vmax.f32 %v3039, 0.0
        %3072 = vst [vmem:[#allocation2] sm:$0xff] 0.0
        %3073 = vst [vmem:[#allocation2 + $0x8] sm:$0xff] 0.0
        %3074 = vst [vmem:[#allocation2 + $0x10] sm:$0x3] 0.0
        %3075 = vst [vmem:[#allocation2 + $0x18] sm:$0xff] 0.0
        %3076 = vst [vmem:[#allocation2 + $0x20] sm:$0xff] 0.0
        %3077 = vst [vmem:[#allocation2 + $0x28] sm:$0x3] 0.0
        %3078 = vst [vmem:[#allocation2 + $0x30] sm:$0xff] 0.0
        %3079 = vst [vmem:[#allocation2 + $0x38] sm:$0xff] 0.0
        %3080 = vst [vmem:[#allocation2 + $0x40] sm:$0x3] 0.0
        %3081 = vst [vmem:[#allocation2 + $0x48] sm:$0xff] 0.0
        %3082 = vst [vmem:[#allocation2 + $0x50] sm:$0xff] 0.0
        %3083 = vst [vmem:[#allocation2 + $0x58] sm:$0x3] 0.0
        %3084 = vst [vmem:[#allocation2 + $0x60] sm:$0xff] 0.0
        %3085 = vst [vmem:[#allocation2 + $0x68] sm:$0xff] 0.0
        %3086 = vst [vmem:[#allocation2 + $0x70] sm:$0x3] 0.0
        %3087 = vst [vmem:[#allocation2 + $0x78] sm:$0xff] 0.0
        %3088 = vst [vmem:[#allocation2 + $0x80] sm:$0xff] 0.0
        %3089 = vst [vmem:[#allocation2 + $0x88] sm:$0x3] 0.0
        %3090 = vst [vmem:[#allocation2 + $0x90] sm:$0xff] 0.0
        %3091 = vst [vmem:[#allocation2 + $0x98] sm:$0xff] 0.0
        %3092 = vst [vmem:[#allocation2 + $0xa0] sm:$0x3] 0.0
        %3093 = vst [vmem:[#allocation2 + $0xa8] sm:$0xff] 0.0
        %3094 = vst [vmem:[#allocation2 + $0xb0] sm:$0xff] 0.0
        %3095 = vst [vmem:[#allocation2 + $0xb8] sm:$0x3] 0.0
        %3096 = vst [vmem:[#allocation2 + $0xc0] sm:$0xff] 0.0
        %3097 = vst [vmem:[#allocation2 + $0xc8] sm:$0xff] 0.0
        %3098 = vst [vmem:[#allocation2 + $0xd0] sm:$0x3] 0.0
        %3099 = vst [vmem:[#allocation2 + $0xd8] sm:$0xff] 0.0
        %3100 = vst [vmem:[#allocation2 + $0xe0] sm:$0xff] 0.0
        %3101 = vst [vmem:[#allocation2 + $0xe8] sm:$0x3] 0.0
        %3102 = vst [vmem:[#allocation2 + $0xf0] sm:$0xff] 0.0
        %3103 = vst [vmem:[#allocation2 + $0xf8] sm:$0xff] 0.0
        %3104 = vst [vmem:[#allocation2 + $0x100] sm:$0x3] 0.0
        %3105 = vst [vmem:[#allocation2 + $0x108] sm:$0xff] 0.0
        %3106 = vst [vmem:[#allocation2 + $0x110] sm:$0xff] 0.0
        %3107 = vst [vmem:[#allocation2 + $0x118] sm:$0x3] 0.0
        %3108 = vst [vmem:[#allocation2 + $0x120] sm:$0xff] 0.0
        %3109 = vst [vmem:[#allocation2 + $0x128] sm:$0xff] 0.0
        %3110 = vst [vmem:[#allocation2 + $0x130] sm:$0x3] 0.0
        %3111 = vst [vmem:[#allocation2 + $0x138] sm:$0xff] 0.0
        %3112 = vst [vmem:[#allocation2 + $0x140] sm:$0xff] 0.0
        %3113 = vst [vmem:[#allocation2 + $0x148] sm:$0x3] 0.0
        %3114 = vst [vmem:[#allocation2 + $0x150] sm:$0xff] 0.0
        %3115 = vst [vmem:[#allocation2 + $0x158] sm:$0xff] 0.0
        %3116 = vst [vmem:[#allocation2 + $0x160] sm:$0x3] 0.0
        %3117 = vst [vmem:[#allocation2 + $0x168] sm:$0xff] 0.0
        %3118 = vst [vmem:[#allocation2 + $0x170] sm:$0xff] 0.0
        %3119 = vst [vmem:[#allocation2 + $0x178] sm:$0x3] 0.0
        %3120 = vst [vmem:[#allocation2 + $0x180] sm:$0xff] 0.0
        %3121 = vst [vmem:[#allocation2 + $0x188] sm:$0xff] 0.0
        %3122 = vst [vmem:[#allocation2 + $0x190] sm:$0x3] 0.0
        %3123 = vst [vmem:[#allocation2 + $0x198] sm:$0xff] 0.0
        %3124 = vst [vmem:[#allocation2 + $0x1a0] sm:$0xff] 0.0
        %3125 = vst [vmem:[#allocation2 + $0x1a8] sm:$0x3] 0.0
        %s3126 = scalar_lea.vmem [#allocation2], 24
        %3127 = vst [vmem:[%s3126 + $0x1] sm:$0xff] %v3040
        %3128 = vst [vmem:[%s3126 + $0x9] sm:$0xff] %v3041
        %3129 = vst [vmem:[%s3126 + $0x19] sm:$0xff] %v3042
        %3130 = vst [vmem:[%s3126 + $0x21] sm:$0xff] %v3043
        %3131 = vst [vmem:[%s3126 + $0x31] sm:$0xff] %v3044
        %3132 = vst [vmem:[%s3126 + $0x39] sm:$0xff] %v3045
        %3133 = vst [vmem:[%s3126 + $0x49] sm:$0xff] %v3046
        %3134 = vst [vmem:[%s3126 + $0x51] sm:$0xff] %v3047
        %3135 = vst [vmem:[%s3126 + $0x61] sm:$0xff] %v3048
        %3136 = vst [vmem:[%s3126 + $0x69] sm:$0xff] %v3049
        %3137 = vst [vmem:[%s3126 + $0x79] sm:$0xff] %v3050
        %3138 = vst [vmem:[%s3126 + $0x81] sm:$0xff] %v3051
        %3139 = vst [vmem:[%s3126 + $0x91] sm:$0xff] %v3052
        %3140 = vst [vmem:[%s3126 + $0x99] sm:$0xff] %v3053
        %3141 = vst [vmem:[%s3126 + $0xa9] sm:$0xff] %v3054
        %3142 = vst [vmem:[%s3126 + $0xb1] sm:$0xff] %v3055
        %3143 = vst [vmem:[%s3126 + $0xc1] sm:$0xff] %v3056
        %3144 = vst [vmem:[%s3126 + $0xc9] sm:$0xff] %v3057
        %3145 = vst [vmem:[%s3126 + $0xd9] sm:$0xff] %v3058
        %3146 = vst [vmem:[%s3126 + $0xe1] sm:$0xff] %v3059
        %3147 = vst [vmem:[%s3126 + $0xf1] sm:$0xff] %v3060
        %3148 = vst [vmem:[%s3126 + $0xf9] sm:$0xff] %v3061
        %3149 = vst [vmem:[%s3126 + $0x109] sm:$0xff] %v3062
        %3150 = vst [vmem:[%s3126 + $0x111] sm:$0xff] %v3063
        %3151 = vst [vmem:[%s3126 + $0x121] sm:$0xff] %v3064
        %3152 = vst [vmem:[%s3126 + $0x129] sm:$0xff] %v3065
        %3153 = vst [vmem:[%s3126 + $0x139] sm:$0xff] %v3066
        %3154 = vst [vmem:[%s3126 + $0x141] sm:$0xff] %v3067
        %3155 = vst [vmem:[%s3126 + $0x151] sm:$0xff] %v3068
        %3156 = vst [vmem:[%s3126 + $0x159] sm:$0xff] %v3069
        %3157 = vst [vmem:[%s3126 + $0x169] sm:$0xff] %v3070
        %3158 = vst [vmem:[%s3126 + $0x171] sm:$0xff] %v3071
        %v3159 = vld [vmem:[#allocation2] sm:$0xff]
        %v3160 = vld [vmem:[#allocation2 + $0x8] sm:$0xff]
        %v3161 = vld [vmem:[#allocation2 + $0x10] sm:$0x3]
        %v3162 = vld [vmem:[#allocation2 + $0x18] sm:$0xff]
        %v3163 = vld [vmem:[#allocation2 + $0x20] sm:$0xff]
        %v3164 = vld [vmem:[#allocation2 + $0x28] sm:$0x3]
        %v3165 = vld [vmem:[#allocation2 + $0x30] sm:$0xff]
        %v3166 = vld [vmem:[#allocation2 + $0x38] sm:$0xff]
        %v3167 = vld [vmem:[#allocation2 + $0x40] sm:$0x3]
        %v3168 = vld [vmem:[#allocation2 + $0x48] sm:$0xff]
        %v3169 = vld [vmem:[#allocation2 + $0x50] sm:$0xff]
        %v3170 = vld [vmem:[#allocation2 + $0x58] sm:$0x3]
        %v3171 = vld [vmem:[#allocation2 + $0x60] sm:$0xff]
        %v3172 = vld [vmem:[#allocation2 + $0x68] sm:$0xff]
        %v3173 = vld [vmem:[#allocation2 + $0x70] sm:$0x3]
        %v3174 = vld [vmem:[#allocation2 + $0x78] sm:$0xff]
        %v3175 = vld [vmem:[#allocation2 + $0x80] sm:$0xff]
        %v3176 = vld [vmem:[#allocation2 + $0x88] sm:$0x3]
        %v3177 = vld [vmem:[#allocation2 + $0x90] sm:$0xff]
        %v3178 = vld [vmem:[#allocation2 + $0x98] sm:$0xff]
        %v3179 = vld [vmem:[#allocation2 + $0xa0] sm:$0x3]
        %v3180 = vld [vmem:[#allocation2 + $0xa8] sm:$0xff]
        %v3181 = vld [vmem:[#allocation2 + $0xb0] sm:$0xff]
        %v3182 = vld [vmem:[#allocation2 + $0xb8] sm:$0x3]
        %v3183 = vld [vmem:[#allocation2 + $0xc0] sm:$0xff]
        %v3184 = vld [vmem:[#allocation2 + $0xc8] sm:$0xff]
        %v3185 = vld [vmem:[#allocation2 + $0xd0] sm:$0x3]
        %v3186 = vld [vmem:[#allocation2 + $0xd8] sm:$0xff]
        %v3187 = vld [vmem:[#allocation2 + $0xe0] sm:$0xff]
        %v3188 = vld [vmem:[#allocation2 + $0xe8] sm:$0x3]
        %v3189 = vld [vmem:[#allocation2 + $0xf0] sm:$0xff]
        %v3190 = vld [vmem:[#allocation2 + $0xf8] sm:$0xff]
        %v3191 = vld [vmem:[#allocation2 + $0x100] sm:$0x3]
        %v3192 = vld [vmem:[#allocation2 + $0x108] sm:$0xff]
        %v3193 = vld [vmem:[#allocation2 + $0x110] sm:$0xff]
        %v3194 = vld [vmem:[#allocation2 + $0x118] sm:$0x3]
        %v3195 = vld [vmem:[#allocation2 + $0x120] sm:$0xff]
        %v3196 = vld [vmem:[#allocation2 + $0x128] sm:$0xff]
        %v3197 = vld [vmem:[#allocation2 + $0x130] sm:$0x3]
        %v3198 = vld [vmem:[#allocation2 + $0x138] sm:$0xff]
        %v3199 = vld [vmem:[#allocation2 + $0x140] sm:$0xff]
        %v3200 = vld [vmem:[#allocation2 + $0x148] sm:$0x3]
        %v3201 = vld [vmem:[#allocation2 + $0x150] sm:$0xff]
        %v3202 = vld [vmem:[#allocation2 + $0x158] sm:$0xff]
        %v3203 = vld [vmem:[#allocation2 + $0x160] sm:$0x3]
        %v3204 = vld [vmem:[#allocation2 + $0x168] sm:$0xff]
        %v3205 = vld [vmem:[#allocation2 + $0x170] sm:$0xff]
        %v3206 = vld [vmem:[#allocation2 + $0x178] sm:$0x3]
        %v3207 = vld [vmem:[#allocation2 + $0x180] sm:$0xff]
        %v3208 = vld [vmem:[#allocation2 + $0x188] sm:$0xff]
        %v3209 = vld [vmem:[#allocation2 + $0x190] sm:$0x3]
        %v3210 = vld [vmem:[#allocation2 + $0x198] sm:$0xff]
        %v3211 = vld [vmem:[#allocation2 + $0x1a0] sm:$0xff]
        %v3212 = vld [vmem:[#allocation2 + $0x1a8] sm:$0x3]
        %v3213 = vld [vmem:[#allocation3] sm:$0xff]
        %v3214 = vld [vmem:[#allocation3 + $0x8] sm:$0xff]
        %v3215 = vld [vmem:[#allocation3 + $0x10] sm:$0xff]
        %v3216 = vld [vmem:[#allocation3 + $0x18] sm:$0xff]
        %v3217 = vld [vmem:[#allocation3 + $0x20] sm:$0xff]
        %v3218 = vld [vmem:[#allocation3 + $0x28] sm:$0xff]
        %v3219 = vld [vmem:[#allocation3 + $0x30] sm:$0xff]
        %v3220 = vld [vmem:[#allocation3 + $0x38] sm:$0xff]
        %v3221 = vld [vmem:[#allocation3 + $0x40] sm:$0xff]
        %v3222 = vld [vmem:[#allocation3 + $0x48] sm:$0xff]
        %v3223 = vld [vmem:[#allocation3 + $0x50] sm:$0xff]
        %v3224 = vld [vmem:[#allocation3 + $0x58] sm:$0xff]
        %v3225 = vld [vmem:[#allocation3 + $0x60] sm:$0xff]
        %v3226 = vld [vmem:[#allocation3 + $0x68] sm:$0xff]
        %v3227 = vld [vmem:[#allocation3 + $0x70] sm:$0xff]
        %v3228 = vld [vmem:[#allocation3 + $0x78] sm:$0xff]
        %v3277 = vrot.slane %v3159, 1
        %v3278 = vrot.slane %v3160, 1
        %v3279 = vsel %vm356, %v3277, %v3278
        %v3280 = vrot.slane %v3161, 1
        %v3281 = vsel %vm356, %v3278, %v3280
        %v3282 = vrot.slane %v3162, 1
        %v3283 = vrot.slane %v3163, 1
        %v3284 = vsel %vm356, %v3282, %v3283
        %v3285 = vrot.slane %v3164, 1
        %v3286 = vsel %vm356, %v3283, %v3285
        %v3287 = vrot.slane %v3165, 1
        %v3288 = vrot.slane %v3166, 1
        %v3289 = vsel %vm356, %v3287, %v3288
        %v3290 = vrot.slane %v3167, 1
        %v3291 = vsel %vm356, %v3288, %v3290
        %v3292 = vrot.slane %v3168, 1
        %v3293 = vrot.slane %v3169, 1
        %v3294 = vsel %vm356, %v3292, %v3293
        %v3295 = vrot.slane %v3170, 1
        %v3296 = vsel %vm356, %v3293, %v3295
        %v3297 = vrot.slane %v3171, 1
        %v3298 = vrot.slane %v3172, 1
        %v3299 = vsel %vm356, %v3297, %v3298
        %v3300 = vrot.slane %v3173, 1
        %v3301 = vsel %vm356, %v3298, %v3300
        %v3302 = vrot.slane %v3174, 1
        %v3303 = vrot.slane %v3175, 1
        %v3304 = vsel %vm356, %v3302, %v3303
        %v3305 = vrot.slane %v3176, 1
        %v3306 = vsel %vm356, %v3303, %v3305
        %v3307 = vrot.slane %v3177, 1
        %v3308 = vrot.slane %v3178, 1
        %v3309 = vsel %vm356, %v3307, %v3308
        %v3310 = vrot.slane %v3179, 1
        %v3311 = vsel %vm356, %v3308, %v3310
        %v3312 = vrot.slane %v3180, 1
        %v3313 = vrot.slane %v3181, 1
        %v3314 = vsel %vm356, %v3312, %v3313
        %v3315 = vrot.slane %v3182, 1
        %v3316 = vsel %vm356, %v3313, %v3315
        %v3317 = vrot.slane %v3183, 1
        %v3318 = vrot.slane %v3184, 1
        %v3319 = vsel %vm356, %v3317, %v3318
        %v3320 = vrot.slane %v3185, 1
        %v3321 = vsel %vm356, %v3318, %v3320
        %v3322 = vrot.slane %v3186, 1
        %v3323 = vrot.slane %v3187, 1
        %v3324 = vsel %vm356, %v3322, %v3323
        %v3325 = vrot.slane %v3188, 1
        %v3326 = vsel %vm356, %v3323, %v3325
        %v3327 = vrot.slane %v3189, 1
        %v3328 = vrot.slane %v3190, 1
        %v3329 = vsel %vm356, %v3327, %v3328
        %v3330 = vrot.slane %v3191, 1
        %v3331 = vsel %vm356, %v3328, %v3330
        %v3332 = vrot.slane %v3192, 1
        %v3333 = vrot.slane %v3193, 1
        %v3334 = vsel %vm356, %v3332, %v3333
        %v3335 = vrot.slane %v3194, 1
        %v3336 = vsel %vm356, %v3333, %v3335
        %v3337 = vrot.slane %v3195, 1
        %v3338 = vrot.slane %v3196, 1
        %v3339 = vsel %vm356, %v3337, %v3338
        %v3340 = vrot.slane %v3197, 1
        %v3341 = vsel %vm356, %v3338, %v3340
        %v3342 = vrot.slane %v3198, 1
        %v3343 = vrot.slane %v3199, 1
        %v3344 = vsel %vm356, %v3342, %v3343
        %v3345 = vrot.slane %v3200, 1
        %v3346 = vsel %vm356, %v3343, %v3345
        %v3347 = vrot.slane %v3201, 1
        %v3348 = vrot.slane %v3202, 1
        %v3349 = vsel %vm356, %v3347, %v3348
        %v3350 = vrot.slane %v3203, 1
        %v3351 = vsel %vm356, %v3348, %v3350
        %v3352 = vrot.slane %v3204, 1
        %v3353 = vrot.slane %v3205, 1
        %v3354 = vsel %vm356, %v3352, %v3353
        %v3355 = vrot.slane %v3206, 1
        %v3356 = vsel %vm356, %v3353, %v3355
        %s3389 = scalar_lea.vmem [#allocation3], 128
        %v3390 = vld [vmem:[%s3389] sm:$0xff]
        %v3391 = vld [vmem:[%s3389 + $0x8] sm:$0xff]
        %v3392 = vld [vmem:[%s3389 + $0x10] sm:$0xff]
        %v3393 = vld [vmem:[%s3389 + $0x18] sm:$0xff]
        %v3394 = vld [vmem:[%s3389 + $0x20] sm:$0xff]
        %v3395 = vld [vmem:[%s3389 + $0x28] sm:$0xff]
        %v3396 = vld [vmem:[%s3389 + $0x30] sm:$0xff]
        %v3397 = vld [vmem:[%s3389 + $0x38] sm:$0xff]
        %v3398 = vld [vmem:[%s3389 + $0x40] sm:$0xff]
        %v3399 = vld [vmem:[%s3389 + $0x48] sm:$0xff]
        %v3400 = vld [vmem:[%s3389 + $0x50] sm:$0xff]
        %v3401 = vld [vmem:[%s3389 + $0x58] sm:$0xff]
        %v3402 = vld [vmem:[%s3389 + $0x60] sm:$0xff]
        %v3403 = vld [vmem:[%s3389 + $0x68] sm:$0xff]
        %v3404 = vld [vmem:[%s3389 + $0x70] sm:$0xff]
        %v3405 = vld [vmem:[%s3389 + $0x78] sm:$0xff]
        %3406 = vmatprep.subr.mxu0 0.0
        %3407 = vmatpush1.msra.mxu0 %v3390
        %3408 = vmatprep.subr.mxu0 0.0
        %3409 = vmatpush1.msra.mxu0 %v3391
        %3410 = vmatprep.subr.mxu0 0.0
        %3411 = vmatpush1.msra.mxu0 %v3392
        %3412 = vmatprep.subr.mxu0 0.0
        %3413 = vmatpush1.msra.mxu0 %v3393
        %3414 = vmatprep.subr.mxu0 0.0
        %3415 = vmatpush1.msra.mxu0 %v3394
        %3416 = vmatprep.subr.mxu0 0.0
        %3417 = vmatpush1.msra.mxu0 %v3395
        %3418 = vmatprep.subr.mxu0 0.0
        %3419 = vmatpush1.msra.mxu0 %v3396
        %3420 = vmatprep.subr.mxu0 0.0
        %3421 = vmatpush1.msra.mxu0 %v3397
        %3422 = vmatprep.subr.mxu0 0.0
        %3423 = vmatpush1.msra.mxu0 %v3398
        %3424 = vmatprep.subr.mxu0 0.0
        %3425 = vmatpush1.msra.mxu0 %v3399
        %3426 = vmatprep.subr.mxu0 0.0
        %3427 = vmatpush1.msra.mxu0 %v3400
        %3428 = vmatprep.subr.mxu0 0.0
        %3429 = vmatpush1.msra.mxu0 %v3401
        %3430 = vmatprep.subr.mxu0 0.0
        %3431 = vmatpush1.msra.mxu0 %v3402
        %3432 = vmatprep.subr.mxu0 0.0
        %3433 = vmatpush1.msra.mxu0 %v3403
        %3434 = vmatprep.subr.mxu0 0.0
        %3435 = vmatpush1.msra.mxu0 %v3404
        %3436 = vmatprep.subr.mxu0 0.0
        %3437 = vmatpush1.msra.mxu0 %v3405
        %3438 = vmatprep.subr.mxu0 0.0
        %3439 = vmatpush1.msra.mxu0 0.0
        %3440 = vmatprep.subr.mxu0 0.0
        %3441 = vmatpush1.msra.mxu0 0.0
        %3442 = vmatprep.subr.mxu0 0.0
        %3443 = vmatpush1.msra.mxu0 0.0
        %3444 = vmatprep.subr.mxu0 0.0
        %3445 = vmatpush1.msra.mxu0 0.0
        %3446 = vmatprep.subr.mxu0 0.0
        %3447 = vmatpush1.msra.mxu0 0.0
        %3448 = vmatprep.subr.mxu0 0.0
        %3449 = vmatpush1.msra.mxu0 0.0
        %3450 = vmatprep.subr.mxu0 0.0
        %3451 = vmatpush1.msra.mxu0 0.0
        %3452 = vmatprep.subr.mxu0 0.0
        %3453 = vmatpush1.msra.mxu0 0.0
        %3454 = vmatprep.subr.mxu0 0.0
        %3455 = vmatpush1.msra.mxu0 0.0
        %3456 = vmatprep.subr.mxu0 0.0
        %3457 = vmatpush1.msra.mxu0 0.0
        %3458 = vmatprep.subr.mxu0 0.0
        %3459 = vmatpush1.msra.mxu0 0.0
        %3460 = vmatprep.subr.mxu0 0.0
        %3461 = vmatpush1.msra.mxu0 0.0
        %3462 = vmatprep.subr.mxu0 0.0
        %3463 = vmatpush1.msra.mxu0 0.0
        %3464 = vmatprep.subr.mxu0 0.0
        %3465 = vmatpush1.msra.mxu0 0.0
        %3466 = vmatprep.subr.mxu0 0.0
        %3467 = vmatpush1.msra.mxu0 0.0
        %3468 = vmatprep.subr.mxu0 0.0
        %3469 = vmatpush1.msra.mxu0 0.0
        %3470 = vmatprep.mubr.f32.mxu0 0.0
        %3471 = vmatmul.mubr.f32.gmra.mrb[0].mxu0 %v3279
        %v3472 = vpop.f32.mrb[0].mxu0
        %v3473 = vadd.f32 0.0, %v3472
        %v3474 = vpop.f32.mrb[0].mxu0
        %3475 = vmatprep.mubr.f32.mxu0 0.0
        %3476 = vmatmul.mubr.f32.gmra.mrb[0].mxu0 %v3281
        %v3477 = vpop.f32.mrb[0].mxu0
        %v3478 = vadd.f32 0.0, %v3477
        %v3479 = vpop.f32.mrb[0].mxu0
        %3480 = vmatprep.mubr.f32.mxu0 0.0
        %3481 = vmatmul.mubr.f32.gmra.mrb[0].mxu0 %v3284
        %v3482 = vpop.f32.mrb[0].mxu0
        %v3483 = vadd.f32 0.0, %v3482
        %v3484 = vpop.f32.mrb[0].mxu0
        %3485 = vmatprep.mubr.f32.mxu0 0.0
        %3486 = vmatmul.mubr.f32.gmra.mrb[0].mxu0 %v3286
        %v3487 = vpop.f32.mrb[0].mxu0
        %v3488 = vadd.f32 0.0, %v3487
        %v3489 = vpop.f32.mrb[0].mxu0
        %3490 = vmatprep.mubr.f32.mxu0 0.0
        %3491 = vmatmul.mubr.f32.gmra.mrb[0].mxu0 %v3289
        %v3492 = vpop.f32.mrb[0].mxu0
        %v3493 = vadd.f32 0.0, %v3492
        %v3494 = vpop.f32.mrb[0].mxu0
        %3495 = vmatprep.mubr.f32.mxu0 0.0
        %3496 = vmatmul.mubr.f32.gmra.mrb[0].mxu0 %v3291
        %v3497 = vpop.f32.mrb[0].mxu0
        %v3498 = vadd.f32 0.0, %v3497
        %v3499 = vpop.f32.mrb[0].mxu0
        %3500 = vmatprep.mubr.f32.mxu0 0.0
        %3501 = vmatmul.mubr.f32.gmra.mrb[0].mxu0 %v3294
        %v3502 = vpop.f32.mrb[0].mxu0
        %v3503 = vadd.f32 0.0, %v3502
        %v3504 = vpop.f32.mrb[0].mxu0
        %3505 = vmatprep.mubr.f32.mxu0 0.0
        %3506 = vmatmul.mubr.f32.gmra.mrb[0].mxu0 %v3296
        %v3507 = vpop.f32.mrb[0].mxu0
        %v3508 = vadd.f32 0.0, %v3507
        %v3509 = vpop.f32.mrb[0].mxu0
        %3510 = vmatprep.mubr.f32.mxu0 0.0
        %3511 = vmatmul.mubr.f32.gmra.mrb[0].mxu0 %v3299
        %v3512 = vpop.f32.mrb[0].mxu0
        %v3513 = vadd.f32 0.0, %v3512
        %v3514 = vpop.f32.mrb[0].mxu0
        %3515 = vmatprep.mubr.f32.mxu0 0.0
        %3516 = vmatmul.mubr.f32.gmra.mrb[0].mxu0 %v3301
        %v3517 = vpop.f32.mrb[0].mxu0
        %v3518 = vadd.f32 0.0, %v3517
        %v3519 = vpop.f32.mrb[0].mxu0
        %3520 = vmatprep.mubr.f32.mxu0 0.0
        %3521 = vmatmul.mubr.f32.gmra.mrb[0].mxu0 %v3304
        %v3522 = vpop.f32.mrb[0].mxu0
        %v3523 = vadd.f32 0.0, %v3522
        %v3524 = vpop.f32.mrb[0].mxu0
        %3525 = vmatprep.mubr.f32.mxu0 0.0
        %3526 = vmatmul.mubr.f32.gmra.mrb[0].mxu0 %v3306
        %v3527 = vpop.f32.mrb[0].mxu0
        %v3528 = vadd.f32 0.0, %v3527
        %v3529 = vpop.f32.mrb[0].mxu0
        %3530 = vmatprep.mubr.f32.mxu0 0.0
        %3531 = vmatmul.mubr.f32.gmra.mrb[0].mxu0 %v3309
        %v3532 = vpop.f32.mrb[0].mxu0
        %v3533 = vadd.f32 0.0, %v3532
        %v3534 = vpop.f32.mrb[0].mxu0
        %3535 = vmatprep.mubr.f32.mxu0 0.0
        %3536 = vmatmul.mubr.f32.gmra.mrb[0].mxu0 %v3311
        %v3537 = vpop.f32.mrb[0].mxu0
        %v3538 = vadd.f32 0.0, %v3537
        %v3539 = vpop.f32.mrb[0].mxu0
        %3540 = vmatprep.mubr.f32.mxu0 0.0
        %3541 = vmatmul.mubr.f32.gmra.mrb[0].mxu0 %v3314
        %v3542 = vpop.f32.mrb[0].mxu0
        %v3543 = vadd.f32 0.0, %v3542
        %v3544 = vpop.f32.mrb[0].mxu0
        %3545 = vmatprep.mubr.f32.mxu0 0.0
        %3546 = vmatmul.mubr.f32.gmra.mrb[0].mxu0 %v3316
        %v3547 = vpop.f32.mrb[0].mxu0
        %v3548 = vadd.f32 0.0, %v3547
        %v3549 = vpop.f32.mrb[0].mxu0
        %3550 = vmatprep.mubr.f32.mxu0 0.0
        %3551 = vmatmul.mubr.f32.gmra.mrb[0].mxu0 %v3319
        %v3552 = vpop.f32.mrb[0].mxu0
        %v3553 = vadd.f32 0.0, %v3552
        %v3554 = vpop.f32.mrb[0].mxu0
        %3555 = vmatprep.mubr.f32.mxu0 0.0
        %3556 = vmatmul.mubr.f32.gmra.mrb[0].mxu0 %v3321
        %v3557 = vpop.f32.mrb[0].mxu0
        %v3558 = vadd.f32 0.0, %v3557
        %v3559 = vpop.f32.mrb[0].mxu0
        %3560 = vmatprep.mubr.f32.mxu0 0.0
        %3561 = vmatmul.mubr.f32.gmra.mrb[0].mxu0 %v3324
        %v3562 = vpop.f32.mrb[0].mxu0
        %v3563 = vadd.f32 0.0, %v3562
        %v3564 = vpop.f32.mrb[0].mxu0
        %3565 = vmatprep.mubr.f32.mxu0 0.0
        %3566 = vmatmul.mubr.f32.gmra.mrb[0].mxu0 %v3326
        %v3567 = vpop.f32.mrb[0].mxu0
        %v3568 = vadd.f32 0.0, %v3567
        %v3569 = vpop.f32.mrb[0].mxu0
        %3570 = vmatprep.mubr.f32.mxu0 0.0
        %3571 = vmatmul.mubr.f32.gmra.mrb[0].mxu0 %v3329
        %v3572 = vpop.f32.mrb[0].mxu0
        %v3573 = vadd.f32 0.0, %v3572
        %v3574 = vpop.f32.mrb[0].mxu0
        %3575 = vmatprep.mubr.f32.mxu0 0.0
        %3576 = vmatmul.mubr.f32.gmra.mrb[0].mxu0 %v3331
        %v3577 = vpop.f32.mrb[0].mxu0
        %v3578 = vadd.f32 0.0, %v3577
        %v3579 = vpop.f32.mrb[0].mxu0
        %3580 = vmatprep.mubr.f32.mxu0 0.0
        %3581 = vmatmul.mubr.f32.gmra.mrb[0].mxu0 %v3334
        %v3582 = vpop.f32.mrb[0].mxu0
        %v3583 = vadd.f32 0.0, %v3582
        %v3584 = vpop.f32.mrb[0].mxu0
        %3585 = vmatprep.mubr.f32.mxu0 0.0
        %3586 = vmatmul.mubr.f32.gmra.mrb[0].mxu0 %v3336
        %v3587 = vpop.f32.mrb[0].mxu0
        %v3588 = vadd.f32 0.0, %v3587
        %v3589 = vpop.f32.mrb[0].mxu0
        %3590 = vmatprep.mubr.f32.mxu0 0.0
        %3591 = vmatmul.mubr.f32.gmra.mrb[0].mxu0 %v3339
        %v3592 = vpop.f32.mrb[0].mxu0
        %v3593 = vadd.f32 0.0, %v3592
        %v3594 = vpop.f32.mrb[0].mxu0
        %3595 = vmatprep.mubr.f32.mxu0 0.0
        %3596 = vmatmul.mubr.f32.gmra.mrb[0].mxu0 %v3341
        %v3597 = vpop.f32.mrb[0].mxu0
        %v3598 = vadd.f32 0.0, %v3597
        %v3599 = vpop.f32.mrb[0].mxu0
        %3600 = vmatprep.mubr.f32.mxu0 0.0
        %3601 = vmatmul.mubr.f32.gmra.mrb[0].mxu0 %v3344
        %v3602 = vpop.f32.mrb[0].mxu0
        %v3603 = vadd.f32 0.0, %v3602
        %v3604 = vpop.f32.mrb[0].mxu0
        %3605 = vmatprep.mubr.f32.mxu0 0.0
        %3606 = vmatmul.mubr.f32.gmra.mrb[0].mxu0 %v3346
        %v3607 = vpop.f32.mrb[0].mxu0
        %v3608 = vadd.f32 0.0, %v3607
        %v3609 = vpop.f32.mrb[0].mxu0
        %3610 = vmatprep.mubr.f32.mxu0 0.0
        %3611 = vmatmul.mubr.f32.gmra.mrb[0].mxu0 %v3349
        %v3612 = vpop.f32.mrb[0].mxu0
        %v3613 = vadd.f32 0.0, %v3612
        %v3614 = vpop.f32.mrb[0].mxu0
        %3615 = vmatprep.mubr.f32.mxu0 0.0
        %3616 = vmatmul.mubr.f32.gmra.mrb[0].mxu0 %v3351
        %v3617 = vpop.f32.mrb[0].mxu0
        %v3618 = vadd.f32 0.0, %v3617
        %v3619 = vpop.f32.mrb[0].mxu0
        %3620 = vmatprep.mubr.f32.mxu0 0.0
        %3621 = vmatmul.mubr.f32.gmra.mrb[0].mxu0 %v3354
        %v3622 = vpop.f32.mrb[0].mxu0
        %v3623 = vadd.f32 0.0, %v3622
        %v3624 = vpop.f32.mrb[0].mxu0
        %3625 = vmatprep.mubr.f32.mxu0 0.0
        %3626 = vmatmul.mubr.f32.gmra.mrb[0].mxu0 %v3356
        %v3627 = vpop.f32.mrb[0].mxu0
        %v3628 = vadd.f32 0.0, %v3627
        %v3629 = vpop.f32.mrb[0].mxu0
        %3630 = vdwg.mxu0
        %3631 = vmatprep.subr.mxu0 0.0
        %3632 = vmatpush1.msra.mxu0 %v3213
        %3633 = vmatprep.subr.mxu0 0.0
        %3634 = vmatpush1.msra.mxu0 %v3214
        %3635 = vmatprep.subr.mxu0 0.0
        %3636 = vmatpush1.msra.mxu0 %v3215
        %3637 = vmatprep.subr.mxu0 0.0
        %3638 = vmatpush1.msra.mxu0 %v3216
        %3639 = vmatprep.subr.mxu0 0.0
        %3640 = vmatpush1.msra.mxu0 %v3217
        %3641 = vmatprep.subr.mxu0 0.0
        %3642 = vmatpush1.msra.mxu0 %v3218
        %3643 = vmatprep.subr.mxu0 0.0
        %3644 = vmatpush1.msra.mxu0 %v3219
        %3645 = vmatprep.subr.mxu0 0.0
        %3646 = vmatpush1.msra.mxu0 %v3220
        %3647 = vmatprep.subr.mxu0 0.0
        %3648 = vmatpush1.msra.mxu0 %v3221
        %3649 = vmatprep.subr.mxu0 0.0
        %3650 = vmatpush1.msra.mxu0 %v3222
        %3651 = vmatprep.subr.mxu0 0.0
        %3652 = vmatpush1.msra.mxu0 %v3223
        %3653 = vmatprep.subr.mxu0 0.0
        %3654 = vmatpush1.msra.mxu0 %v3224
        %3655 = vmatprep.subr.mxu0 0.0
        %3656 = vmatpush1.msra.mxu0 %v3225
        %3657 = vmatprep.subr.mxu0 0.0
        %3658 = vmatpush1.msra.mxu0 %v3226
        %3659 = vmatprep.subr.mxu0 0.0
        %3660 = vmatpush1.msra.mxu0 %v3227
        %3661 = vmatprep.subr.mxu0 0.0
        %3662 = vmatpush1.msra.mxu0 %v3228
        %3663 = vmatprep.subr.mxu0 0.0
        %3664 = vmatpush1.msra.mxu0 0.0
        %3665 = vmatprep.subr.mxu0 0.0
        %3666 = vmatpush1.msra.mxu0 0.0
        %3667 = vmatprep.subr.mxu0 0.0
        %3668 = vmatpush1.msra.mxu0 0.0
        %3669 = vmatprep.subr.mxu0 0.0
        %3670 = vmatpush1.msra.mxu0 0.0
        %3671 = vmatprep.subr.mxu0 0.0
        %3672 = vmatpush1.msra.mxu0 0.0
        %3673 = vmatprep.subr.mxu0 0.0
        %3674 = vmatpush1.msra.mxu0 0.0
        %3675 = vmatprep.subr.mxu0 0.0
        %3676 = vmatpush1.msra.mxu0 0.0
        %3677 = vmatprep.subr.mxu0 0.0
        %3678 = vmatpush1.msra.mxu0 0.0
        %3679 = vmatprep.subr.mxu0 0.0
        %3680 = vmatpush1.msra.mxu0 0.0
        %3681 = vmatprep.subr.mxu0 0.0
        %3682 = vmatpush1.msra.mxu0 0.0
        %3683 = vmatprep.subr.mxu0 0.0
        %3684 = vmatpush1.msra.mxu0 0.0
        %3685 = vmatprep.subr.mxu0 0.0
        %3686 = vmatpush1.msra.mxu0 0.0
        %3687 = vmatprep.subr.mxu0 0.0
        %3688 = vmatpush1.msra.mxu0 0.0
        %3689 = vmatprep.subr.mxu0 0.0
        %3690 = vmatpush1.msra.mxu0 0.0
        %3691 = vmatprep.subr.mxu0 0.0
        %3692 = vmatpush1.msra.mxu0 0.0
        %3693 = vmatprep.subr.mxu0 0.0
        %3694 = vmatpush1.msra.mxu0 0.0
        %3695 = vmatprep.mubr.f32.mxu0 0.0
        %3696 = vmatmul.mubr.f32.gmra.mrb[0].mxu0 %v3159
        %v3697 = vpop.f32.mrb[0].mxu0
        %v3698 = vadd.f32 %v3473, %v3697
        %v3699 = vpop.f32.mrb[0].mxu0
        %3700 = vmatprep.mubr.f32.mxu0 0.0
        %3701 = vmatmul.mubr.f32.gmra.mrb[0].mxu0 %v3160
        %v3702 = vpop.f32.mrb[0].mxu0
        %v3703 = vadd.f32 %v3478, %v3702
        %v3704 = vpop.f32.mrb[0].mxu0
        %3705 = vmatprep.mubr.f32.mxu0 0.0
        %3706 = vmatmul.mubr.f32.gmra.mrb[0].mxu0 %v3162
        %v3707 = vpop.f32.mrb[0].mxu0
        %v3708 = vadd.f32 %v3483, %v3707
        %v3709 = vpop.f32.mrb[0].mxu0
        %3710 = vmatprep.mubr.f32.mxu0 0.0
        %3711 = vmatmul.mubr.f32.gmra.mrb[0].mxu0 %v3163
        %v3712 = vpop.f32.mrb[0].mxu0
        %v3713 = vadd.f32 %v3488, %v3712
        %v3714 = vpop.f32.mrb[0].mxu0
        %3715 = vmatprep.mubr.f32.mxu0 0.0
        %3716 = vmatmul.mubr.f32.gmra.mrb[0].mxu0 %v3165
        %v3717 = vpop.f32.mrb[0].mxu0
        %v3718 = vadd.f32 %v3493, %v3717
        %v3719 = vpop.f32.mrb[0].mxu0
        %3720 = vmatprep.mubr.f32.mxu0 0.0
        %3721 = vmatmul.mubr.f32.gmra.mrb[0].mxu0 %v3166
        %v3722 = vpop.f32.mrb[0].mxu0
        %v3723 = vadd.f32 %v3498, %v3722
        %v3724 = vpop.f32.mrb[0].mxu0
        %3725 = vmatprep.mubr.f32.mxu0 0.0
        %3726 = vmatmul.mubr.f32.gmra.mrb[0].mxu0 %v3168
        %v3727 = vpop.f32.mrb[0].mxu0
        %v3728 = vadd.f32 %v3503, %v3727
        %v3729 = vpop.f32.mrb[0].mxu0
        %3730 = vmatprep.mubr.f32.mxu0 0.0
        %3731 = vmatmul.mubr.f32.gmra.mrb[0].mxu0 %v3169
        %v3732 = vpop.f32.mrb[0].mxu0
        %v3733 = vadd.f32 %v3508, %v3732
        %v3734 = vpop.f32.mrb[0].mxu0
        %3735 = vmatprep.mubr.f32.mxu0 0.0
        %3736 = vmatmul.mubr.f32.gmra.mrb[0].mxu0 %v3171
        %v3737 = vpop.f32.mrb[0].mxu0
        %v3738 = vadd.f32 %v3513, %v3737
        %v3739 = vpop.f32.mrb[0].mxu0
        %3740 = vmatprep.mubr.f32.mxu0 0.0
        %3741 = vmatmul.mubr.f32.gmra.mrb[0].mxu0 %v3172
        %v3742 = vpop.f32.mrb[0].mxu0
        %v3743 = vadd.f32 %v3518, %v3742
        %v3744 = vpop.f32.mrb[0].mxu0
        %3745 = vmatprep.mubr.f32.mxu0 0.0
        %3746 = vmatmul.mubr.f32.gmra.mrb[0].mxu0 %v3174
        %v3747 = vpop.f32.mrb[0].mxu0
        %v3748 = vadd.f32 %v3523, %v3747
        %v3749 = vpop.f32.mrb[0].mxu0
        %3750 = vmatprep.mubr.f32.mxu0 0.0
        %3751 = vmatmul.mubr.f32.gmra.mrb[0].mxu0 %v3175
        %v3752 = vpop.f32.mrb[0].mxu0
        %v3753 = vadd.f32 %v3528, %v3752
        %v3754 = vpop.f32.mrb[0].mxu0
        %3755 = vmatprep.mubr.f32.mxu0 0.0
        %3756 = vmatmul.mubr.f32.gmra.mrb[0].mxu0 %v3177
        %v3757 = vpop.f32.mrb[0].mxu0
        %v3758 = vadd.f32 %v3533, %v3757
        %v3759 = vpop.f32.mrb[0].mxu0
        %3760 = vmatprep.mubr.f32.mxu0 0.0
        %3761 = vmatmul.mubr.f32.gmra.mrb[0].mxu0 %v3178
        %v3762 = vpop.f32.mrb[0].mxu0
        %v3763 = vadd.f32 %v3538, %v3762
        %v3764 = vpop.f32.mrb[0].mxu0
        %3765 = vmatprep.mubr.f32.mxu0 0.0
        %3766 = vmatmul.mubr.f32.gmra.mrb[0].mxu0 %v3180
        %v3767 = vpop.f32.mrb[0].mxu0
        %v3768 = vadd.f32 %v3543, %v3767
        %v3769 = vpop.f32.mrb[0].mxu0
        %3770 = vmatprep.mubr.f32.mxu0 0.0
        %3771 = vmatmul.mubr.f32.gmra.mrb[0].mxu0 %v3181
        %v3772 = vpop.f32.mrb[0].mxu0
        %v3773 = vadd.f32 %v3548, %v3772
        %v3774 = vpop.f32.mrb[0].mxu0
        %3775 = vmatprep.mubr.f32.mxu0 0.0
        %3776 = vmatmul.mubr.f32.gmra.mrb[0].mxu0 %v3183
        %v3777 = vpop.f32.mrb[0].mxu0
        %v3778 = vadd.f32 %v3553, %v3777
        %v3779 = vpop.f32.mrb[0].mxu0
        %3780 = vmatprep.mubr.f32.mxu0 0.0
        %3781 = vmatmul.mubr.f32.gmra.mrb[0].mxu0 %v3184
        %v3782 = vpop.f32.mrb[0].mxu0
        %v3783 = vadd.f32 %v3558, %v3782
        %v3784 = vpop.f32.mrb[0].mxu0
        %3785 = vmatprep.mubr.f32.mxu0 0.0
        %3786 = vmatmul.mubr.f32.gmra.mrb[0].mxu0 %v3186
        %v3787 = vpop.f32.mrb[0].mxu0
        %v3788 = vadd.f32 %v3563, %v3787
        %v3789 = vpop.f32.mrb[0].mxu0
        %3790 = vmatprep.mubr.f32.mxu0 0.0
        %3791 = vmatmul.mubr.f32.gmra.mrb[0].mxu0 %v3187
        %v3792 = vpop.f32.mrb[0].mxu0
        %v3793 = vadd.f32 %v3568, %v3792
        %v3794 = vpop.f32.mrb[0].mxu0
        %3795 = vmatprep.mubr.f32.mxu0 0.0
        %3796 = vmatmul.mubr.f32.gmra.mrb[0].mxu0 %v3189
        %v3797 = vpop.f32.mrb[0].mxu0
        %v3798 = vadd.f32 %v3573, %v3797
        %v3799 = vpop.f32.mrb[0].mxu0
        %3800 = vmatprep.mubr.f32.mxu0 0.0
        %3801 = vmatmul.mubr.f32.gmra.mrb[0].mxu0 %v3190
        %v3802 = vpop.f32.mrb[0].mxu0
        %v3803 = vadd.f32 %v3578, %v3802
        %v3804 = vpop.f32.mrb[0].mxu0
        %3805 = vmatprep.mubr.f32.mxu0 0.0
        %3806 = vmatmul.mubr.f32.gmra.mrb[0].mxu0 %v3192
        %v3807 = vpop.f32.mrb[0].mxu0
        %v3808 = vadd.f32 %v3583, %v3807
        %v3809 = vpop.f32.mrb[0].mxu0
        %3810 = vmatprep.mubr.f32.mxu0 0.0
        %3811 = vmatmul.mubr.f32.gmra.mrb[0].mxu0 %v3193
        %v3812 = vpop.f32.mrb[0].mxu0
        %v3813 = vadd.f32 %v3588, %v3812
        %v3814 = vpop.f32.mrb[0].mxu0
        %3815 = vmatprep.mubr.f32.mxu0 0.0
        %3816 = vmatmul.mubr.f32.gmra.mrb[0].mxu0 %v3195
        %v3817 = vpop.f32.mrb[0].mxu0
        %v3818 = vadd.f32 %v3593, %v3817
        %v3819 = vpop.f32.mrb[0].mxu0
        %3820 = vmatprep.mubr.f32.mxu0 0.0
        %3821 = vmatmul.mubr.f32.gmra.mrb[0].mxu0 %v3196
        %v3822 = vpop.f32.mrb[0].mxu0
        %v3823 = vadd.f32 %v3598, %v3822
        %v3824 = vpop.f32.mrb[0].mxu0
        %3825 = vmatprep.mubr.f32.mxu0 0.0
        %3826 = vmatmul.mubr.f32.gmra.mrb[0].mxu0 %v3198
        %v3827 = vpop.f32.mrb[0].mxu0
        %v3828 = vadd.f32 %v3603, %v3827
        %v3829 = vpop.f32.mrb[0].mxu0
        %3830 = vmatprep.mubr.f32.mxu0 0.0
        %3831 = vmatmul.mubr.f32.gmra.mrb[0].mxu0 %v3199
        %v3832 = vpop.f32.mrb[0].mxu0
        %v3833 = vadd.f32 %v3608, %v3832
        %v3834 = vpop.f32.mrb[0].mxu0
        %3835 = vmatprep.mubr.f32.mxu0 0.0
        %3836 = vmatmul.mubr.f32.gmra.mrb[0].mxu0 %v3201
        %v3837 = vpop.f32.mrb[0].mxu0
        %v3838 = vadd.f32 %v3613, %v3837
        %v3839 = vpop.f32.mrb[0].mxu0
        %3840 = vmatprep.mubr.f32.mxu0 0.0
        %3841 = vmatmul.mubr.f32.gmra.mrb[0].mxu0 %v3202
        %v3842 = vpop.f32.mrb[0].mxu0
        %v3843 = vadd.f32 %v3618, %v3842
        %v3844 = vpop.f32.mrb[0].mxu0
        %3845 = vmatprep.mubr.f32.mxu0 0.0
        %3846 = vmatmul.mubr.f32.gmra.mrb[0].mxu0 %v3204
        %v3847 = vpop.f32.mrb[0].mxu0
        %v3848 = vadd.f32 %v3623, %v3847
        %v3849 = vpop.f32.mrb[0].mxu0
        %3850 = vmatprep.mubr.f32.mxu0 0.0
        %3851 = vmatmul.mubr.f32.gmra.mrb[0].mxu0 %v3205
        %v3852 = vpop.f32.mrb[0].mxu0
        %v3853 = vadd.f32 %v3628, %v3852
        %v3854 = vpop.f32.mrb[0].mxu0
        %3855 = vdwg.mxu0
        %v3856 = vrot.slane %v3159, 2
        %v3857 = vrot.slane %v3160, 2
        %v3858 = vsel %vm936, %v3856, %v3857
        %v3859 = vrot.slane %v3161, 2
        %v3860 = vsel %vm936, %v3857, %v3859
        %v3861 = vrot.slane %v3162, 2
        %v3862 = vrot.slane %v3163, 2
        %v3863 = vsel %vm936, %v3861, %v3862
        %v3864 = vrot.slane %v3164, 2
        %v3865 = vsel %vm936, %v3862, %v3864
        %v3866 = vrot.slane %v3165, 2
        %v3867 = vrot.slane %v3166, 2
        %v3868 = vsel %vm936, %v3866, %v3867
        %v3869 = vrot.slane %v3167, 2
        %v3870 = vsel %vm936, %v3867, %v3869
        %v3871 = vrot.slane %v3168, 2
        %v3872 = vrot.slane %v3169, 2
        %v3873 = vsel %vm936, %v3871, %v3872
        %v3874 = vrot.slane %v3170, 2
        %v3875 = vsel %vm936, %v3872, %v3874
        %v3876 = vrot.slane %v3171, 2
        %v3877 = vrot.slane %v3172, 2
        %v3878 = vsel %vm936, %v3876, %v3877
        %v3879 = vrot.slane %v3173, 2
        %v3880 = vsel %vm936, %v3877, %v3879
        %v3881 = vrot.slane %v3174, 2
        %v3882 = vrot.slane %v3175, 2
        %v3883 = vsel %vm936, %v3881, %v3882
        %v3884 = vrot.slane %v3176, 2
        %v3885 = vsel %vm936, %v3882, %v3884
        %v3886 = vrot.slane %v3177, 2
        %v3887 = vrot.slane %v3178, 2
        %v3888 = vsel %vm936, %v3886, %v3887
        %v3889 = vrot.slane %v3179, 2
        %v3890 = vsel %vm936, %v3887, %v3889
        %v3891 = vrot.slane %v3180, 2
        %v3892 = vrot.slane %v3181, 2
        %v3893 = vsel %vm936, %v3891, %v3892
        %v3894 = vrot.slane %v3182, 2
        %v3895 = vsel %vm936, %v3892, %v3894
        %v3896 = vrot.slane %v3183, 2
        %v3897 = vrot.slane %v3184, 2
        %v3898 = vsel %vm936, %v3896, %v3897
        %v3899 = vrot.slane %v3185, 2
        %v3900 = vsel %vm936, %v3897, %v3899
        %v3901 = vrot.slane %v3186, 2
        %v3902 = vrot.slane %v3187, 2
        %v3903 = vsel %vm936, %v3901, %v3902
        %v3904 = vrot.slane %v3188, 2
        %v3905 = vsel %vm936, %v3902, %v3904
        %v3906 = vrot.slane %v3189, 2
        %v3907 = vrot.slane %v3190, 2
        %v3908 = vsel %vm936, %v3906, %v3907
        %v3909 = vrot.slane %v3191, 2
        %v3910 = vsel %vm936, %v3907, %v3909
        %v3911 = vrot.slane %v3192, 2
        %v3912 = vrot.slane %v3193, 2
        %v3913 = vsel %vm936, %v3911, %v3912
        %v3914 = vrot.slane %v3194, 2
        %v3915 = vsel %vm936, %v3912, %v3914
        %v3916 = vrot.slane %v3195, 2
        %v3917 = vrot.slane %v3196, 2
        %v3918 = vsel %vm936, %v3916, %v3917
        %v3919 = vrot.slane %v3197, 2
        %v3920 = vsel %vm936, %v3917, %v3919
        %v3921 = vrot.slane %v3198, 2
        %v3922 = vrot.slane %v3199, 2
        %v3923 = vsel %vm936, %v3921, %v3922
        %v3924 = vrot.slane %v3200, 2
        %v3925 = vsel %vm936, %v3922, %v3924
        %v3926 = vrot.slane %v3201, 2
        %v3927 = vrot.slane %v3202, 2
        %v3928 = vsel %vm936, %v3926, %v3927
        %v3929 = vrot.slane %v3203, 2
        %v3930 = vsel %vm936, %v3927, %v3929
        %v3931 = vrot.slane %v3204, 2
        %v3932 = vrot.slane %v3205, 2
        %v3933 = vsel %vm936, %v3931, %v3932
        %v3934 = vrot.slane %v3206, 2
        %v3935 = vsel %vm936, %v3932, %v3934
        %s3968 = scalar_lea.vmem [#allocation3], 256
        %v3969 = vld [vmem:[%s3968] sm:$0xff]
        %v3970 = vld [vmem:[%s3968 + $0x8] sm:$0xff]
        %v3971 = vld [vmem:[%s3968 + $0x10] sm:$0xff]
        %v3972 = vld [vmem:[%s3968 + $0x18] sm:$0xff]
        %v3973 = vld [vmem:[%s3968 + $0x20] sm:$0xff]
        %v3974 = vld [vmem:[%s3968 + $0x28] sm:$0xff]
        %v3975 = vld [vmem:[%s3968 + $0x30] sm:$0xff]
        %v3976 = vld [vmem:[%s3968 + $0x38] sm:$0xff]
        %v3977 = vld [vmem:[%s3968 + $0x40] sm:$0xff]
        %v3978 = vld [vmem:[%s3968 + $0x48] sm:$0xff]
        %v3979 = vld [vmem:[%s3968 + $0x50] sm:$0xff]
        %v3980 = vld [vmem:[%s3968 + $0x58] sm:$0xff]
        %v3981 = vld [vmem:[%s3968 + $0x60] sm:$0xff]
        %v3982 = vld [vmem:[%s3968 + $0x68] sm:$0xff]
        %v3983 = vld [vmem:[%s3968 + $0x70] sm:$0xff]
        %v3984 = vld [vmem:[%s3968 + $0x78] sm:$0xff]
        %3985 = vmatprep.subr.mxu0 0.0
        %3986 = vmatpush1.msra.mxu0 %v3969
        %3987 = vmatprep.subr.mxu0 0.0
        %3988 = vmatpush1.msra.mxu0 %v3970
        %3989 = vmatprep.subr.mxu0 0.0
        %3990 = vmatpush1.msra.mxu0 %v3971
        %3991 = vmatprep.subr.mxu0 0.0
        %3992 = vmatpush1.msra.mxu0 %v3972
        %3993 = vmatprep.subr.mxu0 0.0
        %3994 = vmatpush1.msra.mxu0 %v3973
        %3995 = vmatprep.subr.mxu0 0.0
        %3996 = vmatpush1.msra.mxu0 %v3974
        %3997 = vmatprep.subr.mxu0 0.0
        %3998 = vmatpush1.msra.mxu0 %v3975
        %3999 = vmatprep.subr.mxu0 0.0
        %4000 = vmatpush1.msra.mxu0 %v3976
        %4001 = vmatprep.subr.mxu0 0.0
        %4002 = vmatpush1.msra.mxu0 %v3977
        %4003 = vmatprep.subr.mxu0 0.0
        %4004 = vmatpush1.msra.mxu0 %v3978
        %4005 = vmatprep.subr.mxu0 0.0
        %4006 = vmatpush1.msra.mxu0 %v3979
        %4007 = vmatprep.subr.mxu0 0.0
        %4008 = vmatpush1.msra.mxu0 %v3980
        %4009 = vmatprep.subr.mxu0 0.0
        %4010 = vmatpush1.msra.mxu0 %v3981
        %4011 = vmatprep.subr.mxu0 0.0
        %4012 = vmatpush1.msra.mxu0 %v3982
        %4013 = vmatprep.subr.mxu0 0.0
        %4014 = vmatpush1.msra.mxu0 %v3983
        %4015 = vmatprep.subr.mxu0 0.0
        %4016 = vmatpush1.msra.mxu0 %v3984
        %4017 = vmatprep.subr.mxu0 0.0
        %4018 = vmatpush1.msra.mxu0 0.0
        %4019 = vmatprep.subr.mxu0 0.0
        %4020 = vmatpush1.msra.mxu0 0.0
        %4021 = vmatprep.subr.mxu0 0.0
        %4022 = vmatpush1.msra.mxu0 0.0
        %4023 = vmatprep.subr.mxu0 0.0
        %4024 = vmatpush1.msra.mxu0 0.0
        %4025 = vmatprep.subr.mxu0 0.0
        %4026 = vmatpush1.msra.mxu0 0.0
        %4027 = vmatprep.subr.mxu0 0.0
        %4028 = vmatpush1.msra.mxu0 0.0
        %4029 = vmatprep.subr.mxu0 0.0
        %4030 = vmatpush1.msra.mxu0 0.0
        %4031 = vmatprep.subr.mxu0 0.0
        %4032 = vmatpush1.msra.mxu0 0.0
        %4033 = vmatprep.subr.mxu0 0.0
        %4034 = vmatpush1.msra.mxu0 0.0
        %4035 = vmatprep.subr.mxu0 0.0
        %4036 = vmatpush1.msra.mxu0 0.0
        %4037 = vmatprep.subr.mxu0 0.0
        %4038 = vmatpush1.msra.mxu0 0.0
        %4039 = vmatprep.subr.mxu0 0.0
        %4040 = vmatpush1.msra.mxu0 0.0
        %4041 = vmatprep.subr.mxu0 0.0
        %4042 = vmatpush1.msra.mxu0 0.0
        %4043 = vmatprep.subr.mxu0 0.0
        %4044 = vmatpush1.msra.mxu0 0.0
        %4045 = vmatprep.subr.mxu0 0.0
        %4046 = vmatpush1.msra.mxu0 0.0
        %4047 = vmatprep.subr.mxu0 0.0
        %4048 = vmatpush1.msra.mxu0 0.0
        %4049 = vmatprep.mubr.f32.mxu0 0.0
        %4050 = vmatmul.mubr.f32.gmra.mrb[0].mxu0 %v3858
        %v4051 = vpop.f32.mrb[0].mxu0
        %v4052 = vadd.f32 0.0, %v4051
        %v4053 = vpop.f32.mrb[0].mxu0
        %4054 = vmatprep.mubr.f32.mxu0 0.0
        %4055 = vmatmul.mubr.f32.gmra.mrb[0].mxu0 %v3860
        %v4056 = vpop.f32.mrb[0].mxu0
        %v4057 = vadd.f32 0.0, %v4056
        %v4058 = vpop.f32.mrb[0].mxu0
        %4059 = vmatprep.mubr.f32.mxu0 0.0
        %4060 = vmatmul.mubr.f32.gmra.mrb[0].mxu0 %v3863
        %v4061 = vpop.f32.mrb[0].mxu0
        %v4062 = vadd.f32 0.0, %v4061
        %v4063 = vpop.f32.mrb[0].mxu0
        %4064 = vmatprep.mubr.f32.mxu0 0.0
        %4065 = vmatmul.mubr.f32.gmra.mrb[0].mxu0 %v3865
        %v4066 = vpop.f32.mrb[0].mxu0
        %v4067 = vadd.f32 0.0, %v4066
        %v4068 = vpop.f32.mrb[0].mxu0
        %4069 = vmatprep.mubr.f32.mxu0 0.0
        %4070 = vmatmul.mubr.f32.gmra.mrb[0].mxu0 %v3868
        %v4071 = vpop.f32.mrb[0].mxu0
        %v4072 = vadd.f32 0.0, %v4071
        %v4073 = vpop.f32.mrb[0].mxu0
        %4074 = vmatprep.mubr.f32.mxu0 0.0
        %4075 = vmatmul.mubr.f32.gmra.mrb[0].mxu0 %v3870
        %v4076 = vpop.f32.mrb[0].mxu0
        %v4077 = vadd.f32 0.0, %v4076
        %v4078 = vpop.f32.mrb[0].mxu0
        %4079 = vmatprep.mubr.f32.mxu0 0.0
        %4080 = vmatmul.mubr.f32.gmra.mrb[0].mxu0 %v3873
        %v4081 = vpop.f32.mrb[0].mxu0
        %v4082 = vadd.f32 0.0, %v4081
        %v4083 = vpop.f32.mrb[0].mxu0
        %4084 = vmatprep.mubr.f32.mxu0 0.0
        %4085 = vmatmul.mubr.f32.gmra.mrb[0].mxu0 %v3875
        %v4086 = vpop.f32.mrb[0].mxu0
        %v4087 = vadd.f32 0.0, %v4086
        %v4088 = vpop.f32.mrb[0].mxu0
        %4089 = vmatprep.mubr.f32.mxu0 0.0
        %4090 = vmatmul.mubr.f32.gmra.mrb[0].mxu0 %v3878
        %v4091 = vpop.f32.mrb[0].mxu0
        %v4092 = vadd.f32 0.0, %v4091
        %v4093 = vpop.f32.mrb[0].mxu0
        %4094 = vmatprep.mubr.f32.mxu0 0.0
        %4095 = vmatmul.mubr.f32.gmra.mrb[0].mxu0 %v3880
        %v4096 = vpop.f32.mrb[0].mxu0
        %v4097 = vadd.f32 0.0, %v4096
        %v4098 = vpop.f32.mrb[0].mxu0
        %4099 = vmatprep.mubr.f32.mxu0 0.0
        %4100 = vmatmul.mubr.f32.gmra.mrb[0].mxu0 %v3883
        %v4101 = vpop.f32.mrb[0].mxu0
        %v4102 = vadd.f32 0.0, %v4101
        %v4103 = vpop.f32.mrb[0].mxu0
        %4104 = vmatprep.mubr.f32.mxu0 0.0
        %4105 = vmatmul.mubr.f32.gmra.mrb[0].mxu0 %v3885
        %v4106 = vpop.f32.mrb[0].mxu0
        %v4107 = vadd.f32 0.0, %v4106
        %v4108 = vpop.f32.mrb[0].mxu0
        %4109 = vmatprep.mubr.f32.mxu0 0.0
        %4110 = vmatmul.mubr.f32.gmra.mrb[0].mxu0 %v3888
        %v4111 = vpop.f32.mrb[0].mxu0
        %v4112 = vadd.f32 0.0, %v4111
        %v4113 = vpop.f32.mrb[0].mxu0
        %4114 = vmatprep.mubr.f32.mxu0 0.0
        %4115 = vmatmul.mubr.f32.gmra.mrb[0].mxu0 %v3890
        %v4116 = vpop.f32.mrb[0].mxu0
        %v4117 = vadd.f32 0.0, %v4116
        %v4118 = vpop.f32.mrb[0].mxu0
        %4119 = vmatprep.mubr.f32.mxu0 0.0
        %4120 = vmatmul.mubr.f32.gmra.mrb[0].mxu0 %v3893
        %v4121 = vpop.f32.mrb[0].mxu0
        %v4122 = vadd.f32 0.0, %v4121
        %v4123 = vpop.f32.mrb[0].mxu0
        %4124 = vmatprep.mubr.f32.mxu0 0.0
        %4125 = vmatmul.mubr.f32.gmra.mrb[0].mxu0 %v3895
        %v4126 = vpop.f32.mrb[0].mxu0
        %v4127 = vadd.f32 0.0, %v4126
        %v4128 = vpop.f32.mrb[0].mxu0
        %4129 = vmatprep.mubr.f32.mxu0 0.0
        %4130 = vmatmul.mubr.f32.gmra.mrb[0].mxu0 %v3898
        %v4131 = vpop.f32.mrb[0].mxu0
        %v4132 = vadd.f32 0.0, %v4131
        %v4133 = vpop.f32.mrb[0].mxu0
        %4134 = vmatprep.mubr.f32.mxu0 0.0
        %4135 = vmatmul.mubr.f32.gmra.mrb[0].mxu0 %v3900
        %v4136 = vpop.f32.mrb[0].mxu0
        %v4137 = vadd.f32 0.0, %v4136
        %v4138 = vpop.f32.mrb[0].mxu0
        %4139 = vmatprep.mubr.f32.mxu0 0.0
        %4140 = vmatmul.mubr.f32.gmra.mrb[0].mxu0 %v3903
        %v4141 = vpop.f32.mrb[0].mxu0
        %v4142 = vadd.f32 0.0, %v4141
        %v4143 = vpop.f32.mrb[0].mxu0
        %4144 = vmatprep.mubr.f32.mxu0 0.0
        %4145 = vmatmul.mubr.f32.gmra.mrb[0].mxu0 %v3905
        %v4146 = vpop.f32.mrb[0].mxu0
        %v4147 = vadd.f32 0.0, %v4146
        %v4148 = vpop.f32.mrb[0].mxu0
        %4149 = vmatprep.mubr.f32.mxu0 0.0
        %4150 = vmatmul.mubr.f32.gmra.mrb[0].mxu0 %v3908
        %v4151 = vpop.f32.mrb[0].mxu0
        %v4152 = vadd.f32 0.0, %v4151
        %v4153 = vpop.f32.mrb[0].mxu0
        %4154 = vmatprep.mubr.f32.mxu0 0.0
        %4155 = vmatmul.mubr.f32.gmra.mrb[0].mxu0 %v3910
        %v4156 = vpop.f32.mrb[0].mxu0
        %v4157 = vadd.f32 0.0, %v4156
        %v4158 = vpop.f32.mrb[0].mxu0
        %4159 = vmatprep.mubr.f32.mxu0 0.0
        %4160 = vmatmul.mubr.f32.gmra.mrb[0].mxu0 %v3913
        %v4161 = vpop.f32.mrb[0].mxu0
        %v4162 = vadd.f32 0.0, %v4161
        %v4163 = vpop.f32.mrb[0].mxu0
        %4164 = vmatprep.mubr.f32.mxu0 0.0
        %4165 = vmatmul.mubr.f32.gmra.mrb[0].mxu0 %v3915
        %v4166 = vpop.f32.mrb[0].mxu0
        %v4167 = vadd.f32 0.0, %v4166
        %v4168 = vpop.f32.mrb[0].mxu0
        %4169 = vmatprep.mubr.f32.mxu0 0.0
        %4170 = vmatmul.mubr.f32.gmra.mrb[0].mxu0 %v3918
        %v4171 = vpop.f32.mrb[0].mxu0
        %v4172 = vadd.f32 0.0, %v4171
        %v4173 = vpop.f32.mrb[0].mxu0
        %4174 = vmatprep.mubr.f32.mxu0 0.0
        %4175 = vmatmul.mubr.f32.gmra.mrb[0].mxu0 %v3920
        %v4176 = vpop.f32.mrb[0].mxu0
        %v4177 = vadd.f32 0.0, %v4176
        %v4178 = vpop.f32.mrb[0].mxu0
        %4179 = vmatprep.mubr.f32.mxu0 0.0
        %4180 = vmatmul.mubr.f32.gmra.mrb[0].mxu0 %v3923
        %v4181 = vpop.f32.mrb[0].mxu0
        %v4182 = vadd.f32 0.0, %v4181
        %v4183 = vpop.f32.mrb[0].mxu0
        %4184 = vmatprep.mubr.f32.mxu0 0.0
        %4185 = vmatmul.mubr.f32.gmra.mrb[0].mxu0 %v3925
        %v4186 = vpop.f32.mrb[0].mxu0
        %v4187 = vadd.f32 0.0, %v4186
        %v4188 = vpop.f32.mrb[0].mxu0
        %4189 = vmatprep.mubr.f32.mxu0 0.0
        %4190 = vmatmul.mubr.f32.gmra.mrb[0].mxu0 %v3928
        %v4191 = vpop.f32.mrb[0].mxu0
        %v4192 = vadd.f32 0.0, %v4191
        %v4193 = vpop.f32.mrb[0].mxu0
        %4194 = vmatprep.mubr.f32.mxu0 0.0
        %4195 = vmatmul.mubr.f32.gmra.mrb[0].mxu0 %v3930
        %v4196 = vpop.f32.mrb[0].mxu0
        %v4197 = vadd.f32 0.0, %v4196
        %v4198 = vpop.f32.mrb[0].mxu0
        %4199 = vmatprep.mubr.f32.mxu0 0.0
        %4200 = vmatmul.mubr.f32.gmra.mrb[0].mxu0 %v3933
        %v4201 = vpop.f32.mrb[0].mxu0
        %v4202 = vadd.f32 0.0, %v4201
        %v4203 = vpop.f32.mrb[0].mxu0
        %4204 = vmatprep.mubr.f32.mxu0 0.0
        %4205 = vmatmul.mubr.f32.gmra.mrb[0].mxu0 %v3935
        %v4206 = vpop.f32.mrb[0].mxu0
        %v4207 = vadd.f32 0.0, %v4206
        %v4208 = vpop.f32.mrb[0].mxu0
        %4209 = vdwg.mxu0
        %v4210 = vadd.f32 %v3698, %v4052
        %v4211 = vadd.f32 %v3703, %v4057
        %v4212 = vadd.f32 %v3708, %v4062
        %v4213 = vadd.f32 %v3713, %v4067
        %v4214 = vadd.f32 %v3718, %v4072
        %v4215 = vadd.f32 %v3723, %v4077
        %v4216 = vadd.f32 %v3728, %v4082
        %v4217 = vadd.f32 %v3733, %v4087
        %v4218 = vadd.f32 %v3738, %v4092
        %v4219 = vadd.f32 %v3743, %v4097
        %v4220 = vadd.f32 %v3748, %v4102
        %v4221 = vadd.f32 %v3753, %v4107
        %v4222 = vadd.f32 %v3758, %v4112
        %v4223 = vadd.f32 %v3763, %v4117
        %v4224 = vadd.f32 %v3768, %v4122
        %v4225 = vadd.f32 %v3773, %v4127
        %v4226 = vadd.f32 %v3778, %v4132
        %v4227 = vadd.f32 %v3783, %v4137
        %v4228 = vadd.f32 %v3788, %v4142
        %v4229 = vadd.f32 %v3793, %v4147
        %v4230 = vadd.f32 %v3798, %v4152
        %v4231 = vadd.f32 %v3803, %v4157
        %v4232 = vadd.f32 %v3808, %v4162
        %v4233 = vadd.f32 %v3813, %v4167
        %v4234 = vadd.f32 %v3818, %v4172
        %v4235 = vadd.f32 %v3823, %v4177
        %v4236 = vadd.f32 %v3828, %v4182
        %v4237 = vadd.f32 %v3833, %v4187
        %v4238 = vadd.f32 %v3838, %v4192
        %v4239 = vadd.f32 %v3843, %v4197
        %v4240 = vadd.f32 %v3848, %v4202
        %v4241 = vadd.f32 %v3853, %v4207
        %s4242 = scalar_lea.vmem [#allocation3], 384
        %v4243 = vld [vmem:[%s4242] sm:$0xff]
        %v4244 = vld [vmem:[%s4242 + $0x8] sm:$0xff]
        %v4245 = vld [vmem:[%s4242 + $0x10] sm:$0xff]
        %v4246 = vld [vmem:[%s4242 + $0x18] sm:$0xff]
        %v4247 = vld [vmem:[%s4242 + $0x20] sm:$0xff]
        %v4248 = vld [vmem:[%s4242 + $0x28] sm:$0xff]
        %v4249 = vld [vmem:[%s4242 + $0x30] sm:$0xff]
        %v4250 = vld [vmem:[%s4242 + $0x38] sm:$0xff]
        %v4251 = vld [vmem:[%s4242 + $0x40] sm:$0xff]
        %v4252 = vld [vmem:[%s4242 + $0x48] sm:$0xff]
        %v4253 = vld [vmem:[%s4242 + $0x50] sm:$0xff]
        %v4254 = vld [vmem:[%s4242 + $0x58] sm:$0xff]
        %v4255 = vld [vmem:[%s4242 + $0x60] sm:$0xff]
        %v4256 = vld [vmem:[%s4242 + $0x68] sm:$0xff]
        %v4257 = vld [vmem:[%s4242 + $0x70] sm:$0xff]
        %v4258 = vld [vmem:[%s4242 + $0x78] sm:$0xff]
        %4259 = vmatprep.subr.mxu0 0.0
        %4260 = vmatpush1.msra.mxu0 %v4243
        %4261 = vmatprep.subr.mxu0 0.0
        %4262 = vmatpush1.msra.mxu0 %v4244
        %4263 = vmatprep.subr.mxu0 0.0
        %4264 = vmatpush1.msra.mxu0 %v4245
        %4265 = vmatprep.subr.mxu0 0.0
        %4266 = vmatpush1.msra.mxu0 %v4246
        %4267 = vmatprep.subr.mxu0 0.0
        %4268 = vmatpush1.msra.mxu0 %v4247
        %4269 = vmatprep.subr.mxu0 0.0
        %4270 = vmatpush1.msra.mxu0 %v4248
        %4271 = vmatprep.subr.mxu0 0.0
        %4272 = vmatpush1.msra.mxu0 %v4249
        %4273 = vmatprep.subr.mxu0 0.0
        %4274 = vmatpush1.msra.mxu0 %v4250
        %4275 = vmatprep.subr.mxu0 0.0
        %4276 = vmatpush1.msra.mxu0 %v4251
        %4277 = vmatprep.subr.mxu0 0.0
        %4278 = vmatpush1.msra.mxu0 %v4252
        %4279 = vmatprep.subr.mxu0 0.0
        %4280 = vmatpush1.msra.mxu0 %v4253
        %4281 = vmatprep.subr.mxu0 0.0
        %4282 = vmatpush1.msra.mxu0 %v4254
        %4283 = vmatprep.subr.mxu0 0.0
        %4284 = vmatpush1.msra.mxu0 %v4255
        %4285 = vmatprep.subr.mxu0 0.0
        %4286 = vmatpush1.msra.mxu0 %v4256
        %4287 = vmatprep.subr.mxu0 0.0
        %4288 = vmatpush1.msra.mxu0 %v4257
        %4289 = vmatprep.subr.mxu0 0.0
        %4290 = vmatpush1.msra.mxu0 %v4258
        %4291 = vmatprep.subr.mxu0 0.0
        %4292 = vmatpush1.msra.mxu0 0.0
        %4293 = vmatprep.subr.mxu0 0.0
        %4294 = vmatpush1.msra.mxu0 0.0
        %4295 = vmatprep.subr.mxu0 0.0
        %4296 = vmatpush1.msra.mxu0 0.0
        %4297 = vmatprep.subr.mxu0 0.0
        %4298 = vmatpush1.msra.mxu0 0.0
        %4299 = vmatprep.subr.mxu0 0.0
        %4300 = vmatpush1.msra.mxu0 0.0
        %4301 = vmatprep.subr.mxu0 0.0
        %4302 = vmatpush1.msra.mxu0 0.0
        %4303 = vmatprep.subr.mxu0 0.0
        %4304 = vmatpush1.msra.mxu0 0.0
        %4305 = vmatprep.subr.mxu0 0.0
        %4306 = vmatpush1.msra.mxu0 0.0
        %4307 = vmatprep.subr.mxu0 0.0
        %4308 = vmatpush1.msra.mxu0 0.0
        %4309 = vmatprep.subr.mxu0 0.0
        %4310 = vmatpush1.msra.mxu0 0.0
        %4311 = vmatprep.subr.mxu0 0.0
        %4312 = vmatpush1.msra.mxu0 0.0
        %4313 = vmatprep.subr.mxu0 0.0
        %4314 = vmatpush1.msra.mxu0 0.0
        %4315 = vmatprep.subr.mxu0 0.0
        %4316 = vmatpush1.msra.mxu0 0.0
        %4317 = vmatprep.subr.mxu0 0.0
        %4318 = vmatpush1.msra.mxu0 0.0
        %4319 = vmatprep.subr.mxu0 0.0
        %4320 = vmatpush1.msra.mxu0 0.0
        %4321 = vmatprep.subr.mxu0 0.0
        %4322 = vmatpush1.msra.mxu0 0.0
        %4323 = vmatprep.mubr.f32.mxu0 0.0
        %4324 = vmatmul.mubr.f32.gmra.mrb[0].mxu0 %v3162
        %v4325 = vpop.f32.mrb[0].mxu0
        %v4326 = vadd.f32 0.0, %v4325
        %v4327 = vpop.f32.mrb[0].mxu0
        %4328 = vmatprep.mubr.f32.mxu0 0.0
        %4329 = vmatmul.mubr.f32.gmra.mrb[0].mxu0 %v3163
        %v4330 = vpop.f32.mrb[0].mxu0
        %v4331 = vadd.f32 0.0, %v4330
        %v4332 = vpop.f32.mrb[0].mxu0
        %4333 = vmatprep.mubr.f32.mxu0 0.0
        %4334 = vmatmul.mubr.f32.gmra.mrb[0].mxu0 %v3165
        %v4335 = vpop.f32.mrb[0].mxu0
        %v4336 = vadd.f32 0.0, %v4335
        %v4337 = vpop.f32.mrb[0].mxu0
        %4338 = vmatprep.mubr.f32.mxu0 0.0
        %4339 = vmatmul.mubr.f32.gmra.mrb[0].mxu0 %v3166
        %v4340 = vpop.f32.mrb[0].mxu0
        %v4341 = vadd.f32 0.0, %v4340
        %v4342 = vpop.f32.mrb[0].mxu0
        %4343 = vmatprep.mubr.f32.mxu0 0.0
        %4344 = vmatmul.mubr.f32.gmra.mrb[0].mxu0 %v3168
        %v4345 = vpop.f32.mrb[0].mxu0
        %v4346 = vadd.f32 0.0, %v4345
        %v4347 = vpop.f32.mrb[0].mxu0
        %4348 = vmatprep.mubr.f32.mxu0 0.0
        %4349 = vmatmul.mubr.f32.gmra.mrb[0].mxu0 %v3169
        %v4350 = vpop.f32.mrb[0].mxu0
        %v4351 = vadd.f32 0.0, %v4350
        %v4352 = vpop.f32.mrb[0].mxu0
        %4353 = vmatprep.mubr.f32.mxu0 0.0
        %4354 = vmatmul.mubr.f32.gmra.mrb[0].mxu0 %v3171
        %v4355 = vpop.f32.mrb[0].mxu0
        %v4356 = vadd.f32 0.0, %v4355
        %v4357 = vpop.f32.mrb[0].mxu0
        %4358 = vmatprep.mubr.f32.mxu0 0.0
        %4359 = vmatmul.mubr.f32.gmra.mrb[0].mxu0 %v3172
        %v4360 = vpop.f32.mrb[0].mxu0
        %v4361 = vadd.f32 0.0, %v4360
        %v4362 = vpop.f32.mrb[0].mxu0
        %4363 = vmatprep.mubr.f32.mxu0 0.0
        %4364 = vmatmul.mubr.f32.gmra.mrb[0].mxu0 %v3174
        %v4365 = vpop.f32.mrb[0].mxu0
        %v4366 = vadd.f32 0.0, %v4365
        %v4367 = vpop.f32.mrb[0].mxu0
        %4368 = vmatprep.mubr.f32.mxu0 0.0
        %4369 = vmatmul.mubr.f32.gmra.mrb[0].mxu0 %v3175
        %v4370 = vpop.f32.mrb[0].mxu0
        %v4371 = vadd.f32 0.0, %v4370
        %v4372 = vpop.f32.mrb[0].mxu0
        %4373 = vmatprep.mubr.f32.mxu0 0.0
        %4374 = vmatmul.mubr.f32.gmra.mrb[0].mxu0 %v3177
        %v4375 = vpop.f32.mrb[0].mxu0
        %v4376 = vadd.f32 0.0, %v4375
        %v4377 = vpop.f32.mrb[0].mxu0
        %4378 = vmatprep.mubr.f32.mxu0 0.0
        %4379 = vmatmul.mubr.f32.gmra.mrb[0].mxu0 %v3178
        %v4380 = vpop.f32.mrb[0].mxu0
        %v4381 = vadd.f32 0.0, %v4380
        %v4382 = vpop.f32.mrb[0].mxu0
        %4383 = vmatprep.mubr.f32.mxu0 0.0
        %4384 = vmatmul.mubr.f32.gmra.mrb[0].mxu0 %v3180
        %v4385 = vpop.f32.mrb[0].mxu0
        %v4386 = vadd.f32 0.0, %v4385
        %v4387 = vpop.f32.mrb[0].mxu0
        %4388 = vmatprep.mubr.f32.mxu0 0.0
        %4389 = vmatmul.mubr.f32.gmra.mrb[0].mxu0 %v3181
        %v4390 = vpop.f32.mrb[0].mxu0
        %v4391 = vadd.f32 0.0, %v4390
        %v4392 = vpop.f32.mrb[0].mxu0
        %4393 = vmatprep.mubr.f32.mxu0 0.0
        %4394 = vmatmul.mubr.f32.gmra.mrb[0].mxu0 %v3183
        %v4395 = vpop.f32.mrb[0].mxu0
        %v4396 = vadd.f32 0.0, %v4395
        %v4397 = vpop.f32.mrb[0].mxu0
        %4398 = vmatprep.mubr.f32.mxu0 0.0
        %4399 = vmatmul.mubr.f32.gmra.mrb[0].mxu0 %v3184
        %v4400 = vpop.f32.mrb[0].mxu0
        %v4401 = vadd.f32 0.0, %v4400
        %v4402 = vpop.f32.mrb[0].mxu0
        %4403 = vmatprep.mubr.f32.mxu0 0.0
        %4404 = vmatmul.mubr.f32.gmra.mrb[0].mxu0 %v3186
        %v4405 = vpop.f32.mrb[0].mxu0
        %v4406 = vadd.f32 0.0, %v4405
        %v4407 = vpop.f32.mrb[0].mxu0
        %4408 = vmatprep.mubr.f32.mxu0 0.0
        %4409 = vmatmul.mubr.f32.gmra.mrb[0].mxu0 %v3187
        %v4410 = vpop.f32.mrb[0].mxu0
        %v4411 = vadd.f32 0.0, %v4410
        %v4412 = vpop.f32.mrb[0].mxu0
        %4413 = vmatprep.mubr.f32.mxu0 0.0
        %4414 = vmatmul.mubr.f32.gmra.mrb[0].mxu0 %v3189
        %v4415 = vpop.f32.mrb[0].mxu0
        %v4416 = vadd.f32 0.0, %v4415
        %v4417 = vpop.f32.mrb[0].mxu0
        %4418 = vmatprep.mubr.f32.mxu0 0.0
        %4419 = vmatmul.mubr.f32.gmra.mrb[0].mxu0 %v3190
        %v4420 = vpop.f32.mrb[0].mxu0
        %v4421 = vadd.f32 0.0, %v4420
        %v4422 = vpop.f32.mrb[0].mxu0
        %4423 = vmatprep.mubr.f32.mxu0 0.0
        %4424 = vmatmul.mubr.f32.gmra.mrb[0].mxu0 %v3192
        %v4425 = vpop.f32.mrb[0].mxu0
        %v4426 = vadd.f32 0.0, %v4425
        %v4427 = vpop.f32.mrb[0].mxu0
        %4428 = vmatprep.mubr.f32.mxu0 0.0
        %4429 = vmatmul.mubr.f32.gmra.mrb[0].mxu0 %v3193
        %v4430 = vpop.f32.mrb[0].mxu0
        %v4431 = vadd.f32 0.0, %v4430
        %v4432 = vpop.f32.mrb[0].mxu0
        %4433 = vmatprep.mubr.f32.mxu0 0.0
        %4434 = vmatmul.mubr.f32.gmra.mrb[0].mxu0 %v3195
        %v4435 = vpop.f32.mrb[0].mxu0
        %v4436 = vadd.f32 0.0, %v4435
        %v4437 = vpop.f32.mrb[0].mxu0
        %4438 = vmatprep.mubr.f32.mxu0 0.0
        %4439 = vmatmul.mubr.f32.gmra.mrb[0].mxu0 %v3196
        %v4440 = vpop.f32.mrb[0].mxu0
        %v4441 = vadd.f32 0.0, %v4440
        %v4442 = vpop.f32.mrb[0].mxu0
        %4443 = vmatprep.mubr.f32.mxu0 0.0
        %4444 = vmatmul.mubr.f32.gmra.mrb[0].mxu0 %v3198
        %v4445 = vpop.f32.mrb[0].mxu0
        %v4446 = vadd.f32 0.0, %v4445
        %v4447 = vpop.f32.mrb[0].mxu0
        %4448 = vmatprep.mubr.f32.mxu0 0.0
        %4449 = vmatmul.mubr.f32.gmra.mrb[0].mxu0 %v3199
        %v4450 = vpop.f32.mrb[0].mxu0
        %v4451 = vadd.f32 0.0, %v4450
        %v4452 = vpop.f32.mrb[0].mxu0
        %4453 = vmatprep.mubr.f32.mxu0 0.0
        %4454 = vmatmul.mubr.f32.gmra.mrb[0].mxu0 %v3201
        %v4455 = vpop.f32.mrb[0].mxu0
        %v4456 = vadd.f32 0.0, %v4455
        %v4457 = vpop.f32.mrb[0].mxu0
        %4458 = vmatprep.mubr.f32.mxu0 0.0
        %4459 = vmatmul.mubr.f32.gmra.mrb[0].mxu0 %v3202
        %v4460 = vpop.f32.mrb[0].mxu0
        %v4461 = vadd.f32 0.0, %v4460
        %v4462 = vpop.f32.mrb[0].mxu0
        %4463 = vmatprep.mubr.f32.mxu0 0.0
        %4464 = vmatmul.mubr.f32.gmra.mrb[0].mxu0 %v3204
        %v4465 = vpop.f32.mrb[0].mxu0
        %v4466 = vadd.f32 0.0, %v4465
        %v4467 = vpop.f32.mrb[0].mxu0
        %4468 = vmatprep.mubr.f32.mxu0 0.0
        %4469 = vmatmul.mubr.f32.gmra.mrb[0].mxu0 %v3205
        %v4470 = vpop.f32.mrb[0].mxu0
        %v4471 = vadd.f32 0.0, %v4470
        %v4472 = vpop.f32.mrb[0].mxu0
        %4473 = vmatprep.mubr.f32.mxu0 0.0
        %4474 = vmatmul.mubr.f32.gmra.mrb[0].mxu0 %v3207
        %v4475 = vpop.f32.mrb[0].mxu0
        %v4476 = vadd.f32 0.0, %v4475
        %v4477 = vpop.f32.mrb[0].mxu0
        %4478 = vmatprep.mubr.f32.mxu0 0.0
        %4479 = vmatmul.mubr.f32.gmra.mrb[0].mxu0 %v3208
        %v4480 = vpop.f32.mrb[0].mxu0
        %v4481 = vadd.f32 0.0, %v4480
        %v4482 = vpop.f32.mrb[0].mxu0
        %4483 = vdwg.mxu0
        %v4484 = vadd.f32 %v4210, %v4326
        %v4485 = vadd.f32 %v4211, %v4331
        %v4486 = vadd.f32 %v4212, %v4336
        %v4487 = vadd.f32 %v4213, %v4341
        %v4488 = vadd.f32 %v4214, %v4346
        %v4489 = vadd.f32 %v4215, %v4351
        %v4490 = vadd.f32 %v4216, %v4356
        %v4491 = vadd.f32 %v4217, %v4361
        %v4492 = vadd.f32 %v4218, %v4366
        %v4493 = vadd.f32 %v4219, %v4371
        %v4494 = vadd.f32 %v4220, %v4376
        %v4495 = vadd.f32 %v4221, %v4381
        %v4496 = vadd.f32 %v4222, %v4386
        %v4497 = vadd.f32 %v4223, %v4391
        %v4498 = vadd.f32 %v4224, %v4396
        %v4499 = vadd.f32 %v4225, %v4401
        %v4500 = vadd.f32 %v4226, %v4406
        %v4501 = vadd.f32 %v4227, %v4411
        %v4502 = vadd.f32 %v4228, %v4416
        %v4503 = vadd.f32 %v4229, %v4421
        %v4504 = vadd.f32 %v4230, %v4426
        %v4505 = vadd.f32 %v4231, %v4431
        %v4506 = vadd.f32 %v4232, %v4436
        %v4507 = vadd.f32 %v4233, %v4441
        %v4508 = vadd.f32 %v4234, %v4446
        %v4509 = vadd.f32 %v4235, %v4451
        %v4510 = vadd.f32 %v4236, %v4456
        %v4511 = vadd.f32 %v4237, %v4461
        %v4512 = vadd.f32 %v4238, %v4466
        %v4513 = vadd.f32 %v4239, %v4471
        %v4514 = vadd.f32 %v4240, %v4476
        %v4515 = vadd.f32 %v4241, %v4481
        %v4519 = vrot.slane %v3207, 1
        %v4520 = vrot.slane %v3208, 1
        %v4521 = vsel %vm356, %v4519, %v4520
        %v4522 = vrot.slane %v3209, 1
        %v4523 = vsel %vm356, %v4520, %v4522
        %s4526 = scalar_lea.vmem [#allocation3], 512
        %v4527 = vld [vmem:[%s4526] sm:$0xff]
        %v4528 = vld [vmem:[%s4526 + $0x8] sm:$0xff]
        %v4529 = vld [vmem:[%s4526 + $0x10] sm:$0xff]
        %v4530 = vld [vmem:[%s4526 + $0x18] sm:$0xff]
        %v4531 = vld [vmem:[%s4526 + $0x20] sm:$0xff]
        %v4532 = vld [vmem:[%s4526 + $0x28] sm:$0xff]
        %v4533 = vld [vmem:[%s4526 + $0x30] sm:$0xff]
        %v4534 = vld [vmem:[%s4526 + $0x38] sm:$0xff]
        %v4535 = vld [vmem:[%s4526 + $0x40] sm:$0xff]
        %v4536 = vld [vmem:[%s4526 + $0x48] sm:$0xff]
        %v4537 = vld [vmem:[%s4526 + $0x50] sm:$0xff]
        %v4538 = vld [vmem:[%s4526 + $0x58] sm:$0xff]
        %v4539 = vld [vmem:[%s4526 + $0x60] sm:$0xff]
        %v4540 = vld [vmem:[%s4526 + $0x68] sm:$0xff]
        %v4541 = vld [vmem:[%s4526 + $0x70] sm:$0xff]
        %v4542 = vld [vmem:[%s4526 + $0x78] sm:$0xff]
        %4543 = vmatprep.subr.mxu0 0.0
        %4544 = vmatpush1.msra.mxu0 %v4527
        %4545 = vmatprep.subr.mxu0 0.0
        %4546 = vmatpush1.msra.mxu0 %v4528
        %4547 = vmatprep.subr.mxu0 0.0
        %4548 = vmatpush1.msra.mxu0 %v4529
        %4549 = vmatprep.subr.mxu0 0.0
        %4550 = vmatpush1.msra.mxu0 %v4530
        %4551 = vmatprep.subr.mxu0 0.0
        %4552 = vmatpush1.msra.mxu0 %v4531
        %4553 = vmatprep.subr.mxu0 0.0
        %4554 = vmatpush1.msra.mxu0 %v4532
        %4555 = vmatprep.subr.mxu0 0.0
        %4556 = vmatpush1.msra.mxu0 %v4533
        %4557 = vmatprep.subr.mxu0 0.0
        %4558 = vmatpush1.msra.mxu0 %v4534
        %4559 = vmatprep.subr.mxu0 0.0
        %4560 = vmatpush1.msra.mxu0 %v4535
        %4561 = vmatprep.subr.mxu0 0.0
        %4562 = vmatpush1.msra.mxu0 %v4536
        %4563 = vmatprep.subr.mxu0 0.0
        %4564 = vmatpush1.msra.mxu0 %v4537
        %4565 = vmatprep.subr.mxu0 0.0
        %4566 = vmatpush1.msra.mxu0 %v4538
        %4567 = vmatprep.subr.mxu0 0.0
        %4568 = vmatpush1.msra.mxu0 %v4539
        %4569 = vmatprep.subr.mxu0 0.0
        %4570 = vmatpush1.msra.mxu0 %v4540
        %4571 = vmatprep.subr.mxu0 0.0
        %4572 = vmatpush1.msra.mxu0 %v4541
        %4573 = vmatprep.subr.mxu0 0.0
        %4574 = vmatpush1.msra.mxu0 %v4542
        %4575 = vmatprep.subr.mxu0 0.0
        %4576 = vmatpush1.msra.mxu0 0.0
        %4577 = vmatprep.subr.mxu0 0.0
        %4578 = vmatpush1.msra.mxu0 0.0
        %4579 = vmatprep.subr.mxu0 0.0
        %4580 = vmatpush1.msra.mxu0 0.0
        %4581 = vmatprep.subr.mxu0 0.0
        %4582 = vmatpush1.msra.mxu0 0.0
        %4583 = vmatprep.subr.mxu0 0.0
        %4584 = vmatpush1.msra.mxu0 0.0
        %4585 = vmatprep.subr.mxu0 0.0
        %4586 = vmatpush1.msra.mxu0 0.0
        %4587 = vmatprep.subr.mxu0 0.0
        %4588 = vmatpush1.msra.mxu0 0.0
        %4589 = vmatprep.subr.mxu0 0.0
        %4590 = vmatpush1.msra.mxu0 0.0
        %4591 = vmatprep.subr.mxu0 0.0
        %4592 = vmatpush1.msra.mxu0 0.0
        %4593 = vmatprep.subr.mxu0 0.0
        %4594 = vmatpush1.msra.mxu0 0.0
        %4595 = vmatprep.subr.mxu0 0.0
        %4596 = vmatpush1.msra.mxu0 0.0
        %4597 = vmatprep.subr.mxu0 0.0
        %4598 = vmatpush1.msra.mxu0 0.0
        %4599 = vmatprep.subr.mxu0 0.0
        %4600 = vmatpush1.msra.mxu0 0.0
        %4601 = vmatprep.subr.mxu0 0.0
        %4602 = vmatpush1.msra.mxu0 0.0
        %4603 = vmatprep.subr.mxu0 0.0
        %4604 = vmatpush1.msra.mxu0 0.0
        %4605 = vmatprep.subr.mxu0 0.0
        %4606 = vmatpush1.msra.mxu0 0.0
        %4607 = vmatprep.mubr.f32.mxu0 0.0
        %4608 = vmatmul.mubr.f32.gmra.mrb[0].mxu0 %v3284
        %v4609 = vpop.f32.mrb[0].mxu0
        %v4610 = vadd.f32 0.0, %v4609
        %v4611 = vpop.f32.mrb[0].mxu0
        %4612 = vmatprep.mubr.f32.mxu0 0.0
        %4613 = vmatmul.mubr.f32.gmra.mrb[0].mxu0 %v3286
        %v4614 = vpop.f32.mrb[0].mxu0
        %v4615 = vadd.f32 0.0, %v4614
        %v4616 = vpop.f32.mrb[0].mxu0
        %4617 = vmatprep.mubr.f32.mxu0 0.0
        %4618 = vmatmul.mubr.f32.gmra.mrb[0].mxu0 %v3289
        %v4619 = vpop.f32.mrb[0].mxu0
        %v4620 = vadd.f32 0.0, %v4619
        %v4621 = vpop.f32.mrb[0].mxu0
        %4622 = vmatprep.mubr.f32.mxu0 0.0
        %4623 = vmatmul.mubr.f32.gmra.mrb[0].mxu0 %v3291
        %v4624 = vpop.f32.mrb[0].mxu0
        %v4625 = vadd.f32 0.0, %v4624
        %v4626 = vpop.f32.mrb[0].mxu0
        %4627 = vmatprep.mubr.f32.mxu0 0.0
        %4628 = vmatmul.mubr.f32.gmra.mrb[0].mxu0 %v3294
        %v4629 = vpop.f32.mrb[0].mxu0
        %v4630 = vadd.f32 0.0, %v4629
        %v4631 = vpop.f32.mrb[0].mxu0
        %4632 = vmatprep.mubr.f32.mxu0 0.0
        %4633 = vmatmul.mubr.f32.gmra.mrb[0].mxu0 %v3296
        %v4634 = vpop.f32.mrb[0].mxu0
        %v4635 = vadd.f32 0.0, %v4634
        %v4636 = vpop.f32.mrb[0].mxu0
        %4637 = vmatprep.mubr.f32.mxu0 0.0
        %4638 = vmatmul.mubr.f32.gmra.mrb[0].mxu0 %v3299
        %v4639 = vpop.f32.mrb[0].mxu0
        %v4640 = vadd.f32 0.0, %v4639
        %v4641 = vpop.f32.mrb[0].mxu0
        %4642 = vmatprep.mubr.f32.mxu0 0.0
        %4643 = vmatmul.mubr.f32.gmra.mrb[0].mxu0 %v3301
        %v4644 = vpop.f32.mrb[0].mxu0
        %v4645 = vadd.f32 0.0, %v4644
        %v4646 = vpop.f32.mrb[0].mxu0
        %4647 = vmatprep.mubr.f32.mxu0 0.0
        %4648 = vmatmul.mubr.f32.gmra.mrb[0].mxu0 %v3304
        %v4649 = vpop.f32.mrb[0].mxu0
        %v4650 = vadd.f32 0.0, %v4649
        %v4651 = vpop.f32.mrb[0].mxu0
        %4652 = vmatprep.mubr.f32.mxu0 0.0
        %4653 = vmatmul.mubr.f32.gmra.mrb[0].mxu0 %v3306
        %v4654 = vpop.f32.mrb[0].mxu0
        %v4655 = vadd.f32 0.0, %v4654
        %v4656 = vpop.f32.mrb[0].mxu0
        %4657 = vmatprep.mubr.f32.mxu0 0.0
        %4658 = vmatmul.mubr.f32.gmra.mrb[0].mxu0 %v3309
        %v4659 = vpop.f32.mrb[0].mxu0
        %v4660 = vadd.f32 0.0, %v4659
        %v4661 = vpop.f32.mrb[0].mxu0
        %4662 = vmatprep.mubr.f32.mxu0 0.0
        %4663 = vmatmul.mubr.f32.gmra.mrb[0].mxu0 %v3311
        %v4664 = vpop.f32.mrb[0].mxu0
        %v4665 = vadd.f32 0.0, %v4664
        %v4666 = vpop.f32.mrb[0].mxu0
        %4667 = vmatprep.mubr.f32.mxu0 0.0
        %4668 = vmatmul.mubr.f32.gmra.mrb[0].mxu0 %v3314
        %v4669 = vpop.f32.mrb[0].mxu0
        %v4670 = vadd.f32 0.0, %v4669
        %v4671 = vpop.f32.mrb[0].mxu0
        %4672 = vmatprep.mubr.f32.mxu0 0.0
        %4673 = vmatmul.mubr.f32.gmra.mrb[0].mxu0 %v3316
        %v4674 = vpop.f32.mrb[0].mxu0
        %v4675 = vadd.f32 0.0, %v4674
        %v4676 = vpop.f32.mrb[0].mxu0
        %4677 = vmatprep.mubr.f32.mxu0 0.0
        %4678 = vmatmul.mubr.f32.gmra.mrb[0].mxu0 %v3319
        %v4679 = vpop.f32.mrb[0].mxu0
        %v4680 = vadd.f32 0.0, %v4679
        %v4681 = vpop.f32.mrb[0].mxu0
        %4682 = vmatprep.mubr.f32.mxu0 0.0
        %4683 = vmatmul.mubr.f32.gmra.mrb[0].mxu0 %v3321
        %v4684 = vpop.f32.mrb[0].mxu0
        %v4685 = vadd.f32 0.0, %v4684
        %v4686 = vpop.f32.mrb[0].mxu0
        %4687 = vmatprep.mubr.f32.mxu0 0.0
        %4688 = vmatmul.mubr.f32.gmra.mrb[0].mxu0 %v3324
        %v4689 = vpop.f32.mrb[0].mxu0
        %v4690 = vadd.f32 0.0, %v4689
        %v4691 = vpop.f32.mrb[0].mxu0
        %4692 = vmatprep.mubr.f32.mxu0 0.0
        %4693 = vmatmul.mubr.f32.gmra.mrb[0].mxu0 %v3326
        %v4694 = vpop.f32.mrb[0].mxu0
        %v4695 = vadd.f32 0.0, %v4694
        %v4696 = vpop.f32.mrb[0].mxu0
        %4697 = vmatprep.mubr.f32.mxu0 0.0
        %4698 = vmatmul.mubr.f32.gmra.mrb[0].mxu0 %v3329
        %v4699 = vpop.f32.mrb[0].mxu0
        %v4700 = vadd.f32 0.0, %v4699
        %v4701 = vpop.f32.mrb[0].mxu0
        %4702 = vmatprep.mubr.f32.mxu0 0.0
        %4703 = vmatmul.mubr.f32.gmra.mrb[0].mxu0 %v3331
        %v4704 = vpop.f32.mrb[0].mxu0
        %v4705 = vadd.f32 0.0, %v4704
        %v4706 = vpop.f32.mrb[0].mxu0
        %4707 = vmatprep.mubr.f32.mxu0 0.0
        %4708 = vmatmul.mubr.f32.gmra.mrb[0].mxu0 %v3334
        %v4709 = vpop.f32.mrb[0].mxu0
        %v4710 = vadd.f32 0.0, %v4709
        %v4711 = vpop.f32.mrb[0].mxu0
        %4712 = vmatprep.mubr.f32.mxu0 0.0
        %4713 = vmatmul.mubr.f32.gmra.mrb[0].mxu0 %v3336
        %v4714 = vpop.f32.mrb[0].mxu0
        %v4715 = vadd.f32 0.0, %v4714
        %v4716 = vpop.f32.mrb[0].mxu0
        %4717 = vmatprep.mubr.f32.mxu0 0.0
        %4718 = vmatmul.mubr.f32.gmra.mrb[0].mxu0 %v3339
        %v4719 = vpop.f32.mrb[0].mxu0
        %v4720 = vadd.f32 0.0, %v4719
        %v4721 = vpop.f32.mrb[0].mxu0
        %4722 = vmatprep.mubr.f32.mxu0 0.0
        %4723 = vmatmul.mubr.f32.gmra.mrb[0].mxu0 %v3341
        %v4724 = vpop.f32.mrb[0].mxu0
        %v4725 = vadd.f32 0.0, %v4724
        %v4726 = vpop.f32.mrb[0].mxu0
        %4727 = vmatprep.mubr.f32.mxu0 0.0
        %4728 = vmatmul.mubr.f32.gmra.mrb[0].mxu0 %v3344
        %v4729 = vpop.f32.mrb[0].mxu0
        %v4730 = vadd.f32 0.0, %v4729
        %v4731 = vpop.f32.mrb[0].mxu0
        %4732 = vmatprep.mubr.f32.mxu0 0.0
        %4733 = vmatmul.mubr.f32.gmra.mrb[0].mxu0 %v3346
        %v4734 = vpop.f32.mrb[0].mxu0
        %v4735 = vadd.f32 0.0, %v4734
        %v4736 = vpop.f32.mrb[0].mxu0
        %4737 = vmatprep.mubr.f32.mxu0 0.0
        %4738 = vmatmul.mubr.f32.gmra.mrb[0].mxu0 %v3349
        %v4739 = vpop.f32.mrb[0].mxu0
        %v4740 = vadd.f32 0.0, %v4739
        %v4741 = vpop.f32.mrb[0].mxu0
        %4742 = vmatprep.mubr.f32.mxu0 0.0
        %4743 = vmatmul.mubr.f32.gmra.mrb[0].mxu0 %v3351
        %v4744 = vpop.f32.mrb[0].mxu0
        %v4745 = vadd.f32 0.0, %v4744
        %v4746 = vpop.f32.mrb[0].mxu0
        %4747 = vmatprep.mubr.f32.mxu0 0.0
        %4748 = vmatmul.mubr.f32.gmra.mrb[0].mxu0 %v3354
        %v4749 = vpop.f32.mrb[0].mxu0
        %v4750 = vadd.f32 0.0, %v4749
        %v4751 = vpop.f32.mrb[0].mxu0
        %4752 = vmatprep.mubr.f32.mxu0 0.0
        %4753 = vmatmul.mubr.f32.gmra.mrb[0].mxu0 %v3356
        %v4754 = vpop.f32.mrb[0].mxu0
        %v4755 = vadd.f32 0.0, %v4754
        %v4756 = vpop.f32.mrb[0].mxu0
        %4757 = vmatprep.mubr.f32.mxu0 0.0
        %4758 = vmatmul.mubr.f32.gmra.mrb[0].mxu0 %v4521
        %v4759 = vpop.f32.mrb[0].mxu0
        %v4760 = vadd.f32 0.0, %v4759
        %v4761 = vpop.f32.mrb[0].mxu0
        %4762 = vmatprep.mubr.f32.mxu0 0.0
        %4763 = vmatmul.mubr.f32.gmra.mrb[0].mxu0 %v4523
        %v4764 = vpop.f32.mrb[0].mxu0
        %v4765 = vadd.f32 0.0, %v4764
        %v4766 = vpop.f32.mrb[0].mxu0
        %4767 = vdwg.mxu0
        %v4768 = vadd.f32 %v4484, %v4610
        %v4769 = vadd.f32 %v4485, %v4615
        %v4770 = vadd.f32 %v4486, %v4620
        %v4771 = vadd.f32 %v4487, %v4625
        %v4772 = vadd.f32 %v4488, %v4630
        %v4773 = vadd.f32 %v4489, %v4635
        %v4774 = vadd.f32 %v4490, %v4640
        %v4775 = vadd.f32 %v4491, %v4645
        %v4776 = vadd.f32 %v4492, %v4650
        %v4777 = vadd.f32 %v4493, %v4655
        %v4778 = vadd.f32 %v4494, %v4660
        %v4779 = vadd.f32 %v4495, %v4665
        %v4780 = vadd.f32 %v4496, %v4670
        %v4781 = vadd.f32 %v4497, %v4675
        %v4782 = vadd.f32 %v4498, %v4680
        %v4783 = vadd.f32 %v4499, %v4685
        %v4784 = vadd.f32 %v4500, %v4690
        %v4785 = vadd.f32 %v4501, %v4695
        %v4786 = vadd.f32 %v4502, %v4700
        %v4787 = vadd.f32 %v4503, %v4705
        %v4788 = vadd.f32 %v4504, %v4710
        %v4789 = vadd.f32 %v4505, %v4715
        %v4790 = vadd.f32 %v4506, %v4720
        %v4791 = vadd.f32 %v4507, %v4725
        %v4792 = vadd.f32 %v4508, %v4730
        %v4793 = vadd.f32 %v4509, %v4735
        %v4794 = vadd.f32 %v4510, %v4740
        %v4795 = vadd.f32 %v4511, %v4745
        %v4796 = vadd.f32 %v4512, %v4750
        %v4797 = vadd.f32 %v4513, %v4755
        %v4798 = vadd.f32 %v4514, %v4760
        %v4799 = vadd.f32 %v4515, %v4765
        %v4800 = vrot.slane %v3207, 2
        %v4801 = vrot.slane %v3208, 2
        %v4802 = vsel %vm936, %v4800, %v4801
        %v4803 = vrot.slane %v3209, 2
        %v4804 = vsel %vm936, %v4801, %v4803
        %s4807 = scalar_lea.vmem [#allocation3], 640
        %v4808 = vld [vmem:[%s4807] sm:$0xff]
        %v4809 = vld [vmem:[%s4807 + $0x8] sm:$0xff]
        %v4810 = vld [vmem:[%s4807 + $0x10] sm:$0xff]
        %v4811 = vld [vmem:[%s4807 + $0x18] sm:$0xff]
        %v4812 = vld [vmem:[%s4807 + $0x20] sm:$0xff]
        %v4813 = vld [vmem:[%s4807 + $0x28] sm:$0xff]
        %v4814 = vld [vmem:[%s4807 + $0x30] sm:$0xff]
        %v4815 = vld [vmem:[%s4807 + $0x38] sm:$0xff]
        %v4816 = vld [vmem:[%s4807 + $0x40] sm:$0xff]
        %v4817 = vld [vmem:[%s4807 + $0x48] sm:$0xff]
        %v4818 = vld [vmem:[%s4807 + $0x50] sm:$0xff]
        %v4819 = vld [vmem:[%s4807 + $0x58] sm:$0xff]
        %v4820 = vld [vmem:[%s4807 + $0x60] sm:$0xff]
        %v4821 = vld [vmem:[%s4807 + $0x68] sm:$0xff]
        %v4822 = vld [vmem:[%s4807 + $0x70] sm:$0xff]
        %v4823 = vld [vmem:[%s4807 + $0x78] sm:$0xff]
        %4824 = vmatprep.subr.mxu0 0.0
        %4825 = vmatpush1.msra.mxu0 %v4808
        %4826 = vmatprep.subr.mxu0 0.0
        %4827 = vmatpush1.msra.mxu0 %v4809
        %4828 = vmatprep.subr.mxu0 0.0
        %4829 = vmatpush1.msra.mxu0 %v4810
        %4830 = vmatprep.subr.mxu0 0.0
        %4831 = vmatpush1.msra.mxu0 %v4811
        %4832 = vmatprep.subr.mxu0 0.0
        %4833 = vmatpush1.msra.mxu0 %v4812
        %4834 = vmatprep.subr.mxu0 0.0
        %4835 = vmatpush1.msra.mxu0 %v4813
        %4836 = vmatprep.subr.mxu0 0.0
        %4837 = vmatpush1.msra.mxu0 %v4814
        %4838 = vmatprep.subr.mxu0 0.0
        %4839 = vmatpush1.msra.mxu0 %v4815
        %4840 = vmatprep.subr.mxu0 0.0
        %4841 = vmatpush1.msra.mxu0 %v4816
        %4842 = vmatprep.subr.mxu0 0.0
        %4843 = vmatpush1.msra.mxu0 %v4817
        %4844 = vmatprep.subr.mxu0 0.0
        %4845 = vmatpush1.msra.mxu0 %v4818
        %4846 = vmatprep.subr.mxu0 0.0
        %4847 = vmatpush1.msra.mxu0 %v4819
        %4848 = vmatprep.subr.mxu0 0.0
        %4849 = vmatpush1.msra.mxu0 %v4820
        %4850 = vmatprep.subr.mxu0 0.0
        %4851 = vmatpush1.msra.mxu0 %v4821
        %4852 = vmatprep.subr.mxu0 0.0
        %4853 = vmatpush1.msra.mxu0 %v4822
        %4854 = vmatprep.subr.mxu0 0.0
        %4855 = vmatpush1.msra.mxu0 %v4823
        %4856 = vmatprep.subr.mxu0 0.0
        %4857 = vmatpush1.msra.mxu0 0.0
        %4858 = vmatprep.subr.mxu0 0.0
        %4859 = vmatpush1.msra.mxu0 0.0
        %4860 = vmatprep.subr.mxu0 0.0
        %4861 = vmatpush1.msra.mxu0 0.0
        %4862 = vmatprep.subr.mxu0 0.0
        %4863 = vmatpush1.msra.mxu0 0.0
        %4864 = vmatprep.subr.mxu0 0.0
        %4865 = vmatpush1.msra.mxu0 0.0
        %4866 = vmatprep.subr.mxu0 0.0
        %4867 = vmatpush1.msra.mxu0 0.0
        %4868 = vmatprep.subr.mxu0 0.0
        %4869 = vmatpush1.msra.mxu0 0.0
        %4870 = vmatprep.subr.mxu0 0.0
        %4871 = vmatpush1.msra.mxu0 0.0
        %4872 = vmatprep.subr.mxu0 0.0
        %4873 = vmatpush1.msra.mxu0 0.0
        %4874 = vmatprep.subr.mxu0 0.0
        %4875 = vmatpush1.msra.mxu0 0.0
        %4876 = vmatprep.subr.mxu0 0.0
        %4877 = vmatpush1.msra.mxu0 0.0
        %4878 = vmatprep.subr.mxu0 0.0
        %4879 = vmatpush1.msra.mxu0 0.0
        %4880 = vmatprep.subr.mxu0 0.0
        %4881 = vmatpush1.msra.mxu0 0.0
        %4882 = vmatprep.subr.mxu0 0.0
        %4883 = vmatpush1.msra.mxu0 0.0
        %4884 = vmatprep.subr.mxu0 0.0
        %4885 = vmatpush1.msra.mxu0 0.0
        %4886 = vmatprep.subr.mxu0 0.0
        %4887 = vmatpush1.msra.mxu0 0.0
        %4888 = vmatprep.mubr.f32.mxu0 0.0
        %4889 = vmatmul.mubr.f32.gmra.mrb[0].mxu0 %v3863
        %v4890 = vpop.f32.mrb[0].mxu0
        %v4891 = vadd.f32 0.0, %v4890
        %v4892 = vpop.f32.mrb[0].mxu0
        %4893 = vmatprep.mubr.f32.mxu0 0.0
        %4894 = vmatmul.mubr.f32.gmra.mrb[0].mxu0 %v3865
        %v4895 = vpop.f32.mrb[0].mxu0
        %v4896 = vadd.f32 0.0, %v4895
        %v4897 = vpop.f32.mrb[0].mxu0
        %4898 = vmatprep.mubr.f32.mxu0 0.0
        %4899 = vmatmul.mubr.f32.gmra.mrb[0].mxu0 %v3868
        %v4900 = vpop.f32.mrb[0].mxu0
        %v4901 = vadd.f32 0.0, %v4900
        %v4902 = vpop.f32.mrb[0].mxu0
        %4903 = vmatprep.mubr.f32.mxu0 0.0
        %4904 = vmatmul.mubr.f32.gmra.mrb[0].mxu0 %v3870
        %v4905 = vpop.f32.mrb[0].mxu0
        %v4906 = vadd.f32 0.0, %v4905
        %v4907 = vpop.f32.mrb[0].mxu0
        %4908 = vmatprep.mubr.f32.mxu0 0.0
        %4909 = vmatmul.mubr.f32.gmra.mrb[0].mxu0 %v3873
        %v4910 = vpop.f32.mrb[0].mxu0
        %v4911 = vadd.f32 0.0, %v4910
        %v4912 = vpop.f32.mrb[0].mxu0
        %4913 = vmatprep.mubr.f32.mxu0 0.0
        %4914 = vmatmul.mubr.f32.gmra.mrb[0].mxu0 %v3875
        %v4915 = vpop.f32.mrb[0].mxu0
        %v4916 = vadd.f32 0.0, %v4915
        %v4917 = vpop.f32.mrb[0].mxu0
        %4918 = vmatprep.mubr.f32.mxu0 0.0
        %4919 = vmatmul.mubr.f32.gmra.mrb[0].mxu0 %v3878
        %v4920 = vpop.f32.mrb[0].mxu0
        %v4921 = vadd.f32 0.0, %v4920
        %v4922 = vpop.f32.mrb[0].mxu0
        %4923 = vmatprep.mubr.f32.mxu0 0.0
        %4924 = vmatmul.mubr.f32.gmra.mrb[0].mxu0 %v3880
        %v4925 = vpop.f32.mrb[0].mxu0
        %v4926 = vadd.f32 0.0, %v4925
        %v4927 = vpop.f32.mrb[0].mxu0
        %4928 = vmatprep.mubr.f32.mxu0 0.0
        %4929 = vmatmul.mubr.f32.gmra.mrb[0].mxu0 %v3883
        %v4930 = vpop.f32.mrb[0].mxu0
        %v4931 = vadd.f32 0.0, %v4930
        %v4932 = vpop.f32.mrb[0].mxu0
        %4933 = vmatprep.mubr.f32.mxu0 0.0
        %4934 = vmatmul.mubr.f32.gmra.mrb[0].mxu0 %v3885
        %v4935 = vpop.f32.mrb[0].mxu0
        %v4936 = vadd.f32 0.0, %v4935
        %v4937 = vpop.f32.mrb[0].mxu0
        %4938 = vmatprep.mubr.f32.mxu0 0.0
        %4939 = vmatmul.mubr.f32.gmra.mrb[0].mxu0 %v3888
        %v4940 = vpop.f32.mrb[0].mxu0
        %v4941 = vadd.f32 0.0, %v4940
        %v4942 = vpop.f32.mrb[0].mxu0
        %4943 = vmatprep.mubr.f32.mxu0 0.0
        %4944 = vmatmul.mubr.f32.gmra.mrb[0].mxu0 %v3890
        %v4945 = vpop.f32.mrb[0].mxu0
        %v4946 = vadd.f32 0.0, %v4945
        %v4947 = vpop.f32.mrb[0].mxu0
        %4948 = vmatprep.mubr.f32.mxu0 0.0
        %4949 = vmatmul.mubr.f32.gmra.mrb[0].mxu0 %v3893
        %v4950 = vpop.f32.mrb[0].mxu0
        %v4951 = vadd.f32 0.0, %v4950
        %v4952 = vpop.f32.mrb[0].mxu0
        %4953 = vmatprep.mubr.f32.mxu0 0.0
        %4954 = vmatmul.mubr.f32.gmra.mrb[0].mxu0 %v3895
        %v4955 = vpop.f32.mrb[0].mxu0
        %v4956 = vadd.f32 0.0, %v4955
        %v4957 = vpop.f32.mrb[0].mxu0
        %4958 = vmatprep.mubr.f32.mxu0 0.0
        %4959 = vmatmul.mubr.f32.gmra.mrb[0].mxu0 %v3898
        %v4960 = vpop.f32.mrb[0].mxu0
        %v4961 = vadd.f32 0.0, %v4960
        %v4962 = vpop.f32.mrb[0].mxu0
        %4963 = vmatprep.mubr.f32.mxu0 0.0
        %4964 = vmatmul.mubr.f32.gmra.mrb[0].mxu0 %v3900
        %v4965 = vpop.f32.mrb[0].mxu0
        %v4966 = vadd.f32 0.0, %v4965
        %v4967 = vpop.f32.mrb[0].mxu0
        %4968 = vmatprep.mubr.f32.mxu0 0.0
        %4969 = vmatmul.mubr.f32.gmra.mrb[0].mxu0 %v3903
        %v4970 = vpop.f32.mrb[0].mxu0
        %v4971 = vadd.f32 0.0, %v4970
        %v4972 = vpop.f32.mrb[0].mxu0
        %4973 = vmatprep.mubr.f32.mxu0 0.0
        %4974 = vmatmul.mubr.f32.gmra.mrb[0].mxu0 %v3905
        %v4975 = vpop.f32.mrb[0].mxu0
        %v4976 = vadd.f32 0.0, %v4975
        %v4977 = vpop.f32.mrb[0].mxu0
        %4978 = vmatprep.mubr.f32.mxu0 0.0
        %4979 = vmatmul.mubr.f32.gmra.mrb[0].mxu0 %v3908
        %v4980 = vpop.f32.mrb[0].mxu0
        %v4981 = vadd.f32 0.0, %v4980
        %v4982 = vpop.f32.mrb[0].mxu0
        %4983 = vmatprep.mubr.f32.mxu0 0.0
        %4984 = vmatmul.mubr.f32.gmra.mrb[0].mxu0 %v3910
        %v4985 = vpop.f32.mrb[0].mxu0
        %v4986 = vadd.f32 0.0, %v4985
        %v4987 = vpop.f32.mrb[0].mxu0
        %4988 = vmatprep.mubr.f32.mxu0 0.0
        %4989 = vmatmul.mubr.f32.gmra.mrb[0].mxu0 %v3913
        %v4990 = vpop.f32.mrb[0].mxu0
        %v4991 = vadd.f32 0.0, %v4990
        %v4992 = vpop.f32.mrb[0].mxu0
        %4993 = vmatprep.mubr.f32.mxu0 0.0
        %4994 = vmatmul.mubr.f32.gmra.mrb[0].mxu0 %v3915
        %v4995 = vpop.f32.mrb[0].mxu0
        %v4996 = vadd.f32 0.0, %v4995
        %v4997 = vpop.f32.mrb[0].mxu0
        %4998 = vmatprep.mubr.f32.mxu0 0.0
        %4999 = vmatmul.mubr.f32.gmra.mrb[0].mxu0 %v3918
        %v5000 = vpop.f32.mrb[0].mxu0
        %v5001 = vadd.f32 0.0, %v5000
        %v5002 = vpop.f32.mrb[0].mxu0
        %5003 = vmatprep.mubr.f32.mxu0 0.0
        %5004 = vmatmul.mubr.f32.gmra.mrb[0].mxu0 %v3920
        %v5005 = vpop.f32.mrb[0].mxu0
        %v5006 = vadd.f32 0.0, %v5005
        %v5007 = vpop.f32.mrb[0].mxu0
        %5008 = vmatprep.mubr.f32.mxu0 0.0
        %5009 = vmatmul.mubr.f32.gmra.mrb[0].mxu0 %v3923
        %v5010 = vpop.f32.mrb[0].mxu0
        %v5011 = vadd.f32 0.0, %v5010
        %v5012 = vpop.f32.mrb[0].mxu0
        %5013 = vmatprep.mubr.f32.mxu0 0.0
        %5014 = vmatmul.mubr.f32.gmra.mrb[0].mxu0 %v3925
        %v5015 = vpop.f32.mrb[0].mxu0
        %v5016 = vadd.f32 0.0, %v5015
        %v5017 = vpop.f32.mrb[0].mxu0
        %5018 = vmatprep.mubr.f32.mxu0 0.0
        %5019 = vmatmul.mubr.f32.gmra.mrb[0].mxu0 %v3928
        %v5020 = vpop.f32.mrb[0].mxu0
        %v5021 = vadd.f32 0.0, %v5020
        %v5022 = vpop.f32.mrb[0].mxu0
        %5023 = vmatprep.mubr.f32.mxu0 0.0
        %5024 = vmatmul.mubr.f32.gmra.mrb[0].mxu0 %v3930
        %v5025 = vpop.f32.mrb[0].mxu0
        %v5026 = vadd.f32 0.0, %v5025
        %v5027 = vpop.f32.mrb[0].mxu0
        %5028 = vmatprep.mubr.f32.mxu0 0.0
        %5029 = vmatmul.mubr.f32.gmra.mrb[0].mxu0 %v3933
        %v5030 = vpop.f32.mrb[0].mxu0
        %v5031 = vadd.f32 0.0, %v5030
        %v5032 = vpop.f32.mrb[0].mxu0
        %5033 = vmatprep.mubr.f32.mxu0 0.0
        %5034 = vmatmul.mubr.f32.gmra.mrb[0].mxu0 %v3935
        %v5035 = vpop.f32.mrb[0].mxu0
        %v5036 = vadd.f32 0.0, %v5035
        %v5037 = vpop.f32.mrb[0].mxu0
        %5038 = vmatprep.mubr.f32.mxu0 0.0
        %5039 = vmatmul.mubr.f32.gmra.mrb[0].mxu0 %v4802
        %v5040 = vpop.f32.mrb[0].mxu0
        %v5041 = vadd.f32 0.0, %v5040
        %v5042 = vpop.f32.mrb[0].mxu0
        %5043 = vmatprep.mubr.f32.mxu0 0.0
        %5044 = vmatmul.mubr.f32.gmra.mrb[0].mxu0 %v4804
        %v5045 = vpop.f32.mrb[0].mxu0
        %v5046 = vadd.f32 0.0, %v5045
        %v5047 = vpop.f32.mrb[0].mxu0
        %5048 = vdwg.mxu0
        %v5049 = vadd.f32 %v4768, %v4891
        %v5050 = vadd.f32 %v4769, %v4896
        %v5051 = vadd.f32 %v4770, %v4901
        %v5052 = vadd.f32 %v4771, %v4906
        %v5053 = vadd.f32 %v4772, %v4911
        %v5054 = vadd.f32 %v4773, %v4916
        %v5055 = vadd.f32 %v4774, %v4921
        %v5056 = vadd.f32 %v4775, %v4926
        %v5057 = vadd.f32 %v4776, %v4931
        %v5058 = vadd.f32 %v4777, %v4936
        %v5059 = vadd.f32 %v4778, %v4941
        %v5060 = vadd.f32 %v4779, %v4946
        %v5061 = vadd.f32 %v4780, %v4951
        %v5062 = vadd.f32 %v4781, %v4956
        %v5063 = vadd.f32 %v4782, %v4961
        %v5064 = vadd.f32 %v4783, %v4966
        %v5065 = vadd.f32 %v4784, %v4971
        %v5066 = vadd.f32 %v4785, %v4976
        %v5067 = vadd.f32 %v4786, %v4981
        %v5068 = vadd.f32 %v4787, %v4986
        %v5069 = vadd.f32 %v4788, %v4991
        %v5070 = vadd.f32 %v4789, %v4996
        %v5071 = vadd.f32 %v4790, %v5001
        %v5072 = vadd.f32 %v4791, %v5006
        %v5073 = vadd.f32 %v4792, %v5011
        %v5074 = vadd.f32 %v4793, %v5016
        %v5075 = vadd.f32 %v4794, %v5021
        %v5076 = vadd.f32 %v4795, %v5026
        %v5077 = vadd.f32 %v4796, %v5031
        %v5078 = vadd.f32 %v4797, %v5036
        %v5079 = vadd.f32 %v4798, %v5041
        %v5080 = vadd.f32 %v4799, %v5046
        %s5081 = scalar_lea.vmem [#allocation3], 768
        %v5082 = vld [vmem:[%s5081] sm:$0xff]
        %v5083 = vld [vmem:[%s5081 + $0x8] sm:$0xff]
        %v5084 = vld [vmem:[%s5081 + $0x10] sm:$0xff]
        %v5085 = vld [vmem:[%s5081 + $0x18] sm:$0xff]
        %v5086 = vld [vmem:[%s5081 + $0x20] sm:$0xff]
        %v5087 = vld [vmem:[%s5081 + $0x28] sm:$0xff]
        %v5088 = vld [vmem:[%s5081 + $0x30] sm:$0xff]
        %v5089 = vld [vmem:[%s5081 + $0x38] sm:$0xff]
        %v5090 = vld [vmem:[%s5081 + $0x40] sm:$0xff]
        %v5091 = vld [vmem:[%s5081 + $0x48] sm:$0xff]
        %v5092 = vld [vmem:[%s5081 + $0x50] sm:$0xff]
        %v5093 = vld [vmem:[%s5081 + $0x58] sm:$0xff]
        %v5094 = vld [vmem:[%s5081 + $0x60] sm:$0xff]
        %v5095 = vld [vmem:[%s5081 + $0x68] sm:$0xff]
        %v5096 = vld [vmem:[%s5081 + $0x70] sm:$0xff]
        %v5097 = vld [vmem:[%s5081 + $0x78] sm:$0xff]
        %5098 = vmatprep.subr.mxu0 0.0
        %5099 = vmatpush1.msra.mxu0 %v5082
        %5100 = vmatprep.subr.mxu0 0.0
        %5101 = vmatpush1.msra.mxu0 %v5083
        %5102 = vmatprep.subr.mxu0 0.0
        %5103 = vmatpush1.msra.mxu0 %v5084
        %5104 = vmatprep.subr.mxu0 0.0
        %5105 = vmatpush1.msra.mxu0 %v5085
        %5106 = vmatprep.subr.mxu0 0.0
        %5107 = vmatpush1.msra.mxu0 %v5086
        %5108 = vmatprep.subr.mxu0 0.0
        %5109 = vmatpush1.msra.mxu0 %v5087
        %5110 = vmatprep.subr.mxu0 0.0
        %5111 = vmatpush1.msra.mxu0 %v5088
        %5112 = vmatprep.subr.mxu0 0.0
        %5113 = vmatpush1.msra.mxu0 %v5089
        %5114 = vmatprep.subr.mxu0 0.0
        %5115 = vmatpush1.msra.mxu0 %v5090
        %5116 = vmatprep.subr.mxu0 0.0
        %5117 = vmatpush1.msra.mxu0 %v5091
        %5118 = vmatprep.subr.mxu0 0.0
        %5119 = vmatpush1.msra.mxu0 %v5092
        %5120 = vmatprep.subr.mxu0 0.0
        %5121 = vmatpush1.msra.mxu0 %v5093
        %5122 = vmatprep.subr.mxu0 0.0
        %5123 = vmatpush1.msra.mxu0 %v5094
        %5124 = vmatprep.subr.mxu0 0.0
        %5125 = vmatpush1.msra.mxu0 %v5095
        %5126 = vmatprep.subr.mxu0 0.0
        %5127 = vmatpush1.msra.mxu0 %v5096
        %5128 = vmatprep.subr.mxu0 0.0
        %5129 = vmatpush1.msra.mxu0 %v5097
        %5130 = vmatprep.subr.mxu0 0.0
        %5131 = vmatpush1.msra.mxu0 0.0
        %5132 = vmatprep.subr.mxu0 0.0
        %5133 = vmatpush1.msra.mxu0 0.0
        %5134 = vmatprep.subr.mxu0 0.0
        %5135 = vmatpush1.msra.mxu0 0.0
        %5136 = vmatprep.subr.mxu0 0.0
        %5137 = vmatpush1.msra.mxu0 0.0
        %5138 = vmatprep.subr.mxu0 0.0
        %5139 = vmatpush1.msra.mxu0 0.0
        %5140 = vmatprep.subr.mxu0 0.0
        %5141 = vmatpush1.msra.mxu0 0.0
        %5142 = vmatprep.subr.mxu0 0.0
        %5143 = vmatpush1.msra.mxu0 0.0
        %5144 = vmatprep.subr.mxu0 0.0
        %5145 = vmatpush1.msra.mxu0 0.0
        %5146 = vmatprep.subr.mxu0 0.0
        %5147 = vmatpush1.msra.mxu0 0.0
        %5148 = vmatprep.subr.mxu0 0.0
        %5149 = vmatpush1.msra.mxu0 0.0
        %5150 = vmatprep.subr.mxu0 0.0
        %5151 = vmatpush1.msra.mxu0 0.0
        %5152 = vmatprep.subr.mxu0 0.0
        %5153 = vmatpush1.msra.mxu0 0.0
        %5154 = vmatprep.subr.mxu0 0.0
        %5155 = vmatpush1.msra.mxu0 0.0
        %5156 = vmatprep.subr.mxu0 0.0
        %5157 = vmatpush1.msra.mxu0 0.0
        %5158 = vmatprep.subr.mxu0 0.0
        %5159 = vmatpush1.msra.mxu0 0.0
        %5160 = vmatprep.subr.mxu0 0.0
        %5161 = vmatpush1.msra.mxu0 0.0
        %5162 = vmatprep.mubr.f32.mxu0 0.0
        %5163 = vmatmul.mubr.f32.gmra.mrb[0].mxu0 %v3165
        %v5164 = vpop.f32.mrb[0].mxu0
        %v5165 = vadd.f32 0.0, %v5164
        %v5166 = vpop.f32.mrb[0].mxu0
        %5167 = vmatprep.mubr.f32.mxu0 0.0
        %5168 = vmatmul.mubr.f32.gmra.mrb[0].mxu0 %v3166
        %v5169 = vpop.f32.mrb[0].mxu0
        %v5170 = vadd.f32 0.0, %v5169
        %v5171 = vpop.f32.mrb[0].mxu0
        %5172 = vmatprep.mubr.f32.mxu0 0.0
        %5173 = vmatmul.mubr.f32.gmra.mrb[0].mxu0 %v3168
        %v5174 = vpop.f32.mrb[0].mxu0
        %v5175 = vadd.f32 0.0, %v5174
        %v5176 = vpop.f32.mrb[0].mxu0
        %5177 = vmatprep.mubr.f32.mxu0 0.0
        %5178 = vmatmul.mubr.f32.gmra.mrb[0].mxu0 %v3169
        %v5179 = vpop.f32.mrb[0].mxu0
        %v5180 = vadd.f32 0.0, %v5179
        %v5181 = vpop.f32.mrb[0].mxu0
        %5182 = vmatprep.mubr.f32.mxu0 0.0
        %5183 = vmatmul.mubr.f32.gmra.mrb[0].mxu0 %v3171
        %v5184 = vpop.f32.mrb[0].mxu0
        %v5185 = vadd.f32 0.0, %v5184
        %v5186 = vpop.f32.mrb[0].mxu0
        %5187 = vmatprep.mubr.f32.mxu0 0.0
        %5188 = vmatmul.mubr.f32.gmra.mrb[0].mxu0 %v3172
        %v5189 = vpop.f32.mrb[0].mxu0
        %v5190 = vadd.f32 0.0, %v5189
        %v5191 = vpop.f32.mrb[0].mxu0
        %5192 = vmatprep.mubr.f32.mxu0 0.0
        %5193 = vmatmul.mubr.f32.gmra.mrb[0].mxu0 %v3174
        %v5194 = vpop.f32.mrb[0].mxu0
        %v5195 = vadd.f32 0.0, %v5194
        %v5196 = vpop.f32.mrb[0].mxu0
        %5197 = vmatprep.mubr.f32.mxu0 0.0
        %5198 = vmatmul.mubr.f32.gmra.mrb[0].mxu0 %v3175
        %v5199 = vpop.f32.mrb[0].mxu0
        %v5200 = vadd.f32 0.0, %v5199
        %v5201 = vpop.f32.mrb[0].mxu0
        %5202 = vmatprep.mubr.f32.mxu0 0.0
        %5203 = vmatmul.mubr.f32.gmra.mrb[0].mxu0 %v3177
        %v5204 = vpop.f32.mrb[0].mxu0
        %v5205 = vadd.f32 0.0, %v5204
        %v5206 = vpop.f32.mrb[0].mxu0
        %5207 = vmatprep.mubr.f32.mxu0 0.0
        %5208 = vmatmul.mubr.f32.gmra.mrb[0].mxu0 %v3178
        %v5209 = vpop.f32.mrb[0].mxu0
        %v5210 = vadd.f32 0.0, %v5209
        %v5211 = vpop.f32.mrb[0].mxu0
        %5212 = vmatprep.mubr.f32.mxu0 0.0
        %5213 = vmatmul.mubr.f32.gmra.mrb[0].mxu0 %v3180
        %v5214 = vpop.f32.mrb[0].mxu0
        %v5215 = vadd.f32 0.0, %v5214
        %v5216 = vpop.f32.mrb[0].mxu0
        %5217 = vmatprep.mubr.f32.mxu0 0.0
        %5218 = vmatmul.mubr.f32.gmra.mrb[0].mxu0 %v3181
        %v5219 = vpop.f32.mrb[0].mxu0
        %v5220 = vadd.f32 0.0, %v5219
        %v5221 = vpop.f32.mrb[0].mxu0
        %5222 = vmatprep.mubr.f32.mxu0 0.0
        %5223 = vmatmul.mubr.f32.gmra.mrb[0].mxu0 %v3183
        %v5224 = vpop.f32.mrb[0].mxu0
        %v5225 = vadd.f32 0.0, %v5224
        %v5226 = vpop.f32.mrb[0].mxu0
        %5227 = vmatprep.mubr.f32.mxu0 0.0
        %5228 = vmatmul.mubr.f32.gmra.mrb[0].mxu0 %v3184
        %v5229 = vpop.f32.mrb[0].mxu0
        %v5230 = vadd.f32 0.0, %v5229
        %v5231 = vpop.f32.mrb[0].mxu0
        %5232 = vmatprep.mubr.f32.mxu0 0.0
        %5233 = vmatmul.mubr.f32.gmra.mrb[0].mxu0 %v3186
        %v5234 = vpop.f32.mrb[0].mxu0
        %v5235 = vadd.f32 0.0, %v5234
        %v5236 = vpop.f32.mrb[0].mxu0
        %5237 = vmatprep.mubr.f32.mxu0 0.0
        %5238 = vmatmul.mubr.f32.gmra.mrb[0].mxu0 %v3187
        %v5239 = vpop.f32.mrb[0].mxu0
        %v5240 = vadd.f32 0.0, %v5239
        %v5241 = vpop.f32.mrb[0].mxu0
        %5242 = vmatprep.mubr.f32.mxu0 0.0
        %5243 = vmatmul.mubr.f32.gmra.mrb[0].mxu0 %v3189
        %v5244 = vpop.f32.mrb[0].mxu0
        %v5245 = vadd.f32 0.0, %v5244
        %v5246 = vpop.f32.mrb[0].mxu0
        %5247 = vmatprep.mubr.f32.mxu0 0.0
        %5248 = vmatmul.mubr.f32.gmra.mrb[0].mxu0 %v3190
        %v5249 = vpop.f32.mrb[0].mxu0
        %v5250 = vadd.f32 0.0, %v5249
        %v5251 = vpop.f32.mrb[0].mxu0
        %5252 = vmatprep.mubr.f32.mxu0 0.0
        %5253 = vmatmul.mubr.f32.gmra.mrb[0].mxu0 %v3192
        %v5254 = vpop.f32.mrb[0].mxu0
        %v5255 = vadd.f32 0.0, %v5254
        %v5256 = vpop.f32.mrb[0].mxu0
        %5257 = vmatprep.mubr.f32.mxu0 0.0
        %5258 = vmatmul.mubr.f32.gmra.mrb[0].mxu0 %v3193
        %v5259 = vpop.f32.mrb[0].mxu0
        %v5260 = vadd.f32 0.0, %v5259
        %v5261 = vpop.f32.mrb[0].mxu0
        %5262 = vmatprep.mubr.f32.mxu0 0.0
        %5263 = vmatmul.mubr.f32.gmra.mrb[0].mxu0 %v3195
        %v5264 = vpop.f32.mrb[0].mxu0
        %v5265 = vadd.f32 0.0, %v5264
        %v5266 = vpop.f32.mrb[0].mxu0
        %5267 = vmatprep.mubr.f32.mxu0 0.0
        %5268 = vmatmul.mubr.f32.gmra.mrb[0].mxu0 %v3196
        %v5269 = vpop.f32.mrb[0].mxu0
        %v5270 = vadd.f32 0.0, %v5269
        %v5271 = vpop.f32.mrb[0].mxu0
        %5272 = vmatprep.mubr.f32.mxu0 0.0
        %5273 = vmatmul.mubr.f32.gmra.mrb[0].mxu0 %v3198
        %v5274 = vpop.f32.mrb[0].mxu0
        %v5275 = vadd.f32 0.0, %v5274
        %v5276 = vpop.f32.mrb[0].mxu0
        %5277 = vmatprep.mubr.f32.mxu0 0.0
        %5278 = vmatmul.mubr.f32.gmra.mrb[0].mxu0 %v3199
        %v5279 = vpop.f32.mrb[0].mxu0
        %v5280 = vadd.f32 0.0, %v5279
        %v5281 = vpop.f32.mrb[0].mxu0
        %5282 = vmatprep.mubr.f32.mxu0 0.0
        %5283 = vmatmul.mubr.f32.gmra.mrb[0].mxu0 %v3201
        %v5284 = vpop.f32.mrb[0].mxu0
        %v5285 = vadd.f32 0.0, %v5284
        %v5286 = vpop.f32.mrb[0].mxu0
        %5287 = vmatprep.mubr.f32.mxu0 0.0
        %5288 = vmatmul.mubr.f32.gmra.mrb[0].mxu0 %v3202
        %v5289 = vpop.f32.mrb[0].mxu0
        %v5290 = vadd.f32 0.0, %v5289
        %v5291 = vpop.f32.mrb[0].mxu0
        %5292 = vmatprep.mubr.f32.mxu0 0.0
        %5293 = vmatmul.mubr.f32.gmra.mrb[0].mxu0 %v3204
        %v5294 = vpop.f32.mrb[0].mxu0
        %v5295 = vadd.f32 0.0, %v5294
        %v5296 = vpop.f32.mrb[0].mxu0
        %5297 = vmatprep.mubr.f32.mxu0 0.0
        %5298 = vmatmul.mubr.f32.gmra.mrb[0].mxu0 %v3205
        %v5299 = vpop.f32.mrb[0].mxu0
        %v5300 = vadd.f32 0.0, %v5299
        %v5301 = vpop.f32.mrb[0].mxu0
        %5302 = vmatprep.mubr.f32.mxu0 0.0
        %5303 = vmatmul.mubr.f32.gmra.mrb[0].mxu0 %v3207
        %v5304 = vpop.f32.mrb[0].mxu0
        %v5305 = vadd.f32 0.0, %v5304
        %v5306 = vpop.f32.mrb[0].mxu0
        %5307 = vmatprep.mubr.f32.mxu0 0.0
        %5308 = vmatmul.mubr.f32.gmra.mrb[0].mxu0 %v3208
        %v5309 = vpop.f32.mrb[0].mxu0
        %v5310 = vadd.f32 0.0, %v5309
        %v5311 = vpop.f32.mrb[0].mxu0
        %5312 = vmatprep.mubr.f32.mxu0 0.0
        %5313 = vmatmul.mubr.f32.gmra.mrb[0].mxu0 %v3210
        %v5314 = vpop.f32.mrb[0].mxu0
        %v5315 = vadd.f32 0.0, %v5314
        %v5316 = vpop.f32.mrb[0].mxu0
        %5317 = vmatprep.mubr.f32.mxu0 0.0
        %5318 = vmatmul.mubr.f32.gmra.mrb[0].mxu0 %v3211
        %v5319 = vpop.f32.mrb[0].mxu0
        %v5320 = vadd.f32 0.0, %v5319
        %v5321 = vpop.f32.mrb[0].mxu0
        %5322 = vdwg.mxu0
        %v5323 = vadd.f32 %v5049, %v5165
        %v5324 = vadd.f32 %v5050, %v5170
        %v5325 = vadd.f32 %v5051, %v5175
        %v5326 = vadd.f32 %v5052, %v5180
        %v5327 = vadd.f32 %v5053, %v5185
        %v5328 = vadd.f32 %v5054, %v5190
        %v5329 = vadd.f32 %v5055, %v5195
        %v5330 = vadd.f32 %v5056, %v5200
        %v5331 = vadd.f32 %v5057, %v5205
        %v5332 = vadd.f32 %v5058, %v5210
        %v5333 = vadd.f32 %v5059, %v5215
        %v5334 = vadd.f32 %v5060, %v5220
        %v5335 = vadd.f32 %v5061, %v5225
        %v5336 = vadd.f32 %v5062, %v5230
        %v5337 = vadd.f32 %v5063, %v5235
        %v5338 = vadd.f32 %v5064, %v5240
        %v5339 = vadd.f32 %v5065, %v5245
        %v5340 = vadd.f32 %v5066, %v5250
        %v5341 = vadd.f32 %v5067, %v5255
        %v5342 = vadd.f32 %v5068, %v5260
        %v5343 = vadd.f32 %v5069, %v5265
        %v5344 = vadd.f32 %v5070, %v5270
        %v5345 = vadd.f32 %v5071, %v5275
        %v5346 = vadd.f32 %v5072, %v5280
        %v5347 = vadd.f32 %v5073, %v5285
        %v5348 = vadd.f32 %v5074, %v5290
        %v5349 = vadd.f32 %v5075, %v5295
        %v5350 = vadd.f32 %v5076, %v5300
        %v5351 = vadd.f32 %v5077, %v5305
        %v5352 = vadd.f32 %v5078, %v5310
        %v5353 = vadd.f32 %v5079, %v5315
        %v5354 = vadd.f32 %v5080, %v5320
        %v5358 = vrot.slane %v3210, 1
        %v5359 = vrot.slane %v3211, 1
        %v5360 = vsel %vm356, %v5358, %v5359
        %v5361 = vrot.slane %v3212, 1
        %v5362 = vsel %vm356, %v5359, %v5361
        %s5365 = scalar_lea.vmem [#allocation3], 896
        %v5366 = vld [vmem:[%s5365] sm:$0xff]
        %v5367 = vld [vmem:[%s5365 + $0x8] sm:$0xff]
        %v5368 = vld [vmem:[%s5365 + $0x10] sm:$0xff]
        %v5369 = vld [vmem:[%s5365 + $0x18] sm:$0xff]
        %v5370 = vld [vmem:[%s5365 + $0x20] sm:$0xff]
        %v5371 = vld [vmem:[%s5365 + $0x28] sm:$0xff]
        %v5372 = vld [vmem:[%s5365 + $0x30] sm:$0xff]
        %v5373 = vld [vmem:[%s5365 + $0x38] sm:$0xff]
        %v5374 = vld [vmem:[%s5365 + $0x40] sm:$0xff]
        %v5375 = vld [vmem:[%s5365 + $0x48] sm:$0xff]
        %v5376 = vld [vmem:[%s5365 + $0x50] sm:$0xff]
        %v5377 = vld [vmem:[%s5365 + $0x58] sm:$0xff]
        %v5378 = vld [vmem:[%s5365 + $0x60] sm:$0xff]
        %v5379 = vld [vmem:[%s5365 + $0x68] sm:$0xff]
        %v5380 = vld [vmem:[%s5365 + $0x70] sm:$0xff]
        %v5381 = vld [vmem:[%s5365 + $0x78] sm:$0xff]
        %5382 = vmatprep.subr.mxu0 0.0
        %5383 = vmatpush1.msra.mxu0 %v5366
        %5384 = vmatprep.subr.mxu0 0.0
        %5385 = vmatpush1.msra.mxu0 %v5367
        %5386 = vmatprep.subr.mxu0 0.0
        %5387 = vmatpush1.msra.mxu0 %v5368
        %5388 = vmatprep.subr.mxu0 0.0
        %5389 = vmatpush1.msra.mxu0 %v5369
        %5390 = vmatprep.subr.mxu0 0.0
        %5391 = vmatpush1.msra.mxu0 %v5370
        %5392 = vmatprep.subr.mxu0 0.0
        %5393 = vmatpush1.msra.mxu0 %v5371
        %5394 = vmatprep.subr.mxu0 0.0
        %5395 = vmatpush1.msra.mxu0 %v5372
        %5396 = vmatprep.subr.mxu0 0.0
        %5397 = vmatpush1.msra.mxu0 %v5373
        %5398 = vmatprep.subr.mxu0 0.0
        %5399 = vmatpush1.msra.mxu0 %v5374
        %5400 = vmatprep.subr.mxu0 0.0
        %5401 = vmatpush1.msra.mxu0 %v5375
        %5402 = vmatprep.subr.mxu0 0.0
        %5403 = vmatpush1.msra.mxu0 %v5376
        %5404 = vmatprep.subr.mxu0 0.0
        %5405 = vmatpush1.msra.mxu0 %v5377
        %5406 = vmatprep.subr.mxu0 0.0
        %5407 = vmatpush1.msra.mxu0 %v5378
        %5408 = vmatprep.subr.mxu0 0.0
        %5409 = vmatpush1.msra.mxu0 %v5379
        %5410 = vmatprep.subr.mxu0 0.0
        %5411 = vmatpush1.msra.mxu0 %v5380
        %5412 = vmatprep.subr.mxu0 0.0
        %5413 = vmatpush1.msra.mxu0 %v5381
        %5414 = vmatprep.subr.mxu0 0.0
        %5415 = vmatpush1.msra.mxu0 0.0
        %5416 = vmatprep.subr.mxu0 0.0
        %5417 = vmatpush1.msra.mxu0 0.0
        %5418 = vmatprep.subr.mxu0 0.0
        %5419 = vmatpush1.msra.mxu0 0.0
        %5420 = vmatprep.subr.mxu0 0.0
        %5421 = vmatpush1.msra.mxu0 0.0
        %5422 = vmatprep.subr.mxu0 0.0
        %5423 = vmatpush1.msra.mxu0 0.0
        %5424 = vmatprep.subr.mxu0 0.0
        %5425 = vmatpush1.msra.mxu0 0.0
        %5426 = vmatprep.subr.mxu0 0.0
        %5427 = vmatpush1.msra.mxu0 0.0
        %5428 = vmatprep.subr.mxu0 0.0
        %5429 = vmatpush1.msra.mxu0 0.0
        %5430 = vmatprep.subr.mxu0 0.0
        %5431 = vmatpush1.msra.mxu0 0.0
        %5432 = vmatprep.subr.mxu0 0.0
        %5433 = vmatpush1.msra.mxu0 0.0
        %5434 = vmatprep.subr.mxu0 0.0
        %5435 = vmatpush1.msra.mxu0 0.0
        %5436 = vmatprep.subr.mxu0 0.0
        %5437 = vmatpush1.msra.mxu0 0.0
        %5438 = vmatprep.subr.mxu0 0.0
        %5439 = vmatpush1.msra.mxu0 0.0
        %5440 = vmatprep.subr.mxu0 0.0
        %5441 = vmatpush1.msra.mxu0 0.0
        %5442 = vmatprep.subr.mxu0 0.0
        %5443 = vmatpush1.msra.mxu0 0.0
        %5444 = vmatprep.subr.mxu0 0.0
        %5445 = vmatpush1.msra.mxu0 0.0
        %5446 = vmatprep.mubr.f32.mxu0 0.0
        %5447 = vmatmul.mubr.f32.gmra.mrb[0].mxu0 %v3289
        %v5448 = vpop.f32.mrb[0].mxu0
        %v5449 = vadd.f32 0.0, %v5448
        %v5450 = vpop.f32.mrb[0].mxu0
        %5451 = vmatprep.mubr.f32.mxu0 0.0
        %5452 = vmatmul.mubr.f32.gmra.mrb[0].mxu0 %v3291
        %v5453 = vpop.f32.mrb[0].mxu0
        %v5454 = vadd.f32 0.0, %v5453
        %v5455 = vpop.f32.mrb[0].mxu0
        %5456 = vmatprep.mubr.f32.mxu0 0.0
        %5457 = vmatmul.mubr.f32.gmra.mrb[0].mxu0 %v3294
        %v5458 = vpop.f32.mrb[0].mxu0
        %v5459 = vadd.f32 0.0, %v5458
        %v5460 = vpop.f32.mrb[0].mxu0
        %5461 = vmatprep.mubr.f32.mxu0 0.0
        %5462 = vmatmul.mubr.f32.gmra.mrb[0].mxu0 %v3296
        %v5463 = vpop.f32.mrb[0].mxu0
        %v5464 = vadd.f32 0.0, %v5463
        %v5465 = vpop.f32.mrb[0].mxu0
        %5466 = vmatprep.mubr.f32.mxu0 0.0
        %5467 = vmatmul.mubr.f32.gmra.mrb[0].mxu0 %v3299
        %v5468 = vpop.f32.mrb[0].mxu0
        %v5469 = vadd.f32 0.0, %v5468
        %v5470 = vpop.f32.mrb[0].mxu0
        %5471 = vmatprep.mubr.f32.mxu0 0.0
        %5472 = vmatmul.mubr.f32.gmra.mrb[0].mxu0 %v3301
        %v5473 = vpop.f32.mrb[0].mxu0
        %v5474 = vadd.f32 0.0, %v5473
        %v5475 = vpop.f32.mrb[0].mxu0
        %5476 = vmatprep.mubr.f32.mxu0 0.0
        %5477 = vmatmul.mubr.f32.gmra.mrb[0].mxu0 %v3304
        %v5478 = vpop.f32.mrb[0].mxu0
        %v5479 = vadd.f32 0.0, %v5478
        %v5480 = vpop.f32.mrb[0].mxu0
        %5481 = vmatprep.mubr.f32.mxu0 0.0
        %5482 = vmatmul.mubr.f32.gmra.mrb[0].mxu0 %v3306
        %v5483 = vpop.f32.mrb[0].mxu0
        %v5484 = vadd.f32 0.0, %v5483
        %v5485 = vpop.f32.mrb[0].mxu0
        %5486 = vmatprep.mubr.f32.mxu0 0.0
        %5487 = vmatmul.mubr.f32.gmra.mrb[0].mxu0 %v3309
        %v5488 = vpop.f32.mrb[0].mxu0
        %v5489 = vadd.f32 0.0, %v5488
        %v5490 = vpop.f32.mrb[0].mxu0
        %5491 = vmatprep.mubr.f32.mxu0 0.0
        %5492 = vmatmul.mubr.f32.gmra.mrb[0].mxu0 %v3311
        %v5493 = vpop.f32.mrb[0].mxu0
        %v5494 = vadd.f32 0.0, %v5493
        %v5495 = vpop.f32.mrb[0].mxu0
        %5496 = vmatprep.mubr.f32.mxu0 0.0
        %5497 = vmatmul.mubr.f32.gmra.mrb[0].mxu0 %v3314
        %v5498 = vpop.f32.mrb[0].mxu0
        %v5499 = vadd.f32 0.0, %v5498
        %v5500 = vpop.f32.mrb[0].mxu0
        %5501 = vmatprep.mubr.f32.mxu0 0.0
        %5502 = vmatmul.mubr.f32.gmra.mrb[0].mxu0 %v3316
        %v5503 = vpop.f32.mrb[0].mxu0
        %v5504 = vadd.f32 0.0, %v5503
        %v5505 = vpop.f32.mrb[0].mxu0
        %5506 = vmatprep.mubr.f32.mxu0 0.0
        %5507 = vmatmul.mubr.f32.gmra.mrb[0].mxu0 %v3319
        %v5508 = vpop.f32.mrb[0].mxu0
        %v5509 = vadd.f32 0.0, %v5508
        %v5510 = vpop.f32.mrb[0].mxu0
        %5511 = vmatprep.mubr.f32.mxu0 0.0
        %5512 = vmatmul.mubr.f32.gmra.mrb[0].mxu0 %v3321
        %v5513 = vpop.f32.mrb[0].mxu0
        %v5514 = vadd.f32 0.0, %v5513
        %v5515 = vpop.f32.mrb[0].mxu0
        %5516 = vmatprep.mubr.f32.mxu0 0.0
        %5517 = vmatmul.mubr.f32.gmra.mrb[0].mxu0 %v3324
        %v5518 = vpop.f32.mrb[0].mxu0
        %v5519 = vadd.f32 0.0, %v5518
        %v5520 = vpop.f32.mrb[0].mxu0
        %5521 = vmatprep.mubr.f32.mxu0 0.0
        %5522 = vmatmul.mubr.f32.gmra.mrb[0].mxu0 %v3326
        %v5523 = vpop.f32.mrb[0].mxu0
        %v5524 = vadd.f32 0.0, %v5523
        %v5525 = vpop.f32.mrb[0].mxu0
        %5526 = vmatprep.mubr.f32.mxu0 0.0
        %5527 = vmatmul.mubr.f32.gmra.mrb[0].mxu0 %v3329
        %v5528 = vpop.f32.mrb[0].mxu0
        %v5529 = vadd.f32 0.0, %v5528
        %v5530 = vpop.f32.mrb[0].mxu0
        %5531 = vmatprep.mubr.f32.mxu0 0.0
        %5532 = vmatmul.mubr.f32.gmra.mrb[0].mxu0 %v3331
        %v5533 = vpop.f32.mrb[0].mxu0
        %v5534 = vadd.f32 0.0, %v5533
        %v5535 = vpop.f32.mrb[0].mxu0
        %5536 = vmatprep.mubr.f32.mxu0 0.0
        %5537 = vmatmul.mubr.f32.gmra.mrb[0].mxu0 %v3334
        %v5538 = vpop.f32.mrb[0].mxu0
        %v5539 = vadd.f32 0.0, %v5538
        %v5540 = vpop.f32.mrb[0].mxu0
        %5541 = vmatprep.mubr.f32.mxu0 0.0
        %5542 = vmatmul.mubr.f32.gmra.mrb[0].mxu0 %v3336
        %v5543 = vpop.f32.mrb[0].mxu0
        %v5544 = vadd.f32 0.0, %v5543
        %v5545 = vpop.f32.mrb[0].mxu0
        %5546 = vmatprep.mubr.f32.mxu0 0.0
        %5547 = vmatmul.mubr.f32.gmra.mrb[0].mxu0 %v3339
        %v5548 = vpop.f32.mrb[0].mxu0
        %v5549 = vadd.f32 0.0, %v5548
        %v5550 = vpop.f32.mrb[0].mxu0
        %5551 = vmatprep.mubr.f32.mxu0 0.0
        %5552 = vmatmul.mubr.f32.gmra.mrb[0].mxu0 %v3341
        %v5553 = vpop.f32.mrb[0].mxu0
        %v5554 = vadd.f32 0.0, %v5553
        %v5555 = vpop.f32.mrb[0].mxu0
        %5556 = vmatprep.mubr.f32.mxu0 0.0
        %5557 = vmatmul.mubr.f32.gmra.mrb[0].mxu0 %v3344
        %v5558 = vpop.f32.mrb[0].mxu0
        %v5559 = vadd.f32 0.0, %v5558
        %v5560 = vpop.f32.mrb[0].mxu0
        %5561 = vmatprep.mubr.f32.mxu0 0.0
        %5562 = vmatmul.mubr.f32.gmra.mrb[0].mxu0 %v3346
        %v5563 = vpop.f32.mrb[0].mxu0
        %v5564 = vadd.f32 0.0, %v5563
        %v5565 = vpop.f32.mrb[0].mxu0
        %5566 = vmatprep.mubr.f32.mxu0 0.0
        %5567 = vmatmul.mubr.f32.gmra.mrb[0].mxu0 %v3349
        %v5568 = vpop.f32.mrb[0].mxu0
        %v5569 = vadd.f32 0.0, %v5568
        %v5570 = vpop.f32.mrb[0].mxu0
        %5571 = vmatprep.mubr.f32.mxu0 0.0
        %5572 = vmatmul.mubr.f32.gmra.mrb[0].mxu0 %v3351
        %v5573 = vpop.f32.mrb[0].mxu0
        %v5574 = vadd.f32 0.0, %v5573
        %v5575 = vpop.f32.mrb[0].mxu0
        %5576 = vmatprep.mubr.f32.mxu0 0.0
        %5577 = vmatmul.mubr.f32.gmra.mrb[0].mxu0 %v3354
        %v5578 = vpop.f32.mrb[0].mxu0
        %v5579 = vadd.f32 0.0, %v5578
        %v5580 = vpop.f32.mrb[0].mxu0
        %5581 = vmatprep.mubr.f32.mxu0 0.0
        %5582 = vmatmul.mubr.f32.gmra.mrb[0].mxu0 %v3356
        %v5583 = vpop.f32.mrb[0].mxu0
        %v5584 = vadd.f32 0.0, %v5583
        %v5585 = vpop.f32.mrb[0].mxu0
        %5586 = vmatprep.mubr.f32.mxu0 0.0
        %5587 = vmatmul.mubr.f32.gmra.mrb[0].mxu0 %v4521
        %v5588 = vpop.f32.mrb[0].mxu0
        %v5589 = vadd.f32 0.0, %v5588
        %v5590 = vpop.f32.mrb[0].mxu0
        %5591 = vmatprep.mubr.f32.mxu0 0.0
        %5592 = vmatmul.mubr.f32.gmra.mrb[0].mxu0 %v4523
        %v5593 = vpop.f32.mrb[0].mxu0
        %v5594 = vadd.f32 0.0, %v5593
        %v5595 = vpop.f32.mrb[0].mxu0
        %5596 = vmatprep.mubr.f32.mxu0 0.0
        %5597 = vmatmul.mubr.f32.gmra.mrb[0].mxu0 %v5360
        %v5598 = vpop.f32.mrb[0].mxu0
        %v5599 = vadd.f32 0.0, %v5598
        %v5600 = vpop.f32.mrb[0].mxu0
        %5601 = vmatprep.mubr.f32.mxu0 0.0
        %5602 = vmatmul.mubr.f32.gmra.mrb[0].mxu0 %v5362
        %v5603 = vpop.f32.mrb[0].mxu0
        %v5604 = vadd.f32 0.0, %v5603
        %v5605 = vpop.f32.mrb[0].mxu0
        %5606 = vdwg.mxu0
        %v5607 = vadd.f32 %v5323, %v5449
        %v5608 = vadd.f32 %v5324, %v5454
        %v5609 = vadd.f32 %v5325, %v5459
        %v5610 = vadd.f32 %v5326, %v5464
        %v5611 = vadd.f32 %v5327, %v5469
        %v5612 = vadd.f32 %v5328, %v5474
        %v5613 = vadd.f32 %v5329, %v5479
        %v5614 = vadd.f32 %v5330, %v5484
        %v5615 = vadd.f32 %v5331, %v5489
        %v5616 = vadd.f32 %v5332, %v5494
        %v5617 = vadd.f32 %v5333, %v5499
        %v5618 = vadd.f32 %v5334, %v5504
        %v5619 = vadd.f32 %v5335, %v5509
        %v5620 = vadd.f32 %v5336, %v5514
        %v5621 = vadd.f32 %v5337, %v5519
        %v5622 = vadd.f32 %v5338, %v5524
        %v5623 = vadd.f32 %v5339, %v5529
        %v5624 = vadd.f32 %v5340, %v5534
        %v5625 = vadd.f32 %v5341, %v5539
        %v5626 = vadd.f32 %v5342, %v5544
        %v5627 = vadd.f32 %v5343, %v5549
        %v5628 = vadd.f32 %v5344, %v5554
        %v5629 = vadd.f32 %v5345, %v5559
        %v5630 = vadd.f32 %v5346, %v5564
        %v5631 = vadd.f32 %v5347, %v5569
        %v5632 = vadd.f32 %v5348, %v5574
        %v5633 = vadd.f32 %v5349, %v5579
        %v5634 = vadd.f32 %v5350, %v5584
        %v5635 = vadd.f32 %v5351, %v5589
        %v5636 = vadd.f32 %v5352, %v5594
        %v5637 = vadd.f32 %v5353, %v5599
        %v5638 = vadd.f32 %v5354, %v5604
        %v5639 = vrot.slane %v3210, 2
        %v5640 = vrot.slane %v3211, 2
        %v5641 = vsel %vm936, %v5639, %v5640
        %v5642 = vrot.slane %v3212, 2
        %v5643 = vsel %vm936, %v5640, %v5642
        %s5646 = scalar_lea.vmem [#allocation3], 1024
        %v5647 = vld [vmem:[%s5646] sm:$0xff]
        %v5648 = vld [vmem:[%s5646 + $0x8] sm:$0xff]
        %v5649 = vld [vmem:[%s5646 + $0x10] sm:$0xff]
        %v5650 = vld [vmem:[%s5646 + $0x18] sm:$0xff]
        %v5651 = vld [vmem:[%s5646 + $0x20] sm:$0xff]
        %v5652 = vld [vmem:[%s5646 + $0x28] sm:$0xff]
        %v5653 = vld [vmem:[%s5646 + $0x30] sm:$0xff]
        %v5654 = vld [vmem:[%s5646 + $0x38] sm:$0xff]
        %v5655 = vld [vmem:[%s5646 + $0x40] sm:$0xff]
        %v5656 = vld [vmem:[%s5646 + $0x48] sm:$0xff]
        %v5657 = vld [vmem:[%s5646 + $0x50] sm:$0xff]
        %v5658 = vld [vmem:[%s5646 + $0x58] sm:$0xff]
        %v5659 = vld [vmem:[%s5646 + $0x60] sm:$0xff]
        %v5660 = vld [vmem:[%s5646 + $0x68] sm:$0xff]
        %v5661 = vld [vmem:[%s5646 + $0x70] sm:$0xff]
        %v5662 = vld [vmem:[%s5646 + $0x78] sm:$0xff]
        %5663 = vmatprep.subr.mxu0 0.0
        %5664 = vmatpush1.msra.mxu0 %v5647
        %5665 = vmatprep.subr.mxu0 0.0
        %5666 = vmatpush1.msra.mxu0 %v5648
        %5667 = vmatprep.subr.mxu0 0.0
        %5668 = vmatpush1.msra.mxu0 %v5649
        %5669 = vmatprep.subr.mxu0 0.0
        %5670 = vmatpush1.msra.mxu0 %v5650
        %5671 = vmatprep.subr.mxu0 0.0
        %5672 = vmatpush1.msra.mxu0 %v5651
        %5673 = vmatprep.subr.mxu0 0.0
        %5674 = vmatpush1.msra.mxu0 %v5652
        %5675 = vmatprep.subr.mxu0 0.0
        %5676 = vmatpush1.msra.mxu0 %v5653
        %5677 = vmatprep.subr.mxu0 0.0
        %5678 = vmatpush1.msra.mxu0 %v5654
        %5679 = vmatprep.subr.mxu0 0.0
        %5680 = vmatpush1.msra.mxu0 %v5655
        %5681 = vmatprep.subr.mxu0 0.0
        %5682 = vmatpush1.msra.mxu0 %v5656
        %5683 = vmatprep.subr.mxu0 0.0
        %5684 = vmatpush1.msra.mxu0 %v5657
        %5685 = vmatprep.subr.mxu0 0.0
        %5686 = vmatpush1.msra.mxu0 %v5658
        %5687 = vmatprep.subr.mxu0 0.0
        %5688 = vmatpush1.msra.mxu0 %v5659
        %5689 = vmatprep.subr.mxu0 0.0
        %5690 = vmatpush1.msra.mxu0 %v5660
        %5691 = vmatprep.subr.mxu0 0.0
        %5692 = vmatpush1.msra.mxu0 %v5661
        %5693 = vmatprep.subr.mxu0 0.0
        %5694 = vmatpush1.msra.mxu0 %v5662
        %5695 = vmatprep.subr.mxu0 0.0
        %5696 = vmatpush1.msra.mxu0 0.0
        %5697 = vmatprep.subr.mxu0 0.0
        %5698 = vmatpush1.msra.mxu0 0.0
        %5699 = vmatprep.subr.mxu0 0.0
        %5700 = vmatpush1.msra.mxu0 0.0
        %5701 = vmatprep.subr.mxu0 0.0
        %5702 = vmatpush1.msra.mxu0 0.0
        %5703 = vmatprep.subr.mxu0 0.0
        %5704 = vmatpush1.msra.mxu0 0.0
        %5705 = vmatprep.subr.mxu0 0.0
        %5706 = vmatpush1.msra.mxu0 0.0
        %5707 = vmatprep.subr.mxu0 0.0
        %5708 = vmatpush1.msra.mxu0 0.0
        %5709 = vmatprep.subr.mxu0 0.0
        %5710 = vmatpush1.msra.mxu0 0.0
        %5711 = vmatprep.subr.mxu0 0.0
        %5712 = vmatpush1.msra.mxu0 0.0
        %5713 = vmatprep.subr.mxu0 0.0
        %5714 = vmatpush1.msra.mxu0 0.0
        %5715 = vmatprep.subr.mxu0 0.0
        %5716 = vmatpush1.msra.mxu0 0.0
        %5717 = vmatprep.subr.mxu0 0.0
        %5718 = vmatpush1.msra.mxu0 0.0
        %5719 = vmatprep.subr.mxu0 0.0
        %5720 = vmatpush1.msra.mxu0 0.0
        %5721 = vmatprep.subr.mxu0 0.0
        %5722 = vmatpush1.msra.mxu0 0.0
        %5723 = vmatprep.subr.mxu0 0.0
        %5724 = vmatpush1.msra.mxu0 0.0
        %5725 = vmatprep.subr.mxu0 0.0
        %5726 = vmatpush1.msra.mxu0 0.0
        %5727 = vmatprep.mubr.f32.mxu0 0.0
        %5728 = vmatmul.mubr.f32.gmra.mrb[0].mxu0 %v3868
        %v5729 = vpop.f32.mrb[0].mxu0
        %v5730 = vadd.f32 0.0, %v5729
        %v5731 = vpop.f32.mrb[0].mxu0
        %5732 = vmatprep.mubr.f32.mxu0 0.0
        %5733 = vmatmul.mubr.f32.gmra.mrb[0].mxu0 %v3870
        %v5734 = vpop.f32.mrb[0].mxu0
        %v5735 = vadd.f32 0.0, %v5734
        %v5736 = vpop.f32.mrb[0].mxu0
        %5737 = vmatprep.mubr.f32.mxu0 0.0
        %5738 = vmatmul.mubr.f32.gmra.mrb[0].mxu0 %v3873
        %v5739 = vpop.f32.mrb[0].mxu0
        %v5740 = vadd.f32 0.0, %v5739
        %v5741 = vpop.f32.mrb[0].mxu0
        %5742 = vmatprep.mubr.f32.mxu0 0.0
        %5743 = vmatmul.mubr.f32.gmra.mrb[0].mxu0 %v3875
        %v5744 = vpop.f32.mrb[0].mxu0
        %v5745 = vadd.f32 0.0, %v5744
        %v5746 = vpop.f32.mrb[0].mxu0
        %5747 = vmatprep.mubr.f32.mxu0 0.0
        %5748 = vmatmul.mubr.f32.gmra.mrb[0].mxu0 %v3878
        %v5749 = vpop.f32.mrb[0].mxu0
        %v5750 = vadd.f32 0.0, %v5749
        %v5751 = vpop.f32.mrb[0].mxu0
        %5752 = vmatprep.mubr.f32.mxu0 0.0
        %5753 = vmatmul.mubr.f32.gmra.mrb[0].mxu0 %v3880
        %v5754 = vpop.f32.mrb[0].mxu0
        %v5755 = vadd.f32 0.0, %v5754
        %v5756 = vpop.f32.mrb[0].mxu0
        %5757 = vmatprep.mubr.f32.mxu0 0.0
        %5758 = vmatmul.mubr.f32.gmra.mrb[0].mxu0 %v3883
        %v5759 = vpop.f32.mrb[0].mxu0
        %v5760 = vadd.f32 0.0, %v5759
        %v5761 = vpop.f32.mrb[0].mxu0
        %5762 = vmatprep.mubr.f32.mxu0 0.0
        %5763 = vmatmul.mubr.f32.gmra.mrb[0].mxu0 %v3885
        %v5764 = vpop.f32.mrb[0].mxu0
        %v5765 = vadd.f32 0.0, %v5764
        %v5766 = vpop.f32.mrb[0].mxu0
        %5767 = vmatprep.mubr.f32.mxu0 0.0
        %5768 = vmatmul.mubr.f32.gmra.mrb[0].mxu0 %v3888
        %v5769 = vpop.f32.mrb[0].mxu0
        %v5770 = vadd.f32 0.0, %v5769
        %v5771 = vpop.f32.mrb[0].mxu0
        %5772 = vmatprep.mubr.f32.mxu0 0.0
        %5773 = vmatmul.mubr.f32.gmra.mrb[0].mxu0 %v3890
        %v5774 = vpop.f32.mrb[0].mxu0
        %v5775 = vadd.f32 0.0, %v5774
        %v5776 = vpop.f32.mrb[0].mxu0
        %5777 = vmatprep.mubr.f32.mxu0 0.0
        %5778 = vmatmul.mubr.f32.gmra.mrb[0].mxu0 %v3893
        %v5779 = vpop.f32.mrb[0].mxu0
        %v5780 = vadd.f32 0.0, %v5779
        %v5781 = vpop.f32.mrb[0].mxu0
        %5782 = vmatprep.mubr.f32.mxu0 0.0
        %5783 = vmatmul.mubr.f32.gmra.mrb[0].mxu0 %v3895
        %v5784 = vpop.f32.mrb[0].mxu0
        %v5785 = vadd.f32 0.0, %v5784
        %v5786 = vpop.f32.mrb[0].mxu0
        %5787 = vmatprep.mubr.f32.mxu0 0.0
        %5788 = vmatmul.mubr.f32.gmra.mrb[0].mxu0 %v3898
        %v5789 = vpop.f32.mrb[0].mxu0
        %v5790 = vadd.f32 0.0, %v5789
        %v5791 = vpop.f32.mrb[0].mxu0
        %5792 = vmatprep.mubr.f32.mxu0 0.0
        %5793 = vmatmul.mubr.f32.gmra.mrb[0].mxu0 %v3900
        %v5794 = vpop.f32.mrb[0].mxu0
        %v5795 = vadd.f32 0.0, %v5794
        %v5796 = vpop.f32.mrb[0].mxu0
        %5797 = vmatprep.mubr.f32.mxu0 0.0
        %5798 = vmatmul.mubr.f32.gmra.mrb[0].mxu0 %v3903
        %v5799 = vpop.f32.mrb[0].mxu0
        %v5800 = vadd.f32 0.0, %v5799
        %v5801 = vpop.f32.mrb[0].mxu0
        %5802 = vmatprep.mubr.f32.mxu0 0.0
        %5803 = vmatmul.mubr.f32.gmra.mrb[0].mxu0 %v3905
        %v5804 = vpop.f32.mrb[0].mxu0
        %v5805 = vadd.f32 0.0, %v5804
        %v5806 = vpop.f32.mrb[0].mxu0
        %5807 = vmatprep.mubr.f32.mxu0 0.0
        %5808 = vmatmul.mubr.f32.gmra.mrb[0].mxu0 %v3908
        %v5809 = vpop.f32.mrb[0].mxu0
        %v5810 = vadd.f32 0.0, %v5809
        %v5811 = vpop.f32.mrb[0].mxu0
        %5812 = vmatprep.mubr.f32.mxu0 0.0
        %5813 = vmatmul.mubr.f32.gmra.mrb[0].mxu0 %v3910
        %v5814 = vpop.f32.mrb[0].mxu0
        %v5815 = vadd.f32 0.0, %v5814
        %v5816 = vpop.f32.mrb[0].mxu0
        %5817 = vmatprep.mubr.f32.mxu0 0.0
        %5818 = vmatmul.mubr.f32.gmra.mrb[0].mxu0 %v3913
        %v5819 = vpop.f32.mrb[0].mxu0
        %v5820 = vadd.f32 0.0, %v5819
        %v5821 = vpop.f32.mrb[0].mxu0
        %5822 = vmatprep.mubr.f32.mxu0 0.0
        %5823 = vmatmul.mubr.f32.gmra.mrb[0].mxu0 %v3915
        %v5824 = vpop.f32.mrb[0].mxu0
        %v5825 = vadd.f32 0.0, %v5824
        %v5826 = vpop.f32.mrb[0].mxu0
        %5827 = vmatprep.mubr.f32.mxu0 0.0
        %5828 = vmatmul.mubr.f32.gmra.mrb[0].mxu0 %v3918
        %v5829 = vpop.f32.mrb[0].mxu0
        %v5830 = vadd.f32 0.0, %v5829
        %v5831 = vpop.f32.mrb[0].mxu0
        %5832 = vmatprep.mubr.f32.mxu0 0.0
        %5833 = vmatmul.mubr.f32.gmra.mrb[0].mxu0 %v3920
        %v5834 = vpop.f32.mrb[0].mxu0
        %v5835 = vadd.f32 0.0, %v5834
        %v5836 = vpop.f32.mrb[0].mxu0
        %5837 = vmatprep.mubr.f32.mxu0 0.0
        %5838 = vmatmul.mubr.f32.gmra.mrb[0].mxu0 %v3923
        %v5839 = vpop.f32.mrb[0].mxu0
        %v5840 = vadd.f32 0.0, %v5839
        %v5841 = vpop.f32.mrb[0].mxu0
        %5842 = vmatprep.mubr.f32.mxu0 0.0
        %5843 = vmatmul.mubr.f32.gmra.mrb[0].mxu0 %v3925
        %v5844 = vpop.f32.mrb[0].mxu0
        %v5845 = vadd.f32 0.0, %v5844
        %v5846 = vpop.f32.mrb[0].mxu0
        %5847 = vmatprep.mubr.f32.mxu0 0.0
        %5848 = vmatmul.mubr.f32.gmra.mrb[0].mxu0 %v3928
        %v5849 = vpop.f32.mrb[0].mxu0
        %v5850 = vadd.f32 0.0, %v5849
        %v5851 = vpop.f32.mrb[0].mxu0
        %5852 = vmatprep.mubr.f32.mxu0 0.0
        %5853 = vmatmul.mubr.f32.gmra.mrb[0].mxu0 %v3930
        %v5854 = vpop.f32.mrb[0].mxu0
        %v5855 = vadd.f32 0.0, %v5854
        %v5856 = vpop.f32.mrb[0].mxu0
        %5857 = vmatprep.mubr.f32.mxu0 0.0
        %5858 = vmatmul.mubr.f32.gmra.mrb[0].mxu0 %v3933
        %v5859 = vpop.f32.mrb[0].mxu0
        %v5860 = vadd.f32 0.0, %v5859
        %v5861 = vpop.f32.mrb[0].mxu0
        %5862 = vmatprep.mubr.f32.mxu0 0.0
        %5863 = vmatmul.mubr.f32.gmra.mrb[0].mxu0 %v3935
        %v5864 = vpop.f32.mrb[0].mxu0
        %v5865 = vadd.f32 0.0, %v5864
        %v5866 = vpop.f32.mrb[0].mxu0
        %5867 = vmatprep.mubr.f32.mxu0 0.0
        %5868 = vmatmul.mubr.f32.gmra.mrb[0].mxu0 %v4802
        %v5869 = vpop.f32.mrb[0].mxu0
        %v5870 = vadd.f32 0.0, %v5869
        %v5871 = vpop.f32.mrb[0].mxu0
        %5872 = vmatprep.mubr.f32.mxu0 0.0
        %5873 = vmatmul.mubr.f32.gmra.mrb[0].mxu0 %v4804
        %v5874 = vpop.f32.mrb[0].mxu0
        %v5875 = vadd.f32 0.0, %v5874
        %v5876 = vpop.f32.mrb[0].mxu0
        %5877 = vmatprep.mubr.f32.mxu0 0.0
        %5878 = vmatmul.mubr.f32.gmra.mrb[0].mxu0 %v5641
        %v5879 = vpop.f32.mrb[0].mxu0
        %v5880 = vadd.f32 0.0, %v5879
        %v5881 = vpop.f32.mrb[0].mxu0
        %5882 = vmatprep.mubr.f32.mxu0 0.0
        %5883 = vmatmul.mubr.f32.gmra.mrb[0].mxu0 %v5643
        %v5884 = vpop.f32.mrb[0].mxu0
        %v5885 = vadd.f32 0.0, %v5884
        %v5886 = vpop.f32.mrb[0].mxu0
        %5887 = vdwg.mxu0
        %v5888 = vadd.f32 %v5607, %v5730
        %v5889 = vadd.f32 %v5608, %v5735
        %v5890 = vadd.f32 %v5609, %v5740
        %v5891 = vadd.f32 %v5610, %v5745
        %v5892 = vadd.f32 %v5611, %v5750
        %v5893 = vadd.f32 %v5612, %v5755
        %v5894 = vadd.f32 %v5613, %v5760
        %v5895 = vadd.f32 %v5614, %v5765
        %v5896 = vadd.f32 %v5615, %v5770
        %v5897 = vadd.f32 %v5616, %v5775
        %v5898 = vadd.f32 %v5617, %v5780
        %v5899 = vadd.f32 %v5618, %v5785
        %v5900 = vadd.f32 %v5619, %v5790
        %v5901 = vadd.f32 %v5620, %v5795
        %v5902 = vadd.f32 %v5621, %v5800
        %v5903 = vadd.f32 %v5622, %v5805
        %v5904 = vadd.f32 %v5623, %v5810
        %v5905 = vadd.f32 %v5624, %v5815
        %v5906 = vadd.f32 %v5625, %v5820
        %v5907 = vadd.f32 %v5626, %v5825
        %v5908 = vadd.f32 %v5627, %v5830
        %v5909 = vadd.f32 %v5628, %v5835
        %v5910 = vadd.f32 %v5629, %v5840
        %v5911 = vadd.f32 %v5630, %v5845
        %v5912 = vadd.f32 %v5631, %v5850
        %v5913 = vadd.f32 %v5632, %v5855
        %v5914 = vadd.f32 %v5633, %v5860
        %v5915 = vadd.f32 %v5634, %v5865
        %v5916 = vadd.f32 %v5635, %v5870
        %v5917 = vadd.f32 %v5636, %v5875
        %v5918 = vadd.f32 %v5637, %v5880
        %v5919 = vadd.f32 %v5638, %v5885
        %v5920 = vld [vmem:[%s4] sm:$0x1]
        %v5922 = vlaneseq
        %v5923 = vshrl.u32 %v5922, 7
        %v5924 = vsub.s32 0, %v5923
        %v5925 = vrot.slane %v5920, %v5924
        %v5927 = vadd.f32 %v5888, %v5925
        %v5928 = vadd.f32 %v5889, %v5925
        %v5929 = vadd.f32 %v5890, %v5925
        %v5930 = vadd.f32 %v5891, %v5925
        %v5931 = vadd.f32 %v5892, %v5925
        %v5932 = vadd.f32 %v5893, %v5925
        %v5933 = vadd.f32 %v5894, %v5925
        %v5934 = vadd.f32 %v5895, %v5925
        %v5935 = vadd.f32 %v5896, %v5925
        %v5936 = vadd.f32 %v5897, %v5925
        %v5937 = vadd.f32 %v5898, %v5925
        %v5938 = vadd.f32 %v5899, %v5925
        %v5939 = vadd.f32 %v5900, %v5925
        %v5940 = vadd.f32 %v5901, %v5925
        %v5941 = vadd.f32 %v5902, %v5925
        %v5942 = vadd.f32 %v5903, %v5925
        %v5943 = vadd.f32 %v5904, %v5925
        %v5944 = vadd.f32 %v5905, %v5925
        %v5945 = vadd.f32 %v5906, %v5925
        %v5946 = vadd.f32 %v5907, %v5925
        %v5947 = vadd.f32 %v5908, %v5925
        %v5948 = vadd.f32 %v5909, %v5925
        %v5949 = vadd.f32 %v5910, %v5925
        %v5950 = vadd.f32 %v5911, %v5925
        %v5951 = vadd.f32 %v5912, %v5925
        %v5952 = vadd.f32 %v5913, %v5925
        %v5953 = vadd.f32 %v5914, %v5925
        %v5954 = vadd.f32 %v5915, %v5925
        %v5955 = vadd.f32 %v5916, %v5925
        %v5956 = vadd.f32 %v5917, %v5925
        %v5957 = vadd.f32 %v5918, %v5925
        %v5958 = vadd.f32 %v5919, %v5925
        %v5959 = vadd.f32 %v5927, %v364
        %v5960 = vadd.f32 %v5928, %v366
        %v5961 = vadd.f32 %v5929, %v369
        %v5962 = vadd.f32 %v5930, %v371
        %v5963 = vadd.f32 %v5931, %v374
        %v5964 = vadd.f32 %v5932, %v376
        %v5965 = vadd.f32 %v5933, %v379
        %v5966 = vadd.f32 %v5934, %v381
        %v5967 = vadd.f32 %v5935, %v384
        %v5968 = vadd.f32 %v5936, %v386
        %v5969 = vadd.f32 %v5937, %v389
        %v5970 = vadd.f32 %v5938, %v391
        %v5971 = vadd.f32 %v5939, %v394
        %v5972 = vadd.f32 %v5940, %v396
        %v5973 = vadd.f32 %v5941, %v399
        %v5974 = vadd.f32 %v5942, %v401
        %v5975 = vadd.f32 %v5943, %v404
        %v5976 = vadd.f32 %v5944, %v406
        %v5977 = vadd.f32 %v5945, %v409
        %v5978 = vadd.f32 %v5946, %v411
        %v5979 = vadd.f32 %v5947, %v414
        %v5980 = vadd.f32 %v5948, %v416
        %v5981 = vadd.f32 %v5949, %v419
        %v5982 = vadd.f32 %v5950, %v421
        %v5983 = vadd.f32 %v5951, %v424
        %v5984 = vadd.f32 %v5952, %v426
        %v5985 = vadd.f32 %v5953, %v429
        %v5986 = vadd.f32 %v5954, %v431
        %v5987 = vadd.f32 %v5955, %v434
        %v5988 = vadd.f32 %v5956, %v436
        %v5989 = vadd.f32 %v5957, %v1602
        %v5990 = vadd.f32 %v5958, %v1604
        %5991 = vst [vmem:[%s232] sm:$0xff] %v5959
        %5992 = vst [vmem:[%s232 + $0x8] sm:$0xff] %v5960
        %5993 = vst [vmem:[%s232 + $0x10] sm:$0xff] %v5961
        %5994 = vst [vmem:[%s232 + $0x18] sm:$0xff] %v5962
        %5995 = vst [vmem:[%s232 + $0x20] sm:$0xff] %v5963
        %5996 = vst [vmem:[%s232 + $0x28] sm:$0xff] %v5964
        %5997 = vst [vmem:[%s232 + $0x30] sm:$0xff] %v5965
        %5998 = vst [vmem:[%s232 + $0x38] sm:$0xff] %v5966
        %5999 = vst [vmem:[%s232 + $0x40] sm:$0xff] %v5967
        %6000 = vst [vmem:[%s232 + $0x48] sm:$0xff] %v5968
        %6001 = vst [vmem:[%s232 + $0x50] sm:$0xff] %v5969
        %6002 = vst [vmem:[%s232 + $0x58] sm:$0xff] %v5970
        %6003 = vst [vmem:[%s232 + $0x60] sm:$0xff] %v5971
        %6004 = vst [vmem:[%s232 + $0x68] sm:$0xff] %v5972
        %6005 = vst [vmem:[%s232 + $0x70] sm:$0xff] %v5973
        %6006 = vst [vmem:[%s232 + $0x78] sm:$0xff] %v5974
        %6007 = vst [vmem:[%s232 + $0x80] sm:$0xff] %v5975
        %6008 = vst [vmem:[%s232 + $0x88] sm:$0xff] %v5976
        %6009 = vst [vmem:[%s232 + $0x90] sm:$0xff] %v5977
        %6010 = vst [vmem:[%s232 + $0x98] sm:$0xff] %v5978
        %6011 = vst [vmem:[%s232 + $0xa0] sm:$0xff] %v5979
        %6012 = vst [vmem:[%s232 + $0xa8] sm:$0xff] %v5980
        %6013 = vst [vmem:[%s232 + $0xb0] sm:$0xff] %v5981
        %6014 = vst [vmem:[%s232 + $0xb8] sm:$0xff] %v5982
        %6015 = vst [vmem:[%s232 + $0xc0] sm:$0xff] %v5983
        %6016 = vst [vmem:[%s232 + $0xc8] sm:$0xff] %v5984
        %6017 = vst [vmem:[%s232 + $0xd0] sm:$0xff] %v5985
        %6018 = vst [vmem:[%s232 + $0xd8] sm:$0xff] %v5986
        %6019 = vst [vmem:[%s232 + $0xe0] sm:$0xff] %v5987
        %6020 = vst [vmem:[%s232 + $0xe8] sm:$0xff] %v5988
        %6021 = vst [vmem:[%s232 + $0xf0] sm:$0xff] %v5989
        %6022 = vst [vmem:[%s232 + $0xf8] sm:$0xff] %v5990
        %s6023 = sand.u32 %s138, 1
        %s6024 = scalar_lea.sflag [#allocation5], %s6023
        %s6025 = sand.u32 %s138, 1
        %s6026 = smul.addr %s6025, 256
        %s6027 = scalar_lea.vmem [#allocation6], %s6026
        // Predicated region
        $region45: #{tpu_custom_call.1} parent=39 // pred_check
          %p6028 = pneg %p148
        $region46: #{tpu_custom_call.1} parent=39 // pred_check_branch
          %6030 = sbr.rel (%p6028) target = $region48
        $region47: #{tpu_custom_call.1} parent=39 // pred_region
          %s6032 = ssub.s32 4096, 4096
          %6033 = vsyncadd %s6024, %s6032
          %s6034 = smul.addr %s20, 32
          %s6035 = smul.addr %s6034, 128
          %s6036 = scalar_lea.hbm %s5, %s6035
          %s6037 = sshll.u32 %s6027, 4
          %s6038 = int_to_ptr.vmem [resolvable:$true] %s6037
          %6043 = dma.vmem_to_hbm [thread:$0]  %s6038, 4096, %s6036, %s6024, 128, 128, 8
        $region48: #{tpu_custom_call.1} parent=39 // pred_fallthru
          _
      $region40: #{tpu_custom_call.1} parent=5 // pred_fallthru
        _
      %p6044 = scmp.le.s32.totalorder 2, %s15
      // Predicated region
      $region49: #{tpu_custom_call.1} parent=5 // pred_check
        %p6045 = pneg %p6044
      $region50: #{tpu_custom_call.1} parent=5 // pred_check_branch
        %6047 = sbr.rel (%p6045) target = $region52
      $region51: #{tpu_custom_call.1} parent=5 // pred_region
        %s6048 = ssub.s32 %s15, 2
        // Predicated region
        $region53: #{tpu_custom_call.1} parent=51 // pred_check
          %p6049 = pneg %p154
        $region54: #{tpu_custom_call.1} parent=51 // pred_check_branch
          %6051 = sbr.rel (%p6049) target = $region56
        $region55: #{tpu_custom_call.1} parent=51 // pred_region
          %s6052 = sand.u32 %s139, 1
          %s6053 = scalar_lea.sflag [#allocation5], %s6052
          %s6054 = sand.u32 %s139, 1
          %s6055 = smul.addr %s6054, 256
          %s6056 = scalar_lea.vmem [#allocation6], %s6055
          %6057 = dma.done %s6053, 4096
        $region56: #{tpu_custom_call.1} parent=51 // pred_fallthru
          _
      $region52: #{tpu_custom_call.1} parent=5 // pred_fallthru
        _
    $region6: #{tpu_custom_call.1} parent=1 // loop_footer
      %s19 = sadd.s32 1, %s15
    $region7: #{tpu_custom_call.1} parent=1 // loop_footer_branch
      %14 = sbr.rel target = $region3
    $region8: #{tpu_custom_call.1} parent=1 // loop_exit
      _
    %6058 = vsyncpa [#allocation4], 1
    %s6059 = scalar_lea.sflag [#allocation4], 1
    %6060 = vsyncpa %s6059, 1
    %6061 = vsyncpa [#allocation5], 1
    %s6062 = scalar_lea.sflag [#allocation5], 1
    %6063 = vsyncpa %s6062, 1

</llo_original>
